<compile_context>
chip_gen: v6e
topology: v6e:2x2x1
jax: 0.10.0
libtpu: 0.0.40
codegen_flags: <defaults>
</compile_context>

<pallas_src>
import functools

import jax
import jax.numpy as jnp
from jax.experimental import pallas as pl
from jax.experimental.pallas import tpu as pltpu


# ----------------------------------------------------------------------------
# Pallas kernel: fused (bf16 matmul -> +bias -> optional tanh), single K pass
# ----------------------------------------------------------------------------
def _gemm_bias_kernel(a_ref, b_ref, bias_ref, o_ref, *, out_act):
    acc = jnp.dot(a_ref[...], b_ref[...], preferred_element_type=jnp.float32)
    acc = acc + bias_ref[...]                      # (1, N) broadcast
    if out_act == "tanh":
        acc = jnp.tanh(acc)
    o_ref[...] = acc.astype(o_ref.dtype)


def _round_up(x, m):
    return (x + m - 1) // m * m


def fused_gemm(a, b, bias, *, out_act=None, tm_max=512):
    """out[g] = out_act(a[g] @ b[g] + bias).

    a: (G, M, K) f32, b: (G, K, N) f32, bias: (N,) f32  ->  (G, M, N) f32.
    A/B are cast to bf16 for the MXU; accumulation is f32.
    """
    G, M, K = a.shape
    N = b.shape[-1]

    tm = min(tm_max, _round_up(M, 8))              # pad M to sublane (8) only
    Mp = _round_up(M, tm)
    if Mp != M:
        a = jnp.pad(a, ((0, 0), (0, Mp - M), (0, 0)))

    a_bf = a.astype(jnp.bfloat16)
    b_bf = b.astype(jnp.bfloat16)
    bias2 = bias.reshape(1, N).astype(jnp.float32)

    out = pl.pallas_call(
        functools.partial(_gemm_bias_kernel, out_act=out_act),
        out_shape=jax.ShapeDtypeStruct((G, Mp, N), jnp.float32),
        grid_spec=pltpu.PrefetchScalarGridSpec(
            num_scalar_prefetch=0,
            grid=(G, Mp // tm),
            in_specs=[
                pl.BlockSpec((None, tm, K), lambda g, i: (g, i, 0)),
                pl.BlockSpec((None, K, N), lambda g, i: (g, 0, 0)),
                pl.BlockSpec((1, N), lambda g, i: (0, 0)),
            ],
            out_specs=pl.BlockSpec((None, tm, N), lambda g, i: (g, i, 0)),
        ),
        compiler_params=pltpu.CompilerParams(
            dimension_semantics=("parallel", "parallel"),
        ),
    )(a_bf, b_bf, bias2)

    return out[:, :M] if Mp != M else out


# ----------------------------------------------------------------------------
# Conv / ConvTranspose wrappers (NHWC, im2col glue in JAX, GEMM in Pallas)
# ----------------------------------------------------------------------------
def conv2d_s2(x, w, b, *, pre_act=None):
    """torch Conv2d(k=4, s=2, p=1).  x: NHWC, w: (Cout, Cin, 4, 4)."""
    if pre_act == "leaky":
        x = jnp.where(x > 0, x, 0.2 * x)
    elif pre_act == "relu":
        x = jnp.maximum(x, 0.0)

    n, h, wd, cin = x.shape
    cout = w.shape[0]
    ho, wo = h // 2, wd // 2
    xp = jnp.pad(x, ((0, 0), (1, 1), (1, 1), (0, 0)))

    cols = []
    for ky in range(4):
        for kx in range(4):
            cols.append(xp[:, ky:ky + 2 * ho:2, kx:kx + 2 * wo:2, :])
    patches = jnp.concatenate(cols, axis=-1).reshape(n * ho * wo, 16 * cin)

    bm = w.transpose(2, 3, 1, 0).reshape(16 * cin, cout)   # rows: (ky, kx, cin)
    y = fused_gemm(patches[None], bm[None], b)[0]
    return y.reshape(n, ho, wo, cout)


# For output row parity r, the contributing (input-row offset into the
# 1-padded input, kernel row) pairs:  oh = 2*ih - 1 + kh.
_PHASE_TAPS = {0: ((0, 3), (1, 1)), 1: ((1, 2), (2, 0))}


def conv_transpose2d_s2(x, w, b, *, pre_act=None, out_act=None):
    """torch ConvTranspose2d(k=4, s=2, p=1).  x: NHWC, w: (Cin, Cout, 4, 4)."""
    if pre_act == "relu":
        x = jnp.maximum(x, 0.0)
    elif pre_act == "leaky":
        x = jnp.where(x > 0, x, 0.2 * x)

    n, h, wd, cin = x.shape
    cout = w.shape[1]
    xp = jnp.pad(x, ((0, 0), (1, 1), (1, 1), (0, 0)))

    a_list, b_list = [], []
    for rh in (0, 1):
        for rw in (0, 1):
            cols, wrows = [], []
            for dh, kh in _PHASE_TAPS[rh]:
                for dw, kw in _PHASE_TAPS[rw]:
                    cols.append(xp[:, dh:dh + h, dw:dw + wd, :])
                    wrows.append(w[:, :, kh, kw])               # (Cin, Cout)
            a_list.append(jnp.concatenate(cols, axis=-1).reshape(n * h * wd, 4 * cin))
            b_list.append(jnp.concatenate(wrows, axis=0))        # (4*Cin, Cout)

    a4 = jnp.stack(a_list, axis=0)       # (4, M, 4*Cin)
    b4 = jnp.stack(b_list, axis=0)       # (4, 4*Cin, Cout)
    y4 = fused_gemm(a4, b4, b, out_act=out_act)                  # (4, M, Cout)

    # Interleave phases: out[n, 2p+rh, 2q+rw, c] = y4[rh*2+rw, n*p*q, c]
    y4 = y4.reshape(2, 2, n, h, wd, cout).transpose(2, 3, 0, 4, 1, 5)
    return y4.reshape(n, 2 * h, 2 * wd, cout)


def batchnorm_train(x, gamma, beta, eps=1e-5):
    # train-mode BN: biased batch statistics over (N, H, W) per channel (NHWC)
    mean = x.mean(axis=(0, 1, 2), keepdims=True)
    var = ((x - mean) ** 2).mean(axis=(0, 1, 2), keepdims=True)
    return gamma * (x - mean) * jax.lax.rsqrt(var + eps) + beta


# ----------------------------------------------------------------------------
# Parameters (deterministic synthetic init, torch weight layouts)
# ----------------------------------------------------------------------------
def init_params(key, in_channels=3, out_channels=3, ngf=8):
    params = {}

    def conv_p(k, cin, cout):
        k1, k2 = jax.random.split(k)
        return {"w": 0.02 * jax.random.normal(k1, (cout, cin, 4, 4), jnp.float32),
                "b": 0.02 * jax.random.normal(k2, (cout,), jnp.float32)}

    def convt_p(k, cin, cout):
        k1, k2 = jax.random.split(k)
        return {"w": 0.02 * jax.random.normal(k1, (cin, cout, 4, 4), jnp.float32),
                "b": 0.02 * jax.random.normal(k2, (cout,), jnp.float32)}

    def bn_p(c):
        return {"gamma": jnp.ones((c,), jnp.float32),
                "beta": jnp.zeros((c,), jnp.float32)}

    keys = jax.random.split(key, 12)
    params["down1"] = conv_p(keys[0], in_channels, ngf)
    params["down2"] = {**conv_p(keys[1], ngf, ngf * 2), "bn": bn_p(ngf * 2)}
    params["down3"] = {**conv_p(keys[2], ngf * 2, ngf * 4), "bn": bn_p(ngf * 4)}
    params["down4"] = {**conv_p(keys[3], ngf * 4, ngf * 8), "bn": bn_p(ngf * 8)}
    params["down5"] = {**conv_p(keys[4], ngf * 8, ngf * 8), "bn": bn_p(ngf * 8)}
    params["down6"] = conv_p(keys[5], ngf * 8, ngf * 8)
    params["up1"] = {**convt_p(keys[6], ngf * 8, ngf * 8), "bn": bn_p(ngf * 8)}
    params["up2"] = {**convt_p(keys[7], ngf * 16, ngf * 8), "bn": bn_p(ngf * 8)}
    params["up3"] = {**convt_p(keys[8], ngf * 16, ngf * 4), "bn": bn_p(ngf * 4)}
    params["up4"] = {**convt_p(keys[9], ngf * 8, ngf * 2), "bn": bn_p(ngf * 2)}
    params["up5"] = {**convt_p(keys[10], ngf * 4, ngf), "bn": bn_p(ngf)}
    params["up6"] = convt_p(keys[11], ngf * 2, out_channels)
    return params


# ----------------------------------------------------------------------------
# Forward pass (mirrors UNetGenerator.forward); NCHW in/out like torch
# ----------------------------------------------------------------------------
def unet_forward(params, x_nchw):
    p = params
    x = x_nchw.transpose(0, 2, 3, 1)  # -> NHWC

    d1 = conv2d_s2(x, p["down1"]["w"], p["down1"]["b"], pre_act=None)
    d2 = batchnorm_train(conv2d_s2(d1, p["down2"]["w"], p["down2"]["b"], pre_act="leaky"),
                         p["down2"]["bn"]["gamma"], p["down2"]["bn"]["beta"])
    d3 = batchnorm_train(conv2d_s2(d2, p["down3"]["w"], p["down3"]["b"], pre_act="leaky"),
                         p["down3"]["bn"]["gamma"], p["down3"]["bn"]["beta"])
    d4 = batchnorm_train(conv2d_s2(d3, p["down4"]["w"], p["down4"]["b"], pre_act="leaky"),
                         p["down4"]["bn"]["gamma"], p["down4"]["bn"]["beta"])
    d5 = batchnorm_train(conv2d_s2(d4, p["down5"]["w"], p["down5"]["b"], pre_act="leaky"),
                         p["down5"]["bn"]["gamma"], p["down5"]["bn"]["beta"])
    d6 = conv2d_s2(d5, p["down6"]["w"], p["down6"]["b"], pre_act="leaky")

    # TODO(synk): Dropout(0.5) in up1/up2 skipped (inference-mode identity).
    u1 = batchnorm_train(
        conv_transpose2d_s2(d6, p["up1"]["w"], p["up1"]["b"], pre_act="relu"),
        p["up1"]["bn"]["gamma"], p["up1"]["bn"]["beta"])
    u1 = jnp.concatenate([u1, d5], axis=-1)

    u2 = batchnorm_train(
        conv_transpose2d_s2(u1, p["up2"]["w"], p["up2"]["b"], pre_act="relu"),
        p["up2"]["bn"]["gamma"], p["up2"]["bn"]["beta"])
    u2 = jnp.concatenate([u2, d4], axis=-1)

    u3 = batchnorm_train(
        conv_transpose2d_s2(u2, p["up3"]["w"], p["up3"]["b"], pre_act="relu"),
        p["up3"]["bn"]["gamma"], p["up3"]["bn"]["beta"])
    u3 = jnp.concatenate([u3, d3], axis=-1)

    u4 = batchnorm_train(
        conv_transpose2d_s2(u3, p["up4"]["w"], p["up4"]["b"], pre_act="relu"),
        p["up4"]["bn"]["gamma"], p["up4"]["bn"]["beta"])
    u4 = jnp.concatenate([u4, d2], axis=-1)

    u5 = batchnorm_train(
        conv_transpose2d_s2(u4, p["up5"]["w"], p["up5"]["b"], pre_act="relu"),
        p["up5"]["bn"]["gamma"], p["up5"]["bn"]["beta"])
    u5 = jnp.concatenate([u5, d1], axis=-1)

    out = conv_transpose2d_s2(u5, p["up6"]["w"], p["up6"]["b"],
                              pre_act="relu", out_act="tanh")
    return out.transpose(0, 3, 1, 2)  # -> NCHW


if __name__ == "__main__":
    key = jax.random.PRNGKey(0)
    k_param, k_x = jax.random.split(key)

    # Small but UNet-valid shapes: 6 stride-2 downsamplings need spatial 64.
    batch, in_ch, out_ch, ngf, spatial = 2, 3, 3, 8, 64
    params = init_params(k_param, in_channels=in_ch, out_channels=out_ch, ngf=ngf)
    x = jax.random.normal(k_x, (batch, in_ch, spatial, spatial), jnp.float32)

    fwd = jax.jit(unet_forward)
    y = fwd(params, x)
    y = jax.block_until_ready(y)

    assert y.shape == (batch, out_ch, spatial, spatial), y.shape
    assert bool(jnp.all(jnp.isfinite(y)))
    assert bool(jnp.all(jnp.abs(y) <= 1.0 + 1e-6))  # tanh output range
    print("KERNEL_OK")
</pallas_src>

<mosaic_0001>
module attributes {stable_mosaic.version = 11 : i64} {
  func.func @_gemm_bias_kernel(%arg0: i32, %arg1: i32, %arg2: memref<1x512x48xbf16, #tpu.memory_space<vmem>>, %arg3: memref<1x48x8xbf16, #tpu.memory_space<vmem>>, %arg4: memref<1x8xf32, #tpu.memory_space<vmem>>, %arg5: memref<1x512x8xf32, #tpu.memory_space<vmem>>) attributes {dimension_semantics = [#tpu.dimension_semantics<parallel>, #tpu.dimension_semantics<parallel>], iteration_bounds = array<i64: 1, 4>, scalar_prefetch = 0 : i64, scratch_operands = 0 : i64, tpu.core_type = #tpu.core_type<tc>, window_params = [{transform_indices = @transform_0, window_bounds = array<i64: 1, 512, 48>}, {transform_indices = @transform_1, window_bounds = array<i64: 1, 48, 8>}, {pipeline_mode = #tpu.pipeline_mode<synchronous>, transform_indices = @transform_2, window_bounds = array<i64: 1, 8>}, {transform_indices = @transform_3, window_bounds = array<i64: 1, 512, 8>}]} {
    %c0 = arith.constant 0 : index
    %c0_0 = arith.constant 0 : index
    %c0_1 = arith.constant 0 : index
    %0 = vector.load %arg2[%c0, %c0_0, %c0_1] : memref<1x512x48xbf16, #tpu.memory_space<vmem>>, vector<1x512x48xbf16>
    %1 = vector.shape_cast %0 : vector<1x512x48xbf16> to vector<512x48xbf16>
    %c0_2 = arith.constant 0 : index
    %c0_3 = arith.constant 0 : index
    %c0_4 = arith.constant 0 : index
    %2 = vector.load %arg3[%c0_2, %c0_3, %c0_4] : memref<1x48x8xbf16, #tpu.memory_space<vmem>>, vector<1x48x8xbf16>
    %3 = vector.shape_cast %2 : vector<1x48x8xbf16> to vector<48x8xbf16>
    %cst = arith.constant dense<0.000000e+00> : vector<512x8xf32>
    %4 = tpu.matmul %1, %3, %cst {dimension_numbers = #tpu.dot_dimension_numbers<[1], [0], [0], [1], [0, 0, 1, 1], [], []>} : vector<512x48xbf16>, vector<48x8xbf16>, vector<512x8xf32> -> vector<512x8xf32>
    %c0_5 = arith.constant 0 : index
    %c0_6 = arith.constant 0 : index
    %5 = vector.load %arg4[%c0_5, %c0_6] : memref<1x8xf32, #tpu.memory_space<vmem>>, vector<1x8xf32>
    %6 = vector.broadcast %5 : vector<1x8xf32> to vector<512x8xf32>
    %7 = arith.addf %4, %6 : vector<512x8xf32>
    %c0_7 = arith.constant 0 : index
    %c0_8 = arith.constant 0 : index
    %c0_9 = arith.constant 0 : index
    %8 = vector.load %arg5[%c0_7, %c0_8, %c0_9] : memref<1x512x8xf32, #tpu.memory_space<vmem>>, vector<1x512x8xf32>
    %9 = vector.shape_cast %8 : vector<1x512x8xf32> to vector<512x8xf32>
    %10 = vector.shape_cast %7 : vector<512x8xf32> to vector<1x512x8xf32>
    tpu.vector_store %arg5[%c0_7, %c0_8, %c0_9], %10 {strides = array<i32>} : memref<1x512x8xf32, #tpu.memory_space<vmem>>, vector<1x512x8xf32>,
    return
  }
  func.func @transform_0(%arg0: i32, %arg1: i32) -> (i32, i32, i32) {
    %c0_i32 = arith.constant 0 : i32
    %c0_i32_0 = arith.constant 0 : i32
    return %arg0, %arg1, %c0_i32 : i32, i32, i32
  }
  func.func @transform_1(%arg0: i32, %arg1: i32) -> (i32, i32, i32) {
    %c0_i32 = arith.constant 0 : i32
    %c0_i32_0 = arith.constant 0 : i32
    %c0_i32_1 = arith.constant 0 : i32
    return %arg0, %c0_i32, %c0_i32_0 : i32, i32, i32
  }
  func.func @transform_2(%arg0: i32, %arg1: i32) -> (i32, i32) {
    %c0_i32 = arith.constant 0 : i32
    %c0_i32_0 = arith.constant 0 : i32
    %c0_i32_1 = arith.constant 0 : i32
    return %c0_i32, %c0_i32_0 : i32, i32
  }
  func.func @transform_3(%arg0: i32, %arg1: i32) -> (i32, i32, i32) {
    %c0_i32 = arith.constant 0 : i32
    %c0_i32_0 = arith.constant 0 : i32
    return %arg0, %arg1, %c0_i32 : i32, i32, i32
  }
}

module attributes {stable_mosaic.version = 11 : i64} {
  func.func @_gemm_bias_kernel(%arg0: i32, %arg1: i32, %arg2: memref<1x512x128xbf16, #tpu.memory_space<vmem>>, %arg3: memref<1x128x16xbf16, #tpu.memory_space<vmem>>, %arg4: memref<1x16xf32, #tpu.memory_space<vmem>>, %arg5: memref<1x512x16xf32, #tpu.memory_space<vmem>>) attributes {dimension_semantics = [#tpu.dimension_semantics<parallel>, #tpu.dimension_semantics<parallel>], iteration_bounds = array<i64: 1, 1>, scalar_prefetch = 0 : i64, scratch_operands = 0 : i64, tpu.core_type = #tpu.core_type<tc>, window_params = [{transform_indices = @transform_0, window_bounds = array<i64: 1, 512, 128>}, {transform_indices = @transform_1, window_bounds = array<i64: 1, 128, 16>}, {pipeline_mode = #tpu.pipeline_mode<synchronous>, transform_indices = @transform_2, window_bounds = array<i64: 1, 16>}, {transform_indices = @transform_3, window_bounds = array<i64: 1, 512, 16>}]} {
    %c0 = arith.constant 0 : index
    %c0_0 = arith.constant 0 : index
    %c0_1 = arith.constant 0 : index
    %0 = vector.load %arg2[%c0, %c0_0, %c0_1] : memref<1x512x128xbf16, #tpu.memory_space<vmem>>, vector<1x512x128xbf16>
    %1 = vector.shape_cast %0 : vector<1x512x128xbf16> to vector<512x128xbf16>
    %c0_2 = arith.constant 0 : index
    %c0_3 = arith.constant 0 : index
    %c0_4 = arith.constant 0 : index
    %2 = vector.load %arg3[%c0_2, %c0_3, %c0_4] : memref<1x128x16xbf16, #tpu.memory_space<vmem>>, vector<1x128x16xbf16>
    %3 = vector.shape_cast %2 : vector<1x128x16xbf16> to vector<128x16xbf16>
    %cst = arith.constant dense<0.000000e+00> : vector<512x16xf32>
    %4 = tpu.matmul %1, %3, %cst {dimension_numbers = #tpu.dot_dimension_numbers<[1], [0], [0], [1], [0, 0, 1, 1], [], []>} : vector<512x128xbf16>, vector<128x16xbf16>, vector<512x16xf32> -> vector<512x16xf32>
    %c0_5 = arith.constant 0 : index
    %c0_6 = arith.constant 0 : index
    %5 = vector.load %arg4[%c0_5, %c0_6] : memref<1x16xf32, #tpu.memory_space<vmem>>, vector<1x16xf32>
    %6 = vector.broadcast %5 : vector<1x16xf32> to vector<512x16xf32>
    %7 = arith.addf %4, %6 : vector<512x16xf32>
    %c0_7 = arith.constant 0 : index
    %c0_8 = arith.constant 0 : index
    %c0_9 = arith.constant 0 : index
    %8 = vector.load %arg5[%c0_7, %c0_8, %c0_9] : memref<1x512x16xf32, #tpu.memory_space<vmem>>, vector<1x512x16xf32>
    %9 = vector.shape_cast %8 : vector<1x512x16xf32> to vector<512x16xf32>
    %10 = vector.shape_cast %7 : vector<512x16xf32> to vector<1x512x16xf32>
    tpu.vector_store %arg5[%c0_7, %c0_8, %c0_9], %10 {strides = array<i32>} : memref<1x512x16xf32, #tpu.memory_space<vmem>>, vector<1x512x16xf32>,
    return
  }
  func.func @transform_0(%arg0: i32, %arg1: i32) -> (i32, i32, i32) {
    %c0_i32 = arith.constant 0 : i32
    %c0_i32_0 = arith.constant 0 : i32
    return %arg0, %arg1, %c0_i32 : i32, i32, i32
  }
  func.func @transform_1(%arg0: i32, %arg1: i32) -> (i32, i32, i32) {
    %c0_i32 = arith.constant 0 : i32
    %c0_i32_0 = arith.constant 0 : i32
    %c0_i32_1 = arith.constant 0 : i32
    return %arg0, %c0_i32, %c0_i32_0 : i32, i32, i32
  }
  func.func @transform_2(%arg0: i32, %arg1: i32) -> (i32, i32) {
    %c0_i32 = arith.constant 0 : i32
    %c0_i32_0 = arith.constant 0 : i32
    %c0_i32_1 = arith.constant 0 : i32
    return %c0_i32, %c0_i32_0 : i32, i32
  }
  func.func @transform_3(%arg0: i32, %arg1: i32) -> (i32, i32, i32) {
    %c0_i32 = arith.constant 0 : i32
    %c0_i32_0 = arith.constant 0 : i32
    return %arg0, %arg1, %c0_i32 : i32, i32, i32
  }
}

module attributes {stable_mosaic.version = 11 : i64} {
  func.func @_gemm_bias_kernel(%arg0: i32, %arg1: i32, %arg2: memref<1x128x256xbf16, #tpu.memory_space<vmem>>, %arg3: memref<1x256x32xbf16, #tpu.memory_space<vmem>>, %arg4: memref<1x32xf32, #tpu.memory_space<vmem>>, %arg5: memref<1x128x32xf32, #tpu.memory_space<vmem>>) attributes {dimension_semantics = [#tpu.dimension_semantics<parallel>, #tpu.dimension_semantics<parallel>], iteration_bounds = array<i64: 1, 1>, scalar_prefetch = 0 : i64, scratch_operands = 0 : i64, tpu.core_type = #tpu.core_type<tc>, window_params = [{transform_indices = @transform_0, window_bounds = array<i64: 1, 128, 256>}, {transform_indices = @transform_1, window_bounds = array<i64: 1, 256, 32>}, {pipeline_mode = #tpu.pipeline_mode<synchronous>, transform_indices = @transform_2, window_bounds = array<i64: 1, 32>}, {transform_indices = @transform_3, window_bounds = array<i64: 1, 128, 32>}]} {
    %c0 = arith.constant 0 : index
    %c0_0 = arith.constant 0 : index
    %c0_1 = arith.constant 0 : index
    %0 = vector.load %arg2[%c0, %c0_0, %c0_1] : memref<1x128x256xbf16, #tpu.memory_space<vmem>>, vector<1x128x256xbf16>
    %1 = vector.shape_cast %0 : vector<1x128x256xbf16> to vector<128x256xbf16>
    %c0_2 = arith.constant 0 : index
    %c0_3 = arith.constant 0 : index
    %c0_4 = arith.constant 0 : index
    %2 = vector.load %arg3[%c0_2, %c0_3, %c0_4] : memref<1x256x32xbf16, #tpu.memory_space<vmem>>, vector<1x256x32xbf16>
    %3 = vector.shape_cast %2 : vector<1x256x32xbf16> to vector<256x32xbf16>
    %cst = arith.constant dense<0.000000e+00> : vector<128x32xf32>
    %4 = tpu.matmul %1, %3, %cst {dimension_numbers = #tpu.dot_dimension_numbers<[1], [0], [0], [1], [0, 0, 1, 1], [], []>} : vector<128x256xbf16>, vector<256x32xbf16>, vector<128x32xf32> -> vector<128x32xf32>
    %c0_5 = arith.constant 0 : index
    %c0_6 = arith.constant 0 : index
    %5 = vector.load %arg4[%c0_5, %c0_6] : memref<1x32xf32, #tpu.memory_space<vmem>>, vector<1x32xf32>
    %6 = vector.broadcast %5 : vector<1x32xf32> to vector<128x32xf32>
    %7 = arith.addf %4, %6 : vector<128x32xf32>
    %c0_7 = arith.constant 0 : index
    %c0_8 = arith.constant 0 : index
    %c0_9 = arith.constant 0 : index
    %8 = vector.load %arg5[%c0_7, %c0_8, %c0_9] : memref<1x128x32xf32, #tpu.memory_space<vmem>>, vector<1x128x32xf32>
    %9 = vector.shape_cast %8 : vector<1x128x32xf32> to vector<128x32xf32>
    %10 = vector.shape_cast %7 : vector<128x32xf32> to vector<1x128x32xf32>
    tpu.vector_store %arg5[%c0_7, %c0_8, %c0_9], %10 {strides = array<i32>} : memref<1x128x32xf32, #tpu.memory_space<vmem>>, vector<1x128x32xf32>,
    return
  }
  func.func @transform_0(%arg0: i32, %arg1: i32) -> (i32, i32, i32) {
    %c0_i32 = arith.constant 0 : i32
    %c0_i32_0 = arith.constant 0 : i32
    return %arg0, %arg1, %c0_i32 : i32, i32, i32
  }
  func.func @transform_1(%arg0: i32, %arg1: i32) -> (i32, i32, i32) {
    %c0_i32 = arith.constant 0 : i32
    %c0_i32_0 = arith.constant 0 : i32
    %c0_i32_1 = arith.constant 0 : i32
    return %arg0, %c0_i32, %c0_i32_0 : i32, i32, i32
  }
  func.func @transform_2(%arg0: i32, %arg1: i32) -> (i32, i32) {
    %c0_i32 = arith.constant 0 : i32
    %c0_i32_0 = arith.constant 0 : i32
    %c0_i32_1 = arith.constant 0 : i32
    return %c0_i32, %c0_i32_0 : i32, i32
  }
  func.func @transform_3(%arg0: i32, %arg1: i32) -> (i32, i32, i32) {
    %c0_i32 = arith.constant 0 : i32
    %c0_i32_0 = arith.constant 0 : i32
    return %arg0, %arg1, %c0_i32 : i32, i32, i32
  }
}

module attributes {stable_mosaic.version = 11 : i64} {
  func.func @_gemm_bias_kernel(%arg0: i32, %arg1: i32, %arg2: memref<1x32x512xbf16, #tpu.memory_space<vmem>>, %arg3: memref<1x512x64xbf16, #tpu.memory_space<vmem>>, %arg4: memref<1x64xf32, #tpu.memory_space<vmem>>, %arg5: memref<1x32x64xf32, #tpu.memory_space<vmem>>) attributes {dimension_semantics = [#tpu.dimension_semantics<parallel>, #tpu.dimension_semantics<parallel>], iteration_bounds = array<i64: 1, 1>, scalar_prefetch = 0 : i64, scratch_operands = 0 : i64, tpu.core_type = #tpu.core_type<tc>, window_params = [{transform_indices = @transform_0, window_bounds = array<i64: 1, 32, 512>}, {transform_indices = @transform_1, window_bounds = array<i64: 1, 512, 64>}, {pipeline_mode = #tpu.pipeline_mode<synchronous>, transform_indices = @transform_2, window_bounds = array<i64: 1, 64>}, {transform_indices = @transform_3, window_bounds = array<i64: 1, 32, 64>}]} {
    %c0 = arith.constant 0 : index
    %c0_0 = arith.constant 0 : index
    %c0_1 = arith.constant 0 : index
    %0 = vector.load %arg2[%c0, %c0_0, %c0_1] : memref<1x32x512xbf16, #tpu.memory_space<vmem>>, vector<1x32x512xbf16>
    %1 = vector.shape_cast %0 : vector<1x32x512xbf16> to vector<32x512xbf16>
    %c0_2 = arith.constant 0 : index
    %c0_3 = arith.constant 0 : index
    %c0_4 = arith.constant 0 : index
    %2 = vector.load %arg3[%c0_2, %c0_3, %c0_4] : memref<1x512x64xbf16, #tpu.memory_space<vmem>>, vector<1x512x64xbf16>
    %3 = vector.shape_cast %2 : vector<1x512x64xbf16> to vector<512x64xbf16>
    %cst = arith.constant dense<0.000000e+00> : vector<32x64xf32>
    %4 = tpu.matmul %1, %3, %cst {dimension_numbers = #tpu.dot_dimension_numbers<[1], [0], [0], [1], [0, 0, 1, 1], [], []>} : vector<32x512xbf16>, vector<512x64xbf16>, vector<32x64xf32> -> vector<32x64xf32>
    %c0_5 = arith.constant 0 : index
    %c0_6 = arith.constant 0 : index
    %5 = vector.load %arg4[%c0_5, %c0_6] : memref<1x64xf32, #tpu.memory_space<vmem>>, vector<1x64xf32>
    %6 = vector.broadcast %5 : vector<1x64xf32> to vector<32x64xf32>
    %7 = arith.addf %4, %6 : vector<32x64xf32>
    %c0_7 = arith.constant 0 : index
    %c0_8 = arith.constant 0 : index
    %c0_9 = arith.constant 0 : index
    %8 = vector.load %arg5[%c0_7, %c0_8, %c0_9] : memref<1x32x64xf32, #tpu.memory_space<vmem>>, vector<1x32x64xf32>
    %9 = vector.shape_cast %8 : vector<1x32x64xf32> to vector<32x64xf32>
    %10 = vector.shape_cast %7 : vector<32x64xf32> to vector<1x32x64xf32>
    tpu.vector_store %arg5[%c0_7, %c0_8, %c0_9], %10 {strides = array<i32>} : memref<1x32x64xf32, #tpu.memory_space<vmem>>, vector<1x32x64xf32>,
    return
  }
  func.func @transform_0(%arg0: i32, %arg1: i32) -> (i32, i32, i32) {
    %c0_i32 = arith.constant 0 : i32
    %c0_i32_0 = arith.constant 0 : i32
    return %arg0, %arg1, %c0_i32 : i32, i32, i32
  }
  func.func @transform_1(%arg0: i32, %arg1: i32) -> (i32, i32, i32) {
    %c0_i32 = arith.constant 0 : i32
    %c0_i32_0 = arith.constant 0 : i32
    %c0_i32_1 = arith.constant 0 : i32
    return %arg0, %c0_i32, %c0_i32_0 : i32, i32, i32
  }
  func.func @transform_2(%arg0: i32, %arg1: i32) -> (i32, i32) {
    %c0_i32 = arith.constant 0 : i32
    %c0_i32_0 = arith.constant 0 : i32
    %c0_i32_1 = arith.constant 0 : i32
    return %c0_i32, %c0_i32_0 : i32, i32
  }
  func.func @transform_3(%arg0: i32, %arg1: i32) -> (i32, i32, i32) {
    %c0_i32 = arith.constant 0 : i32
    %c0_i32_0 = arith.constant 0 : i32
    return %arg0, %arg1, %c0_i32 : i32, i32, i32
  }
}

module attributes {stable_mosaic.version = 11 : i64} {
  func.func @_gemm_bias_kernel(%arg0: i32, %arg1: i32, %arg2: memref<1x8x1024xbf16, #tpu.memory_space<vmem>>, %arg3: memref<1x1024x64xbf16, #tpu.memory_space<vmem>>, %arg4: memref<1x64xf32, #tpu.memory_space<vmem>>, %arg5: memref<1x8x64xf32, #tpu.memory_space<vmem>>) attributes {dimension_semantics = [#tpu.dimension_semantics<parallel>, #tpu.dimension_semantics<parallel>], iteration_bounds = array<i64: 1, 1>, scalar_prefetch = 0 : i64, scratch_operands = 0 : i64, tpu.core_type = #tpu.core_type<tc>, window_params = [{transform_indices = @transform_0, window_bounds = array<i64: 1, 8, 1024>}, {transform_indices = @transform_1, window_bounds = array<i64: 1, 1024, 64>}, {pipeline_mode = #tpu.pipeline_mode<synchronous>, transform_indices = @transform_2, window_bounds = array<i64: 1, 64>}, {transform_indices = @transform_3, window_bounds = array<i64: 1, 8, 64>}]} {
    %c0 = arith.constant 0 : index
    %c0_0 = arith.constant 0 : index
    %c0_1 = arith.constant 0 : index
    %0 = vector.load %arg2[%c0, %c0_0, %c0_1] : memref<1x8x1024xbf16, #tpu.memory_space<vmem>>, vector<1x8x1024xbf16>
    %1 = vector.shape_cast %0 : vector<1x8x1024xbf16> to vector<8x1024xbf16>
    %c0_2 = arith.constant 0 : index
    %c0_3 = arith.constant 0 : index
    %c0_4 = arith.constant 0 : index
    %2 = vector.load %arg3[%c0_2, %c0_3, %c0_4] : memref<1x1024x64xbf16, #tpu.memory_space<vmem>>, vector<1x1024x64xbf16>
    %3 = vector.shape_cast %2 : vector<1x1024x64xbf16> to vector<1024x64xbf16>
    %cst = arith.constant dense<0.000000e+00> : vector<8x64xf32>
    %4 = tpu.matmul %1, %3, %cst {dimension_numbers = #tpu.dot_dimension_numbers<[1], [0], [0], [1], [0, 0, 1, 1], [], []>} : vector<8x1024xbf16>, vector<1024x64xbf16>, vector<8x64xf32> -> vector<8x64xf32>
    %c0_5 = arith.constant 0 : index
    %c0_6 = arith.constant 0 : index
    %5 = vector.load %arg4[%c0_5, %c0_6] : memref<1x64xf32, #tpu.memory_space<vmem>>, vector<1x64xf32>
    %6 = vector.broadcast %5 : vector<1x64xf32> to vector<8x64xf32>
    %7 = arith.addf %4, %6 : vector<8x64xf32>
    %c0_7 = arith.constant 0 : index
    %c0_8 = arith.constant 0 : index
    %c0_9 = arith.constant 0 : index
    %8 = vector.load %arg5[%c0_7, %c0_8, %c0_9] : memref<1x8x64xf32, #tpu.memory_space<vmem>>, vector<1x8x64xf32>
    %9 = vector.shape_cast %8 : vector<1x8x64xf32> to vector<8x64xf32>
    %10 = vector.shape_cast %7 : vector<8x64xf32> to vector<1x8x64xf32>
    tpu.vector_store %arg5[%c0_7, %c0_8, %c0_9], %10 {strides = array<i32>} : memref<1x8x64xf32, #tpu.memory_space<vmem>>, vector<1x8x64xf32>,
    return
  }
  func.func @transform_0(%arg0: i32, %arg1: i32) -> (i32, i32, i32) {
    %c0_i32 = arith.constant 0 : i32
    %c0_i32_0 = arith.constant 0 : i32
    return %arg0, %arg1, %c0_i32 : i32, i32, i32
  }
  func.func @transform_1(%arg0: i32, %arg1: i32) -> (i32, i32, i32) {
    %c0_i32 = arith.constant 0 : i32
    %c0_i32_0 = arith.constant 0 : i32
    %c0_i32_1 = arith.constant 0 : i32
    return %arg0, %c0_i32, %c0_i32_0 : i32, i32, i32
  }
  func.func @transform_2(%arg0: i32, %arg1: i32) -> (i32, i32) {
    %c0_i32 = arith.constant 0 : i32
    %c0_i32_0 = arith.constant 0 : i32
    %c0_i32_1 = arith.constant 0 : i32
    return %c0_i32, %c0_i32_0 : i32, i32
  }
  func.func @transform_3(%arg0: i32, %arg1: i32) -> (i32, i32, i32) {
    %c0_i32 = arith.constant 0 : i32
    %c0_i32_0 = arith.constant 0 : i32
    return %arg0, %arg1, %c0_i32 : i32, i32, i32
  }
}

module attributes {stable_mosaic.version = 11 : i64} {
  func.func @_gemm_bias_kernel(%arg0: i32, %arg1: i32, %arg2: memref<1x8x256xbf16, #tpu.memory_space<vmem>>, %arg3: memref<1x256x64xbf16, #tpu.memory_space<vmem>>, %arg4: memref<1x64xf32, #tpu.memory_space<vmem>>, %arg5: memref<1x8x64xf32, #tpu.memory_space<vmem>>) attributes {dimension_semantics = [#tpu.dimension_semantics<parallel>, #tpu.dimension_semantics<parallel>], iteration_bounds = array<i64: 4, 1>, scalar_prefetch = 0 : i64, scratch_operands = 0 : i64, tpu.core_type = #tpu.core_type<tc>, window_params = [{transform_indices = @transform_0, window_bounds = array<i64: 1, 8, 256>}, {transform_indices = @transform_1, window_bounds = array<i64: 1, 256, 64>}, {pipeline_mode = #tpu.pipeline_mode<synchronous>, transform_indices = @transform_2, window_bounds = array<i64: 1, 64>}, {transform_indices = @transform_3, window_bounds = array<i64: 1, 8, 64>}]} {
    %c0 = arith.constant 0 : index
    %c0_0 = arith.constant 0 : index
    %c0_1 = arith.constant 0 : index
    %0 = vector.load %arg2[%c0, %c0_0, %c0_1] : memref<1x8x256xbf16, #tpu.memory_space<vmem>>, vector<1x8x256xbf16>
    %1 = vector.shape_cast %0 : vector<1x8x256xbf16> to vector<8x256xbf16>
    %c0_2 = arith.constant 0 : index
    %c0_3 = arith.constant 0 : index
    %c0_4 = arith.constant 0 : index
    %2 = vector.load %arg3[%c0_2, %c0_3, %c0_4] : memref<1x256x64xbf16, #tpu.memory_space<vmem>>, vector<1x256x64xbf16>
    %3 = vector.shape_cast %2 : vector<1x256x64xbf16> to vector<256x64xbf16>
    %cst = arith.constant dense<0.000000e+00> : vector<8x64xf32>
    %4 = tpu.matmul %1, %3, %cst {dimension_numbers = #tpu.dot_dimension_numbers<[1], [0], [0], [1], [0, 0, 1, 1], [], []>} : vector<8x256xbf16>, vector<256x64xbf16>, vector<8x64xf32> -> vector<8x64xf32>
    %c0_5 = arith.constant 0 : index
    %c0_6 = arith.constant 0 : index
    %5 = vector.load %arg4[%c0_5, %c0_6] : memref<1x64xf32, #tpu.memory_space<vmem>>, vector<1x64xf32>
    %6 = vector.broadcast %5 : vector<1x64xf32> to vector<8x64xf32>
    %7 = arith.addf %4, %6 : vector<8x64xf32>
    %c0_7 = arith.constant 0 : index
    %c0_8 = arith.constant 0 : index
    %c0_9 = arith.constant 0 : index
    %8 = vector.load %arg5[%c0_7, %c0_8, %c0_9] : memref<1x8x64xf32, #tpu.memory_space<vmem>>, vector<1x8x64xf32>
    %9 = vector.shape_cast %8 : vector<1x8x64xf32> to vector<8x64xf32>
    %10 = vector.shape_cast %7 : vector<8x64xf32> to vector<1x8x64xf32>
    tpu.vector_store %arg5[%c0_7, %c0_8, %c0_9], %10 {strides = array<i32>} : memref<1x8x64xf32, #tpu.memory_space<vmem>>, vector<1x8x64xf32>,
    return
  }
  func.func @transform_0(%arg0: i32, %arg1: i32) -> (i32, i32, i32) {
    %c0_i32 = arith.constant 0 : i32
    %c0_i32_0 = arith.constant 0 : i32
    return %arg0, %arg1, %c0_i32 : i32, i32, i32
  }
  func.func @transform_1(%arg0: i32, %arg1: i32) -> (i32, i32, i32) {
    %c0_i32 = arith.constant 0 : i32
    %c0_i32_0 = arith.constant 0 : i32
    %c0_i32_1 = arith.constant 0 : i32
    return %arg0, %c0_i32, %c0_i32_0 : i32, i32, i32
  }
  func.func @transform_2(%arg0: i32, %arg1: i32) -> (i32, i32) {
    %c0_i32 = arith.constant 0 : i32
    %c0_i32_0 = arith.constant 0 : i32
    %c0_i32_1 = arith.constant 0 : i32
    return %c0_i32, %c0_i32_0 : i32, i32
  }
  func.func @transform_3(%arg0: i32, %arg1: i32) -> (i32, i32, i32) {
    %c0_i32 = arith.constant 0 : i32
    %c0_i32_0 = arith.constant 0 : i32
    return %arg0, %arg1, %c0_i32 : i32, i32, i32
  }
}

module attributes {stable_mosaic.version = 11 : i64} {
  func.func @_gemm_bias_kernel(%arg0: i32, %arg1: i32, %arg2: memref<1x8x512xbf16, #tpu.memory_space<vmem>>, %arg3: memref<1x512x64xbf16, #tpu.memory_space<vmem>>, %arg4: memref<1x64xf32, #tpu.memory_space<vmem>>, %arg5: memref<1x8x64xf32, #tpu.memory_space<vmem>>) attributes {dimension_semantics = [#tpu.dimension_semantics<parallel>, #tpu.dimension_semantics<parallel>], iteration_bounds = array<i64: 4, 1>, scalar_prefetch = 0 : i64, scratch_operands = 0 : i64, tpu.core_type = #tpu.core_type<tc>, window_params = [{transform_indices = @transform_0, window_bounds = array<i64: 1, 8, 512>}, {transform_indices = @transform_1, window_bounds = array<i64: 1, 512, 64>}, {pipeline_mode = #tpu.pipeline_mode<synchronous>, transform_indices = @transform_2, window_bounds = array<i64: 1, 64>}, {transform_indices = @transform_3, window_bounds = array<i64: 1, 8, 64>}]} {
    %c0 = arith.constant 0 : index
    %c0_0 = arith.constant 0 : index
    %c0_1 = arith.constant 0 : index
    %0 = vector.load %arg2[%c0, %c0_0, %c0_1] : memref<1x8x512xbf16, #tpu.memory_space<vmem>>, vector<1x8x512xbf16>
    %1 = vector.shape_cast %0 : vector<1x8x512xbf16> to vector<8x512xbf16>
    %c0_2 = arith.constant 0 : index
    %c0_3 = arith.constant 0 : index
    %c0_4 = arith.constant 0 : index
    %2 = vector.load %arg3[%c0_2, %c0_3, %c0_4] : memref<1x512x64xbf16, #tpu.memory_space<vmem>>, vector<1x512x64xbf16>
    %3 = vector.shape_cast %2 : vector<1x512x64xbf16> to vector<512x64xbf16>
    %cst = arith.constant dense<0.000000e+00> : vector<8x64xf32>
    %4 = tpu.matmul %1, %3, %cst {dimension_numbers = #tpu.dot_dimension_numbers<[1], [0], [0], [1], [0, 0, 1, 1], [], []>} : vector<8x512xbf16>, vector<512x64xbf16>, vector<8x64xf32> -> vector<8x64xf32>
    %c0_5 = arith.constant 0 : index
    %c0_6 = arith.constant 0 : index
    %5 = vector.load %arg4[%c0_5, %c0_6] : memref<1x64xf32, #tpu.memory_space<vmem>>, vector<1x64xf32>
    %6 = vector.broadcast %5 : vector<1x64xf32> to vector<8x64xf32>
    %7 = arith.addf %4, %6 : vector<8x64xf32>
    %c0_7 = arith.constant 0 : index
    %c0_8 = arith.constant 0 : index
    %c0_9 = arith.constant 0 : index
    %8 = vector.load %arg5[%c0_7, %c0_8, %c0_9] : memref<1x8x64xf32, #tpu.memory_space<vmem>>, vector<1x8x64xf32>
    %9 = vector.shape_cast %8 : vector<1x8x64xf32> to vector<8x64xf32>
    %10 = vector.shape_cast %7 : vector<8x64xf32> to vector<1x8x64xf32>
    tpu.vector_store %arg5[%c0_7, %c0_8, %c0_9], %10 {strides = array<i32>} : memref<1x8x64xf32, #tpu.memory_space<vmem>>, vector<1x8x64xf32>,
    return
  }
  func.func @transform_0(%arg0: i32, %arg1: i32) -> (i32, i32, i32) {
    %c0_i32 = arith.constant 0 : i32
    %c0_i32_0 = arith.constant 0 : i32
    return %arg0, %arg1, %c0_i32 : i32, i32, i32
  }
  func.func @transform_1(%arg0: i32, %arg1: i32) -> (i32, i32, i32) {
    %c0_i32 = arith.constant 0 : i32
    %c0_i32_0 = arith.constant 0 : i32
    %c0_i32_1 = arith.constant 0 : i32
    return %arg0, %c0_i32, %c0_i32_0 : i32, i32, i32
  }
  func.func @transform_2(%arg0: i32, %arg1: i32) -> (i32, i32) {
    %c0_i32 = arith.constant 0 : i32
    %c0_i32_0 = arith.constant 0 : i32
    %c0_i32_1 = arith.constant 0 : i32
    return %c0_i32, %c0_i32_0 : i32, i32
  }
  func.func @transform_3(%arg0: i32, %arg1: i32) -> (i32, i32, i32) {
    %c0_i32 = arith.constant 0 : i32
    %c0_i32_0 = arith.constant 0 : i32
    return %arg0, %arg1, %c0_i32 : i32, i32, i32
  }
}

module attributes {stable_mosaic.version = 11 : i64} {
  func.func @_gemm_bias_kernel(%arg0: i32, %arg1: i32, %arg2: memref<1x32x512xbf16, #tpu.memory_space<vmem>>, %arg3: memref<1x512x32xbf16, #tpu.memory_space<vmem>>, %arg4: memref<1x32xf32, #tpu.memory_space<vmem>>, %arg5: memref<1x32x32xf32, #tpu.memory_space<vmem>>) attributes {dimension_semantics = [#tpu.dimension_semantics<parallel>, #tpu.dimension_semantics<parallel>], iteration_bounds = array<i64: 4, 1>, scalar_prefetch = 0 : i64, scratch_operands = 0 : i64, tpu.core_type = #tpu.core_type<tc>, window_params = [{transform_indices = @transform_0, window_bounds = array<i64: 1, 32, 512>}, {transform_indices = @transform_1, window_bounds = array<i64: 1, 512, 32>}, {pipeline_mode = #tpu.pipeline_mode<synchronous>, transform_indices = @transform_2, window_bounds = array<i64: 1, 32>}, {transform_indices = @transform_3, window_bounds = array<i64: 1, 32, 32>}]} {
    %c0 = arith.constant 0 : index
    %c0_0 = arith.constant 0 : index
    %c0_1 = arith.constant 0 : index
    %0 = vector.load %arg2[%c0, %c0_0, %c0_1] : memref<1x32x512xbf16, #tpu.memory_space<vmem>>, vector<1x32x512xbf16>
    %1 = vector.shape_cast %0 : vector<1x32x512xbf16> to vector<32x512xbf16>
    %c0_2 = arith.constant 0 : index
    %c0_3 = arith.constant 0 : index
    %c0_4 = arith.constant 0 : index
    %2 = vector.load %arg3[%c0_2, %c0_3, %c0_4] : memref<1x512x32xbf16, #tpu.memory_space<vmem>>, vector<1x512x32xbf16>
    %3 = vector.shape_cast %2 : vector<1x512x32xbf16> to vector<512x32xbf16>
    %cst = arith.constant dense<0.000000e+00> : vector<32x32xf32>
    %4 = tpu.matmul %1, %3, %cst {dimension_numbers = #tpu.dot_dimension_numbers<[1], [0], [0], [1], [0, 0, 1, 1], [], []>} : vector<32x512xbf16>, vector<512x32xbf16>, vector<32x32xf32> -> vector<32x32xf32>
    %c0_5 = arith.constant 0 : index
    %c0_6 = arith.constant 0 : index
    %5 = vector.load %arg4[%c0_5, %c0_6] : memref<1x32xf32, #tpu.memory_space<vmem>>, vector<1x32xf32>
    %6 = vector.broadcast %5 : vector<1x32xf32> to vector<32x32xf32>
    %7 = arith.addf %4, %6 : vector<32x32xf32>
    %c0_7 = arith.constant 0 : index
    %c0_8 = arith.constant 0 : index
    %c0_9 = arith.constant 0 : index
    %8 = vector.load %arg5[%c0_7, %c0_8, %c0_9] : memref<1x32x32xf32, #tpu.memory_space<vmem>>, vector<1x32x32xf32>
    %9 = vector.shape_cast %8 : vector<1x32x32xf32> to vector<32x32xf32>
    %10 = vector.shape_cast %7 : vector<32x32xf32> to vector<1x32x32xf32>
    tpu.vector_store %arg5[%c0_7, %c0_8, %c0_9], %10 {strides = array<i32>} : memref<1x32x32xf32, #tpu.memory_space<vmem>>, vector<1x32x32xf32>,
    return
  }
  func.func @transform_0(%arg0: i32, %arg1: i32) -> (i32, i32, i32) {
    %c0_i32 = arith.constant 0 : i32
    %c0_i32_0 = arith.constant 0 : i32
    return %arg0, %arg1, %c0_i32 : i32, i32, i32
  }
  func.func @transform_1(%arg0: i32, %arg1: i32) -> (i32, i32, i32) {
    %c0_i32 = arith.constant 0 : i32
    %c0_i32_0 = arith.constant 0 : i32
    %c0_i32_1 = arith.constant 0 : i32
    return %arg0, %c0_i32, %c0_i32_0 : i32, i32, i32
  }
  func.func @transform_2(%arg0: i32, %arg1: i32) -> (i32, i32) {
    %c0_i32 = arith.constant 0 : i32
    %c0_i32_0 = arith.constant 0 : i32
    %c0_i32_1 = arith.constant 0 : i32
    return %c0_i32, %c0_i32_0 : i32, i32
  }
  func.func @transform_3(%arg0: i32, %arg1: i32) -> (i32, i32, i32) {
    %c0_i32 = arith.constant 0 : i32
    %c0_i32_0 = arith.constant 0 : i32
    return %arg0, %arg1, %c0_i32 : i32, i32, i32
  }
}

module attributes {stable_mosaic.version = 11 : i64} {
  func.func @_gemm_bias_kernel(%arg0: i32, %arg1: i32, %arg2: memref<1x128x256xbf16, #tpu.memory_space<vmem>>, %arg3: memref<1x256x16xbf16, #tpu.memory_space<vmem>>, %arg4: memref<1x16xf32, #tpu.memory_space<vmem>>, %arg5: memref<1x128x16xf32, #tpu.memory_space<vmem>>) attributes {dimension_semantics = [#tpu.dimension_semantics<parallel>, #tpu.dimension_semantics<parallel>], iteration_bounds = array<i64: 4, 1>, scalar_prefetch = 0 : i64, scratch_operands = 0 : i64, tpu.core_type = #tpu.core_type<tc>, window_params = [{transform_indices = @transform_0, window_bounds = array<i64: 1, 128, 256>}, {transform_indices = @transform_1, window_bounds = array<i64: 1, 256, 16>}, {pipeline_mode = #tpu.pipeline_mode<synchronous>, transform_indices = @transform_2, window_bounds = array<i64: 1, 16>}, {transform_indices = @transform_3, window_bounds = array<i64: 1, 128, 16>}]} {
    %c0 = arith.constant 0 : index
    %c0_0 = arith.constant 0 : index
    %c0_1 = arith.constant 0 : index
    %0 = vector.load %arg2[%c0, %c0_0, %c0_1] : memref<1x128x256xbf16, #tpu.memory_space<vmem>>, vector<1x128x256xbf16>
    %1 = vector.shape_cast %0 : vector<1x128x256xbf16> to vector<128x256xbf16>
    %c0_2 = arith.constant 0 : index
    %c0_3 = arith.constant 0 : index
    %c0_4 = arith.constant 0 : index
    %2 = vector.load %arg3[%c0_2, %c0_3, %c0_4] : memref<1x256x16xbf16, #tpu.memory_space<vmem>>, vector<1x256x16xbf16>
    %3 = vector.shape_cast %2 : vector<1x256x16xbf16> to vector<256x16xbf16>
    %cst = arith.constant dense<0.000000e+00> : vector<128x16xf32>
    %4 = tpu.matmul %1, %3, %cst {dimension_numbers = #tpu.dot_dimension_numbers<[1], [0], [0], [1], [0, 0, 1, 1], [], []>} : vector<128x256xbf16>, vector<256x16xbf16>, vector<128x16xf32> -> vector<128x16xf32>
    %c0_5 = arith.constant 0 : index
    %c0_6 = arith.constant 0 : index
    %5 = vector.load %arg4[%c0_5, %c0_6] : memref<1x16xf32, #tpu.memory_space<vmem>>, vector<1x16xf32>
    %6 = vector.broadcast %5 : vector<1x16xf32> to vector<128x16xf32>
    %7 = arith.addf %4, %6 : vector<128x16xf32>
    %c0_7 = arith.constant 0 : index
    %c0_8 = arith.constant 0 : index
    %c0_9 = arith.constant 0 : index
    %8 = vector.load %arg5[%c0_7, %c0_8, %c0_9] : memref<1x128x16xf32, #tpu.memory_space<vmem>>, vector<1x128x16xf32>
    %9 = vector.shape_cast %8 : vector<1x128x16xf32> to vector<128x16xf32>
    %10 = vector.shape_cast %7 : vector<128x16xf32> to vector<1x128x16xf32>
    tpu.vector_store %arg5[%c0_7, %c0_8, %c0_9], %10 {strides = array<i32>} : memref<1x128x16xf32, #tpu.memory_space<vmem>>, vector<1x128x16xf32>,
    return
  }
  func.func @transform_0(%arg0: i32, %arg1: i32) -> (i32, i32, i32) {
    %c0_i32 = arith.constant 0 : i32
    %c0_i32_0 = arith.constant 0 : i32
    return %arg0, %arg1, %c0_i32 : i32, i32, i32
  }
  func.func @transform_1(%arg0: i32, %arg1: i32) -> (i32, i32, i32) {
    %c0_i32 = arith.constant 0 : i32
    %c0_i32_0 = arith.constant 0 : i32
    %c0_i32_1 = arith.constant 0 : i32
    return %arg0, %c0_i32, %c0_i32_0 : i32, i32, i32
  }
  func.func @transform_2(%arg0: i32, %arg1: i32) -> (i32, i32) {
    %c0_i32 = arith.constant 0 : i32
    %c0_i32_0 = arith.constant 0 : i32
    %c0_i32_1 = arith.constant 0 : i32
    return %c0_i32, %c0_i32_0 : i32, i32
  }
  func.func @transform_3(%arg0: i32, %arg1: i32) -> (i32, i32, i32) {
    %c0_i32 = arith.constant 0 : i32
    %c0_i32_0 = arith.constant 0 : i32
    return %arg0, %arg1, %c0_i32 : i32, i32, i32
  }
}

module attributes {stable_mosaic.version = 11 : i64} {
  func.func @_gemm_bias_kernel(%arg0: i32, %arg1: i32, %arg2: memref<1x512x128xbf16, #tpu.memory_space<vmem>>, %arg3: memref<1x128x8xbf16, #tpu.memory_space<vmem>>, %arg4: memref<1x8xf32, #tpu.memory_space<vmem>>, %arg5: memref<1x512x8xf32, #tpu.memory_space<vmem>>) attributes {dimension_semantics = [#tpu.dimension_semantics<parallel>, #tpu.dimension_semantics<parallel>], iteration_bounds = array<i64: 4, 1>, scalar_prefetch = 0 : i64, scratch_operands = 0 : i64, tpu.core_type = #tpu.core_type<tc>, window_params = [{transform_indices = @transform_0, window_bounds = array<i64: 1, 512, 128>}, {transform_indices = @transform_1, window_bounds = array<i64: 1, 128, 8>}, {pipeline_mode = #tpu.pipeline_mode<synchronous>, transform_indices = @transform_2, window_bounds = array<i64: 1, 8>}, {transform_indices = @transform_3, window_bounds = array<i64: 1, 512, 8>}]} {
    %c0 = arith.constant 0 : index
    %c0_0 = arith.constant 0 : index
    %c0_1 = arith.constant 0 : index
    %0 = vector.load %arg2[%c0, %c0_0, %c0_1] : memref<1x512x128xbf16, #tpu.memory_space<vmem>>, vector<1x512x128xbf16>
    %1 = vector.shape_cast %0 : vector<1x512x128xbf16> to vector<512x128xbf16>
    %c0_2 = arith.constant 0 : index
    %c0_3 = arith.constant 0 : index
    %c0_4 = arith.constant 0 : index
    %2 = vector.load %arg3[%c0_2, %c0_3, %c0_4] : memref<1x128x8xbf16, #tpu.memory_space<vmem>>, vector<1x128x8xbf16>
    %3 = vector.shape_cast %2 : vector<1x128x8xbf16> to vector<128x8xbf16>
    %cst = arith.constant dense<0.000000e+00> : vector<512x8xf32>
    %4 = tpu.matmul %1, %3, %cst {dimension_numbers = #tpu.dot_dimension_numbers<[1], [0], [0], [1], [0, 0, 1, 1], [], []>} : vector<512x128xbf16>, vector<128x8xbf16>, vector<512x8xf32> -> vector<512x8xf32>
    %c0_5 = arith.constant 0 : index
    %c0_6 = arith.constant 0 : index
    %5 = vector.load %arg4[%c0_5, %c0_6] : memref<1x8xf32, #tpu.memory_space<vmem>>, vector<1x8xf32>
    %6 = vector.broadcast %5 : vector<1x8xf32> to vector<512x8xf32>
    %7 = arith.addf %4, %6 : vector<512x8xf32>
    %c0_7 = arith.constant 0 : index
    %c0_8 = arith.constant 0 : index
    %c0_9 = arith.constant 0 : index
    %8 = vector.load %arg5[%c0_7, %c0_8, %c0_9] : memref<1x512x8xf32, #tpu.memory_space<vmem>>, vector<1x512x8xf32>
    %9 = vector.shape_cast %8 : vector<1x512x8xf32> to vector<512x8xf32>
    %10 = vector.shape_cast %7 : vector<512x8xf32> to vector<1x512x8xf32>
    tpu.vector_store %arg5[%c0_7, %c0_8, %c0_9], %10 {strides = array<i32>} : memref<1x512x8xf32, #tpu.memory_space<vmem>>, vector<1x512x8xf32>,
    return
  }
  func.func @transform_0(%arg0: i32, %arg1: i32) -> (i32, i32, i32) {
    %c0_i32 = arith.constant 0 : i32
    %c0_i32_0 = arith.constant 0 : i32
    return %arg0, %arg1, %c0_i32 : i32, i32, i32
  }
  func.func @transform_1(%arg0: i32, %arg1: i32) -> (i32, i32, i32) {
    %c0_i32 = arith.constant 0 : i32
    %c0_i32_0 = arith.constant 0 : i32
    %c0_i32_1 = arith.constant 0 : i32
    return %arg0, %c0_i32, %c0_i32_0 : i32, i32, i32
  }
  func.func @transform_2(%arg0: i32, %arg1: i32) -> (i32, i32) {
    %c0_i32 = arith.constant 0 : i32
    %c0_i32_0 = arith.constant 0 : i32
    %c0_i32_1 = arith.constant 0 : i32
    return %c0_i32, %c0_i32_0 : i32, i32
  }
  func.func @transform_3(%arg0: i32, %arg1: i32) -> (i32, i32, i32) {
    %c0_i32 = arith.constant 0 : i32
    %c0_i32_0 = arith.constant 0 : i32
    return %arg0, %arg1, %c0_i32 : i32, i32, i32
  }
}

module attributes {stable_mosaic.version = 11 : i64} {
  func.func @_gemm_bias_kernel(%arg0: i32, %arg1: i32, %arg2: memref<1x512x64xbf16, #tpu.memory_space<vmem>>, %arg3: memref<1x64x3xbf16, #tpu.memory_space<vmem>>, %arg4: memref<1x3xf32, #tpu.memory_space<vmem>>, %arg5: memref<1x512x3xf32, #tpu.memory_space<vmem>>) attributes {dimension_semantics = [#tpu.dimension_semantics<parallel>, #tpu.dimension_semantics<parallel>], iteration_bounds = array<i64: 4, 4>, scalar_prefetch = 0 : i64, scratch_operands = 0 : i64, tpu.core_type = #tpu.core_type<tc>, window_params = [{transform_indices = @transform_0, window_bounds = array<i64: 1, 512, 64>}, {transform_indices = @transform_1, window_bounds = array<i64: 1, 64, 3>}, {pipeline_mode = #tpu.pipeline_mode<synchronous>, transform_indices = @transform_2, window_bounds = array<i64: 1, 3>}, {transform_indices = @transform_3, window_bounds = array<i64: 1, 512, 3>}]} {
    %c0 = arith.constant 0 : index
    %c0_0 = arith.constant 0 : index
    %c0_1 = arith.constant 0 : index
    %0 = vector.load %arg2[%c0, %c0_0, %c0_1] : memref<1x512x64xbf16, #tpu.memory_space<vmem>>, vector<1x512x64xbf16>
    %1 = vector.shape_cast %0 : vector<1x512x64xbf16> to vector<512x64xbf16>
    %c0_2 = arith.constant 0 : index
    %c0_3 = arith.constant 0 : index
    %c0_4 = arith.constant 0 : index
    %2 = vector.load %arg3[%c0_2, %c0_3, %c0_4] : memref<1x64x3xbf16, #tpu.memory_space<vmem>>, vector<1x64x3xbf16>
    %3 = vector.shape_cast %2 : vector<1x64x3xbf16> to vector<64x3xbf16>
    %cst = arith.constant dense<0.000000e+00> : vector<512x3xf32>
    %4 = tpu.matmul %1, %3, %cst {dimension_numbers = #tpu.dot_dimension_numbers<[1], [0], [0], [1], [0, 0, 1, 1], [], []>} : vector<512x64xbf16>, vector<64x3xbf16>, vector<512x3xf32> -> vector<512x3xf32>
    %c0_5 = arith.constant 0 : index
    %c0_6 = arith.constant 0 : index
    %5 = vector.load %arg4[%c0_5, %c0_6] : memref<1x3xf32, #tpu.memory_space<vmem>>, vector<1x3xf32>
    %6 = vector.broadcast %5 : vector<1x3xf32> to vector<512x3xf32>
    %7 = arith.addf %4, %6 : vector<512x3xf32>
    %8 = math.tanh %7 : vector<512x3xf32>
    %c0_7 = arith.constant 0 : index
    %c0_8 = arith.constant 0 : index
    %c0_9 = arith.constant 0 : index
    %9 = vector.load %arg5[%c0_7, %c0_8, %c0_9] : memref<1x512x3xf32, #tpu.memory_space<vmem>>, vector<1x512x3xf32>
    %10 = vector.shape_cast %9 : vector<1x512x3xf32> to vector<512x3xf32>
    %11 = vector.shape_cast %8 : vector<512x3xf32> to vector<1x512x3xf32>
    tpu.vector_store %arg5[%c0_7, %c0_8, %c0_9], %11 {strides = array<i32>} : memref<1x512x3xf32, #tpu.memory_space<vmem>>, vector<1x512x3xf32>,
    return
  }
  func.func @transform_0(%arg0: i32, %arg1: i32) -> (i32, i32, i32) {
    %c0_i32 = arith.constant 0 : i32
    %c0_i32_0 = arith.constant 0 : i32
    return %arg0, %arg1, %c0_i32 : i32, i32, i32
  }
  func.func @transform_1(%arg0: i32, %arg1: i32) -> (i32, i32, i32) {
    %c0_i32 = arith.constant 0 : i32
    %c0_i32_0 = arith.constant 0 : i32
    %c0_i32_1 = arith.constant 0 : i32
    return %arg0, %c0_i32, %c0_i32_0 : i32, i32, i32
  }
  func.func @transform_2(%arg0: i32, %arg1: i32) -> (i32, i32) {
    %c0_i32 = arith.constant 0 : i32
    %c0_i32_0 = arith.constant 0 : i32
    %c0_i32_1 = arith.constant 0 : i32
    return %c0_i32, %c0_i32_0 : i32, i32
  }
  func.func @transform_3(%arg0: i32, %arg1: i32) -> (i32, i32, i32) {
    %c0_i32 = arith.constant 0 : i32
    %c0_i32_0 = arith.constant 0 : i32
    return %arg0, %arg1, %c0_i32 : i32, i32, i32
  }
}

</mosaic_0001>

<llo_original>
// kernel: unet_forward.12
$region0: #{unet_forward.12}
  #allocation0 [shape = 'u32[]', space=smem, size = 0x4, offset = 0x4, fixed_abs, tag = 'smem constant byte address 0x4 - core index']
  #allocation1 [shape = 'u32[144,128]{1,0:T(1,128)}', space=vmem, size = 0x12000, scoped, tag = 'internal scratch']
  %s0 = inlined_call_operand.vmem [shape: bf16[1,2048,48], index: 0, kind: input, shape index: {}]
  %s1 = inlined_call_operand.vmem [shape: bf16[1,48,8], index: 1, kind: input, shape index: {}]
  %s2 = inlined_call_operand.vmem [shape: f32[1,8], index: 2, kind: input, shape index: {}]
  %s3 = inlined_call_operand.vmem [shape: f32[1,2048,8], index: 3, kind: output, shape index: {}]
  %s4 = sld [smem:[#allocation0]]
  $region45: #{unet_forward.12} parent=0
    _
  %s6 = ssub.s32 1, %s4
  %s7 = scalar_select 0, %s6, %s4
  loop: start=0, step=1, limit=6
  $region2: #{unet_forward.12} parent=0 // loop_pre_header
    _
  $region3: #{unet_forward.12} parent=0 // loop_header
    %s9 = sphi 0, %s13
    %p10 = scmp.ge.s32.totalorder %s9, 6
    %s16 = sphi 0, %s28
    %s17 = sphi 0, %s24
    %s18 = sphi 0, %s16
    %s19 = sphi 0, %s17
    %s20 = sphi 0, %s18
    %s21 = sphi 0, %s19
    %s33 = sphi 0, %s35
    %s36 = sphi 0, %s33
    %s37 = sphi 0, %s36
    %s53 = sphi 0, %s37
    %s59 = sphi 0, %s61
    %s62 = sphi 0, %s59
    %s63 = sphi 0, %s62
    %s79 = sphi 0, %s63
    %s83 = sphi 0, %s83
    %s85 = sphi 0, %s83
    %s86 = sphi 0, %s85
    %s100 = sphi 0, %s86
    %s108 = sphi 0, %s110
    %s111 = sphi 0, %s108
    %s112 = sphi 0, %s111
    %s128 = sphi 0, %s112
  $region4: #{unet_forward.12} parent=0 // loop_header_branch
    %12 = sbr.rel (%p10) target = $region8
  $region5: #{unet_forward.12} parent=0 // loop_body
    %s14 = ssub.s32 %s9, 1
    %s15 = ssub.s32 %s9, 2
    %s22 = sadd.s32 1, %s17
    %p23 = scmp.ge.s32.totalorder %s22, 4
    %s24 = scalar_select %p23, 0, %s22
    %s25 = sadd.s32 1, %s16
    %s26 = scalar_select %p23, %s25, %s16
    %p27 = scmp.ge.s32.totalorder %s26, 1
    %s28 = scalar_select %p27, 0, %s26
    %s29 = ssub.s32 %s16, %s28
    %s30 = ssub.s32 %s17, %s24
    %s31 = sor.u32 %s29, %s30
    %p32 = scmp.eq.s32.totalorder %s31, 0
    %s34 = sadd.s32 %s33, 1
    %s35 = scalar_select %p32, %s33, %s34
    %p38 = pneg %p32
    %p39 = scmp.eq.s32.totalorder %s9, 3
    %p40 = por %p38, %p39
    %p41 = scmp.ne.s32.totalorder %s33, %s36
    %p42 = scmp.eq.s32.totalorder %s9, 0
    %p43 = por %p41, %p42
    %p44 = scmp.ne.s32.totalorder %s33, %s36
    %p45 = scmp.eq.s32.totalorder %s14, 3
    %p46 = por %p44, %p45
    %p47 = scmp.ne.s32.totalorder %s36, %s37
    %p48 = scmp.eq.s32.totalorder %s14, 0
    %p49 = por %p47, %p48
    %p50 = scmp.ne.s32.totalorder %s36, %s37
    %p51 = scmp.eq.s32.totalorder %s15, 3
    %p52 = por %p50, %p51
    %p54 = scmp.ne.s32.totalorder %s37, %s53
    %p55 = scmp.eq.s32.totalorder %s15, 0
    %p56 = por %p54, %p55
    %s57 = ssub.s32 %s16, %s28
    %p58 = scmp.eq.s32.totalorder %s57, 0
    %s60 = sadd.s32 %s59, 1
    %s61 = scalar_select %p58, %s59, %s60
    %p64 = pneg %p58
    %p65 = scmp.eq.s32.totalorder %s9, 3
    %p66 = por %p64, %p65
    %p67 = scmp.ne.s32.totalorder %s59, %s62
    %p68 = scmp.eq.s32.totalorder %s9, 0
    %p69 = por %p67, %p68
    %p70 = scmp.ne.s32.totalorder %s59, %s62
    %p71 = scmp.eq.s32.totalorder %s14, 3
    %p72 = por %p70, %p71
    %p73 = scmp.ne.s32.totalorder %s62, %s63
    %p74 = scmp.eq.s32.totalorder %s14, 0
    %p75 = por %p73, %p74
    %p76 = scmp.ne.s32.totalorder %s62, %s63
    %p77 = scmp.eq.s32.totalorder %s15, 3
    %p78 = por %p76, %p77
    %p80 = scmp.ne.s32.totalorder %s63, %s79
    %p81 = scmp.eq.s32.totalorder %s15, 0
    %p82 = por %p80, %p81
    %s84 = sadd.s32 %s83, 1
    %p87 = scmp.eq.s32.totalorder %s9, 3
    %p88 = scmp.ne.s32.totalorder %s83, %s85
    %p89 = scmp.eq.s32.totalorder %s9, 0
    %p90 = por %p88, %p89
    %p91 = scmp.ne.s32.totalorder %s83, %s85
    %p92 = scmp.eq.s32.totalorder %s14, 3
    %p93 = por %p91, %p92
    %p94 = scmp.ne.s32.totalorder %s85, %s86
    %p95 = scmp.eq.s32.totalorder %s14, 0
    %p96 = por %p94, %p95
    %p97 = scmp.ne.s32.totalorder %s85, %s86
    %p98 = scmp.eq.s32.totalorder %s15, 3
    %p99 = por %p97, %p98
    %p101 = scmp.ne.s32.totalorder %s86, %s100
    %p102 = scmp.eq.s32.totalorder %s15, 0
    %p103 = por %p101, %p102
    %s104 = ssub.s32 %s16, %s28
    %s105 = ssub.s32 %s17, %s24
    %s106 = sor.u32 %s104, %s105
    %p107 = scmp.eq.s32.totalorder %s106, 0
    %s109 = sadd.s32 %s108, 1
    %s110 = scalar_select %p107, %s108, %s109
    %p113 = pneg %p107
    %p114 = scmp.eq.s32.totalorder %s9, 3
    %p115 = por %p113, %p114
    %p116 = scmp.ne.s32.totalorder %s108, %s111
    %p117 = scmp.eq.s32.totalorder %s9, 0
    %p118 = por %p116, %p117
    %p119 = scmp.ne.s32.totalorder %s108, %s111
    %p120 = scmp.eq.s32.totalorder %s14, 3
    %p121 = por %p119, %p120
    %p122 = scmp.ne.s32.totalorder %s111, %s112
    %p123 = scmp.eq.s32.totalorder %s14, 0
    %p124 = por %p122, %p123
    %p125 = scmp.ne.s32.totalorder %s111, %s112
    %p126 = scmp.eq.s32.totalorder %s15, 3
    %p127 = por %p125, %p126
    %p129 = scmp.ne.s32.totalorder %s112, %s128
    %p130 = scmp.eq.s32.totalorder %s15, 0
    %p131 = por %p129, %p130
    %p132 = scmp.le.s32.totalorder 1, %s9
    %p133 = scmp.lt.s32.totalorder %s9, 5
    %p134 = pnand %p132, %p133
    %p135 = pneg %p134
    // Predicated region
    $region9: #{unet_forward.12} parent=5 // pred_check
      _
    $region10: #{unet_forward.12} parent=5 // pred_check_branch
      %137 = sbr.rel (%p134) target = $region12
    $region11: #{unet_forward.12} parent=5 // pred_region
      %s138 = ssub.s32 %s9, 1
      // Predicated region
      $region13: #{unet_forward.12} parent=11 // pred_check
        %p139 = pneg %p75
      $region14: #{unet_forward.12} parent=11 // pred_check_branch
        %141 = sbr.rel (%p139) target = $region16
      $region15: #{unet_forward.12} parent=11 // pred_region
        %p142 = scmp.lt.s32.totalorder %s18, 0
        %s143 = scalar_select %p142, %s18, 0
        %s144 = smul.addr %s143, 6
        %s145 = smul.addr %s144, 4
        %s146 = scalar_lea.vmem %s1, %s145
      $region16: #{unet_forward.12} parent=11 // pred_fallthru
        _
      // Predicated region
      $region17: #{unet_forward.12} parent=11 // pred_check
        %p147 = pneg %p96
      $region18: #{unet_forward.12} parent=11 // pred_check_branch
        %149 = sbr.rel (%p147) target = $region20
      $region19: #{unet_forward.12} parent=11 // pred_region
        _
      $region20: #{unet_forward.12} parent=11 // pred_fallthru
        _
    $region12: #{unet_forward.12} parent=5 // pred_fallthru
      _
    %p150 = scmp.lt.s32.totalorder %s9, 4
    // Predicated region
    $region21: #{unet_forward.12} parent=5 // pred_check
      %p151 = pneg %p150
    $region22: #{unet_forward.12} parent=5 // pred_check_branch
      %153 = sbr.rel (%p151) target = $region24
    $region23: #{unet_forward.12} parent=5 // pred_region
      // Predicated region
      $region25: #{unet_forward.12} parent=23 // pred_check
        %p154 = pneg %p43
      $region26: #{unet_forward.12} parent=23 // pred_check_branch
        %156 = sbr.rel (%p154) target = $region28
      $region27: #{unet_forward.12} parent=23 // pred_region
        %s157 = smul.u32 64, %s17
        %p158 = scmp.lt.s32.totalorder %s16, 0
        %s159 = scalar_select %p158, %s16, 0
        %p160 = scmp.lt.s32.totalorder %s157, 255
        %s161 = scalar_select %p160, %s157, 255
        %s162 = smul.addr %s159, 256
        %s163 = sadd.s32 %s161, %s162
        %s164 = smul.addr %s163, 4
        %s165 = scalar_lea.vmem %s0, %s164
        %s166 = smul.u32 64, %s17
      $region28: #{unet_forward.12} parent=23 // pred_fallthru
        _
    $region24: #{unet_forward.12} parent=5 // pred_fallthru
      _
    %p167 = scmp.le.s32.totalorder 1, %s9
    %p168 = scmp.lt.s32.totalorder %s9, 5
    %p169 = pnand %p167, %p168
    %p170 = pneg %p169
    // Predicated region
    $region29: #{unet_forward.12} parent=5 // pred_check
      _
    $region30: #{unet_forward.12} parent=5 // pred_check_branch
      %172 = sbr.rel (%p169) target = $region32
    $region31: #{unet_forward.12} parent=5 // pred_region
      %s173 = ssub.s32 %s9, 1
      %s174 = smul.u32 64, %s19
      %p175 = scmp.lt.s32.totalorder %s18, 0
      %s176 = scalar_select %p175, %s18, 0
      %p177 = scmp.lt.s32.totalorder %s174, 255
      %s178 = scalar_select %p177, %s174, 255
      %s179 = smul.addr %s176, 256
      %s180 = sadd.s32 %s178, %s179
      %s181 = smul.addr %s180, 4
      %s182 = scalar_lea.vmem %s0, %s181
      %p183 = pneg %p49
      %p184 = pneg %p46
      %p185 = scmp.lt.s32.totalorder %s18, 0
      %s186 = scalar_select %p185, %s18, 0
      %s187 = smul.addr %s186, 6
      %s188 = smul.addr %s187, 4
      %s189 = scalar_lea.vmem %s1, %s188
      %p190 = pneg %p75
      %p191 = pneg %p72
      %p192 = pneg %p96
      %p193 = pneg %p93
      %p194 = pneg %p124
      %p195 = pneg %p121
      %s196 = smul.u32 64, %s19
      %p197 = scmp.lt.s32.totalorder %s18, 0
      %s198 = scalar_select %p197, %s18, 0
      %p199 = scmp.lt.s32.totalorder %s196, 255
      %s200 = scalar_select %p199, %s196, 255
      %s201 = smul.addr %s198, 256
      %s202 = sadd.s32 %s200, %s201
      %s203 = smul.addr %s202, 8
      %s204 = scalar_lea.vmem %s3, %s203
      %s205 = smul.u32 64, %s19
      %p206 = scmp.lt.s32.totalorder %s18, 0
      %s207 = scalar_select %p206, %s18, 0
      %p208 = scmp.lt.s32.totalorder %s205, 255
      %s209 = scalar_select %p208, %s205, 255
      %s210 = smul.addr %s207, 256
      %s211 = sadd.s32 %s209, %s210
      %s212 = smul.addr %s211, 4
      %s213 = scalar_lea.vmem %s0, %s212
      %s214 = smul.u32 64, %s19
      %p215 = scmp.lt.s32.totalorder %s18, 0
      %s216 = scalar_select %p215, %s18, 0
      %s217 = smul.addr %s216, 6
      %s218 = smul.addr %s217, 4
      %s219 = scalar_lea.vmem %s1, %s218
      %s220 = smul.u32 64, %s19
      %p221 = scmp.lt.s32.totalorder %s18, 0
      %s222 = scalar_select %p221, %s18, 0
      %p223 = scmp.lt.s32.totalorder %s220, 255
      %s224 = scalar_select %p223, %s220, 255
      %s225 = smul.addr %s222, 256
      %s226 = sadd.s32 %s224, %s225
      %s227 = smul.addr %s226, 8
      %s228 = scalar_lea.vmem %s3, %s227
      %s229 = smul.u32 64, %s19
      %v231 = vld [vmem:[%s213] sm:$0xf]
      %v232 = vld [vmem:[%s213 + $0x4] sm:$0xf]
      %v233 = vld [vmem:[%s213 + $0x8] sm:$0xf]
      %v234 = vld [vmem:[%s213 + $0xc] sm:$0xf]
      %v235 = vld [vmem:[%s213 + $0x10] sm:$0xf]
      %v236 = vld [vmem:[%s213 + $0x14] sm:$0xf]
      %v237 = vld [vmem:[%s213 + $0x18] sm:$0xf]
      %v238 = vld [vmem:[%s213 + $0x1c] sm:$0xf]
      %v239 = vld [vmem:[%s213 + $0x20] sm:$0xf]
      %v240 = vld [vmem:[%s213 + $0x24] sm:$0xf]
      %v241 = vld [vmem:[%s213 + $0x28] sm:$0xf]
      %v242 = vld [vmem:[%s213 + $0x2c] sm:$0xf]
      %v243 = vld [vmem:[%s213 + $0x30] sm:$0xf]
      %v244 = vld [vmem:[%s213 + $0x34] sm:$0xf]
      %v245 = vld [vmem:[%s213 + $0x38] sm:$0xf]
      %v246 = vld [vmem:[%s213 + $0x3c] sm:$0xf]
      %v247 = vld [vmem:[%s213 + $0x40] sm:$0xf]
      %v248 = vld [vmem:[%s213 + $0x44] sm:$0xf]
      %v249 = vld [vmem:[%s213 + $0x48] sm:$0xf]
      %v250 = vld [vmem:[%s213 + $0x4c] sm:$0xf]
      %v251 = vld [vmem:[%s213 + $0x50] sm:$0xf]
      %v252 = vld [vmem:[%s213 + $0x54] sm:$0xf]
      %v253 = vld [vmem:[%s213 + $0x58] sm:$0xf]
      %v254 = vld [vmem:[%s213 + $0x5c] sm:$0xf]
      %v255 = vld [vmem:[%s213 + $0x60] sm:$0xf]
      %v256 = vld [vmem:[%s213 + $0x64] sm:$0xf]
      %v257 = vld [vmem:[%s213 + $0x68] sm:$0xf]
      %v258 = vld [vmem:[%s213 + $0x6c] sm:$0xf]
      %v259 = vld [vmem:[%s213 + $0x70] sm:$0xf]
      %v260 = vld [vmem:[%s213 + $0x74] sm:$0xf]
      %v261 = vld [vmem:[%s213 + $0x78] sm:$0xf]
      %v262 = vld [vmem:[%s213 + $0x7c] sm:$0xf]
      %v263 = vld [vmem:[%s213 + $0x80] sm:$0xf]
      %v264 = vld [vmem:[%s213 + $0x84] sm:$0xf]
      %v265 = vld [vmem:[%s213 + $0x88] sm:$0xf]
      %v266 = vld [vmem:[%s213 + $0x8c] sm:$0xf]
      %v267 = vld [vmem:[%s213 + $0x90] sm:$0xf]
      %v268 = vld [vmem:[%s213 + $0x94] sm:$0xf]
      %v269 = vld [vmem:[%s213 + $0x98] sm:$0xf]
      %v270 = vld [vmem:[%s213 + $0x9c] sm:$0xf]
      %v271 = vld [vmem:[%s213 + $0xa0] sm:$0xf]
      %v272 = vld [vmem:[%s213 + $0xa4] sm:$0xf]
      %v273 = vld [vmem:[%s213 + $0xa8] sm:$0xf]
      %v274 = vld [vmem:[%s213 + $0xac] sm:$0xf]
      %v275 = vld [vmem:[%s213 + $0xb0] sm:$0xf]
      %v276 = vld [vmem:[%s213 + $0xb4] sm:$0xf]
      %v277 = vld [vmem:[%s213 + $0xb8] sm:$0xf]
      %v278 = vld [vmem:[%s213 + $0xbc] sm:$0xf]
      %v279 = vld [vmem:[%s213 + $0xc0] sm:$0xf]
      %v280 = vld [vmem:[%s213 + $0xc4] sm:$0xf]
      %v281 = vld [vmem:[%s213 + $0xc8] sm:$0xf]
      %v282 = vld [vmem:[%s213 + $0xcc] sm:$0xf]
      %v283 = vld [vmem:[%s213 + $0xd0] sm:$0xf]
      %v284 = vld [vmem:[%s213 + $0xd4] sm:$0xf]
      %v285 = vld [vmem:[%s213 + $0xd8] sm:$0xf]
      %v286 = vld [vmem:[%s213 + $0xdc] sm:$0xf]
      %v287 = vld [vmem:[%s213 + $0xe0] sm:$0xf]
      %v288 = vld [vmem:[%s213 + $0xe4] sm:$0xf]
      %v289 = vld [vmem:[%s213 + $0xe8] sm:$0xf]
      %v290 = vld [vmem:[%s213 + $0xec] sm:$0xf]
      %v291 = vld [vmem:[%s213 + $0xf0] sm:$0xf]
      %v292 = vld [vmem:[%s213 + $0xf4] sm:$0xf]
      %v293 = vld [vmem:[%s213 + $0xf8] sm:$0xf]
      %v294 = vld [vmem:[%s213 + $0xfc] sm:$0xf]
      %v295 = vld [vmem:[%s219] sm:$0xf]
      %v296 = vld [vmem:[%s219 + $0x4] sm:$0xf]
      %v297 = vld [vmem:[%s219 + $0x8] sm:$0xf]
      %v298 = vld [vmem:[%s219 + $0xc] sm:$0xf]
      %v299 = vld [vmem:[%s219 + $0x10] sm:$0xf]
      %v300 = vld [vmem:[%s219 + $0x14] sm:$0xf]
      %v301 = vld [vmem:[%s2] sm:$0x1]
      %v303 = vlaneseq
      %v304 = vshrl.u32 %v303, 7
      %v305 = vsub.s32 0, %v304
      %v306 = vrot.slane %v301, %v305
      %v372 = vunpack.c.l.b16 %v231
      %v373 = vunpack.c.l.b16 %v232
      %v374 = vunpack.c.l.b16 %v233
      %v375 = vunpack.c.l.b16 %v234
      %v376 = vunpack.c.l.b16 %v235
      %v377 = vunpack.c.l.b16 %v236
      %v378 = vunpack.c.l.b16 %v237
      %v379 = vunpack.c.l.b16 %v238
      %v380 = vunpack.c.l.b16 %v239
      %v381 = vunpack.c.l.b16 %v240
      %v382 = vunpack.c.l.b16 %v241
      %v383 = vunpack.c.l.b16 %v242
      %v384 = vunpack.c.l.b16 %v243
      %v385 = vunpack.c.l.b16 %v244
      %v386 = vunpack.c.l.b16 %v245
      %v387 = vunpack.c.l.b16 %v246
      %v388 = vunpack.c.l.b16 %v247
      %v389 = vunpack.c.l.b16 %v248
      %v390 = vunpack.c.l.b16 %v249
      %v391 = vunpack.c.l.b16 %v250
      %v392 = vunpack.c.l.b16 %v251
      %v393 = vunpack.c.l.b16 %v252
      %v394 = vunpack.c.l.b16 %v253
      %v395 = vunpack.c.l.b16 %v254
      %v396 = vunpack.c.l.b16 %v255
      %v397 = vunpack.c.l.b16 %v256
      %v398 = vunpack.c.l.b16 %v257
      %v399 = vunpack.c.l.b16 %v258
      %v400 = vunpack.c.l.b16 %v259
      %v401 = vunpack.c.l.b16 %v260
      %v402 = vunpack.c.l.b16 %v261
      %v403 = vunpack.c.l.b16 %v262
      %v404 = vunpack.c.l.b16 %v263
      %v405 = vunpack.c.l.b16 %v264
      %v406 = vunpack.c.l.b16 %v265
      %v407 = vunpack.c.l.b16 %v266
      %v408 = vunpack.c.l.b16 %v267
      %v409 = vunpack.c.l.b16 %v268
      %v410 = vunpack.c.l.b16 %v269
      %v411 = vunpack.c.l.b16 %v270
      %v412 = vunpack.c.l.b16 %v271
      %v413 = vunpack.c.l.b16 %v272
      %v414 = vunpack.c.l.b16 %v273
      %v415 = vunpack.c.l.b16 %v274
      %v416 = vunpack.c.l.b16 %v275
      %v417 = vunpack.c.l.b16 %v276
      %v418 = vunpack.c.l.b16 %v277
      %v419 = vunpack.c.l.b16 %v278
      %v420 = vunpack.c.l.b16 %v279
      %v421 = vunpack.c.l.b16 %v280
      %v422 = vunpack.c.l.b16 %v281
      %v423 = vunpack.c.l.b16 %v282
      %v424 = vunpack.c.l.b16 %v283
      %v425 = vunpack.c.l.b16 %v284
      %v426 = vunpack.c.l.b16 %v285
      %v427 = vunpack.c.l.b16 %v286
      %v428 = vunpack.c.l.b16 %v287
      %v429 = vunpack.c.l.b16 %v288
      %v430 = vunpack.c.l.b16 %v289
      %v431 = vunpack.c.l.b16 %v290
      %v432 = vunpack.c.l.b16 %v291
      %v433 = vunpack.c.l.b16 %v292
      %v434 = vunpack.c.l.b16 %v293
      %v435 = vunpack.c.l.b16 %v294
      %v436 = vpack.c.b16 %v373, %v372
      %v437 = vpack.c.b16 %v375, %v374
      %v438 = vpack.c.b16 %v377, %v376
      %v439 = vpack.c.b16 %v379, %v378
      %v440 = vpack.c.b16 %v381, %v380
      %v441 = vpack.c.b16 %v383, %v382
      %v442 = vpack.c.b16 %v385, %v384
      %v443 = vpack.c.b16 %v387, %v386
      %v444 = vpack.c.b16 %v389, %v388
      %v445 = vpack.c.b16 %v391, %v390
      %v446 = vpack.c.b16 %v393, %v392
      %v447 = vpack.c.b16 %v395, %v394
      %v448 = vpack.c.b16 %v397, %v396
      %v449 = vpack.c.b16 %v399, %v398
      %v450 = vpack.c.b16 %v401, %v400
      %v451 = vpack.c.b16 %v403, %v402
      %v452 = vpack.c.b16 %v405, %v404
      %v453 = vpack.c.b16 %v407, %v406
      %v454 = vpack.c.b16 %v409, %v408
      %v455 = vpack.c.b16 %v411, %v410
      %v456 = vpack.c.b16 %v413, %v412
      %v457 = vpack.c.b16 %v415, %v414
      %v458 = vpack.c.b16 %v417, %v416
      %v459 = vpack.c.b16 %v419, %v418
      %v460 = vpack.c.b16 %v421, %v420
      %v461 = vpack.c.b16 %v423, %v422
      %v462 = vpack.c.b16 %v425, %v424
      %v463 = vpack.c.b16 %v427, %v426
      %v464 = vpack.c.b16 %v429, %v428
      %v465 = vpack.c.b16 %v431, %v430
      %v466 = vpack.c.b16 %v433, %v432
      %v467 = vpack.c.b16 %v435, %v434
      %v474 = vunpack.c.l.b16 %v295
      %v475 = vunpack.c.l.b16 %v296
      %v476 = vunpack.c.l.b16 %v297
      %v477 = vunpack.c.l.b16 %v298
      %v478 = vunpack.c.l.b16 %v299
      %v479 = vunpack.c.l.b16 %v300
      %v480 = vpack.c.b16 %v475, %v474
      %v481 = vpack.c.b16 %v477, %v476
      %v482 = vpack.c.b16 %v479, %v478
      %vm486 = vcmask 392192
      %v488 = vsel %vm486, %v436, 0
      %v491 = vsel %vm486, %v437, 0
      %v494 = vsel %vm486, %v438, 0
      %v497 = vsel %vm486, %v439, 0
      %v500 = vsel %vm486, %v440, 0
      %v503 = vsel %vm486, %v441, 0
      %v506 = vsel %vm486, %v442, 0
      %v509 = vsel %vm486, %v443, 0
      %v512 = vsel %vm486, %v444, 0
      %v515 = vsel %vm486, %v445, 0
      %v518 = vsel %vm486, %v446, 0
      %v521 = vsel %vm486, %v447, 0
      %v524 = vsel %vm486, %v448, 0
      %v527 = vsel %vm486, %v449, 0
      %v530 = vsel %vm486, %v450, 0
      %v533 = vsel %vm486, %v451, 0
      %v536 = vsel %vm486, %v452, 0
      %v539 = vsel %vm486, %v453, 0
      %v542 = vsel %vm486, %v454, 0
      %v545 = vsel %vm486, %v455, 0
      %v548 = vsel %vm486, %v456, 0
      %v551 = vsel %vm486, %v457, 0
      %v554 = vsel %vm486, %v458, 0
      %v557 = vsel %vm486, %v459, 0
      %v560 = vsel %vm486, %v460, 0
      %v563 = vsel %vm486, %v461, 0
      %v566 = vsel %vm486, %v462, 0
      %v569 = vsel %vm486, %v463, 0
      %v572 = vsel %vm486, %v464, 0
      %v575 = vsel %vm486, %v465, 0
      %v578 = vsel %vm486, %v466, 0
      %v581 = vsel %vm486, %v467, 0
      %583 = vmatprep.subr.bf16.mxu0 0
      %584 = vmatpush1.bf16.msra.mxu0 0
      %585 = vmatprep.subr.bf16.mxu0 0
      %586 = vmatpush1.bf16.msra.mxu0 0
      %587 = vmatprep.subr.bf16.mxu0 0
      %588 = vmatpush1.bf16.msra.mxu0 0
      %589 = vmatprep.subr.bf16.mxu0 0
      %590 = vmatpush1.bf16.msra.mxu0 0
      %591 = vmatprep.subr.bf16.mxu0 0
      %592 = vmatpush1.bf16.msra.mxu0 0
      %593 = vmatprep.subr.bf16.mxu0 0
      %594 = vmatpush1.bf16.msra.mxu0 %v482
      %595 = vmatprep.subr.bf16.mxu0 0
      %596 = vmatpush1.bf16.msra.mxu0 %v481
      %597 = vmatprep.subr.bf16.mxu0 0
      %598 = vmatpush1.bf16.msra.mxu0 %v480
      %599 = vmatprep.subr.bf16.mxu0 0
      %600 = vmatpush2.bf16.msra.mxu0 0
      %601 = vmatprep.subr.bf16.mxu0 0
      %602 = vmatpush2.bf16.msra.mxu0 0
      %603 = vmatprep.subr.bf16.mxu0 0
      %604 = vmatpush2.bf16.msra.mxu0 0
      %605 = vmatprep.subr.bf16.mxu0 0
      %606 = vmatpush2.bf16.msra.mxu0 0
      %607 = vmatprep.subr.bf16.mxu0 0
      %608 = vmatpush2.bf16.msra.mxu0 0
      %609 = vmatprep.subr.bf16.mxu0 0
      %610 = vmatpush2.bf16.msra.mxu0 0
      %611 = vmatprep.subr.bf16.mxu0 0
      %612 = vmatpush2.bf16.msra.mxu0 0
      %613 = vmatprep.subr.bf16.mxu0 0
      %614 = vmatpush2.bf16.msra.mxu0 0
      %615 = vmatprep.mubr.bf16.mxu0 0
      %616 = vmatmul.mubr.bf16.gmra.mxu0 %v488
      %v617 = vpop.f32.mrf.mxu0
      %v618 = vadd.f32 %v306, %v617
      %v619 = vpop.f32.mrf.mxu0
      %v620 = vpop.f32.mrf.mxu0
      %v621 = vadd.f32 %v306, %v620
      %v622 = vpop.f32.mrf.mxu0
      %623 = vmatprep.mubr.bf16.mxu0 0
      %624 = vmatmul.mubr.bf16.gmra.mxu0 %v491
      %v625 = vpop.f32.mrf.mxu0
      %v626 = vadd.f32 %v306, %v625
      %v627 = vpop.f32.mrf.mxu0
      %v628 = vpop.f32.mrf.mxu0
      %v629 = vadd.f32 %v306, %v628
      %v630 = vpop.f32.mrf.mxu0
      %631 = vmatprep.mubr.bf16.mxu0 0
      %632 = vmatmul.mubr.bf16.gmra.mxu0 %v494
      %v633 = vpop.f32.mrf.mxu0
      %v634 = vadd.f32 %v306, %v633
      %v635 = vpop.f32.mrf.mxu0
      %v636 = vpop.f32.mrf.mxu0
      %v637 = vadd.f32 %v306, %v636
      %v638 = vpop.f32.mrf.mxu0
      %639 = vmatprep.mubr.bf16.mxu0 0
      %640 = vmatmul.mubr.bf16.gmra.mxu0 %v497
      %v641 = vpop.f32.mrf.mxu0
      %v642 = vadd.f32 %v306, %v641
      %v643 = vpop.f32.mrf.mxu0
      %v644 = vpop.f32.mrf.mxu0
      %v645 = vadd.f32 %v306, %v644
      %v646 = vpop.f32.mrf.mxu0
      %647 = vmatprep.mubr.bf16.mxu0 0
      %648 = vmatmul.mubr.bf16.gmra.mxu0 %v500
      %v649 = vpop.f32.mrf.mxu0
      %v650 = vadd.f32 %v306, %v649
      %v651 = vpop.f32.mrf.mxu0
      %v652 = vpop.f32.mrf.mxu0
      %v653 = vadd.f32 %v306, %v652
      %v654 = vpop.f32.mrf.mxu0
      %655 = vmatprep.mubr.bf16.mxu0 0
      %656 = vmatmul.mubr.bf16.gmra.mxu0 %v503
      %v657 = vpop.f32.mrf.mxu0
      %v658 = vadd.f32 %v306, %v657
      %v659 = vpop.f32.mrf.mxu0
      %v660 = vpop.f32.mrf.mxu0
      %v661 = vadd.f32 %v306, %v660
      %v662 = vpop.f32.mrf.mxu0
      %663 = vmatprep.mubr.bf16.mxu0 0
      %664 = vmatmul.mubr.bf16.gmra.mxu0 %v506
      %v665 = vpop.f32.mrf.mxu0
      %v666 = vadd.f32 %v306, %v665
      %v667 = vpop.f32.mrf.mxu0
      %v668 = vpop.f32.mrf.mxu0
      %v669 = vadd.f32 %v306, %v668
      %v670 = vpop.f32.mrf.mxu0
      %671 = vmatprep.mubr.bf16.mxu0 0
      %672 = vmatmul.mubr.bf16.gmra.mxu0 %v509
      %v673 = vpop.f32.mrf.mxu0
      %v674 = vadd.f32 %v306, %v673
      %v675 = vpop.f32.mrf.mxu0
      %v676 = vpop.f32.mrf.mxu0
      %v677 = vadd.f32 %v306, %v676
      %v678 = vpop.f32.mrf.mxu0
      %679 = vmatprep.mubr.bf16.mxu0 0
      %680 = vmatmul.mubr.bf16.gmra.mxu0 %v512
      %v681 = vpop.f32.mrf.mxu0
      %v682 = vadd.f32 %v306, %v681
      %v683 = vpop.f32.mrf.mxu0
      %v684 = vpop.f32.mrf.mxu0
      %v685 = vadd.f32 %v306, %v684
      %v686 = vpop.f32.mrf.mxu0
      %687 = vmatprep.mubr.bf16.mxu0 0
      %688 = vmatmul.mubr.bf16.gmra.mxu0 %v515
      %v689 = vpop.f32.mrf.mxu0
      %v690 = vadd.f32 %v306, %v689
      %v691 = vpop.f32.mrf.mxu0
      %v692 = vpop.f32.mrf.mxu0
      %v693 = vadd.f32 %v306, %v692
      %v694 = vpop.f32.mrf.mxu0
      %695 = vmatprep.mubr.bf16.mxu0 0
      %696 = vmatmul.mubr.bf16.gmra.mxu0 %v518
      %v697 = vpop.f32.mrf.mxu0
      %v698 = vadd.f32 %v306, %v697
      %v699 = vpop.f32.mrf.mxu0
      %v700 = vpop.f32.mrf.mxu0
      %v701 = vadd.f32 %v306, %v700
      %v702 = vpop.f32.mrf.mxu0
      %703 = vmatprep.mubr.bf16.mxu0 0
      %704 = vmatmul.mubr.bf16.gmra.mxu0 %v521
      %v705 = vpop.f32.mrf.mxu0
      %v706 = vadd.f32 %v306, %v705
      %v707 = vpop.f32.mrf.mxu0
      %v708 = vpop.f32.mrf.mxu0
      %v709 = vadd.f32 %v306, %v708
      %v710 = vpop.f32.mrf.mxu0
      %711 = vmatprep.mubr.bf16.mxu0 0
      %712 = vmatmul.mubr.bf16.gmra.mxu0 %v524
      %v713 = vpop.f32.mrf.mxu0
      %v714 = vadd.f32 %v306, %v713
      %v715 = vpop.f32.mrf.mxu0
      %v716 = vpop.f32.mrf.mxu0
      %v717 = vadd.f32 %v306, %v716
      %v718 = vpop.f32.mrf.mxu0
      %719 = vmatprep.mubr.bf16.mxu0 0
      %720 = vmatmul.mubr.bf16.gmra.mxu0 %v527
      %v721 = vpop.f32.mrf.mxu0
      %v722 = vadd.f32 %v306, %v721
      %v723 = vpop.f32.mrf.mxu0
      %v724 = vpop.f32.mrf.mxu0
      %v725 = vadd.f32 %v306, %v724
      %v726 = vpop.f32.mrf.mxu0
      %727 = vmatprep.mubr.bf16.mxu0 0
      %728 = vmatmul.mubr.bf16.gmra.mxu0 %v530
      %v729 = vpop.f32.mrf.mxu0
      %v730 = vadd.f32 %v306, %v729
      %v731 = vpop.f32.mrf.mxu0
      %v732 = vpop.f32.mrf.mxu0
      %v733 = vadd.f32 %v306, %v732
      %v734 = vpop.f32.mrf.mxu0
      %735 = vmatprep.mubr.bf16.mxu0 0
      %736 = vmatmul.mubr.bf16.gmra.mxu0 %v533
      %v737 = vpop.f32.mrf.mxu0
      %v738 = vadd.f32 %v306, %v737
      %v739 = vpop.f32.mrf.mxu0
      %v740 = vpop.f32.mrf.mxu0
      %v741 = vadd.f32 %v306, %v740
      %v742 = vpop.f32.mrf.mxu0
      %743 = vmatprep.mubr.bf16.mxu0 0
      %744 = vmatmul.mubr.bf16.gmra.mxu0 %v536
      %v745 = vpop.f32.mrf.mxu0
      %v746 = vadd.f32 %v306, %v745
      %v747 = vpop.f32.mrf.mxu0
      %v748 = vpop.f32.mrf.mxu0
      %v749 = vadd.f32 %v306, %v748
      %v750 = vpop.f32.mrf.mxu0
      %751 = vmatprep.mubr.bf16.mxu0 0
      %752 = vmatmul.mubr.bf16.gmra.mxu0 %v539
      %v753 = vpop.f32.mrf.mxu0
      %v754 = vadd.f32 %v306, %v753
      %v755 = vpop.f32.mrf.mxu0
      %v756 = vpop.f32.mrf.mxu0
      %v757 = vadd.f32 %v306, %v756
      %v758 = vpop.f32.mrf.mxu0
      %759 = vmatprep.mubr.bf16.mxu0 0
      %760 = vmatmul.mubr.bf16.gmra.mxu0 %v542
      %v761 = vpop.f32.mrf.mxu0
      %v762 = vadd.f32 %v306, %v761
      %v763 = vpop.f32.mrf.mxu0
      %v764 = vpop.f32.mrf.mxu0
      %v765 = vadd.f32 %v306, %v764
      %v766 = vpop.f32.mrf.mxu0
      %767 = vmatprep.mubr.bf16.mxu0 0
      %768 = vmatmul.mubr.bf16.gmra.mxu0 %v545
      %v769 = vpop.f32.mrf.mxu0
      %v770 = vadd.f32 %v306, %v769
      %v771 = vpop.f32.mrf.mxu0
      %v772 = vpop.f32.mrf.mxu0
      %v773 = vadd.f32 %v306, %v772
      %v774 = vpop.f32.mrf.mxu0
      %775 = vmatprep.mubr.bf16.mxu0 0
      %776 = vmatmul.mubr.bf16.gmra.mxu0 %v548
      %v777 = vpop.f32.mrf.mxu0
      %v778 = vadd.f32 %v306, %v777
      %v779 = vpop.f32.mrf.mxu0
      %v780 = vpop.f32.mrf.mxu0
      %v781 = vadd.f32 %v306, %v780
      %v782 = vpop.f32.mrf.mxu0
      %783 = vmatprep.mubr.bf16.mxu0 0
      %784 = vmatmul.mubr.bf16.gmra.mxu0 %v551
      %v785 = vpop.f32.mrf.mxu0
      %v786 = vadd.f32 %v306, %v785
      %v787 = vpop.f32.mrf.mxu0
      %v788 = vpop.f32.mrf.mxu0
      %v789 = vadd.f32 %v306, %v788
      %v790 = vpop.f32.mrf.mxu0
      %791 = vmatprep.mubr.bf16.mxu0 0
      %792 = vmatmul.mubr.bf16.gmra.mxu0 %v554
      %v793 = vpop.f32.mrf.mxu0
      %v794 = vadd.f32 %v306, %v793
      %v795 = vpop.f32.mrf.mxu0
      %v796 = vpop.f32.mrf.mxu0
      %v797 = vadd.f32 %v306, %v796
      %v798 = vpop.f32.mrf.mxu0
      %799 = vmatprep.mubr.bf16.mxu0 0
      %800 = vmatmul.mubr.bf16.gmra.mxu0 %v557
      %v801 = vpop.f32.mrf.mxu0
      %v802 = vadd.f32 %v306, %v801
      %v803 = vpop.f32.mrf.mxu0
      %v804 = vpop.f32.mrf.mxu0
      %v805 = vadd.f32 %v306, %v804
      %v806 = vpop.f32.mrf.mxu0
      %807 = vmatprep.mubr.bf16.mxu0 0
      %808 = vmatmul.mubr.bf16.gmra.mxu0 %v560
      %v809 = vpop.f32.mrf.mxu0
      %v810 = vadd.f32 %v306, %v809
      %v811 = vpop.f32.mrf.mxu0
      %v812 = vpop.f32.mrf.mxu0
      %v813 = vadd.f32 %v306, %v812
      %v814 = vpop.f32.mrf.mxu0
      %815 = vmatprep.mubr.bf16.mxu0 0
      %816 = vmatmul.mubr.bf16.gmra.mxu0 %v563
      %v817 = vpop.f32.mrf.mxu0
      %v818 = vadd.f32 %v306, %v817
      %v819 = vpop.f32.mrf.mxu0
      %v820 = vpop.f32.mrf.mxu0
      %v821 = vadd.f32 %v306, %v820
      %v822 = vpop.f32.mrf.mxu0
      %823 = vmatprep.mubr.bf16.mxu0 0
      %824 = vmatmul.mubr.bf16.gmra.mxu0 %v566
      %v825 = vpop.f32.mrf.mxu0
      %v826 = vadd.f32 %v306, %v825
      %v827 = vpop.f32.mrf.mxu0
      %v828 = vpop.f32.mrf.mxu0
      %v829 = vadd.f32 %v306, %v828
      %v830 = vpop.f32.mrf.mxu0
      %831 = vmatprep.mubr.bf16.mxu0 0
      %832 = vmatmul.mubr.bf16.gmra.mxu0 %v569
      %v833 = vpop.f32.mrf.mxu0
      %v834 = vadd.f32 %v306, %v833
      %v835 = vpop.f32.mrf.mxu0
      %v836 = vpop.f32.mrf.mxu0
      %v837 = vadd.f32 %v306, %v836
      %v838 = vpop.f32.mrf.mxu0
      %839 = vmatprep.mubr.bf16.mxu0 0
      %840 = vmatmul.mubr.bf16.gmra.mxu0 %v572
      %v841 = vpop.f32.mrf.mxu0
      %v842 = vadd.f32 %v306, %v841
      %v843 = vpop.f32.mrf.mxu0
      %v844 = vpop.f32.mrf.mxu0
      %v845 = vadd.f32 %v306, %v844
      %v846 = vpop.f32.mrf.mxu0
      %847 = vmatprep.mubr.bf16.mxu0 0
      %848 = vmatmul.mubr.bf16.gmra.mxu0 %v575
      %v849 = vpop.f32.mrf.mxu0
      %v850 = vadd.f32 %v306, %v849
      %v851 = vpop.f32.mrf.mxu0
      %v852 = vpop.f32.mrf.mxu0
      %v853 = vadd.f32 %v306, %v852
      %v854 = vpop.f32.mrf.mxu0
      %855 = vmatprep.mubr.bf16.mxu0 0
      %856 = vmatmul.mubr.bf16.gmra.mxu0 %v578
      %v857 = vpop.f32.mrf.mxu0
      %v858 = vadd.f32 %v306, %v857
      %v859 = vpop.f32.mrf.mxu0
      %v860 = vpop.f32.mrf.mxu0
      %v861 = vadd.f32 %v306, %v860
      %v862 = vpop.f32.mrf.mxu0
      %863 = vmatprep.mubr.bf16.mxu0 0
      %864 = vmatmul.mubr.bf16.gmra.mxu0 %v581
      %v865 = vpop.f32.mrf.mxu0
      %v866 = vadd.f32 %v306, %v865
      %v867 = vpop.f32.mrf.mxu0
      %v868 = vpop.f32.mrf.mxu0
      %v869 = vadd.f32 %v306, %v868
      %v870 = vpop.f32.mrf.mxu0
      %871 = vdwg.mxu0
      %vm872 = vcmask 64512
      %873 = vst.msk [vmem:[%s228] sm:$0xff] %vm872, %v618
      %874 = vst.msk [vmem:[%s228 + $0x8] sm:$0xff] %vm872, %v621
      %875 = vst.msk [vmem:[%s228 + $0x10] sm:$0xff] %vm872, %v626
      %876 = vst.msk [vmem:[%s228 + $0x18] sm:$0xff] %vm872, %v629
      %877 = vst.msk [vmem:[%s228 + $0x20] sm:$0xff] %vm872, %v634
      %878 = vst.msk [vmem:[%s228 + $0x28] sm:$0xff] %vm872, %v637
      %879 = vst.msk [vmem:[%s228 + $0x30] sm:$0xff] %vm872, %v642
      %880 = vst.msk [vmem:[%s228 + $0x38] sm:$0xff] %vm872, %v645
      %881 = vst.msk [vmem:[%s228 + $0x40] sm:$0xff] %vm872, %v650
      %882 = vst.msk [vmem:[%s228 + $0x48] sm:$0xff] %vm872, %v653
      %883 = vst.msk [vmem:[%s228 + $0x50] sm:$0xff] %vm872, %v658
      %884 = vst.msk [vmem:[%s228 + $0x58] sm:$0xff] %vm872, %v661
      %885 = vst.msk [vmem:[%s228 + $0x60] sm:$0xff] %vm872, %v666
      %886 = vst.msk [vmem:[%s228 + $0x68] sm:$0xff] %vm872, %v669
      %887 = vst.msk [vmem:[%s228 + $0x70] sm:$0xff] %vm872, %v674
      %888 = vst.msk [vmem:[%s228 + $0x78] sm:$0xff] %vm872, %v677
      %889 = vst.msk [vmem:[%s228 + $0x80] sm:$0xff] %vm872, %v682
      %890 = vst.msk [vmem:[%s228 + $0x88] sm:$0xff] %vm872, %v685
      %891 = vst.msk [vmem:[%s228 + $0x90] sm:$0xff] %vm872, %v690
      %892 = vst.msk [vmem:[%s228 + $0x98] sm:$0xff] %vm872, %v693
      %893 = vst.msk [vmem:[%s228 + $0xa0] sm:$0xff] %vm872, %v698
      %894 = vst.msk [vmem:[%s228 + $0xa8] sm:$0xff] %vm872, %v701
      %895 = vst.msk [vmem:[%s228 + $0xb0] sm:$0xff] %vm872, %v706
      %896 = vst.msk [vmem:[%s228 + $0xb8] sm:$0xff] %vm872, %v709
      %897 = vst.msk [vmem:[%s228 + $0xc0] sm:$0xff] %vm872, %v714
      %898 = vst.msk [vmem:[%s228 + $0xc8] sm:$0xff] %vm872, %v717
      %899 = vst.msk [vmem:[%s228 + $0xd0] sm:$0xff] %vm872, %v722
      %900 = vst.msk [vmem:[%s228 + $0xd8] sm:$0xff] %vm872, %v725
      %901 = vst.msk [vmem:[%s228 + $0xe0] sm:$0xff] %vm872, %v730
      %902 = vst.msk [vmem:[%s228 + $0xe8] sm:$0xff] %vm872, %v733
      %903 = vst.msk [vmem:[%s228 + $0xf0] sm:$0xff] %vm872, %v738
      %904 = vst.msk [vmem:[%s228 + $0xf8] sm:$0xff] %vm872, %v741
      %905 = vst.msk [vmem:[%s228 + $0x100] sm:$0xff] %vm872, %v746
      %906 = vst.msk [vmem:[%s228 + $0x108] sm:$0xff] %vm872, %v749
      %907 = vst.msk [vmem:[%s228 + $0x110] sm:$0xff] %vm872, %v754
      %908 = vst.msk [vmem:[%s228 + $0x118] sm:$0xff] %vm872, %v757
      %909 = vst.msk [vmem:[%s228 + $0x120] sm:$0xff] %vm872, %v762
      %910 = vst.msk [vmem:[%s228 + $0x128] sm:$0xff] %vm872, %v765
      %911 = vst.msk [vmem:[%s228 + $0x130] sm:$0xff] %vm872, %v770
      %912 = vst.msk [vmem:[%s228 + $0x138] sm:$0xff] %vm872, %v773
      %913 = vst.msk [vmem:[%s228 + $0x140] sm:$0xff] %vm872, %v778
      %914 = vst.msk [vmem:[%s228 + $0x148] sm:$0xff] %vm872, %v781
      %915 = vst.msk [vmem:[%s228 + $0x150] sm:$0xff] %vm872, %v786
      %916 = vst.msk [vmem:[%s228 + $0x158] sm:$0xff] %vm872, %v789
      %917 = vst.msk [vmem:[%s228 + $0x160] sm:$0xff] %vm872, %v794
      %918 = vst.msk [vmem:[%s228 + $0x168] sm:$0xff] %vm872, %v797
      %919 = vst.msk [vmem:[%s228 + $0x170] sm:$0xff] %vm872, %v802
      %920 = vst.msk [vmem:[%s228 + $0x178] sm:$0xff] %vm872, %v805
      %921 = vst.msk [vmem:[%s228 + $0x180] sm:$0xff] %vm872, %v810
      %922 = vst.msk [vmem:[%s228 + $0x188] sm:$0xff] %vm872, %v813
      %923 = vst.msk [vmem:[%s228 + $0x190] sm:$0xff] %vm872, %v818
      %924 = vst.msk [vmem:[%s228 + $0x198] sm:$0xff] %vm872, %v821
      %925 = vst.msk [vmem:[%s228 + $0x1a0] sm:$0xff] %vm872, %v826
      %926 = vst.msk [vmem:[%s228 + $0x1a8] sm:$0xff] %vm872, %v829
      %927 = vst.msk [vmem:[%s228 + $0x1b0] sm:$0xff] %vm872, %v834
      %928 = vst.msk [vmem:[%s228 + $0x1b8] sm:$0xff] %vm872, %v837
      %929 = vst.msk [vmem:[%s228 + $0x1c0] sm:$0xff] %vm872, %v842
      %930 = vst.msk [vmem:[%s228 + $0x1c8] sm:$0xff] %vm872, %v845
      %931 = vst.msk [vmem:[%s228 + $0x1d0] sm:$0xff] %vm872, %v850
      %932 = vst.msk [vmem:[%s228 + $0x1d8] sm:$0xff] %vm872, %v853
      %933 = vst.msk [vmem:[%s228 + $0x1e0] sm:$0xff] %vm872, %v858
      %934 = vst.msk [vmem:[%s228 + $0x1e8] sm:$0xff] %vm872, %v861
      %935 = vst.msk [vmem:[%s228 + $0x1f0] sm:$0xff] %vm872, %v866
      %936 = vst.msk [vmem:[%s228 + $0x1f8] sm:$0xff] %vm872, %v869
      %s937 = smul.u32 64, %s19
      %p938 = scmp.lt.s32.totalorder %s18, 0
      %s939 = scalar_select %p938, %s18, 0
      %p940 = scmp.lt.s32.totalorder %s937, 255
      %s941 = scalar_select %p940, %s937, 255
      %s942 = smul.addr %s939, 256
      %s943 = sadd.s32 %s941, %s942
      %s944 = smul.addr %s943, 8
      %s945 = scalar_lea.vmem %s3, %s944
      // Predicated region
      $region33: #{unet_forward.12} parent=31 // pred_check
        %p946 = pneg %p121
      $region34: #{unet_forward.12} parent=31 // pred_check_branch
        %948 = sbr.rel (%p946) target = $region36
      $region35: #{unet_forward.12} parent=31 // pred_region
        %s949 = smul.u32 64, %s19
      $region36: #{unet_forward.12} parent=31 // pred_fallthru
        _
    $region32: #{unet_forward.12} parent=5 // pred_fallthru
      _
    %p950 = scmp.le.s32.totalorder 2, %s9
    // Predicated region
    $region37: #{unet_forward.12} parent=5 // pred_check
      %p951 = pneg %p950
    $region38: #{unet_forward.12} parent=5 // pred_check_branch
      %953 = sbr.rel (%p951) target = $region40
    $region39: #{unet_forward.12} parent=5 // pred_region
      %s954 = ssub.s32 %s9, 2
      // Predicated region
      $region41: #{unet_forward.12} parent=39 // pred_check
        %p955 = pneg %p127
      $region42: #{unet_forward.12} parent=39 // pred_check_branch
        %957 = sbr.rel (%p955) target = $region44
      $region43: #{unet_forward.12} parent=39 // pred_region
        %s958 = smul.u32 64, %s21
        %p959 = scmp.lt.s32.totalorder %s20, 0
        %s960 = scalar_select %p959, %s20, 0
        %p961 = scmp.lt.s32.totalorder %s958, 255
        %s962 = scalar_select %p961, %s958, 255
        %s963 = smul.addr %s960, 256
        %s964 = sadd.s32 %s962, %s963
        %s965 = smul.addr %s964, 8
        %s966 = scalar_lea.vmem %s3, %s965
      $region44: #{unet_forward.12} parent=39 // pred_fallthru
        _
    $region40: #{unet_forward.12} parent=5 // pred_fallthru
      _
  $region6: #{unet_forward.12} parent=0 // loop_footer
    %s13 = sadd.s32 1, %s9
  $region7: #{unet_forward.12} parent=0 // loop_footer_branch
    %8 = sbr.rel target = $region3
  $region8: #{unet_forward.12} parent=0 // loop_exit
    _

// kernel: unet_forward.13
$region0: #{unet_forward.13}
  #allocation0 [shape = 'u32[]', space=smem, size = 0x4, offset = 0x4, fixed_abs, tag = 'smem constant byte address 0x4 - core index']
  #allocation1 [shape = 'u32[144,128]{1,0:T(1,128)}', space=vmem, size = 0x12000, scoped, tag = 'internal scratch']
  %s0 = inlined_call_operand.vmem [shape: bf16[1,512,128], index: 0, kind: input, shape index: {}]
  %s1 = inlined_call_operand.vmem [shape: bf16[1,128,16], index: 1, kind: input, shape index: {}]
  %s2 = inlined_call_operand.vmem [shape: f32[1,16], index: 2, kind: input, shape index: {}]
  %s3 = inlined_call_operand.vmem [shape: f32[1,512,16], index: 3, kind: output, shape index: {}]
  %s4 = sld [smem:[#allocation0]]
  $region22: #{unet_forward.13} parent=0
    _
  %s6 = ssub.s32 1, %s4
  %s7 = scalar_select 0, %s6, %s4
  // Predicated region
  $region2: #{unet_forward.13} parent=0 // pred_check
    _
  $region3: #{unet_forward.13} parent=0 // pred_check_branch
    %9 = sbr.rel (0) target = $region5
  $region4: #{unet_forward.13} parent=0 // pred_region
    _
  $region5: #{unet_forward.13} parent=0 // pred_fallthru
    _
  // Predicated region
  $region6: #{unet_forward.13} parent=0 // pred_check
    _
  $region7: #{unet_forward.13} parent=0 // pred_check_branch
    %11 = sbr.rel (0) target = $region9
  $region8: #{unet_forward.13} parent=0 // pred_region
    _
  $region9: #{unet_forward.13} parent=0 // pred_fallthru
    _
  // Predicated region
  $region10: #{unet_forward.13} parent=0 // pred_check
    _
  $region11: #{unet_forward.13} parent=0 // pred_check_branch
    %13 = sbr.rel (0) target = $region13
  $region12: #{unet_forward.13} parent=0 // pred_region
    _
  $region13: #{unet_forward.13} parent=0 // pred_fallthru
    _
  %v15 = vld [vmem:[%s0] sm:$0xf]
  %v16 = vld [vmem:[%s0 + $0x4] sm:$0xf]
  %v17 = vld [vmem:[%s0 + $0x8] sm:$0xf]
  %v18 = vld [vmem:[%s0 + $0xc] sm:$0xf]
  %v19 = vld [vmem:[%s0 + $0x10] sm:$0xf]
  %v20 = vld [vmem:[%s0 + $0x14] sm:$0xf]
  %v21 = vld [vmem:[%s0 + $0x18] sm:$0xf]
  %v22 = vld [vmem:[%s0 + $0x1c] sm:$0xf]
  %v23 = vld [vmem:[%s0 + $0x20] sm:$0xf]
  %v24 = vld [vmem:[%s0 + $0x24] sm:$0xf]
  %v25 = vld [vmem:[%s0 + $0x28] sm:$0xf]
  %v26 = vld [vmem:[%s0 + $0x2c] sm:$0xf]
  %v27 = vld [vmem:[%s0 + $0x30] sm:$0xf]
  %v28 = vld [vmem:[%s0 + $0x34] sm:$0xf]
  %v29 = vld [vmem:[%s0 + $0x38] sm:$0xf]
  %v30 = vld [vmem:[%s0 + $0x3c] sm:$0xf]
  %v31 = vld [vmem:[%s0 + $0x40] sm:$0xf]
  %v32 = vld [vmem:[%s0 + $0x44] sm:$0xf]
  %v33 = vld [vmem:[%s0 + $0x48] sm:$0xf]
  %v34 = vld [vmem:[%s0 + $0x4c] sm:$0xf]
  %v35 = vld [vmem:[%s0 + $0x50] sm:$0xf]
  %v36 = vld [vmem:[%s0 + $0x54] sm:$0xf]
  %v37 = vld [vmem:[%s0 + $0x58] sm:$0xf]
  %v38 = vld [vmem:[%s0 + $0x5c] sm:$0xf]
  %v39 = vld [vmem:[%s0 + $0x60] sm:$0xf]
  %v40 = vld [vmem:[%s0 + $0x64] sm:$0xf]
  %v41 = vld [vmem:[%s0 + $0x68] sm:$0xf]
  %v42 = vld [vmem:[%s0 + $0x6c] sm:$0xf]
  %v43 = vld [vmem:[%s0 + $0x70] sm:$0xf]
  %v44 = vld [vmem:[%s0 + $0x74] sm:$0xf]
  %v45 = vld [vmem:[%s0 + $0x78] sm:$0xf]
  %v46 = vld [vmem:[%s0 + $0x7c] sm:$0xf]
  %v47 = vld [vmem:[%s0 + $0x80] sm:$0xf]
  %v48 = vld [vmem:[%s0 + $0x84] sm:$0xf]
  %v49 = vld [vmem:[%s0 + $0x88] sm:$0xf]
  %v50 = vld [vmem:[%s0 + $0x8c] sm:$0xf]
  %v51 = vld [vmem:[%s0 + $0x90] sm:$0xf]
  %v52 = vld [vmem:[%s0 + $0x94] sm:$0xf]
  %v53 = vld [vmem:[%s0 + $0x98] sm:$0xf]
  %v54 = vld [vmem:[%s0 + $0x9c] sm:$0xf]
  %v55 = vld [vmem:[%s0 + $0xa0] sm:$0xf]
  %v56 = vld [vmem:[%s0 + $0xa4] sm:$0xf]
  %v57 = vld [vmem:[%s0 + $0xa8] sm:$0xf]
  %v58 = vld [vmem:[%s0 + $0xac] sm:$0xf]
  %v59 = vld [vmem:[%s0 + $0xb0] sm:$0xf]
  %v60 = vld [vmem:[%s0 + $0xb4] sm:$0xf]
  %v61 = vld [vmem:[%s0 + $0xb8] sm:$0xf]
  %v62 = vld [vmem:[%s0 + $0xbc] sm:$0xf]
  %v63 = vld [vmem:[%s0 + $0xc0] sm:$0xf]
  %v64 = vld [vmem:[%s0 + $0xc4] sm:$0xf]
  %v65 = vld [vmem:[%s0 + $0xc8] sm:$0xf]
  %v66 = vld [vmem:[%s0 + $0xcc] sm:$0xf]
  %v67 = vld [vmem:[%s0 + $0xd0] sm:$0xf]
  %v68 = vld [vmem:[%s0 + $0xd4] sm:$0xf]
  %v69 = vld [vmem:[%s0 + $0xd8] sm:$0xf]
  %v70 = vld [vmem:[%s0 + $0xdc] sm:$0xf]
  %v71 = vld [vmem:[%s0 + $0xe0] sm:$0xf]
  %v72 = vld [vmem:[%s0 + $0xe4] sm:$0xf]
  %v73 = vld [vmem:[%s0 + $0xe8] sm:$0xf]
  %v74 = vld [vmem:[%s0 + $0xec] sm:$0xf]
  %v75 = vld [vmem:[%s0 + $0xf0] sm:$0xf]
  %v76 = vld [vmem:[%s0 + $0xf4] sm:$0xf]
  %v77 = vld [vmem:[%s0 + $0xf8] sm:$0xf]
  %v78 = vld [vmem:[%s0 + $0xfc] sm:$0xf]
  %v79 = vld [vmem:[%s1] sm:$0xf]
  %v80 = vld [vmem:[%s1 + $0x4] sm:$0xf]
  %v81 = vld [vmem:[%s1 + $0x8] sm:$0xf]
  %v82 = vld [vmem:[%s1 + $0xc] sm:$0xf]
  %v83 = vld [vmem:[%s1 + $0x10] sm:$0xf]
  %v84 = vld [vmem:[%s1 + $0x14] sm:$0xf]
  %v85 = vld [vmem:[%s1 + $0x18] sm:$0xf]
  %v86 = vld [vmem:[%s1 + $0x1c] sm:$0xf]
  %v87 = vld [vmem:[%s1 + $0x20] sm:$0xf]
  %v88 = vld [vmem:[%s1 + $0x24] sm:$0xf]
  %v89 = vld [vmem:[%s1 + $0x28] sm:$0xf]
  %v90 = vld [vmem:[%s1 + $0x2c] sm:$0xf]
  %v91 = vld [vmem:[%s1 + $0x30] sm:$0xf]
  %v92 = vld [vmem:[%s1 + $0x34] sm:$0xf]
  %v93 = vld [vmem:[%s1 + $0x38] sm:$0xf]
  %v94 = vld [vmem:[%s1 + $0x3c] sm:$0xf]
  %v95 = vld [vmem:[%s2] sm:$0x1]
  %v97 = vlaneseq
  %v98 = vshrl.u32 %v97, 7
  %v99 = vsub.s32 0, %v98
  %v100 = vrot.slane %v95, %v99
  %v166 = vunpack.c.l.b16 %v15
  %v167 = vunpack.c.l.b16 %v16
  %v168 = vunpack.c.l.b16 %v17
  %v169 = vunpack.c.l.b16 %v18
  %v170 = vunpack.c.l.b16 %v19
  %v171 = vunpack.c.l.b16 %v20
  %v172 = vunpack.c.l.b16 %v21
  %v173 = vunpack.c.l.b16 %v22
  %v174 = vunpack.c.l.b16 %v23
  %v175 = vunpack.c.l.b16 %v24
  %v176 = vunpack.c.l.b16 %v25
  %v177 = vunpack.c.l.b16 %v26
  %v178 = vunpack.c.l.b16 %v27
  %v179 = vunpack.c.l.b16 %v28
  %v180 = vunpack.c.l.b16 %v29
  %v181 = vunpack.c.l.b16 %v30
  %v182 = vunpack.c.l.b16 %v31
  %v183 = vunpack.c.l.b16 %v32
  %v184 = vunpack.c.l.b16 %v33
  %v185 = vunpack.c.l.b16 %v34
  %v186 = vunpack.c.l.b16 %v35
  %v187 = vunpack.c.l.b16 %v36
  %v188 = vunpack.c.l.b16 %v37
  %v189 = vunpack.c.l.b16 %v38
  %v190 = vunpack.c.l.b16 %v39
  %v191 = vunpack.c.l.b16 %v40
  %v192 = vunpack.c.l.b16 %v41
  %v193 = vunpack.c.l.b16 %v42
  %v194 = vunpack.c.l.b16 %v43
  %v195 = vunpack.c.l.b16 %v44
  %v196 = vunpack.c.l.b16 %v45
  %v197 = vunpack.c.l.b16 %v46
  %v198 = vunpack.c.l.b16 %v47
  %v199 = vunpack.c.l.b16 %v48
  %v200 = vunpack.c.l.b16 %v49
  %v201 = vunpack.c.l.b16 %v50
  %v202 = vunpack.c.l.b16 %v51
  %v203 = vunpack.c.l.b16 %v52
  %v204 = vunpack.c.l.b16 %v53
  %v205 = vunpack.c.l.b16 %v54
  %v206 = vunpack.c.l.b16 %v55
  %v207 = vunpack.c.l.b16 %v56
  %v208 = vunpack.c.l.b16 %v57
  %v209 = vunpack.c.l.b16 %v58
  %v210 = vunpack.c.l.b16 %v59
  %v211 = vunpack.c.l.b16 %v60
  %v212 = vunpack.c.l.b16 %v61
  %v213 = vunpack.c.l.b16 %v62
  %v214 = vunpack.c.l.b16 %v63
  %v215 = vunpack.c.l.b16 %v64
  %v216 = vunpack.c.l.b16 %v65
  %v217 = vunpack.c.l.b16 %v66
  %v218 = vunpack.c.l.b16 %v67
  %v219 = vunpack.c.l.b16 %v68
  %v220 = vunpack.c.l.b16 %v69
  %v221 = vunpack.c.l.b16 %v70
  %v222 = vunpack.c.l.b16 %v71
  %v223 = vunpack.c.l.b16 %v72
  %v224 = vunpack.c.l.b16 %v73
  %v225 = vunpack.c.l.b16 %v74
  %v226 = vunpack.c.l.b16 %v75
  %v227 = vunpack.c.l.b16 %v76
  %v228 = vunpack.c.l.b16 %v77
  %v229 = vunpack.c.l.b16 %v78
  %v230 = vpack.c.b16 %v167, %v166
  %v231 = vpack.c.b16 %v169, %v168
  %v232 = vpack.c.b16 %v171, %v170
  %v233 = vpack.c.b16 %v173, %v172
  %v234 = vpack.c.b16 %v175, %v174
  %v235 = vpack.c.b16 %v177, %v176
  %v236 = vpack.c.b16 %v179, %v178
  %v237 = vpack.c.b16 %v181, %v180
  %v238 = vpack.c.b16 %v183, %v182
  %v239 = vpack.c.b16 %v185, %v184
  %v240 = vpack.c.b16 %v187, %v186
  %v241 = vpack.c.b16 %v189, %v188
  %v242 = vpack.c.b16 %v191, %v190
  %v243 = vpack.c.b16 %v193, %v192
  %v244 = vpack.c.b16 %v195, %v194
  %v245 = vpack.c.b16 %v197, %v196
  %v246 = vpack.c.b16 %v199, %v198
  %v247 = vpack.c.b16 %v201, %v200
  %v248 = vpack.c.b16 %v203, %v202
  %v249 = vpack.c.b16 %v205, %v204
  %v250 = vpack.c.b16 %v207, %v206
  %v251 = vpack.c.b16 %v209, %v208
  %v252 = vpack.c.b16 %v211, %v210
  %v253 = vpack.c.b16 %v213, %v212
  %v254 = vpack.c.b16 %v215, %v214
  %v255 = vpack.c.b16 %v217, %v216
  %v256 = vpack.c.b16 %v219, %v218
  %v257 = vpack.c.b16 %v221, %v220
  %v258 = vpack.c.b16 %v223, %v222
  %v259 = vpack.c.b16 %v225, %v224
  %v260 = vpack.c.b16 %v227, %v226
  %v261 = vpack.c.b16 %v229, %v228
  %v310 = vunpack.c.l.b16 %v79
  %v311 = vunpack.c.l.b16 %v80
  %v312 = vunpack.c.l.b16 %v81
  %v313 = vunpack.c.l.b16 %v82
  %v314 = vunpack.c.l.b16 %v83
  %v315 = vunpack.c.l.b16 %v84
  %v316 = vunpack.c.l.b16 %v85
  %v317 = vunpack.c.l.b16 %v86
  %v318 = vunpack.c.l.b16 %v87
  %v319 = vunpack.c.l.b16 %v88
  %v320 = vunpack.c.l.b16 %v89
  %v321 = vunpack.c.l.b16 %v90
  %v322 = vunpack.c.l.b16 %v91
  %v323 = vunpack.c.l.b16 %v92
  %v324 = vunpack.c.l.b16 %v93
  %v325 = vunpack.c.l.b16 %v94
  %v326 = vpack.c.b16 %v311, %v310
  %v327 = vpack.c.b16 %v313, %v312
  %v328 = vpack.c.b16 %v315, %v314
  %v329 = vpack.c.b16 %v317, %v316
  %v330 = vpack.c.b16 %v319, %v318
  %v331 = vpack.c.b16 %v321, %v320
  %v332 = vpack.c.b16 %v323, %v322
  %v333 = vpack.c.b16 %v325, %v324
  %342 = vmatprep.subr.bf16.mxu0 0
  %343 = vmatpush1.bf16.msra.mxu0 %v333
  %344 = vmatprep.subr.bf16.mxu0 0
  %345 = vmatpush1.bf16.msra.mxu0 %v332
  %346 = vmatprep.subr.bf16.mxu0 0
  %347 = vmatpush1.bf16.msra.mxu0 %v331
  %348 = vmatprep.subr.bf16.mxu0 0
  %349 = vmatpush1.bf16.msra.mxu0 %v330
  %350 = vmatprep.subr.bf16.mxu0 0
  %351 = vmatpush1.bf16.msra.mxu0 %v329
  %352 = vmatprep.subr.bf16.mxu0 0
  %353 = vmatpush1.bf16.msra.mxu0 %v328
  %354 = vmatprep.subr.bf16.mxu0 0
  %355 = vmatpush1.bf16.msra.mxu0 %v327
  %356 = vmatprep.subr.bf16.mxu0 0
  %357 = vmatpush1.bf16.msra.mxu0 %v326
  %358 = vmatprep.subr.bf16.mxu0 0
  %359 = vmatpush2.bf16.msra.mxu0 0
  %360 = vmatprep.subr.bf16.mxu0 0
  %361 = vmatpush2.bf16.msra.mxu0 0
  %362 = vmatprep.subr.bf16.mxu0 0
  %363 = vmatpush2.bf16.msra.mxu0 0
  %364 = vmatprep.subr.bf16.mxu0 0
  %365 = vmatpush2.bf16.msra.mxu0 0
  %366 = vmatprep.subr.bf16.mxu0 0
  %367 = vmatpush2.bf16.msra.mxu0 0
  %368 = vmatprep.subr.bf16.mxu0 0
  %369 = vmatpush2.bf16.msra.mxu0 0
  %370 = vmatprep.subr.bf16.mxu0 0
  %371 = vmatpush2.bf16.msra.mxu0 0
  %372 = vmatprep.subr.bf16.mxu0 0
  %373 = vmatpush2.bf16.msra.mxu0 0
  %374 = vmatprep.mubr.bf16.mxu0 0
  %375 = vmatmul.mubr.bf16.gmra.mxu0 %v230
  %v376 = vpop.f32.mrf.mxu0
  %v377 = vadd.f32 %v100, %v376
  %v378 = vpop.f32.mrf.mxu0
  %v379 = vpop.f32.mrf.mxu0
  %v380 = vadd.f32 %v100, %v379
  %v381 = vpop.f32.mrf.mxu0
  %382 = vmatprep.mubr.bf16.mxu0 0
  %383 = vmatmul.mubr.bf16.gmra.mxu0 %v231
  %v384 = vpop.f32.mrf.mxu0
  %v385 = vadd.f32 %v100, %v384
  %v386 = vpop.f32.mrf.mxu0
  %v387 = vpop.f32.mrf.mxu0
  %v388 = vadd.f32 %v100, %v387
  %v389 = vpop.f32.mrf.mxu0
  %390 = vmatprep.mubr.bf16.mxu0 0
  %391 = vmatmul.mubr.bf16.gmra.mxu0 %v232
  %v392 = vpop.f32.mrf.mxu0
  %v393 = vadd.f32 %v100, %v392
  %v394 = vpop.f32.mrf.mxu0
  %v395 = vpop.f32.mrf.mxu0
  %v396 = vadd.f32 %v100, %v395
  %v397 = vpop.f32.mrf.mxu0
  %398 = vmatprep.mubr.bf16.mxu0 0
  %399 = vmatmul.mubr.bf16.gmra.mxu0 %v233
  %v400 = vpop.f32.mrf.mxu0
  %v401 = vadd.f32 %v100, %v400
  %v402 = vpop.f32.mrf.mxu0
  %v403 = vpop.f32.mrf.mxu0
  %v404 = vadd.f32 %v100, %v403
  %v405 = vpop.f32.mrf.mxu0
  %406 = vmatprep.mubr.bf16.mxu0 0
  %407 = vmatmul.mubr.bf16.gmra.mxu0 %v234
  %v408 = vpop.f32.mrf.mxu0
  %v409 = vadd.f32 %v100, %v408
  %v410 = vpop.f32.mrf.mxu0
  %v411 = vpop.f32.mrf.mxu0
  %v412 = vadd.f32 %v100, %v411
  %v413 = vpop.f32.mrf.mxu0
  %414 = vmatprep.mubr.bf16.mxu0 0
  %415 = vmatmul.mubr.bf16.gmra.mxu0 %v235
  %v416 = vpop.f32.mrf.mxu0
  %v417 = vadd.f32 %v100, %v416
  %v418 = vpop.f32.mrf.mxu0
  %v419 = vpop.f32.mrf.mxu0
  %v420 = vadd.f32 %v100, %v419
  %v421 = vpop.f32.mrf.mxu0
  %422 = vmatprep.mubr.bf16.mxu0 0
  %423 = vmatmul.mubr.bf16.gmra.mxu0 %v236
  %v424 = vpop.f32.mrf.mxu0
  %v425 = vadd.f32 %v100, %v424
  %v426 = vpop.f32.mrf.mxu0
  %v427 = vpop.f32.mrf.mxu0
  %v428 = vadd.f32 %v100, %v427
  %v429 = vpop.f32.mrf.mxu0
  %430 = vmatprep.mubr.bf16.mxu0 0
  %431 = vmatmul.mubr.bf16.gmra.mxu0 %v237
  %v432 = vpop.f32.mrf.mxu0
  %v433 = vadd.f32 %v100, %v432
  %v434 = vpop.f32.mrf.mxu0
  %v435 = vpop.f32.mrf.mxu0
  %v436 = vadd.f32 %v100, %v435
  %v437 = vpop.f32.mrf.mxu0
  %438 = vmatprep.mubr.bf16.mxu0 0
  %439 = vmatmul.mubr.bf16.gmra.mxu0 %v238
  %v440 = vpop.f32.mrf.mxu0
  %v441 = vadd.f32 %v100, %v440
  %v442 = vpop.f32.mrf.mxu0
  %v443 = vpop.f32.mrf.mxu0
  %v444 = vadd.f32 %v100, %v443
  %v445 = vpop.f32.mrf.mxu0
  %446 = vmatprep.mubr.bf16.mxu0 0
  %447 = vmatmul.mubr.bf16.gmra.mxu0 %v239
  %v448 = vpop.f32.mrf.mxu0
  %v449 = vadd.f32 %v100, %v448
  %v450 = vpop.f32.mrf.mxu0
  %v451 = vpop.f32.mrf.mxu0
  %v452 = vadd.f32 %v100, %v451
  %v453 = vpop.f32.mrf.mxu0
  %454 = vmatprep.mubr.bf16.mxu0 0
  %455 = vmatmul.mubr.bf16.gmra.mxu0 %v240
  %v456 = vpop.f32.mrf.mxu0
  %v457 = vadd.f32 %v100, %v456
  %v458 = vpop.f32.mrf.mxu0
  %v459 = vpop.f32.mrf.mxu0
  %v460 = vadd.f32 %v100, %v459
  %v461 = vpop.f32.mrf.mxu0
  %462 = vmatprep.mubr.bf16.mxu0 0
  %463 = vmatmul.mubr.bf16.gmra.mxu0 %v241
  %v464 = vpop.f32.mrf.mxu0
  %v465 = vadd.f32 %v100, %v464
  %v466 = vpop.f32.mrf.mxu0
  %v467 = vpop.f32.mrf.mxu0
  %v468 = vadd.f32 %v100, %v467
  %v469 = vpop.f32.mrf.mxu0
  %470 = vmatprep.mubr.bf16.mxu0 0
  %471 = vmatmul.mubr.bf16.gmra.mxu0 %v242
  %v472 = vpop.f32.mrf.mxu0
  %v473 = vadd.f32 %v100, %v472
  %v474 = vpop.f32.mrf.mxu0
  %v475 = vpop.f32.mrf.mxu0
  %v476 = vadd.f32 %v100, %v475
  %v477 = vpop.f32.mrf.mxu0
  %478 = vmatprep.mubr.bf16.mxu0 0
  %479 = vmatmul.mubr.bf16.gmra.mxu0 %v243
  %v480 = vpop.f32.mrf.mxu0
  %v481 = vadd.f32 %v100, %v480
  %v482 = vpop.f32.mrf.mxu0
  %v483 = vpop.f32.mrf.mxu0
  %v484 = vadd.f32 %v100, %v483
  %v485 = vpop.f32.mrf.mxu0
  %486 = vmatprep.mubr.bf16.mxu0 0
  %487 = vmatmul.mubr.bf16.gmra.mxu0 %v244
  %v488 = vpop.f32.mrf.mxu0
  %v489 = vadd.f32 %v100, %v488
  %v490 = vpop.f32.mrf.mxu0
  %v491 = vpop.f32.mrf.mxu0
  %v492 = vadd.f32 %v100, %v491
  %v493 = vpop.f32.mrf.mxu0
  %494 = vmatprep.mubr.bf16.mxu0 0
  %495 = vmatmul.mubr.bf16.gmra.mxu0 %v245
  %v496 = vpop.f32.mrf.mxu0
  %v497 = vadd.f32 %v100, %v496
  %v498 = vpop.f32.mrf.mxu0
  %v499 = vpop.f32.mrf.mxu0
  %v500 = vadd.f32 %v100, %v499
  %v501 = vpop.f32.mrf.mxu0
  %502 = vmatprep.mubr.bf16.mxu0 0
  %503 = vmatmul.mubr.bf16.gmra.mxu0 %v246
  %v504 = vpop.f32.mrf.mxu0
  %v505 = vadd.f32 %v100, %v504
  %v506 = vpop.f32.mrf.mxu0
  %v507 = vpop.f32.mrf.mxu0
  %v508 = vadd.f32 %v100, %v507
  %v509 = vpop.f32.mrf.mxu0
  %510 = vmatprep.mubr.bf16.mxu0 0
  %511 = vmatmul.mubr.bf16.gmra.mxu0 %v247
  %v512 = vpop.f32.mrf.mxu0
  %v513 = vadd.f32 %v100, %v512
  %v514 = vpop.f32.mrf.mxu0
  %v515 = vpop.f32.mrf.mxu0
  %v516 = vadd.f32 %v100, %v515
  %v517 = vpop.f32.mrf.mxu0
  %518 = vmatprep.mubr.bf16.mxu0 0
  %519 = vmatmul.mubr.bf16.gmra.mxu0 %v248
  %v520 = vpop.f32.mrf.mxu0
  %v521 = vadd.f32 %v100, %v520
  %v522 = vpop.f32.mrf.mxu0
  %v523 = vpop.f32.mrf.mxu0
  %v524 = vadd.f32 %v100, %v523
  %v525 = vpop.f32.mrf.mxu0
  %526 = vmatprep.mubr.bf16.mxu0 0
  %527 = vmatmul.mubr.bf16.gmra.mxu0 %v249
  %v528 = vpop.f32.mrf.mxu0
  %v529 = vadd.f32 %v100, %v528
  %v530 = vpop.f32.mrf.mxu0
  %v531 = vpop.f32.mrf.mxu0
  %v532 = vadd.f32 %v100, %v531
  %v533 = vpop.f32.mrf.mxu0
  %534 = vmatprep.mubr.bf16.mxu0 0
  %535 = vmatmul.mubr.bf16.gmra.mxu0 %v250
  %v536 = vpop.f32.mrf.mxu0
  %v537 = vadd.f32 %v100, %v536
  %v538 = vpop.f32.mrf.mxu0
  %v539 = vpop.f32.mrf.mxu0
  %v540 = vadd.f32 %v100, %v539
  %v541 = vpop.f32.mrf.mxu0
  %542 = vmatprep.mubr.bf16.mxu0 0
  %543 = vmatmul.mubr.bf16.gmra.mxu0 %v251
  %v544 = vpop.f32.mrf.mxu0
  %v545 = vadd.f32 %v100, %v544
  %v546 = vpop.f32.mrf.mxu0
  %v547 = vpop.f32.mrf.mxu0
  %v548 = vadd.f32 %v100, %v547
  %v549 = vpop.f32.mrf.mxu0
  %550 = vmatprep.mubr.bf16.mxu0 0
  %551 = vmatmul.mubr.bf16.gmra.mxu0 %v252
  %v552 = vpop.f32.mrf.mxu0
  %v553 = vadd.f32 %v100, %v552
  %v554 = vpop.f32.mrf.mxu0
  %v555 = vpop.f32.mrf.mxu0
  %v556 = vadd.f32 %v100, %v555
  %v557 = vpop.f32.mrf.mxu0
  %558 = vmatprep.mubr.bf16.mxu0 0
  %559 = vmatmul.mubr.bf16.gmra.mxu0 %v253
  %v560 = vpop.f32.mrf.mxu0
  %v561 = vadd.f32 %v100, %v560
  %v562 = vpop.f32.mrf.mxu0
  %v563 = vpop.f32.mrf.mxu0
  %v564 = vadd.f32 %v100, %v563
  %v565 = vpop.f32.mrf.mxu0
  %566 = vmatprep.mubr.bf16.mxu0 0
  %567 = vmatmul.mubr.bf16.gmra.mxu0 %v254
  %v568 = vpop.f32.mrf.mxu0
  %v569 = vadd.f32 %v100, %v568
  %v570 = vpop.f32.mrf.mxu0
  %v571 = vpop.f32.mrf.mxu0
  %v572 = vadd.f32 %v100, %v571
  %v573 = vpop.f32.mrf.mxu0
  %574 = vmatprep.mubr.bf16.mxu0 0
  %575 = vmatmul.mubr.bf16.gmra.mxu0 %v255
  %v576 = vpop.f32.mrf.mxu0
  %v577 = vadd.f32 %v100, %v576
  %v578 = vpop.f32.mrf.mxu0
  %v579 = vpop.f32.mrf.mxu0
  %v580 = vadd.f32 %v100, %v579
  %v581 = vpop.f32.mrf.mxu0
  %582 = vmatprep.mubr.bf16.mxu0 0
  %583 = vmatmul.mubr.bf16.gmra.mxu0 %v256
  %v584 = vpop.f32.mrf.mxu0
  %v585 = vadd.f32 %v100, %v584
  %v586 = vpop.f32.mrf.mxu0
  %v587 = vpop.f32.mrf.mxu0
  %v588 = vadd.f32 %v100, %v587
  %v589 = vpop.f32.mrf.mxu0
  %590 = vmatprep.mubr.bf16.mxu0 0
  %591 = vmatmul.mubr.bf16.gmra.mxu0 %v257
  %v592 = vpop.f32.mrf.mxu0
  %v593 = vadd.f32 %v100, %v592
  %v594 = vpop.f32.mrf.mxu0
  %v595 = vpop.f32.mrf.mxu0
  %v596 = vadd.f32 %v100, %v595
  %v597 = vpop.f32.mrf.mxu0
  %598 = vmatprep.mubr.bf16.mxu0 0
  %599 = vmatmul.mubr.bf16.gmra.mxu0 %v258
  %v600 = vpop.f32.mrf.mxu0
  %v601 = vadd.f32 %v100, %v600
  %v602 = vpop.f32.mrf.mxu0
  %v603 = vpop.f32.mrf.mxu0
  %v604 = vadd.f32 %v100, %v603
  %v605 = vpop.f32.mrf.mxu0
  %606 = vmatprep.mubr.bf16.mxu0 0
  %607 = vmatmul.mubr.bf16.gmra.mxu0 %v259
  %v608 = vpop.f32.mrf.mxu0
  %v609 = vadd.f32 %v100, %v608
  %v610 = vpop.f32.mrf.mxu0
  %v611 = vpop.f32.mrf.mxu0
  %v612 = vadd.f32 %v100, %v611
  %v613 = vpop.f32.mrf.mxu0
  %614 = vmatprep.mubr.bf16.mxu0 0
  %615 = vmatmul.mubr.bf16.gmra.mxu0 %v260
  %v616 = vpop.f32.mrf.mxu0
  %v617 = vadd.f32 %v100, %v616
  %v618 = vpop.f32.mrf.mxu0
  %v619 = vpop.f32.mrf.mxu0
  %v620 = vadd.f32 %v100, %v619
  %v621 = vpop.f32.mrf.mxu0
  %622 = vmatprep.mubr.bf16.mxu0 0
  %623 = vmatmul.mubr.bf16.gmra.mxu0 %v261
  %v624 = vpop.f32.mrf.mxu0
  %v625 = vadd.f32 %v100, %v624
  %v626 = vpop.f32.mrf.mxu0
  %v627 = vpop.f32.mrf.mxu0
  %v628 = vadd.f32 %v100, %v627
  %v629 = vpop.f32.mrf.mxu0
  %630 = vdwg.mxu0
  %vm631 = vcmask 130048
  %632 = vst.msk [vmem:[%s3] sm:$0xff] %vm631, %v377
  %633 = vst.msk [vmem:[%s3 + $0x8] sm:$0xff] %vm631, %v380
  %634 = vst.msk [vmem:[%s3 + $0x10] sm:$0xff] %vm631, %v385
  %635 = vst.msk [vmem:[%s3 + $0x18] sm:$0xff] %vm631, %v388
  %636 = vst.msk [vmem:[%s3 + $0x20] sm:$0xff] %vm631, %v393
  %637 = vst.msk [vmem:[%s3 + $0x28] sm:$0xff] %vm631, %v396
  %638 = vst.msk [vmem:[%s3 + $0x30] sm:$0xff] %vm631, %v401
  %639 = vst.msk [vmem:[%s3 + $0x38] sm:$0xff] %vm631, %v404
  %640 = vst.msk [vmem:[%s3 + $0x40] sm:$0xff] %vm631, %v409
  %641 = vst.msk [vmem:[%s3 + $0x48] sm:$0xff] %vm631, %v412
  %642 = vst.msk [vmem:[%s3 + $0x50] sm:$0xff] %vm631, %v417
  %643 = vst.msk [vmem:[%s3 + $0x58] sm:$0xff] %vm631, %v420
  %644 = vst.msk [vmem:[%s3 + $0x60] sm:$0xff] %vm631, %v425
  %645 = vst.msk [vmem:[%s3 + $0x68] sm:$0xff] %vm631, %v428
  %646 = vst.msk [vmem:[%s3 + $0x70] sm:$0xff] %vm631, %v433
  %647 = vst.msk [vmem:[%s3 + $0x78] sm:$0xff] %vm631, %v436
  %648 = vst.msk [vmem:[%s3 + $0x80] sm:$0xff] %vm631, %v441
  %649 = vst.msk [vmem:[%s3 + $0x88] sm:$0xff] %vm631, %v444
  %650 = vst.msk [vmem:[%s3 + $0x90] sm:$0xff] %vm631, %v449
  %651 = vst.msk [vmem:[%s3 + $0x98] sm:$0xff] %vm631, %v452
  %652 = vst.msk [vmem:[%s3 + $0xa0] sm:$0xff] %vm631, %v457
  %653 = vst.msk [vmem:[%s3 + $0xa8] sm:$0xff] %vm631, %v460
  %654 = vst.msk [vmem:[%s3 + $0xb0] sm:$0xff] %vm631, %v465
  %655 = vst.msk [vmem:[%s3 + $0xb8] sm:$0xff] %vm631, %v468
  %656 = vst.msk [vmem:[%s3 + $0xc0] sm:$0xff] %vm631, %v473
  %657 = vst.msk [vmem:[%s3 + $0xc8] sm:$0xff] %vm631, %v476
  %658 = vst.msk [vmem:[%s3 + $0xd0] sm:$0xff] %vm631, %v481
  %659 = vst.msk [vmem:[%s3 + $0xd8] sm:$0xff] %vm631, %v484
  %660 = vst.msk [vmem:[%s3 + $0xe0] sm:$0xff] %vm631, %v489
  %661 = vst.msk [vmem:[%s3 + $0xe8] sm:$0xff] %vm631, %v492
  %662 = vst.msk [vmem:[%s3 + $0xf0] sm:$0xff] %vm631, %v497
  %663 = vst.msk [vmem:[%s3 + $0xf8] sm:$0xff] %vm631, %v500
  %664 = vst.msk [vmem:[%s3 + $0x100] sm:$0xff] %vm631, %v505
  %665 = vst.msk [vmem:[%s3 + $0x108] sm:$0xff] %vm631, %v508
  %666 = vst.msk [vmem:[%s3 + $0x110] sm:$0xff] %vm631, %v513
  %667 = vst.msk [vmem:[%s3 + $0x118] sm:$0xff] %vm631, %v516
  %668 = vst.msk [vmem:[%s3 + $0x120] sm:$0xff] %vm631, %v521
  %669 = vst.msk [vmem:[%s3 + $0x128] sm:$0xff] %vm631, %v524
  %670 = vst.msk [vmem:[%s3 + $0x130] sm:$0xff] %vm631, %v529
  %671 = vst.msk [vmem:[%s3 + $0x138] sm:$0xff] %vm631, %v532
  %672 = vst.msk [vmem:[%s3 + $0x140] sm:$0xff] %vm631, %v537
  %673 = vst.msk [vmem:[%s3 + $0x148] sm:$0xff] %vm631, %v540
  %674 = vst.msk [vmem:[%s3 + $0x150] sm:$0xff] %vm631, %v545
  %675 = vst.msk [vmem:[%s3 + $0x158] sm:$0xff] %vm631, %v548
  %676 = vst.msk [vmem:[%s3 + $0x160] sm:$0xff] %vm631, %v553
  %677 = vst.msk [vmem:[%s3 + $0x168] sm:$0xff] %vm631, %v556
  %678 = vst.msk [vmem:[%s3 + $0x170] sm:$0xff] %vm631, %v561
  %679 = vst.msk [vmem:[%s3 + $0x178] sm:$0xff] %vm631, %v564
  %680 = vst.msk [vmem:[%s3 + $0x180] sm:$0xff] %vm631, %v569
  %681 = vst.msk [vmem:[%s3 + $0x188] sm:$0xff] %vm631, %v572
  %682 = vst.msk [vmem:[%s3 + $0x190] sm:$0xff] %vm631, %v577
  %683 = vst.msk [vmem:[%s3 + $0x198] sm:$0xff] %vm631, %v580
  %684 = vst.msk [vmem:[%s3 + $0x1a0] sm:$0xff] %vm631, %v585
  %685 = vst.msk [vmem:[%s3 + $0x1a8] sm:$0xff] %vm631, %v588
  %686 = vst.msk [vmem:[%s3 + $0x1b0] sm:$0xff] %vm631, %v593
  %687 = vst.msk [vmem:[%s3 + $0x1b8] sm:$0xff] %vm631, %v596
  %688 = vst.msk [vmem:[%s3 + $0x1c0] sm:$0xff] %vm631, %v601
  %689 = vst.msk [vmem:[%s3 + $0x1c8] sm:$0xff] %vm631, %v604
  %690 = vst.msk [vmem:[%s3 + $0x1d0] sm:$0xff] %vm631, %v609
  %691 = vst.msk [vmem:[%s3 + $0x1d8] sm:$0xff] %vm631, %v612
  %692 = vst.msk [vmem:[%s3 + $0x1e0] sm:$0xff] %vm631, %v617
  %693 = vst.msk [vmem:[%s3 + $0x1e8] sm:$0xff] %vm631, %v620
  %694 = vst.msk [vmem:[%s3 + $0x1f0] sm:$0xff] %vm631, %v625
  %695 = vst.msk [vmem:[%s3 + $0x1f8] sm:$0xff] %vm631, %v628
  // Predicated region
  $region14: #{unet_forward.13} parent=0 // pred_check
    _
  $region15: #{unet_forward.13} parent=0 // pred_check_branch
    %697 = sbr.rel (0) target = $region17
  $region16: #{unet_forward.13} parent=0 // pred_region
    _
  $region17: #{unet_forward.13} parent=0 // pred_fallthru
    _
  // Predicated region
  $region18: #{unet_forward.13} parent=0 // pred_check
    _
  $region19: #{unet_forward.13} parent=0 // pred_check_branch
    %699 = sbr.rel (0) target = $region21
  $region20: #{unet_forward.13} parent=0 // pred_region
    _
  $region21: #{unet_forward.13} parent=0 // pred_fallthru
    _

// kernel: unet_forward.14
$region0: #{unet_forward.14}
  #allocation0 [shape = 'u32[]', space=smem, size = 0x4, offset = 0x4, fixed_abs, tag = 'smem constant byte address 0x4 - core index']
  #allocation1 [shape = 'u32[144,128]{1,0:T(1,128)}', space=vmem, size = 0x12000, scoped, tag = 'internal scratch']
  %s0 = inlined_call_operand.vmem [shape: bf16[1,128,256], index: 0, kind: input, shape index: {}]
  %s1 = inlined_call_operand.vmem [shape: bf16[1,256,32], index: 1, kind: input, shape index: {}]
  %s2 = inlined_call_operand.vmem [shape: f32[1,32], index: 2, kind: input, shape index: {}]
  %s3 = inlined_call_operand.vmem [shape: f32[1,128,32], index: 3, kind: output, shape index: {}]
  %s4 = sld [smem:[#allocation0]]
  $region22: #{unet_forward.14} parent=0
    _
  %s6 = ssub.s32 1, %s4
  %s7 = scalar_select 0, %s6, %s4
  // Predicated region
  $region2: #{unet_forward.14} parent=0 // pred_check
    _
  $region3: #{unet_forward.14} parent=0 // pred_check_branch
    %9 = sbr.rel (0) target = $region5
  $region4: #{unet_forward.14} parent=0 // pred_region
    _
  $region5: #{unet_forward.14} parent=0 // pred_fallthru
    _
  // Predicated region
  $region6: #{unet_forward.14} parent=0 // pred_check
    _
  $region7: #{unet_forward.14} parent=0 // pred_check_branch
    %11 = sbr.rel (0) target = $region9
  $region8: #{unet_forward.14} parent=0 // pred_region
    _
  $region9: #{unet_forward.14} parent=0 // pred_fallthru
    _
  // Predicated region
  $region10: #{unet_forward.14} parent=0 // pred_check
    _
  $region11: #{unet_forward.14} parent=0 // pred_check_branch
    %13 = sbr.rel (0) target = $region13
  $region12: #{unet_forward.14} parent=0 // pred_region
    _
  $region13: #{unet_forward.14} parent=0 // pred_fallthru
    _
  %v15 = vld [vmem:[%s0] sm:$0xff]
  %v16 = vld [vmem:[%s0 + $0x8] sm:$0xff]
  %v17 = vld [vmem:[%s0 + $0x10] sm:$0xff]
  %v18 = vld [vmem:[%s0 + $0x18] sm:$0xff]
  %v19 = vld [vmem:[%s0 + $0x20] sm:$0xff]
  %v20 = vld [vmem:[%s0 + $0x28] sm:$0xff]
  %v21 = vld [vmem:[%s0 + $0x30] sm:$0xff]
  %v22 = vld [vmem:[%s0 + $0x38] sm:$0xff]
  %v23 = vld [vmem:[%s0 + $0x40] sm:$0xff]
  %v24 = vld [vmem:[%s0 + $0x48] sm:$0xff]
  %v25 = vld [vmem:[%s0 + $0x50] sm:$0xff]
  %v26 = vld [vmem:[%s0 + $0x58] sm:$0xff]
  %v27 = vld [vmem:[%s0 + $0x60] sm:$0xff]
  %v28 = vld [vmem:[%s0 + $0x68] sm:$0xff]
  %v29 = vld [vmem:[%s0 + $0x70] sm:$0xff]
  %v30 = vld [vmem:[%s0 + $0x78] sm:$0xff]
  %v31 = vld [vmem:[%s1] sm:$0xf]
  %v32 = vld [vmem:[%s1 + $0x4] sm:$0xf]
  %v33 = vld [vmem:[%s1 + $0x8] sm:$0xf]
  %v34 = vld [vmem:[%s1 + $0xc] sm:$0xf]
  %v35 = vld [vmem:[%s1 + $0x10] sm:$0xf]
  %v36 = vld [vmem:[%s1 + $0x14] sm:$0xf]
  %v37 = vld [vmem:[%s1 + $0x18] sm:$0xf]
  %v38 = vld [vmem:[%s1 + $0x1c] sm:$0xf]
  %v39 = vld [vmem:[%s1 + $0x20] sm:$0xf]
  %v40 = vld [vmem:[%s1 + $0x24] sm:$0xf]
  %v41 = vld [vmem:[%s1 + $0x28] sm:$0xf]
  %v42 = vld [vmem:[%s1 + $0x2c] sm:$0xf]
  %v43 = vld [vmem:[%s1 + $0x30] sm:$0xf]
  %v44 = vld [vmem:[%s1 + $0x34] sm:$0xf]
  %v45 = vld [vmem:[%s1 + $0x38] sm:$0xf]
  %v46 = vld [vmem:[%s1 + $0x3c] sm:$0xf]
  %v47 = vld [vmem:[%s1 + $0x40] sm:$0xf]
  %v48 = vld [vmem:[%s1 + $0x44] sm:$0xf]
  %v49 = vld [vmem:[%s1 + $0x48] sm:$0xf]
  %v50 = vld [vmem:[%s1 + $0x4c] sm:$0xf]
  %v51 = vld [vmem:[%s1 + $0x50] sm:$0xf]
  %v52 = vld [vmem:[%s1 + $0x54] sm:$0xf]
  %v53 = vld [vmem:[%s1 + $0x58] sm:$0xf]
  %v54 = vld [vmem:[%s1 + $0x5c] sm:$0xf]
  %v55 = vld [vmem:[%s1 + $0x60] sm:$0xf]
  %v56 = vld [vmem:[%s1 + $0x64] sm:$0xf]
  %v57 = vld [vmem:[%s1 + $0x68] sm:$0xf]
  %v58 = vld [vmem:[%s1 + $0x6c] sm:$0xf]
  %v59 = vld [vmem:[%s1 + $0x70] sm:$0xf]
  %v60 = vld [vmem:[%s1 + $0x74] sm:$0xf]
  %v61 = vld [vmem:[%s1 + $0x78] sm:$0xf]
  %v62 = vld [vmem:[%s1 + $0x7c] sm:$0xf]
  %v63 = vld [vmem:[%s2] sm:$0x1]
  %v65 = vlaneseq
  %v66 = vshrl.u32 %v65, 7
  %v67 = vsub.s32 0, %v66
  %v68 = vrot.slane %v63, %v67
  %v86 = vunpack.c.l.b16 %v15
  %v87 = vunpack.c.h.b16 %v15
  %v88 = vunpack.c.l.b16 %v16
  %v89 = vunpack.c.h.b16 %v16
  %v90 = vunpack.c.l.b16 %v17
  %v91 = vunpack.c.h.b16 %v17
  %v92 = vunpack.c.l.b16 %v18
  %v93 = vunpack.c.h.b16 %v18
  %v94 = vunpack.c.l.b16 %v19
  %v95 = vunpack.c.h.b16 %v19
  %v96 = vunpack.c.l.b16 %v20
  %v97 = vunpack.c.h.b16 %v20
  %v98 = vunpack.c.l.b16 %v21
  %v99 = vunpack.c.h.b16 %v21
  %v100 = vunpack.c.l.b16 %v22
  %v101 = vunpack.c.h.b16 %v22
  %v102 = vunpack.c.l.b16 %v23
  %v103 = vunpack.c.h.b16 %v23
  %v104 = vunpack.c.l.b16 %v24
  %v105 = vunpack.c.h.b16 %v24
  %v106 = vunpack.c.l.b16 %v25
  %v107 = vunpack.c.h.b16 %v25
  %v108 = vunpack.c.l.b16 %v26
  %v109 = vunpack.c.h.b16 %v26
  %v110 = vunpack.c.l.b16 %v27
  %v111 = vunpack.c.h.b16 %v27
  %v112 = vunpack.c.l.b16 %v28
  %v113 = vunpack.c.h.b16 %v28
  %v114 = vunpack.c.l.b16 %v29
  %v115 = vunpack.c.h.b16 %v29
  %v116 = vunpack.c.l.b16 %v30
  %v117 = vunpack.c.h.b16 %v30
  %v118 = vpack.c.b16 %v88, %v86
  %v119 = vpack.c.b16 %v89, %v87
  %v120 = vpack.c.b16 %v92, %v90
  %v121 = vpack.c.b16 %v93, %v91
  %v122 = vpack.c.b16 %v96, %v94
  %v123 = vpack.c.b16 %v97, %v95
  %v124 = vpack.c.b16 %v100, %v98
  %v125 = vpack.c.b16 %v101, %v99
  %v126 = vpack.c.b16 %v104, %v102
  %v127 = vpack.c.b16 %v105, %v103
  %v128 = vpack.c.b16 %v108, %v106
  %v129 = vpack.c.b16 %v109, %v107
  %v130 = vpack.c.b16 %v112, %v110
  %v131 = vpack.c.b16 %v113, %v111
  %v132 = vpack.c.b16 %v116, %v114
  %v133 = vpack.c.b16 %v117, %v115
  %v182 = vunpack.c.l.b16 %v31
  %v183 = vunpack.c.l.b16 %v32
  %v184 = vunpack.c.l.b16 %v33
  %v185 = vunpack.c.l.b16 %v34
  %v186 = vunpack.c.l.b16 %v35
  %v187 = vunpack.c.l.b16 %v36
  %v188 = vunpack.c.l.b16 %v37
  %v189 = vunpack.c.l.b16 %v38
  %v190 = vunpack.c.l.b16 %v39
  %v191 = vunpack.c.l.b16 %v40
  %v192 = vunpack.c.l.b16 %v41
  %v193 = vunpack.c.l.b16 %v42
  %v194 = vunpack.c.l.b16 %v43
  %v195 = vunpack.c.l.b16 %v44
  %v196 = vunpack.c.l.b16 %v45
  %v197 = vunpack.c.l.b16 %v46
  %v198 = vunpack.c.l.b16 %v47
  %v199 = vunpack.c.l.b16 %v48
  %v200 = vunpack.c.l.b16 %v49
  %v201 = vunpack.c.l.b16 %v50
  %v202 = vunpack.c.l.b16 %v51
  %v203 = vunpack.c.l.b16 %v52
  %v204 = vunpack.c.l.b16 %v53
  %v205 = vunpack.c.l.b16 %v54
  %v206 = vunpack.c.l.b16 %v55
  %v207 = vunpack.c.l.b16 %v56
  %v208 = vunpack.c.l.b16 %v57
  %v209 = vunpack.c.l.b16 %v58
  %v210 = vunpack.c.l.b16 %v59
  %v211 = vunpack.c.l.b16 %v60
  %v212 = vunpack.c.l.b16 %v61
  %v213 = vunpack.c.l.b16 %v62
  %v214 = vpack.c.b16 %v183, %v182
  %v215 = vpack.c.b16 %v185, %v184
  %v216 = vpack.c.b16 %v187, %v186
  %v217 = vpack.c.b16 %v189, %v188
  %v218 = vpack.c.b16 %v191, %v190
  %v219 = vpack.c.b16 %v193, %v192
  %v220 = vpack.c.b16 %v195, %v194
  %v221 = vpack.c.b16 %v197, %v196
  %v222 = vpack.c.b16 %v199, %v198
  %v223 = vpack.c.b16 %v201, %v200
  %v224 = vpack.c.b16 %v203, %v202
  %v225 = vpack.c.b16 %v205, %v204
  %v226 = vpack.c.b16 %v207, %v206
  %v227 = vpack.c.b16 %v209, %v208
  %v228 = vpack.c.b16 %v211, %v210
  %v229 = vpack.c.b16 %v213, %v212
  %246 = vmatprep.subr.bf16.mxu0 0
  %247 = vmatpush1.bf16.msra.mxu0 %v221
  %248 = vmatprep.subr.bf16.mxu0 0
  %249 = vmatpush1.bf16.msra.mxu0 %v220
  %250 = vmatprep.subr.bf16.mxu0 0
  %251 = vmatpush1.bf16.msra.mxu0 %v219
  %252 = vmatprep.subr.bf16.mxu0 0
  %253 = vmatpush1.bf16.msra.mxu0 %v218
  %254 = vmatprep.subr.bf16.mxu0 0
  %255 = vmatpush1.bf16.msra.mxu0 %v217
  %256 = vmatprep.subr.bf16.mxu0 0
  %257 = vmatpush1.bf16.msra.mxu0 %v216
  %258 = vmatprep.subr.bf16.mxu0 0
  %259 = vmatpush1.bf16.msra.mxu0 %v215
  %260 = vmatprep.subr.bf16.mxu0 0
  %261 = vmatpush1.bf16.msra.mxu0 %v214
  %262 = vmatprep.subr.bf16.mxu0 0
  %263 = vmatpush2.bf16.msra.mxu0 %v229
  %264 = vmatprep.subr.bf16.mxu0 0
  %265 = vmatpush2.bf16.msra.mxu0 %v228
  %266 = vmatprep.subr.bf16.mxu0 0
  %267 = vmatpush2.bf16.msra.mxu0 %v227
  %268 = vmatprep.subr.bf16.mxu0 0
  %269 = vmatpush2.bf16.msra.mxu0 %v226
  %270 = vmatprep.subr.bf16.mxu0 0
  %271 = vmatpush2.bf16.msra.mxu0 %v225
  %272 = vmatprep.subr.bf16.mxu0 0
  %273 = vmatpush2.bf16.msra.mxu0 %v224
  %274 = vmatprep.subr.bf16.mxu0 0
  %275 = vmatpush2.bf16.msra.mxu0 %v223
  %276 = vmatprep.subr.bf16.mxu0 0
  %277 = vmatpush2.bf16.msra.mxu0 %v222
  %278 = vmatprep.mubr.bf16.mxu0 %v119
  %279 = vmatmul.mubr.bf16.gmra.mxu0 %v118
  %v280 = vpop.f32.mrf.mxu0
  %v281 = vadd.f32 %v68, %v280
  %v282 = vpop.f32.mrf.mxu0
  %v283 = vpop.f32.mrf.mxu0
  %v284 = vadd.f32 %v68, %v283
  %v285 = vpop.f32.mrf.mxu0
  %286 = vmatprep.mubr.bf16.mxu0 %v121
  %287 = vmatmul.mubr.bf16.gmra.mxu0 %v120
  %v288 = vpop.f32.mrf.mxu0
  %v289 = vadd.f32 %v68, %v288
  %v290 = vpop.f32.mrf.mxu0
  %v291 = vpop.f32.mrf.mxu0
  %v292 = vadd.f32 %v68, %v291
  %v293 = vpop.f32.mrf.mxu0
  %294 = vmatprep.mubr.bf16.mxu0 %v123
  %295 = vmatmul.mubr.bf16.gmra.mxu0 %v122
  %v296 = vpop.f32.mrf.mxu0
  %v297 = vadd.f32 %v68, %v296
  %v298 = vpop.f32.mrf.mxu0
  %v299 = vpop.f32.mrf.mxu0
  %v300 = vadd.f32 %v68, %v299
  %v301 = vpop.f32.mrf.mxu0
  %302 = vmatprep.mubr.bf16.mxu0 %v125
  %303 = vmatmul.mubr.bf16.gmra.mxu0 %v124
  %v304 = vpop.f32.mrf.mxu0
  %v305 = vadd.f32 %v68, %v304
  %v306 = vpop.f32.mrf.mxu0
  %v307 = vpop.f32.mrf.mxu0
  %v308 = vadd.f32 %v68, %v307
  %v309 = vpop.f32.mrf.mxu0
  %310 = vmatprep.mubr.bf16.mxu0 %v127
  %311 = vmatmul.mubr.bf16.gmra.mxu0 %v126
  %v312 = vpop.f32.mrf.mxu0
  %v313 = vadd.f32 %v68, %v312
  %v314 = vpop.f32.mrf.mxu0
  %v315 = vpop.f32.mrf.mxu0
  %v316 = vadd.f32 %v68, %v315
  %v317 = vpop.f32.mrf.mxu0
  %318 = vmatprep.mubr.bf16.mxu0 %v129
  %319 = vmatmul.mubr.bf16.gmra.mxu0 %v128
  %v320 = vpop.f32.mrf.mxu0
  %v321 = vadd.f32 %v68, %v320
  %v322 = vpop.f32.mrf.mxu0
  %v323 = vpop.f32.mrf.mxu0
  %v324 = vadd.f32 %v68, %v323
  %v325 = vpop.f32.mrf.mxu0
  %326 = vmatprep.mubr.bf16.mxu0 %v131
  %327 = vmatmul.mubr.bf16.gmra.mxu0 %v130
  %v328 = vpop.f32.mrf.mxu0
  %v329 = vadd.f32 %v68, %v328
  %v330 = vpop.f32.mrf.mxu0
  %v331 = vpop.f32.mrf.mxu0
  %v332 = vadd.f32 %v68, %v331
  %v333 = vpop.f32.mrf.mxu0
  %334 = vmatprep.mubr.bf16.mxu0 %v133
  %335 = vmatmul.mubr.bf16.gmra.mxu0 %v132
  %v336 = vpop.f32.mrf.mxu0
  %v337 = vadd.f32 %v68, %v336
  %v338 = vpop.f32.mrf.mxu0
  %v339 = vpop.f32.mrf.mxu0
  %v340 = vadd.f32 %v68, %v339
  %v341 = vpop.f32.mrf.mxu0
  %342 = vdwg.mxu0
  %vm343 = vcmask 261120
  %344 = vst.msk [vmem:[%s3] sm:$0xff] %vm343, %v281
  %345 = vst.msk [vmem:[%s3 + $0x8] sm:$0xff] %vm343, %v284
  %346 = vst.msk [vmem:[%s3 + $0x10] sm:$0xff] %vm343, %v289
  %347 = vst.msk [vmem:[%s3 + $0x18] sm:$0xff] %vm343, %v292
  %348 = vst.msk [vmem:[%s3 + $0x20] sm:$0xff] %vm343, %v297
  %349 = vst.msk [vmem:[%s3 + $0x28] sm:$0xff] %vm343, %v300
  %350 = vst.msk [vmem:[%s3 + $0x30] sm:$0xff] %vm343, %v305
  %351 = vst.msk [vmem:[%s3 + $0x38] sm:$0xff] %vm343, %v308
  %352 = vst.msk [vmem:[%s3 + $0x40] sm:$0xff] %vm343, %v313
  %353 = vst.msk [vmem:[%s3 + $0x48] sm:$0xff] %vm343, %v316
  %354 = vst.msk [vmem:[%s3 + $0x50] sm:$0xff] %vm343, %v321
  %355 = vst.msk [vmem:[%s3 + $0x58] sm:$0xff] %vm343, %v324
  %356 = vst.msk [vmem:[%s3 + $0x60] sm:$0xff] %vm343, %v329
  %357 = vst.msk [vmem:[%s3 + $0x68] sm:$0xff] %vm343, %v332
  %358 = vst.msk [vmem:[%s3 + $0x70] sm:$0xff] %vm343, %v337
  %359 = vst.msk [vmem:[%s3 + $0x78] sm:$0xff] %vm343, %v340
  // Predicated region
  $region14: #{unet_forward.14} parent=0 // pred_check
    _
  $region15: #{unet_forward.14} parent=0 // pred_check_branch
    %361 = sbr.rel (0) target = $region17
  $region16: #{unet_forward.14} parent=0 // pred_region
    _
  $region17: #{unet_forward.14} parent=0 // pred_fallthru
    _
  // Predicated region
  $region18: #{unet_forward.14} parent=0 // pred_check
    _
  $region19: #{unet_forward.14} parent=0 // pred_check_branch
    %363 = sbr.rel (0) target = $region21
  $region20: #{unet_forward.14} parent=0 // pred_region
    _
  $region21: #{unet_forward.14} parent=0 // pred_fallthru
    _

// kernel: unet_forward.15
$region0: #{unet_forward.15}
  #allocation0 [shape = 'u32[]', space=smem, size = 0x4, offset = 0x4, fixed_abs, tag = 'smem constant byte address 0x4 - core index']
  #allocation1 [shape = 'u32[144,128]{1,0:T(1,128)}', space=vmem, size = 0x12000, scoped, tag = 'internal scratch']
  %s0 = inlined_call_operand.vmem [shape: bf16[1,32,512], index: 0, kind: input, shape index: {}]
  %s1 = inlined_call_operand.vmem [shape: bf16[1,512,64], index: 1, kind: input, shape index: {}]
  %s2 = inlined_call_operand.vmem [shape: f32[1,64], index: 2, kind: input, shape index: {}]
  %s3 = inlined_call_operand.vmem [shape: f32[1,32,64], index: 3, kind: output, shape index: {}]
  %s4 = sld [smem:[#allocation0]]
  $region22: #{unet_forward.15} parent=0
    _
  %s6 = ssub.s32 1, %s4
  %s7 = scalar_select 0, %s6, %s4
  // Predicated region
  $region2: #{unet_forward.15} parent=0 // pred_check
    _
  $region3: #{unet_forward.15} parent=0 // pred_check_branch
    %9 = sbr.rel (0) target = $region5
  $region4: #{unet_forward.15} parent=0 // pred_region
    _
  $region5: #{unet_forward.15} parent=0 // pred_fallthru
    _
  // Predicated region
  $region6: #{unet_forward.15} parent=0 // pred_check
    _
  $region7: #{unet_forward.15} parent=0 // pred_check_branch
    %11 = sbr.rel (0) target = $region9
  $region8: #{unet_forward.15} parent=0 // pred_region
    _
  $region9: #{unet_forward.15} parent=0 // pred_fallthru
    _
  // Predicated region
  $region10: #{unet_forward.15} parent=0 // pred_check
    _
  $region11: #{unet_forward.15} parent=0 // pred_check_branch
    %13 = sbr.rel (0) target = $region13
  $region12: #{unet_forward.15} parent=0 // pred_region
    _
  $region13: #{unet_forward.15} parent=0 // pred_fallthru
    _
  %v15 = vld [vmem:[%s0] sm:$0xff]
  %v16 = vld [vmem:[%s0 + $0x8] sm:$0xff]
  %v17 = vld [vmem:[%s0 + $0x10] sm:$0xff]
  %v18 = vld [vmem:[%s0 + $0x18] sm:$0xff]
  %v19 = vld [vmem:[%s0 + $0x20] sm:$0xff]
  %v20 = vld [vmem:[%s0 + $0x28] sm:$0xff]
  %v21 = vld [vmem:[%s0 + $0x30] sm:$0xff]
  %v22 = vld [vmem:[%s0 + $0x38] sm:$0xff]
  %v23 = vld [vmem:[%s1] sm:$0xf]
  %v24 = vld [vmem:[%s1 + $0x4] sm:$0xf]
  %v25 = vld [vmem:[%s1 + $0x8] sm:$0xf]
  %v26 = vld [vmem:[%s1 + $0xc] sm:$0xf]
  %v27 = vld [vmem:[%s1 + $0x10] sm:$0xf]
  %v28 = vld [vmem:[%s1 + $0x14] sm:$0xf]
  %v29 = vld [vmem:[%s1 + $0x18] sm:$0xf]
  %v30 = vld [vmem:[%s1 + $0x1c] sm:$0xf]
  %v31 = vld [vmem:[%s1 + $0x20] sm:$0xf]
  %v32 = vld [vmem:[%s1 + $0x24] sm:$0xf]
  %v33 = vld [vmem:[%s1 + $0x28] sm:$0xf]
  %v34 = vld [vmem:[%s1 + $0x2c] sm:$0xf]
  %v35 = vld [vmem:[%s1 + $0x30] sm:$0xf]
  %v36 = vld [vmem:[%s1 + $0x34] sm:$0xf]
  %v37 = vld [vmem:[%s1 + $0x38] sm:$0xf]
  %v38 = vld [vmem:[%s1 + $0x3c] sm:$0xf]
  %v39 = vld [vmem:[%s1 + $0x40] sm:$0xf]
  %v40 = vld [vmem:[%s1 + $0x44] sm:$0xf]
  %v41 = vld [vmem:[%s1 + $0x48] sm:$0xf]
  %v42 = vld [vmem:[%s1 + $0x4c] sm:$0xf]
  %v43 = vld [vmem:[%s1 + $0x50] sm:$0xf]
  %v44 = vld [vmem:[%s1 + $0x54] sm:$0xf]
  %v45 = vld [vmem:[%s1 + $0x58] sm:$0xf]
  %v46 = vld [vmem:[%s1 + $0x5c] sm:$0xf]
  %v47 = vld [vmem:[%s1 + $0x60] sm:$0xf]
  %v48 = vld [vmem:[%s1 + $0x64] sm:$0xf]
  %v49 = vld [vmem:[%s1 + $0x68] sm:$0xf]
  %v50 = vld [vmem:[%s1 + $0x6c] sm:$0xf]
  %v51 = vld [vmem:[%s1 + $0x70] sm:$0xf]
  %v52 = vld [vmem:[%s1 + $0x74] sm:$0xf]
  %v53 = vld [vmem:[%s1 + $0x78] sm:$0xf]
  %v54 = vld [vmem:[%s1 + $0x7c] sm:$0xf]
  %v55 = vld [vmem:[%s1 + $0x80] sm:$0xf]
  %v56 = vld [vmem:[%s1 + $0x84] sm:$0xf]
  %v57 = vld [vmem:[%s1 + $0x88] sm:$0xf]
  %v58 = vld [vmem:[%s1 + $0x8c] sm:$0xf]
  %v59 = vld [vmem:[%s1 + $0x90] sm:$0xf]
  %v60 = vld [vmem:[%s1 + $0x94] sm:$0xf]
  %v61 = vld [vmem:[%s1 + $0x98] sm:$0xf]
  %v62 = vld [vmem:[%s1 + $0x9c] sm:$0xf]
  %v63 = vld [vmem:[%s1 + $0xa0] sm:$0xf]
  %v64 = vld [vmem:[%s1 + $0xa4] sm:$0xf]
  %v65 = vld [vmem:[%s1 + $0xa8] sm:$0xf]
  %v66 = vld [vmem:[%s1 + $0xac] sm:$0xf]
  %v67 = vld [vmem:[%s1 + $0xb0] sm:$0xf]
  %v68 = vld [vmem:[%s1 + $0xb4] sm:$0xf]
  %v69 = vld [vmem:[%s1 + $0xb8] sm:$0xf]
  %v70 = vld [vmem:[%s1 + $0xbc] sm:$0xf]
  %v71 = vld [vmem:[%s1 + $0xc0] sm:$0xf]
  %v72 = vld [vmem:[%s1 + $0xc4] sm:$0xf]
  %v73 = vld [vmem:[%s1 + $0xc8] sm:$0xf]
  %v74 = vld [vmem:[%s1 + $0xcc] sm:$0xf]
  %v75 = vld [vmem:[%s1 + $0xd0] sm:$0xf]
  %v76 = vld [vmem:[%s1 + $0xd4] sm:$0xf]
  %v77 = vld [vmem:[%s1 + $0xd8] sm:$0xf]
  %v78 = vld [vmem:[%s1 + $0xdc] sm:$0xf]
  %v79 = vld [vmem:[%s1 + $0xe0] sm:$0xf]
  %v80 = vld [vmem:[%s1 + $0xe4] sm:$0xf]
  %v81 = vld [vmem:[%s1 + $0xe8] sm:$0xf]
  %v82 = vld [vmem:[%s1 + $0xec] sm:$0xf]
  %v83 = vld [vmem:[%s1 + $0xf0] sm:$0xf]
  %v84 = vld [vmem:[%s1 + $0xf4] sm:$0xf]
  %v85 = vld [vmem:[%s1 + $0xf8] sm:$0xf]
  %v86 = vld [vmem:[%s1 + $0xfc] sm:$0xf]
  %v87 = vld [vmem:[%s2] sm:$0x1]
  %v89 = vlaneseq
  %v90 = vshrl.u32 %v89, 7
  %v91 = vsub.s32 0, %v90
  %v92 = vrot.slane %v87, %v91
  %v102 = vunpack.c.l.b16 %v15
  %v103 = vunpack.c.h.b16 %v15
  %v104 = vunpack.c.l.b16 %v16
  %v105 = vunpack.c.h.b16 %v16
  %v106 = vunpack.c.l.b16 %v17
  %v107 = vunpack.c.h.b16 %v17
  %v108 = vunpack.c.l.b16 %v18
  %v109 = vunpack.c.h.b16 %v18
  %v110 = vunpack.c.l.b16 %v19
  %v111 = vunpack.c.h.b16 %v19
  %v112 = vunpack.c.l.b16 %v20
  %v113 = vunpack.c.h.b16 %v20
  %v114 = vunpack.c.l.b16 %v21
  %v115 = vunpack.c.h.b16 %v21
  %v116 = vunpack.c.l.b16 %v22
  %v117 = vunpack.c.h.b16 %v22
  %v118 = vpack.c.b16 %v106, %v102
  %v119 = vpack.c.b16 %v107, %v103
  %v120 = vpack.c.b16 %v108, %v104
  %v121 = vpack.c.b16 %v109, %v105
  %v122 = vpack.c.b16 %v114, %v110
  %v123 = vpack.c.b16 %v115, %v111
  %v124 = vpack.c.b16 %v116, %v112
  %v125 = vpack.c.b16 %v117, %v113
  %v198 = vunpack.c.l.b16 %v23
  %v199 = vunpack.c.l.b16 %v24
  %v200 = vunpack.c.l.b16 %v25
  %v201 = vunpack.c.l.b16 %v26
  %v202 = vunpack.c.l.b16 %v27
  %v203 = vunpack.c.l.b16 %v28
  %v204 = vunpack.c.l.b16 %v29
  %v205 = vunpack.c.l.b16 %v30
  %v206 = vunpack.c.l.b16 %v31
  %v207 = vunpack.c.l.b16 %v32
  %v208 = vunpack.c.l.b16 %v33
  %v209 = vunpack.c.l.b16 %v34
  %v210 = vunpack.c.l.b16 %v35
  %v211 = vunpack.c.l.b16 %v36
  %v212 = vunpack.c.l.b16 %v37
  %v213 = vunpack.c.l.b16 %v38
  %v214 = vunpack.c.l.b16 %v39
  %v215 = vunpack.c.l.b16 %v40
  %v216 = vunpack.c.l.b16 %v41
  %v217 = vunpack.c.l.b16 %v42
  %v218 = vunpack.c.l.b16 %v43
  %v219 = vunpack.c.l.b16 %v44
  %v220 = vunpack.c.l.b16 %v45
  %v221 = vunpack.c.l.b16 %v46
  %v222 = vunpack.c.l.b16 %v47
  %v223 = vunpack.c.l.b16 %v48
  %v224 = vunpack.c.l.b16 %v49
  %v225 = vunpack.c.l.b16 %v50
  %v226 = vunpack.c.l.b16 %v51
  %v227 = vunpack.c.l.b16 %v52
  %v228 = vunpack.c.l.b16 %v53
  %v229 = vunpack.c.l.b16 %v54
  %v230 = vunpack.c.l.b16 %v55
  %v231 = vunpack.c.l.b16 %v56
  %v232 = vunpack.c.l.b16 %v57
  %v233 = vunpack.c.l.b16 %v58
  %v234 = vunpack.c.l.b16 %v59
  %v235 = vunpack.c.l.b16 %v60
  %v236 = vunpack.c.l.b16 %v61
  %v237 = vunpack.c.l.b16 %v62
  %v238 = vunpack.c.l.b16 %v63
  %v239 = vunpack.c.l.b16 %v64
  %v240 = vunpack.c.l.b16 %v65
  %v241 = vunpack.c.l.b16 %v66
  %v242 = vunpack.c.l.b16 %v67
  %v243 = vunpack.c.l.b16 %v68
  %v244 = vunpack.c.l.b16 %v69
  %v245 = vunpack.c.l.b16 %v70
  %v246 = vunpack.c.l.b16 %v71
  %v247 = vunpack.c.l.b16 %v72
  %v248 = vunpack.c.l.b16 %v73
  %v249 = vunpack.c.l.b16 %v74
  %v250 = vunpack.c.l.b16 %v75
  %v251 = vunpack.c.l.b16 %v76
  %v252 = vunpack.c.l.b16 %v77
  %v253 = vunpack.c.l.b16 %v78
  %v254 = vunpack.c.l.b16 %v79
  %v255 = vunpack.c.l.b16 %v80
  %v256 = vunpack.c.l.b16 %v81
  %v257 = vunpack.c.l.b16 %v82
  %v258 = vunpack.c.l.b16 %v83
  %v259 = vunpack.c.l.b16 %v84
  %v260 = vunpack.c.l.b16 %v85
  %v261 = vunpack.c.l.b16 %v86
  %v262 = vpack.c.b16 %v199, %v198
  %v263 = vpack.c.b16 %v201, %v200
  %v264 = vpack.c.b16 %v203, %v202
  %v265 = vpack.c.b16 %v205, %v204
  %v266 = vpack.c.b16 %v207, %v206
  %v267 = vpack.c.b16 %v209, %v208
  %v268 = vpack.c.b16 %v211, %v210
  %v269 = vpack.c.b16 %v213, %v212
  %v270 = vpack.c.b16 %v215, %v214
  %v271 = vpack.c.b16 %v217, %v216
  %v272 = vpack.c.b16 %v219, %v218
  %v273 = vpack.c.b16 %v221, %v220
  %v274 = vpack.c.b16 %v223, %v222
  %v275 = vpack.c.b16 %v225, %v224
  %v276 = vpack.c.b16 %v227, %v226
  %v277 = vpack.c.b16 %v229, %v228
  %v278 = vpack.c.b16 %v231, %v230
  %v279 = vpack.c.b16 %v233, %v232
  %v280 = vpack.c.b16 %v235, %v234
  %v281 = vpack.c.b16 %v237, %v236
  %v282 = vpack.c.b16 %v239, %v238
  %v283 = vpack.c.b16 %v241, %v240
  %v284 = vpack.c.b16 %v243, %v242
  %v285 = vpack.c.b16 %v245, %v244
  %v286 = vpack.c.b16 %v247, %v246
  %v287 = vpack.c.b16 %v249, %v248
  %v288 = vpack.c.b16 %v251, %v250
  %v289 = vpack.c.b16 %v253, %v252
  %v290 = vpack.c.b16 %v255, %v254
  %v291 = vpack.c.b16 %v257, %v256
  %v292 = vpack.c.b16 %v259, %v258
  %v293 = vpack.c.b16 %v261, %v260
  %326 = vmatprep.subr.bf16.mxu0 0
  %327 = vmatpush1.bf16.msra.mxu0 %v269
  %328 = vmatprep.subr.bf16.mxu0 0
  %329 = vmatpush1.bf16.msra.mxu0 %v268
  %330 = vmatprep.subr.bf16.mxu0 0
  %331 = vmatpush1.bf16.msra.mxu0 %v267
  %332 = vmatprep.subr.bf16.mxu0 0
  %333 = vmatpush1.bf16.msra.mxu0 %v266
  %334 = vmatprep.subr.bf16.mxu0 0
  %335 = vmatpush1.bf16.msra.mxu0 %v265
  %336 = vmatprep.subr.bf16.mxu0 0
  %337 = vmatpush1.bf16.msra.mxu0 %v264
  %338 = vmatprep.subr.bf16.mxu0 0
  %339 = vmatpush1.bf16.msra.mxu0 %v263
  %340 = vmatprep.subr.bf16.mxu0 0
  %341 = vmatpush1.bf16.msra.mxu0 %v262
  %342 = vmatprep.subr.bf16.mxu0 0
  %343 = vmatpush2.bf16.msra.mxu0 %v277
  %344 = vmatprep.subr.bf16.mxu0 0
  %345 = vmatpush2.bf16.msra.mxu0 %v276
  %346 = vmatprep.subr.bf16.mxu0 0
  %347 = vmatpush2.bf16.msra.mxu0 %v275
  %348 = vmatprep.subr.bf16.mxu0 0
  %349 = vmatpush2.bf16.msra.mxu0 %v274
  %350 = vmatprep.subr.bf16.mxu0 0
  %351 = vmatpush2.bf16.msra.mxu0 %v273
  %352 = vmatprep.subr.bf16.mxu0 0
  %353 = vmatpush2.bf16.msra.mxu0 %v272
  %354 = vmatprep.subr.bf16.mxu0 0
  %355 = vmatpush2.bf16.msra.mxu0 %v271
  %356 = vmatprep.subr.bf16.mxu0 0
  %357 = vmatpush2.bf16.msra.mxu0 %v270
  %358 = vmatprep.mubr.bf16.mxu0 %v119
  %359 = vmatmul.mubr.bf16.gmra.mxu0 %v118
  %v360 = vpop.f32.mrf.mxu0
  %v361 = vadd.f32 %v92, %v360
  %v362 = vpop.f32.mrf.mxu0
  %v363 = vpop.f32.mrf.mxu0
  %v364 = vadd.f32 %v92, %v363
  %v365 = vpop.f32.mrf.mxu0
  %366 = vmatprep.mubr.bf16.mxu0 %v123
  %367 = vmatmul.mubr.bf16.gmra.mxu0 %v122
  %v368 = vpop.f32.mrf.mxu0
  %v369 = vadd.f32 %v92, %v368
  %v370 = vpop.f32.mrf.mxu0
  %v371 = vpop.f32.mrf.mxu0
  %v372 = vadd.f32 %v92, %v371
  %v373 = vpop.f32.mrf.mxu0
  %374 = vdwg.mxu0
  %375 = vmatprep.subr.bf16.mxu0 0
  %376 = vmatpush1.bf16.msra.mxu0 %v285
  %377 = vmatprep.subr.bf16.mxu0 0
  %378 = vmatpush1.bf16.msra.mxu0 %v284
  %379 = vmatprep.subr.bf16.mxu0 0
  %380 = vmatpush1.bf16.msra.mxu0 %v283
  %381 = vmatprep.subr.bf16.mxu0 0
  %382 = vmatpush1.bf16.msra.mxu0 %v282
  %383 = vmatprep.subr.bf16.mxu0 0
  %384 = vmatpush1.bf16.msra.mxu0 %v281
  %385 = vmatprep.subr.bf16.mxu0 0
  %386 = vmatpush1.bf16.msra.mxu0 %v280
  %387 = vmatprep.subr.bf16.mxu0 0
  %388 = vmatpush1.bf16.msra.mxu0 %v279
  %389 = vmatprep.subr.bf16.mxu0 0
  %390 = vmatpush1.bf16.msra.mxu0 %v278
  %391 = vmatprep.subr.bf16.mxu0 0
  %392 = vmatpush2.bf16.msra.mxu0 %v293
  %393 = vmatprep.subr.bf16.mxu0 0
  %394 = vmatpush2.bf16.msra.mxu0 %v292
  %395 = vmatprep.subr.bf16.mxu0 0
  %396 = vmatpush2.bf16.msra.mxu0 %v291
  %397 = vmatprep.subr.bf16.mxu0 0
  %398 = vmatpush2.bf16.msra.mxu0 %v290
  %399 = vmatprep.subr.bf16.mxu0 0
  %400 = vmatpush2.bf16.msra.mxu0 %v289
  %401 = vmatprep.subr.bf16.mxu0 0
  %402 = vmatpush2.bf16.msra.mxu0 %v288
  %403 = vmatprep.subr.bf16.mxu0 0
  %404 = vmatpush2.bf16.msra.mxu0 %v287
  %405 = vmatprep.subr.bf16.mxu0 0
  %406 = vmatpush2.bf16.msra.mxu0 %v286
  %407 = vmatprep.mubr.bf16.mxu0 %v121
  %408 = vmatmul.mubr.bf16.gmra.mxu0 %v120
  %v409 = vpop.f32.mrf.mxu0
  %v410 = vadd.f32 %v361, %v409
  %v411 = vpop.f32.mrf.mxu0
  %v412 = vpop.f32.mrf.mxu0
  %v413 = vadd.f32 %v364, %v412
  %v414 = vpop.f32.mrf.mxu0
  %415 = vmatprep.mubr.bf16.mxu0 %v125
  %416 = vmatmul.mubr.bf16.gmra.mxu0 %v124
  %v417 = vpop.f32.mrf.mxu0
  %v418 = vadd.f32 %v369, %v417
  %v419 = vpop.f32.mrf.mxu0
  %v420 = vpop.f32.mrf.mxu0
  %v421 = vadd.f32 %v372, %v420
  %v422 = vpop.f32.mrf.mxu0
  %423 = vdwg.mxu0
  %vm424 = vcmask 523264
  %425 = vst.msk [vmem:[%s3] sm:$0xff] %vm424, %v410
  %426 = vst.msk [vmem:[%s3 + $0x8] sm:$0xff] %vm424, %v413
  %427 = vst.msk [vmem:[%s3 + $0x10] sm:$0xff] %vm424, %v418
  %428 = vst.msk [vmem:[%s3 + $0x18] sm:$0xff] %vm424, %v421
  // Predicated region
  $region14: #{unet_forward.15} parent=0 // pred_check
    _
  $region15: #{unet_forward.15} parent=0 // pred_check_branch
    %430 = sbr.rel (0) target = $region17
  $region16: #{unet_forward.15} parent=0 // pred_region
    _
  $region17: #{unet_forward.15} parent=0 // pred_fallthru
    _
  // Predicated region
  $region18: #{unet_forward.15} parent=0 // pred_check
    _
  $region19: #{unet_forward.15} parent=0 // pred_check_branch
    %432 = sbr.rel (0) target = $region21
  $region20: #{unet_forward.15} parent=0 // pred_region
    _
  $region21: #{unet_forward.15} parent=0 // pred_fallthru
    _

// kernel: unet_forward.16
$region0: #{unet_forward.16}
  #allocation0 [shape = 'u32[]', space=smem, size = 0x4, offset = 0x4, fixed_abs, tag = 'smem constant byte address 0x4 - core index']
  #allocation1 [shape = 'u32[144,128]{1,0:T(1,128)}', space=vmem, size = 0x12000, scoped, tag = 'internal scratch']
  %s0 = inlined_call_operand.vmem [shape: bf16[1,8,1024], index: 0, kind: input, shape index: {}]
  %s1 = inlined_call_operand.vmem [shape: bf16[1,1024,64], index: 1, kind: input, shape index: {}]
  %s2 = inlined_call_operand.vmem [shape: f32[1,64], index: 2, kind: input, shape index: {}]
  %s3 = inlined_call_operand.vmem [shape: f32[1,8,64], index: 3, kind: output, shape index: {}]
  %s4 = sld [smem:[#allocation0]]
  $region22: #{unet_forward.16} parent=0
    _
  %s6 = ssub.s32 1, %s4
  %s7 = scalar_select 0, %s6, %s4
  // Predicated region
  $region2: #{unet_forward.16} parent=0 // pred_check
    _
  $region3: #{unet_forward.16} parent=0 // pred_check_branch
    %9 = sbr.rel (0) target = $region5
  $region4: #{unet_forward.16} parent=0 // pred_region
    _
  $region5: #{unet_forward.16} parent=0 // pred_fallthru
    _
  // Predicated region
  $region6: #{unet_forward.16} parent=0 // pred_check
    _
  $region7: #{unet_forward.16} parent=0 // pred_check_branch
    %11 = sbr.rel (0) target = $region9
  $region8: #{unet_forward.16} parent=0 // pred_region
    _
  $region9: #{unet_forward.16} parent=0 // pred_fallthru
    _
  // Predicated region
  $region10: #{unet_forward.16} parent=0 // pred_check
    _
  $region11: #{unet_forward.16} parent=0 // pred_check_branch
    %13 = sbr.rel (0) target = $region13
  $region12: #{unet_forward.16} parent=0 // pred_region
    _
  $region13: #{unet_forward.16} parent=0 // pred_fallthru
    _
  %v15 = vld [vmem:[%s0] sm:$0xff]
  %v16 = vld [vmem:[%s0 + $0x8] sm:$0xff]
  %v17 = vld [vmem:[%s0 + $0x10] sm:$0xff]
  %v18 = vld [vmem:[%s0 + $0x18] sm:$0xff]
  %v19 = vld [vmem:[%s1] sm:$0xf]
  %v20 = vld [vmem:[%s1 + $0x4] sm:$0xf]
  %v21 = vld [vmem:[%s1 + $0x8] sm:$0xf]
  %v22 = vld [vmem:[%s1 + $0xc] sm:$0xf]
  %v23 = vld [vmem:[%s1 + $0x10] sm:$0xf]
  %v24 = vld [vmem:[%s1 + $0x14] sm:$0xf]
  %v25 = vld [vmem:[%s1 + $0x18] sm:$0xf]
  %v26 = vld [vmem:[%s1 + $0x1c] sm:$0xf]
  %v27 = vld [vmem:[%s1 + $0x20] sm:$0xf]
  %v28 = vld [vmem:[%s1 + $0x24] sm:$0xf]
  %v29 = vld [vmem:[%s1 + $0x28] sm:$0xf]
  %v30 = vld [vmem:[%s1 + $0x2c] sm:$0xf]
  %v31 = vld [vmem:[%s1 + $0x30] sm:$0xf]
  %v32 = vld [vmem:[%s1 + $0x34] sm:$0xf]
  %v33 = vld [vmem:[%s1 + $0x38] sm:$0xf]
  %v34 = vld [vmem:[%s1 + $0x3c] sm:$0xf]
  %v35 = vld [vmem:[%s1 + $0x40] sm:$0xf]
  %v36 = vld [vmem:[%s1 + $0x44] sm:$0xf]
  %v37 = vld [vmem:[%s1 + $0x48] sm:$0xf]
  %v38 = vld [vmem:[%s1 + $0x4c] sm:$0xf]
  %v39 = vld [vmem:[%s1 + $0x50] sm:$0xf]
  %v40 = vld [vmem:[%s1 + $0x54] sm:$0xf]
  %v41 = vld [vmem:[%s1 + $0x58] sm:$0xf]
  %v42 = vld [vmem:[%s1 + $0x5c] sm:$0xf]
  %v43 = vld [vmem:[%s1 + $0x60] sm:$0xf]
  %v44 = vld [vmem:[%s1 + $0x64] sm:$0xf]
  %v45 = vld [vmem:[%s1 + $0x68] sm:$0xf]
  %v46 = vld [vmem:[%s1 + $0x6c] sm:$0xf]
  %v47 = vld [vmem:[%s1 + $0x70] sm:$0xf]
  %v48 = vld [vmem:[%s1 + $0x74] sm:$0xf]
  %v49 = vld [vmem:[%s1 + $0x78] sm:$0xf]
  %v50 = vld [vmem:[%s1 + $0x7c] sm:$0xf]
  %v51 = vld [vmem:[%s1 + $0x80] sm:$0xf]
  %v52 = vld [vmem:[%s1 + $0x84] sm:$0xf]
  %v53 = vld [vmem:[%s1 + $0x88] sm:$0xf]
  %v54 = vld [vmem:[%s1 + $0x8c] sm:$0xf]
  %v55 = vld [vmem:[%s1 + $0x90] sm:$0xf]
  %v56 = vld [vmem:[%s1 + $0x94] sm:$0xf]
  %v57 = vld [vmem:[%s1 + $0x98] sm:$0xf]
  %v58 = vld [vmem:[%s1 + $0x9c] sm:$0xf]
  %v59 = vld [vmem:[%s1 + $0xa0] sm:$0xf]
  %v60 = vld [vmem:[%s1 + $0xa4] sm:$0xf]
  %v61 = vld [vmem:[%s1 + $0xa8] sm:$0xf]
  %v62 = vld [vmem:[%s1 + $0xac] sm:$0xf]
  %v63 = vld [vmem:[%s1 + $0xb0] sm:$0xf]
  %v64 = vld [vmem:[%s1 + $0xb4] sm:$0xf]
  %v65 = vld [vmem:[%s1 + $0xb8] sm:$0xf]
  %v66 = vld [vmem:[%s1 + $0xbc] sm:$0xf]
  %v67 = vld [vmem:[%s1 + $0xc0] sm:$0xf]
  %v68 = vld [vmem:[%s1 + $0xc4] sm:$0xf]
  %v69 = vld [vmem:[%s1 + $0xc8] sm:$0xf]
  %v70 = vld [vmem:[%s1 + $0xcc] sm:$0xf]
  %v71 = vld [vmem:[%s1 + $0xd0] sm:$0xf]
  %v72 = vld [vmem:[%s1 + $0xd4] sm:$0xf]
  %v73 = vld [vmem:[%s1 + $0xd8] sm:$0xf]
  %v74 = vld [vmem:[%s1 + $0xdc] sm:$0xf]
  %v75 = vld [vmem:[%s1 + $0xe0] sm:$0xf]
  %v76 = vld [vmem:[%s1 + $0xe4] sm:$0xf]
  %v77 = vld [vmem:[%s1 + $0xe8] sm:$0xf]
  %v78 = vld [vmem:[%s1 + $0xec] sm:$0xf]
  %v79 = vld [vmem:[%s1 + $0xf0] sm:$0xf]
  %v80 = vld [vmem:[%s1 + $0xf4] sm:$0xf]
  %v81 = vld [vmem:[%s1 + $0xf8] sm:$0xf]
  %v82 = vld [vmem:[%s1 + $0xfc] sm:$0xf]
  %v83 = vld [vmem:[%s1 + $0x100] sm:$0xf]
  %v84 = vld [vmem:[%s1 + $0x104] sm:$0xf]
  %v85 = vld [vmem:[%s1 + $0x108] sm:$0xf]
  %v86 = vld [vmem:[%s1 + $0x10c] sm:$0xf]
  %v87 = vld [vmem:[%s1 + $0x110] sm:$0xf]
  %v88 = vld [vmem:[%s1 + $0x114] sm:$0xf]
  %v89 = vld [vmem:[%s1 + $0x118] sm:$0xf]
  %v90 = vld [vmem:[%s1 + $0x11c] sm:$0xf]
  %v91 = vld [vmem:[%s1 + $0x120] sm:$0xf]
  %v92 = vld [vmem:[%s1 + $0x124] sm:$0xf]
  %v93 = vld [vmem:[%s1 + $0x128] sm:$0xf]
  %v94 = vld [vmem:[%s1 + $0x12c] sm:$0xf]
  %v95 = vld [vmem:[%s1 + $0x130] sm:$0xf]
  %v96 = vld [vmem:[%s1 + $0x134] sm:$0xf]
  %v97 = vld [vmem:[%s1 + $0x138] sm:$0xf]
  %v98 = vld [vmem:[%s1 + $0x13c] sm:$0xf]
  %v99 = vld [vmem:[%s1 + $0x140] sm:$0xf]
  %v100 = vld [vmem:[%s1 + $0x144] sm:$0xf]
  %v101 = vld [vmem:[%s1 + $0x148] sm:$0xf]
  %v102 = vld [vmem:[%s1 + $0x14c] sm:$0xf]
  %v103 = vld [vmem:[%s1 + $0x150] sm:$0xf]
  %v104 = vld [vmem:[%s1 + $0x154] sm:$0xf]
  %v105 = vld [vmem:[%s1 + $0x158] sm:$0xf]
  %v106 = vld [vmem:[%s1 + $0x15c] sm:$0xf]
  %v107 = vld [vmem:[%s1 + $0x160] sm:$0xf]
  %v108 = vld [vmem:[%s1 + $0x164] sm:$0xf]
  %v109 = vld [vmem:[%s1 + $0x168] sm:$0xf]
  %v110 = vld [vmem:[%s1 + $0x16c] sm:$0xf]
  %v111 = vld [vmem:[%s1 + $0x170] sm:$0xf]
  %v112 = vld [vmem:[%s1 + $0x174] sm:$0xf]
  %v113 = vld [vmem:[%s1 + $0x178] sm:$0xf]
  %v114 = vld [vmem:[%s1 + $0x17c] sm:$0xf]
  %v115 = vld [vmem:[%s1 + $0x180] sm:$0xf]
  %v116 = vld [vmem:[%s1 + $0x184] sm:$0xf]
  %v117 = vld [vmem:[%s1 + $0x188] sm:$0xf]
  %v118 = vld [vmem:[%s1 + $0x18c] sm:$0xf]
  %v119 = vld [vmem:[%s1 + $0x190] sm:$0xf]
  %v120 = vld [vmem:[%s1 + $0x194] sm:$0xf]
  %v121 = vld [vmem:[%s1 + $0x198] sm:$0xf]
  %v122 = vld [vmem:[%s1 + $0x19c] sm:$0xf]
  %v123 = vld [vmem:[%s1 + $0x1a0] sm:$0xf]
  %v124 = vld [vmem:[%s1 + $0x1a4] sm:$0xf]
  %v125 = vld [vmem:[%s1 + $0x1a8] sm:$0xf]
  %v126 = vld [vmem:[%s1 + $0x1ac] sm:$0xf]
  %v127 = vld [vmem:[%s1 + $0x1b0] sm:$0xf]
  %v128 = vld [vmem:[%s1 + $0x1b4] sm:$0xf]
  %v129 = vld [vmem:[%s1 + $0x1b8] sm:$0xf]
  %v130 = vld [vmem:[%s1 + $0x1bc] sm:$0xf]
  %v131 = vld [vmem:[%s1 + $0x1c0] sm:$0xf]
  %v132 = vld [vmem:[%s1 + $0x1c4] sm:$0xf]
  %v133 = vld [vmem:[%s1 + $0x1c8] sm:$0xf]
  %v134 = vld [vmem:[%s1 + $0x1cc] sm:$0xf]
  %v135 = vld [vmem:[%s1 + $0x1d0] sm:$0xf]
  %v136 = vld [vmem:[%s1 + $0x1d4] sm:$0xf]
  %v137 = vld [vmem:[%s1 + $0x1d8] sm:$0xf]
  %v138 = vld [vmem:[%s1 + $0x1dc] sm:$0xf]
  %v139 = vld [vmem:[%s1 + $0x1e0] sm:$0xf]
  %v140 = vld [vmem:[%s1 + $0x1e4] sm:$0xf]
  %v141 = vld [vmem:[%s1 + $0x1e8] sm:$0xf]
  %v142 = vld [vmem:[%s1 + $0x1ec] sm:$0xf]
  %v143 = vld [vmem:[%s1 + $0x1f0] sm:$0xf]
  %v144 = vld [vmem:[%s1 + $0x1f4] sm:$0xf]
  %v145 = vld [vmem:[%s1 + $0x1f8] sm:$0xf]
  %v146 = vld [vmem:[%s1 + $0x1fc] sm:$0xf]
  %v147 = vld [vmem:[%s2] sm:$0x1]
  %v149 = vlaneseq
  %v150 = vshrl.u32 %v149, 7
  %v151 = vsub.s32 0, %v150
  %v152 = vrot.slane %v147, %v151
  %v158 = vunpack.c.l.b16 %v15
  %v159 = vunpack.c.h.b16 %v15
  %v160 = vunpack.c.l.b16 %v16
  %v161 = vunpack.c.h.b16 %v16
  %v162 = vunpack.c.l.b16 %v17
  %v163 = vunpack.c.h.b16 %v17
  %v164 = vunpack.c.l.b16 %v18
  %v165 = vunpack.c.h.b16 %v18
  %v166 = vpack.c.b16 %v158, %v158
  %v167 = vpack.c.b16 %v159, %v159
  %v168 = vpack.c.b16 %v160, %v160
  %v169 = vpack.c.b16 %v161, %v161
  %v170 = vpack.c.b16 %v162, %v162
  %v171 = vpack.c.b16 %v163, %v163
  %v172 = vpack.c.b16 %v164, %v164
  %v173 = vpack.c.b16 %v165, %v165
  %v310 = vunpack.c.l.b16 %v19
  %v311 = vunpack.c.l.b16 %v20
  %v312 = vunpack.c.l.b16 %v21
  %v313 = vunpack.c.l.b16 %v22
  %v314 = vunpack.c.l.b16 %v23
  %v315 = vunpack.c.l.b16 %v24
  %v316 = vunpack.c.l.b16 %v25
  %v317 = vunpack.c.l.b16 %v26
  %v318 = vunpack.c.l.b16 %v27
  %v319 = vunpack.c.l.b16 %v28
  %v320 = vunpack.c.l.b16 %v29
  %v321 = vunpack.c.l.b16 %v30
  %v322 = vunpack.c.l.b16 %v31
  %v323 = vunpack.c.l.b16 %v32
  %v324 = vunpack.c.l.b16 %v33
  %v325 = vunpack.c.l.b16 %v34
  %v326 = vunpack.c.l.b16 %v35
  %v327 = vunpack.c.l.b16 %v36
  %v328 = vunpack.c.l.b16 %v37
  %v329 = vunpack.c.l.b16 %v38
  %v330 = vunpack.c.l.b16 %v39
  %v331 = vunpack.c.l.b16 %v40
  %v332 = vunpack.c.l.b16 %v41
  %v333 = vunpack.c.l.b16 %v42
  %v334 = vunpack.c.l.b16 %v43
  %v335 = vunpack.c.l.b16 %v44
  %v336 = vunpack.c.l.b16 %v45
  %v337 = vunpack.c.l.b16 %v46
  %v338 = vunpack.c.l.b16 %v47
  %v339 = vunpack.c.l.b16 %v48
  %v340 = vunpack.c.l.b16 %v49
  %v341 = vunpack.c.l.b16 %v50
  %v342 = vunpack.c.l.b16 %v51
  %v343 = vunpack.c.l.b16 %v52
  %v344 = vunpack.c.l.b16 %v53
  %v345 = vunpack.c.l.b16 %v54
  %v346 = vunpack.c.l.b16 %v55
  %v347 = vunpack.c.l.b16 %v56
  %v348 = vunpack.c.l.b16 %v57
  %v349 = vunpack.c.l.b16 %v58
  %v350 = vunpack.c.l.b16 %v59
  %v351 = vunpack.c.l.b16 %v60
  %v352 = vunpack.c.l.b16 %v61
  %v353 = vunpack.c.l.b16 %v62
  %v354 = vunpack.c.l.b16 %v63
  %v355 = vunpack.c.l.b16 %v64
  %v356 = vunpack.c.l.b16 %v65
  %v357 = vunpack.c.l.b16 %v66
  %v358 = vunpack.c.l.b16 %v67
  %v359 = vunpack.c.l.b16 %v68
  %v360 = vunpack.c.l.b16 %v69
  %v361 = vunpack.c.l.b16 %v70
  %v362 = vunpack.c.l.b16 %v71
  %v363 = vunpack.c.l.b16 %v72
  %v364 = vunpack.c.l.b16 %v73
  %v365 = vunpack.c.l.b16 %v74
  %v366 = vunpack.c.l.b16 %v75
  %v367 = vunpack.c.l.b16 %v76
  %v368 = vunpack.c.l.b16 %v77
  %v369 = vunpack.c.l.b16 %v78
  %v370 = vunpack.c.l.b16 %v79
  %v371 = vunpack.c.l.b16 %v80
  %v372 = vunpack.c.l.b16 %v81
  %v373 = vunpack.c.l.b16 %v82
  %v374 = vunpack.c.l.b16 %v83
  %v375 = vunpack.c.l.b16 %v84
  %v376 = vunpack.c.l.b16 %v85
  %v377 = vunpack.c.l.b16 %v86
  %v378 = vunpack.c.l.b16 %v87
  %v379 = vunpack.c.l.b16 %v88
  %v380 = vunpack.c.l.b16 %v89
  %v381 = vunpack.c.l.b16 %v90
  %v382 = vunpack.c.l.b16 %v91
  %v383 = vunpack.c.l.b16 %v92
  %v384 = vunpack.c.l.b16 %v93
  %v385 = vunpack.c.l.b16 %v94
  %v386 = vunpack.c.l.b16 %v95
  %v387 = vunpack.c.l.b16 %v96
  %v388 = vunpack.c.l.b16 %v97
  %v389 = vunpack.c.l.b16 %v98
  %v390 = vunpack.c.l.b16 %v99
  %v391 = vunpack.c.l.b16 %v100
  %v392 = vunpack.c.l.b16 %v101
  %v393 = vunpack.c.l.b16 %v102
  %v394 = vunpack.c.l.b16 %v103
  %v395 = vunpack.c.l.b16 %v104
  %v396 = vunpack.c.l.b16 %v105
  %v397 = vunpack.c.l.b16 %v106
  %v398 = vunpack.c.l.b16 %v107
  %v399 = vunpack.c.l.b16 %v108
  %v400 = vunpack.c.l.b16 %v109
  %v401 = vunpack.c.l.b16 %v110
  %v402 = vunpack.c.l.b16 %v111
  %v403 = vunpack.c.l.b16 %v112
  %v404 = vunpack.c.l.b16 %v113
  %v405 = vunpack.c.l.b16 %v114
  %v406 = vunpack.c.l.b16 %v115
  %v407 = vunpack.c.l.b16 %v116
  %v408 = vunpack.c.l.b16 %v117
  %v409 = vunpack.c.l.b16 %v118
  %v410 = vunpack.c.l.b16 %v119
  %v411 = vunpack.c.l.b16 %v120
  %v412 = vunpack.c.l.b16 %v121
  %v413 = vunpack.c.l.b16 %v122
  %v414 = vunpack.c.l.b16 %v123
  %v415 = vunpack.c.l.b16 %v124
  %v416 = vunpack.c.l.b16 %v125
  %v417 = vunpack.c.l.b16 %v126
  %v418 = vunpack.c.l.b16 %v127
  %v419 = vunpack.c.l.b16 %v128
  %v420 = vunpack.c.l.b16 %v129
  %v421 = vunpack.c.l.b16 %v130
  %v422 = vunpack.c.l.b16 %v131
  %v423 = vunpack.c.l.b16 %v132
  %v424 = vunpack.c.l.b16 %v133
  %v425 = vunpack.c.l.b16 %v134
  %v426 = vunpack.c.l.b16 %v135
  %v427 = vunpack.c.l.b16 %v136
  %v428 = vunpack.c.l.b16 %v137
  %v429 = vunpack.c.l.b16 %v138
  %v430 = vunpack.c.l.b16 %v139
  %v431 = vunpack.c.l.b16 %v140
  %v432 = vunpack.c.l.b16 %v141
  %v433 = vunpack.c.l.b16 %v142
  %v434 = vunpack.c.l.b16 %v143
  %v435 = vunpack.c.l.b16 %v144
  %v436 = vunpack.c.l.b16 %v145
  %v437 = vunpack.c.l.b16 %v146
  %v438 = vpack.c.b16 %v311, %v310
  %v439 = vpack.c.b16 %v313, %v312
  %v440 = vpack.c.b16 %v315, %v314
  %v441 = vpack.c.b16 %v317, %v316
  %v442 = vpack.c.b16 %v319, %v318
  %v443 = vpack.c.b16 %v321, %v320
  %v444 = vpack.c.b16 %v323, %v322
  %v445 = vpack.c.b16 %v325, %v324
  %v446 = vpack.c.b16 %v327, %v326
  %v447 = vpack.c.b16 %v329, %v328
  %v448 = vpack.c.b16 %v331, %v330
  %v449 = vpack.c.b16 %v333, %v332
  %v450 = vpack.c.b16 %v335, %v334
  %v451 = vpack.c.b16 %v337, %v336
  %v452 = vpack.c.b16 %v339, %v338
  %v453 = vpack.c.b16 %v341, %v340
  %v454 = vpack.c.b16 %v343, %v342
  %v455 = vpack.c.b16 %v345, %v344
  %v456 = vpack.c.b16 %v347, %v346
  %v457 = vpack.c.b16 %v349, %v348
  %v458 = vpack.c.b16 %v351, %v350
  %v459 = vpack.c.b16 %v353, %v352
  %v460 = vpack.c.b16 %v355, %v354
  %v461 = vpack.c.b16 %v357, %v356
  %v462 = vpack.c.b16 %v359, %v358
  %v463 = vpack.c.b16 %v361, %v360
  %v464 = vpack.c.b16 %v363, %v362
  %v465 = vpack.c.b16 %v365, %v364
  %v466 = vpack.c.b16 %v367, %v366
  %v467 = vpack.c.b16 %v369, %v368
  %v468 = vpack.c.b16 %v371, %v370
  %v469 = vpack.c.b16 %v373, %v372
  %v470 = vpack.c.b16 %v375, %v374
  %v471 = vpack.c.b16 %v377, %v376
  %v472 = vpack.c.b16 %v379, %v378
  %v473 = vpack.c.b16 %v381, %v380
  %v474 = vpack.c.b16 %v383, %v382
  %v475 = vpack.c.b16 %v385, %v384
  %v476 = vpack.c.b16 %v387, %v386
  %v477 = vpack.c.b16 %v389, %v388
  %v478 = vpack.c.b16 %v391, %v390
  %v479 = vpack.c.b16 %v393, %v392
  %v480 = vpack.c.b16 %v395, %v394
  %v481 = vpack.c.b16 %v397, %v396
  %v482 = vpack.c.b16 %v399, %v398
  %v483 = vpack.c.b16 %v401, %v400
  %v484 = vpack.c.b16 %v403, %v402
  %v485 = vpack.c.b16 %v405, %v404
  %v486 = vpack.c.b16 %v407, %v406
  %v487 = vpack.c.b16 %v409, %v408
  %v488 = vpack.c.b16 %v411, %v410
  %v489 = vpack.c.b16 %v413, %v412
  %v490 = vpack.c.b16 %v415, %v414
  %v491 = vpack.c.b16 %v417, %v416
  %v492 = vpack.c.b16 %v419, %v418
  %v493 = vpack.c.b16 %v421, %v420
  %v494 = vpack.c.b16 %v423, %v422
  %v495 = vpack.c.b16 %v425, %v424
  %v496 = vpack.c.b16 %v427, %v426
  %v497 = vpack.c.b16 %v429, %v428
  %v498 = vpack.c.b16 %v431, %v430
  %v499 = vpack.c.b16 %v433, %v432
  %v500 = vpack.c.b16 %v435, %v434
  %v501 = vpack.c.b16 %v437, %v436
  %566 = vmatprep.subr.bf16.mxu0 0
  %567 = vmatpush1.bf16.msra.mxu0 %v445
  %568 = vmatprep.subr.bf16.mxu0 0
  %569 = vmatpush1.bf16.msra.mxu0 %v444
  %570 = vmatprep.subr.bf16.mxu0 0
  %571 = vmatpush1.bf16.msra.mxu0 %v443
  %572 = vmatprep.subr.bf16.mxu0 0
  %573 = vmatpush1.bf16.msra.mxu0 %v442
  %574 = vmatprep.subr.bf16.mxu0 0
  %575 = vmatpush1.bf16.msra.mxu0 %v441
  %576 = vmatprep.subr.bf16.mxu0 0
  %577 = vmatpush1.bf16.msra.mxu0 %v440
  %578 = vmatprep.subr.bf16.mxu0 0
  %579 = vmatpush1.bf16.msra.mxu0 %v439
  %580 = vmatprep.subr.bf16.mxu0 0
  %581 = vmatpush1.bf16.msra.mxu0 %v438
  %582 = vmatprep.subr.bf16.mxu0 0
  %583 = vmatpush2.bf16.msra.mxu0 %v453
  %584 = vmatprep.subr.bf16.mxu0 0
  %585 = vmatpush2.bf16.msra.mxu0 %v452
  %586 = vmatprep.subr.bf16.mxu0 0
  %587 = vmatpush2.bf16.msra.mxu0 %v451
  %588 = vmatprep.subr.bf16.mxu0 0
  %589 = vmatpush2.bf16.msra.mxu0 %v450
  %590 = vmatprep.subr.bf16.mxu0 0
  %591 = vmatpush2.bf16.msra.mxu0 %v449
  %592 = vmatprep.subr.bf16.mxu0 0
  %593 = vmatpush2.bf16.msra.mxu0 %v448
  %594 = vmatprep.subr.bf16.mxu0 0
  %595 = vmatpush2.bf16.msra.mxu0 %v447
  %596 = vmatprep.subr.bf16.mxu0 0
  %597 = vmatpush2.bf16.msra.mxu0 %v446
  %598 = vmatprep.mubr.bf16.mxu0 %v167
  %599 = vmatmul.mubr.bf16.gmra.mxu0 %v166
  %v600 = vpop.f32.mrf.mxu0
  %v601 = vadd.f32 %v152, %v600
  %v602 = vpop.f32.mrf.mxu0
  %v603 = vpop.f32.mrf.mxu0
  %v604 = vpop.f32.mrf.mxu0
  %605 = vdwg.mxu0
  %606 = vmatprep.subr.bf16.mxu0 0
  %607 = vmatpush1.bf16.msra.mxu0 %v461
  %608 = vmatprep.subr.bf16.mxu0 0
  %609 = vmatpush1.bf16.msra.mxu0 %v460
  %610 = vmatprep.subr.bf16.mxu0 0
  %611 = vmatpush1.bf16.msra.mxu0 %v459
  %612 = vmatprep.subr.bf16.mxu0 0
  %613 = vmatpush1.bf16.msra.mxu0 %v458
  %614 = vmatprep.subr.bf16.mxu0 0
  %615 = vmatpush1.bf16.msra.mxu0 %v457
  %616 = vmatprep.subr.bf16.mxu0 0
  %617 = vmatpush1.bf16.msra.mxu0 %v456
  %618 = vmatprep.subr.bf16.mxu0 0
  %619 = vmatpush1.bf16.msra.mxu0 %v455
  %620 = vmatprep.subr.bf16.mxu0 0
  %621 = vmatpush1.bf16.msra.mxu0 %v454
  %622 = vmatprep.subr.bf16.mxu0 0
  %623 = vmatpush2.bf16.msra.mxu0 %v469
  %624 = vmatprep.subr.bf16.mxu0 0
  %625 = vmatpush2.bf16.msra.mxu0 %v468
  %626 = vmatprep.subr.bf16.mxu0 0
  %627 = vmatpush2.bf16.msra.mxu0 %v467
  %628 = vmatprep.subr.bf16.mxu0 0
  %629 = vmatpush2.bf16.msra.mxu0 %v466
  %630 = vmatprep.subr.bf16.mxu0 0
  %631 = vmatpush2.bf16.msra.mxu0 %v465
  %632 = vmatprep.subr.bf16.mxu0 0
  %633 = vmatpush2.bf16.msra.mxu0 %v464
  %634 = vmatprep.subr.bf16.mxu0 0
  %635 = vmatpush2.bf16.msra.mxu0 %v463
  %636 = vmatprep.subr.bf16.mxu0 0
  %637 = vmatpush2.bf16.msra.mxu0 %v462
  %638 = vmatprep.mubr.bf16.mxu0 %v169
  %639 = vmatmul.mubr.bf16.gmra.mxu0 %v168
  %v640 = vpop.f32.mrf.mxu0
  %v641 = vadd.f32 %v601, %v640
  %v642 = vpop.f32.mrf.mxu0
  %v643 = vpop.f32.mrf.mxu0
  %v644 = vpop.f32.mrf.mxu0
  %645 = vdwg.mxu0
  %646 = vmatprep.subr.bf16.mxu0 0
  %647 = vmatpush1.bf16.msra.mxu0 %v477
  %648 = vmatprep.subr.bf16.mxu0 0
  %649 = vmatpush1.bf16.msra.mxu0 %v476
  %650 = vmatprep.subr.bf16.mxu0 0
  %651 = vmatpush1.bf16.msra.mxu0 %v475
  %652 = vmatprep.subr.bf16.mxu0 0
  %653 = vmatpush1.bf16.msra.mxu0 %v474
  %654 = vmatprep.subr.bf16.mxu0 0
  %655 = vmatpush1.bf16.msra.mxu0 %v473
  %656 = vmatprep.subr.bf16.mxu0 0
  %657 = vmatpush1.bf16.msra.mxu0 %v472
  %658 = vmatprep.subr.bf16.mxu0 0
  %659 = vmatpush1.bf16.msra.mxu0 %v471
  %660 = vmatprep.subr.bf16.mxu0 0
  %661 = vmatpush1.bf16.msra.mxu0 %v470
  %662 = vmatprep.subr.bf16.mxu0 0
  %663 = vmatpush2.bf16.msra.mxu0 %v485
  %664 = vmatprep.subr.bf16.mxu0 0
  %665 = vmatpush2.bf16.msra.mxu0 %v484
  %666 = vmatprep.subr.bf16.mxu0 0
  %667 = vmatpush2.bf16.msra.mxu0 %v483
  %668 = vmatprep.subr.bf16.mxu0 0
  %669 = vmatpush2.bf16.msra.mxu0 %v482
  %670 = vmatprep.subr.bf16.mxu0 0
  %671 = vmatpush2.bf16.msra.mxu0 %v481
  %672 = vmatprep.subr.bf16.mxu0 0
  %673 = vmatpush2.bf16.msra.mxu0 %v480
  %674 = vmatprep.subr.bf16.mxu0 0
  %675 = vmatpush2.bf16.msra.mxu0 %v479
  %676 = vmatprep.subr.bf16.mxu0 0
  %677 = vmatpush2.bf16.msra.mxu0 %v478
  %678 = vmatprep.mubr.bf16.mxu0 %v171
  %679 = vmatmul.mubr.bf16.gmra.mxu0 %v170
  %v680 = vpop.f32.mrf.mxu0
  %v681 = vadd.f32 %v641, %v680
  %v682 = vpop.f32.mrf.mxu0
  %v683 = vpop.f32.mrf.mxu0
  %v684 = vpop.f32.mrf.mxu0
  %685 = vdwg.mxu0
  %686 = vmatprep.subr.bf16.mxu0 0
  %687 = vmatpush1.bf16.msra.mxu0 %v493
  %688 = vmatprep.subr.bf16.mxu0 0
  %689 = vmatpush1.bf16.msra.mxu0 %v492
  %690 = vmatprep.subr.bf16.mxu0 0
  %691 = vmatpush1.bf16.msra.mxu0 %v491
  %692 = vmatprep.subr.bf16.mxu0 0
  %693 = vmatpush1.bf16.msra.mxu0 %v490
  %694 = vmatprep.subr.bf16.mxu0 0
  %695 = vmatpush1.bf16.msra.mxu0 %v489
  %696 = vmatprep.subr.bf16.mxu0 0
  %697 = vmatpush1.bf16.msra.mxu0 %v488
  %698 = vmatprep.subr.bf16.mxu0 0
  %699 = vmatpush1.bf16.msra.mxu0 %v487
  %700 = vmatprep.subr.bf16.mxu0 0
  %701 = vmatpush1.bf16.msra.mxu0 %v486
  %702 = vmatprep.subr.bf16.mxu0 0
  %703 = vmatpush2.bf16.msra.mxu0 %v501
  %704 = vmatprep.subr.bf16.mxu0 0
  %705 = vmatpush2.bf16.msra.mxu0 %v500
  %706 = vmatprep.subr.bf16.mxu0 0
  %707 = vmatpush2.bf16.msra.mxu0 %v499
  %708 = vmatprep.subr.bf16.mxu0 0
  %709 = vmatpush2.bf16.msra.mxu0 %v498
  %710 = vmatprep.subr.bf16.mxu0 0
  %711 = vmatpush2.bf16.msra.mxu0 %v497
  %712 = vmatprep.subr.bf16.mxu0 0
  %713 = vmatpush2.bf16.msra.mxu0 %v496
  %714 = vmatprep.subr.bf16.mxu0 0
  %715 = vmatpush2.bf16.msra.mxu0 %v495
  %716 = vmatprep.subr.bf16.mxu0 0
  %717 = vmatpush2.bf16.msra.mxu0 %v494
  %718 = vmatprep.mubr.bf16.mxu0 %v173
  %719 = vmatmul.mubr.bf16.gmra.mxu0 %v172
  %v720 = vpop.f32.mrf.mxu0
  %v721 = vadd.f32 %v681, %v720
  %v722 = vpop.f32.mrf.mxu0
  %v723 = vpop.f32.mrf.mxu0
  %v724 = vpop.f32.mrf.mxu0
  %725 = vdwg.mxu0
  %vm726 = vcmask 523264
  %727 = vst.msk [vmem:[%s3] sm:$0xff] %vm726, %v721
  // Predicated region
  $region14: #{unet_forward.16} parent=0 // pred_check
    _
  $region15: #{unet_forward.16} parent=0 // pred_check_branch
    %729 = sbr.rel (0) target = $region17
  $region16: #{unet_forward.16} parent=0 // pred_region
    _
  $region17: #{unet_forward.16} parent=0 // pred_fallthru
    _
  // Predicated region
  $region18: #{unet_forward.16} parent=0 // pred_check
    _
  $region19: #{unet_forward.16} parent=0 // pred_check_branch
    %731 = sbr.rel (0) target = $region21
  $region20: #{unet_forward.16} parent=0 // pred_region
    _
  $region21: #{unet_forward.16} parent=0 // pred_fallthru
    _

// kernel: unet_forward.18
$region0: #{unet_forward.18}
  #allocation0 [shape = 'u32[]', space=smem, size = 0x4, offset = 0x4, fixed_abs, tag = 'smem constant byte address 0x4 - core index']
  #allocation1 [shape = 'u32[144,128]{1,0:T(1,128)}', space=vmem, size = 0x12000, scoped, tag = 'internal scratch']
  %s0 = inlined_call_operand.vmem [shape: bf16[4,8,256], index: 0, kind: input, shape index: {}]
  %s1 = inlined_call_operand.vmem [shape: bf16[4,256,64], index: 1, kind: input, shape index: {}]
  %s2 = inlined_call_operand.vmem [shape: f32[1,64], index: 2, kind: input, shape index: {}]
  %s3 = inlined_call_operand.vmem [shape: f32[4,8,64], index: 3, kind: output, shape index: {}]
  %s4 = sld [smem:[#allocation0]]
  $region45: #{unet_forward.18} parent=0
    _
  %s6 = ssub.s32 1, %s4
  %s7 = scalar_select 0, %s6, %s4
  loop: start=0, step=1, limit=6
  $region2: #{unet_forward.18} parent=0 // loop_pre_header
    _
  $region3: #{unet_forward.18} parent=0 // loop_header
    %s9 = sphi 0, %s13
    %p10 = scmp.ge.s32.totalorder %s9, 6
    %s16 = sphi 0, %s28
    %s17 = sphi 0, %s24
    %s18 = sphi 0, %s16
    %s19 = sphi 0, %s17
    %s20 = sphi 0, %s18
    %s21 = sphi 0, %s19
    %s33 = sphi 0, %s35
    %s36 = sphi 0, %s33
    %s37 = sphi 0, %s36
    %s53 = sphi 0, %s37
    %s59 = sphi 0, %s61
    %s62 = sphi 0, %s59
    %s63 = sphi 0, %s62
    %s79 = sphi 0, %s63
    %s83 = sphi 0, %s83
    %s85 = sphi 0, %s83
    %s86 = sphi 0, %s85
    %s100 = sphi 0, %s86
    %s108 = sphi 0, %s110
    %s111 = sphi 0, %s108
    %s112 = sphi 0, %s111
    %s128 = sphi 0, %s112
  $region4: #{unet_forward.18} parent=0 // loop_header_branch
    %12 = sbr.rel (%p10) target = $region8
  $region5: #{unet_forward.18} parent=0 // loop_body
    %s14 = ssub.s32 %s9, 1
    %s15 = ssub.s32 %s9, 2
    %s22 = sadd.s32 1, %s17
    %p23 = scmp.ge.s32.totalorder %s22, 1
    %s24 = scalar_select %p23, 0, %s22
    %s25 = sadd.s32 1, %s16
    %s26 = scalar_select %p23, %s25, %s16
    %p27 = scmp.ge.s32.totalorder %s26, 4
    %s28 = scalar_select %p27, 0, %s26
    %s29 = ssub.s32 %s16, %s28
    %s30 = ssub.s32 %s17, %s24
    %s31 = sor.u32 %s29, %s30
    %p32 = scmp.eq.s32.totalorder %s31, 0
    %s34 = sadd.s32 %s33, 1
    %s35 = scalar_select %p32, %s33, %s34
    %p38 = pneg %p32
    %p39 = scmp.eq.s32.totalorder %s9, 3
    %p40 = por %p38, %p39
    %p41 = scmp.ne.s32.totalorder %s33, %s36
    %p42 = scmp.eq.s32.totalorder %s9, 0
    %p43 = por %p41, %p42
    %p44 = scmp.ne.s32.totalorder %s33, %s36
    %p45 = scmp.eq.s32.totalorder %s14, 3
    %p46 = por %p44, %p45
    %p47 = scmp.ne.s32.totalorder %s36, %s37
    %p48 = scmp.eq.s32.totalorder %s14, 0
    %p49 = por %p47, %p48
    %p50 = scmp.ne.s32.totalorder %s36, %s37
    %p51 = scmp.eq.s32.totalorder %s15, 3
    %p52 = por %p50, %p51
    %p54 = scmp.ne.s32.totalorder %s37, %s53
    %p55 = scmp.eq.s32.totalorder %s15, 0
    %p56 = por %p54, %p55
    %s57 = ssub.s32 %s16, %s28
    %p58 = scmp.eq.s32.totalorder %s57, 0
    %s60 = sadd.s32 %s59, 1
    %s61 = scalar_select %p58, %s59, %s60
    %p64 = pneg %p58
    %p65 = scmp.eq.s32.totalorder %s9, 3
    %p66 = por %p64, %p65
    %p67 = scmp.ne.s32.totalorder %s59, %s62
    %p68 = scmp.eq.s32.totalorder %s9, 0
    %p69 = por %p67, %p68
    %p70 = scmp.ne.s32.totalorder %s59, %s62
    %p71 = scmp.eq.s32.totalorder %s14, 3
    %p72 = por %p70, %p71
    %p73 = scmp.ne.s32.totalorder %s62, %s63
    %p74 = scmp.eq.s32.totalorder %s14, 0
    %p75 = por %p73, %p74
    %p76 = scmp.ne.s32.totalorder %s62, %s63
    %p77 = scmp.eq.s32.totalorder %s15, 3
    %p78 = por %p76, %p77
    %p80 = scmp.ne.s32.totalorder %s63, %s79
    %p81 = scmp.eq.s32.totalorder %s15, 0
    %p82 = por %p80, %p81
    %s84 = sadd.s32 %s83, 1
    %p87 = scmp.eq.s32.totalorder %s9, 3
    %p88 = scmp.ne.s32.totalorder %s83, %s85
    %p89 = scmp.eq.s32.totalorder %s9, 0
    %p90 = por %p88, %p89
    %p91 = scmp.ne.s32.totalorder %s83, %s85
    %p92 = scmp.eq.s32.totalorder %s14, 3
    %p93 = por %p91, %p92
    %p94 = scmp.ne.s32.totalorder %s85, %s86
    %p95 = scmp.eq.s32.totalorder %s14, 0
    %p96 = por %p94, %p95
    %p97 = scmp.ne.s32.totalorder %s85, %s86
    %p98 = scmp.eq.s32.totalorder %s15, 3
    %p99 = por %p97, %p98
    %p101 = scmp.ne.s32.totalorder %s86, %s100
    %p102 = scmp.eq.s32.totalorder %s15, 0
    %p103 = por %p101, %p102
    %s104 = ssub.s32 %s16, %s28
    %s105 = ssub.s32 %s17, %s24
    %s106 = sor.u32 %s104, %s105
    %p107 = scmp.eq.s32.totalorder %s106, 0
    %s109 = sadd.s32 %s108, 1
    %s110 = scalar_select %p107, %s108, %s109
    %p113 = pneg %p107
    %p114 = scmp.eq.s32.totalorder %s9, 3
    %p115 = por %p113, %p114
    %p116 = scmp.ne.s32.totalorder %s108, %s111
    %p117 = scmp.eq.s32.totalorder %s9, 0
    %p118 = por %p116, %p117
    %p119 = scmp.ne.s32.totalorder %s108, %s111
    %p120 = scmp.eq.s32.totalorder %s14, 3
    %p121 = por %p119, %p120
    %p122 = scmp.ne.s32.totalorder %s111, %s112
    %p123 = scmp.eq.s32.totalorder %s14, 0
    %p124 = por %p122, %p123
    %p125 = scmp.ne.s32.totalorder %s111, %s112
    %p126 = scmp.eq.s32.totalorder %s15, 3
    %p127 = por %p125, %p126
    %p129 = scmp.ne.s32.totalorder %s112, %s128
    %p130 = scmp.eq.s32.totalorder %s15, 0
    %p131 = por %p129, %p130
    %p132 = scmp.le.s32.totalorder 1, %s9
    %p133 = scmp.lt.s32.totalorder %s9, 5
    %p134 = pnand %p132, %p133
    %p135 = pneg %p134
    // Predicated region
    $region9: #{unet_forward.18} parent=5 // pred_check
      _
    $region10: #{unet_forward.18} parent=5 // pred_check_branch
      %137 = sbr.rel (%p134) target = $region12
    $region11: #{unet_forward.18} parent=5 // pred_region
      %s138 = ssub.s32 %s9, 1
      // Predicated region
      $region13: #{unet_forward.18} parent=11 // pred_check
        %p139 = pneg %p96
      $region14: #{unet_forward.18} parent=11 // pred_check_branch
        %141 = sbr.rel (%p139) target = $region16
      $region15: #{unet_forward.18} parent=11 // pred_region
        _
      $region16: #{unet_forward.18} parent=11 // pred_fallthru
        _
    $region12: #{unet_forward.18} parent=5 // pred_fallthru
      _
    %p142 = scmp.lt.s32.totalorder %s9, 4
    // Predicated region
    $region17: #{unet_forward.18} parent=5 // pred_check
      %p143 = pneg %p142
    $region18: #{unet_forward.18} parent=5 // pred_check_branch
      %145 = sbr.rel (%p143) target = $region20
    $region19: #{unet_forward.18} parent=5 // pred_region
      // Predicated region
      $region21: #{unet_forward.18} parent=19 // pred_check
        %p146 = pneg %p43
      $region22: #{unet_forward.18} parent=19 // pred_check_branch
        %148 = sbr.rel (%p146) target = $region24
      $region23: #{unet_forward.18} parent=19 // pred_region
        %p149 = scmp.lt.s32.totalorder %s16, 3
        %s150 = scalar_select %p149, %s16, 3
        %p151 = scmp.lt.s32.totalorder %s17, 0
        %s152 = scalar_select %p151, %s17, 0
        %s153 = smul.addr %s152, 2
        %s154 = smul.addr %s150, 2
        %s155 = sadd.s32 %s153, %s154
        %s156 = smul.addr %s155, 4
        %s157 = scalar_lea.vmem %s0, %s156
      $region24: #{unet_forward.18} parent=19 // pred_fallthru
        _
      // Predicated region
      $region25: #{unet_forward.18} parent=19 // pred_check
        %p158 = pneg %p69
      $region26: #{unet_forward.18} parent=19 // pred_check_branch
        %160 = sbr.rel (%p158) target = $region28
      $region27: #{unet_forward.18} parent=19 // pred_region
        %p161 = scmp.lt.s32.totalorder %s16, 3
        %s162 = scalar_select %p161, %s16, 3
        %s163 = smul.addr %s162, 32
        %s164 = smul.addr %s163, 4
        %s165 = scalar_lea.vmem %s1, %s164
      $region28: #{unet_forward.18} parent=19 // pred_fallthru
        _
    $region20: #{unet_forward.18} parent=5 // pred_fallthru
      _
    %p166 = scmp.le.s32.totalorder 1, %s9
    %p167 = scmp.lt.s32.totalorder %s9, 5
    %p168 = pnand %p166, %p167
    %p169 = pneg %p168
    // Predicated region
    $region29: #{unet_forward.18} parent=5 // pred_check
      _
    $region30: #{unet_forward.18} parent=5 // pred_check_branch
      %171 = sbr.rel (%p168) target = $region32
    $region31: #{unet_forward.18} parent=5 // pred_region
      %s172 = ssub.s32 %s9, 1
      %p173 = scmp.lt.s32.totalorder %s18, 3
      %s174 = scalar_select %p173, %s18, 3
      %p175 = scmp.lt.s32.totalorder %s19, 0
      %s176 = scalar_select %p175, %s19, 0
      %s177 = smul.addr %s176, 2
      %s178 = smul.addr %s174, 2
      %s179 = sadd.s32 %s177, %s178
      %s180 = smul.addr %s179, 4
      %s181 = scalar_lea.vmem %s0, %s180
      %p182 = pneg %p49
      %p183 = pneg %p46
      %p184 = scmp.lt.s32.totalorder %s18, 3
      %s185 = scalar_select %p184, %s18, 3
      %s186 = smul.addr %s185, 32
      %s187 = smul.addr %s186, 4
      %s188 = scalar_lea.vmem %s1, %s187
      %p189 = pneg %p75
      %p190 = pneg %p72
      %p191 = pneg %p96
      %p192 = pneg %p93
      %p193 = pneg %p124
      %p194 = pneg %p121
      %p195 = scmp.lt.s32.totalorder %s18, 3
      %s196 = scalar_select %p195, %s18, 3
      %p197 = scmp.lt.s32.totalorder %s19, 0
      %s198 = scalar_select %p197, %s19, 0
      %s199 = sadd.s32 %s198, %s196
      %s200 = smul.addr %s199, 8
      %s201 = scalar_lea.vmem %s3, %s200
      %p202 = scmp.lt.s32.totalorder %s18, 3
      %s203 = scalar_select %p202, %s18, 3
      %p204 = scmp.lt.s32.totalorder %s19, 0
      %s205 = scalar_select %p204, %s19, 0
      %s206 = smul.addr %s205, 2
      %s207 = smul.addr %s203, 2
      %s208 = sadd.s32 %s206, %s207
      %s209 = smul.addr %s208, 4
      %s210 = scalar_lea.vmem %s0, %s209
      %p211 = scmp.lt.s32.totalorder %s18, 3
      %s212 = scalar_select %p211, %s18, 3
      %s213 = smul.addr %s212, 32
      %s214 = smul.addr %s213, 4
      %s215 = scalar_lea.vmem %s1, %s214
      %p216 = scmp.lt.s32.totalorder %s18, 3
      %s217 = scalar_select %p216, %s18, 3
      %p218 = scmp.lt.s32.totalorder %s19, 0
      %s219 = scalar_select %p218, %s19, 0
      %s220 = sadd.s32 %s219, %s217
      %s221 = smul.addr %s220, 8
      %s222 = scalar_lea.vmem %s3, %s221
      %v224 = vld [vmem:[%s210] sm:$0xff]
      %v225 = vld [vmem:[%s215] sm:$0xf]
      %v226 = vld [vmem:[%s215 + $0x4] sm:$0xf]
      %v227 = vld [vmem:[%s215 + $0x8] sm:$0xf]
      %v228 = vld [vmem:[%s215 + $0xc] sm:$0xf]
      %v229 = vld [vmem:[%s215 + $0x10] sm:$0xf]
      %v230 = vld [vmem:[%s215 + $0x14] sm:$0xf]
      %v231 = vld [vmem:[%s215 + $0x18] sm:$0xf]
      %v232 = vld [vmem:[%s215 + $0x1c] sm:$0xf]
      %v233 = vld [vmem:[%s215 + $0x20] sm:$0xf]
      %v234 = vld [vmem:[%s215 + $0x24] sm:$0xf]
      %v235 = vld [vmem:[%s215 + $0x28] sm:$0xf]
      %v236 = vld [vmem:[%s215 + $0x2c] sm:$0xf]
      %v237 = vld [vmem:[%s215 + $0x30] sm:$0xf]
      %v238 = vld [vmem:[%s215 + $0x34] sm:$0xf]
      %v239 = vld [vmem:[%s215 + $0x38] sm:$0xf]
      %v240 = vld [vmem:[%s215 + $0x3c] sm:$0xf]
      %v241 = vld [vmem:[%s215 + $0x40] sm:$0xf]
      %v242 = vld [vmem:[%s215 + $0x44] sm:$0xf]
      %v243 = vld [vmem:[%s215 + $0x48] sm:$0xf]
      %v244 = vld [vmem:[%s215 + $0x4c] sm:$0xf]
      %v245 = vld [vmem:[%s215 + $0x50] sm:$0xf]
      %v246 = vld [vmem:[%s215 + $0x54] sm:$0xf]
      %v247 = vld [vmem:[%s215 + $0x58] sm:$0xf]
      %v248 = vld [vmem:[%s215 + $0x5c] sm:$0xf]
      %v249 = vld [vmem:[%s215 + $0x60] sm:$0xf]
      %v250 = vld [vmem:[%s215 + $0x64] sm:$0xf]
      %v251 = vld [vmem:[%s215 + $0x68] sm:$0xf]
      %v252 = vld [vmem:[%s215 + $0x6c] sm:$0xf]
      %v253 = vld [vmem:[%s215 + $0x70] sm:$0xf]
      %v254 = vld [vmem:[%s215 + $0x74] sm:$0xf]
      %v255 = vld [vmem:[%s215 + $0x78] sm:$0xf]
      %v256 = vld [vmem:[%s215 + $0x7c] sm:$0xf]
      %v257 = vld [vmem:[%s2] sm:$0x1]
      %v259 = vlaneseq
      %v260 = vshrl.u32 %v259, 7
      %v261 = vsub.s32 0, %v260
      %v262 = vrot.slane %v257, %v261
      %v265 = vunpack.c.l.b16 %v224
      %v266 = vunpack.c.h.b16 %v224
      %v267 = vpack.c.b16 %v265, %v265
      %v268 = vpack.c.b16 %v266, %v266
      %v303 = vunpack.c.l.b16 %v225
      %v304 = vunpack.c.l.b16 %v226
      %v305 = vunpack.c.l.b16 %v227
      %v306 = vunpack.c.l.b16 %v228
      %v307 = vunpack.c.l.b16 %v229
      %v308 = vunpack.c.l.b16 %v230
      %v309 = vunpack.c.l.b16 %v231
      %v310 = vunpack.c.l.b16 %v232
      %v311 = vunpack.c.l.b16 %v233
      %v312 = vunpack.c.l.b16 %v234
      %v313 = vunpack.c.l.b16 %v235
      %v314 = vunpack.c.l.b16 %v236
      %v315 = vunpack.c.l.b16 %v237
      %v316 = vunpack.c.l.b16 %v238
      %v317 = vunpack.c.l.b16 %v239
      %v318 = vunpack.c.l.b16 %v240
      %v319 = vunpack.c.l.b16 %v241
      %v320 = vunpack.c.l.b16 %v242
      %v321 = vunpack.c.l.b16 %v243
      %v322 = vunpack.c.l.b16 %v244
      %v323 = vunpack.c.l.b16 %v245
      %v324 = vunpack.c.l.b16 %v246
      %v325 = vunpack.c.l.b16 %v247
      %v326 = vunpack.c.l.b16 %v248
      %v327 = vunpack.c.l.b16 %v249
      %v328 = vunpack.c.l.b16 %v250
      %v329 = vunpack.c.l.b16 %v251
      %v330 = vunpack.c.l.b16 %v252
      %v331 = vunpack.c.l.b16 %v253
      %v332 = vunpack.c.l.b16 %v254
      %v333 = vunpack.c.l.b16 %v255
      %v334 = vunpack.c.l.b16 %v256
      %v335 = vpack.c.b16 %v304, %v303
      %v336 = vpack.c.b16 %v306, %v305
      %v337 = vpack.c.b16 %v308, %v307
      %v338 = vpack.c.b16 %v310, %v309
      %v339 = vpack.c.b16 %v312, %v311
      %v340 = vpack.c.b16 %v314, %v313
      %v341 = vpack.c.b16 %v316, %v315
      %v342 = vpack.c.b16 %v318, %v317
      %v343 = vpack.c.b16 %v320, %v319
      %v344 = vpack.c.b16 %v322, %v321
      %v345 = vpack.c.b16 %v324, %v323
      %v346 = vpack.c.b16 %v326, %v325
      %v347 = vpack.c.b16 %v328, %v327
      %v348 = vpack.c.b16 %v330, %v329
      %v349 = vpack.c.b16 %v332, %v331
      %v350 = vpack.c.b16 %v334, %v333
      %367 = vmatprep.subr.bf16.mxu0 0
      %368 = vmatpush1.bf16.msra.mxu0 %v342
      %369 = vmatprep.subr.bf16.mxu0 0
      %370 = vmatpush1.bf16.msra.mxu0 %v341
      %371 = vmatprep.subr.bf16.mxu0 0
      %372 = vmatpush1.bf16.msra.mxu0 %v340
      %373 = vmatprep.subr.bf16.mxu0 0
      %374 = vmatpush1.bf16.msra.mxu0 %v339
      %375 = vmatprep.subr.bf16.mxu0 0
      %376 = vmatpush1.bf16.msra.mxu0 %v338
      %377 = vmatprep.subr.bf16.mxu0 0
      %378 = vmatpush1.bf16.msra.mxu0 %v337
      %379 = vmatprep.subr.bf16.mxu0 0
      %380 = vmatpush1.bf16.msra.mxu0 %v336
      %381 = vmatprep.subr.bf16.mxu0 0
      %382 = vmatpush1.bf16.msra.mxu0 %v335
      %383 = vmatprep.subr.bf16.mxu0 0
      %384 = vmatpush2.bf16.msra.mxu0 %v350
      %385 = vmatprep.subr.bf16.mxu0 0
      %386 = vmatpush2.bf16.msra.mxu0 %v349
      %387 = vmatprep.subr.bf16.mxu0 0
      %388 = vmatpush2.bf16.msra.mxu0 %v348
      %389 = vmatprep.subr.bf16.mxu0 0
      %390 = vmatpush2.bf16.msra.mxu0 %v347
      %391 = vmatprep.subr.bf16.mxu0 0
      %392 = vmatpush2.bf16.msra.mxu0 %v346
      %393 = vmatprep.subr.bf16.mxu0 0
      %394 = vmatpush2.bf16.msra.mxu0 %v345
      %395 = vmatprep.subr.bf16.mxu0 0
      %396 = vmatpush2.bf16.msra.mxu0 %v344
      %397 = vmatprep.subr.bf16.mxu0 0
      %398 = vmatpush2.bf16.msra.mxu0 %v343
      %399 = vmatprep.mubr.bf16.mxu0 %v268
      %400 = vmatmul.mubr.bf16.gmra.mxu0 %v267
      %v401 = vpop.f32.mrf.mxu0
      %v402 = vadd.f32 %v262, %v401
      %v403 = vpop.f32.mrf.mxu0
      %v404 = vpop.f32.mrf.mxu0
      %v405 = vpop.f32.mrf.mxu0
      %406 = vdwg.mxu0
      %vm407 = vcmask 523264
      %408 = vst.msk [vmem:[%s222] sm:$0xff] %vm407, %v402
      %p409 = scmp.lt.s32.totalorder %s18, 3
      %s410 = scalar_select %p409, %s18, 3
      %p411 = scmp.lt.s32.totalorder %s19, 0
      %s412 = scalar_select %p411, %s19, 0
      %s413 = sadd.s32 %s412, %s410
      %s414 = smul.addr %s413, 8
      %s415 = scalar_lea.vmem %s3, %s414
      // Predicated region
      $region33: #{unet_forward.18} parent=31 // pred_check
        %p416 = pneg %p121
      $region34: #{unet_forward.18} parent=31 // pred_check_branch
        %418 = sbr.rel (%p416) target = $region36
      $region35: #{unet_forward.18} parent=31 // pred_region
        _
      $region36: #{unet_forward.18} parent=31 // pred_fallthru
        _
    $region32: #{unet_forward.18} parent=5 // pred_fallthru
      _
    %p419 = scmp.le.s32.totalorder 2, %s9
    // Predicated region
    $region37: #{unet_forward.18} parent=5 // pred_check
      %p420 = pneg %p419
    $region38: #{unet_forward.18} parent=5 // pred_check_branch
      %422 = sbr.rel (%p420) target = $region40
    $region39: #{unet_forward.18} parent=5 // pred_region
      %s423 = ssub.s32 %s9, 2
      // Predicated region
      $region41: #{unet_forward.18} parent=39 // pred_check
        %p424 = pneg %p127
      $region42: #{unet_forward.18} parent=39 // pred_check_branch
        %426 = sbr.rel (%p424) target = $region44
      $region43: #{unet_forward.18} parent=39 // pred_region
        %p427 = scmp.lt.s32.totalorder %s20, 3
        %s428 = scalar_select %p427, %s20, 3
        %p429 = scmp.lt.s32.totalorder %s21, 0
        %s430 = scalar_select %p429, %s21, 0
        %s431 = sadd.s32 %s430, %s428
        %s432 = smul.addr %s431, 8
        %s433 = scalar_lea.vmem %s3, %s432
      $region44: #{unet_forward.18} parent=39 // pred_fallthru
        _
    $region40: #{unet_forward.18} parent=5 // pred_fallthru
      _
  $region6: #{unet_forward.18} parent=0 // loop_footer
    %s13 = sadd.s32 1, %s9
  $region7: #{unet_forward.18} parent=0 // loop_footer_branch
    %8 = sbr.rel target = $region3
  $region8: #{unet_forward.18} parent=0 // loop_exit
    _

// kernel: unet_forward.19
$region0: #{unet_forward.19}
  #allocation0 [shape = 'u32[]', space=smem, size = 0x4, offset = 0x4, fixed_abs, tag = 'smem constant byte address 0x4 - core index']
  #allocation1 [shape = 'u32[144,128]{1,0:T(1,128)}', space=vmem, size = 0x12000, scoped, tag = 'internal scratch']
  %s0 = inlined_call_operand.vmem [shape: bf16[4,8,512], index: 0, kind: input, shape index: {}]
  %s1 = inlined_call_operand.vmem [shape: bf16[4,512,64], index: 1, kind: input, shape index: {}]
  %s2 = inlined_call_operand.vmem [shape: f32[1,64], index: 2, kind: input, shape index: {}]
  %s3 = inlined_call_operand.vmem [shape: f32[4,8,64], index: 3, kind: output, shape index: {}]
  %s4 = sld [smem:[#allocation0]]
  $region45: #{unet_forward.19} parent=0
    _
  %s6 = ssub.s32 1, %s4
  %s7 = scalar_select 0, %s6, %s4
  loop: start=0, step=1, limit=6
  $region2: #{unet_forward.19} parent=0 // loop_pre_header
    _
  $region3: #{unet_forward.19} parent=0 // loop_header
    %s9 = sphi 0, %s13
    %p10 = scmp.ge.s32.totalorder %s9, 6
    %s16 = sphi 0, %s28
    %s17 = sphi 0, %s24
    %s18 = sphi 0, %s16
    %s19 = sphi 0, %s17
    %s20 = sphi 0, %s18
    %s21 = sphi 0, %s19
    %s33 = sphi 0, %s35
    %s36 = sphi 0, %s33
    %s37 = sphi 0, %s36
    %s53 = sphi 0, %s37
    %s59 = sphi 0, %s61
    %s62 = sphi 0, %s59
    %s63 = sphi 0, %s62
    %s79 = sphi 0, %s63
    %s83 = sphi 0, %s83
    %s85 = sphi 0, %s83
    %s86 = sphi 0, %s85
    %s100 = sphi 0, %s86
    %s108 = sphi 0, %s110
    %s111 = sphi 0, %s108
    %s112 = sphi 0, %s111
    %s128 = sphi 0, %s112
  $region4: #{unet_forward.19} parent=0 // loop_header_branch
    %12 = sbr.rel (%p10) target = $region8
  $region5: #{unet_forward.19} parent=0 // loop_body
    %s14 = ssub.s32 %s9, 1
    %s15 = ssub.s32 %s9, 2
    %s22 = sadd.s32 1, %s17
    %p23 = scmp.ge.s32.totalorder %s22, 1
    %s24 = scalar_select %p23, 0, %s22
    %s25 = sadd.s32 1, %s16
    %s26 = scalar_select %p23, %s25, %s16
    %p27 = scmp.ge.s32.totalorder %s26, 4
    %s28 = scalar_select %p27, 0, %s26
    %s29 = ssub.s32 %s16, %s28
    %s30 = ssub.s32 %s17, %s24
    %s31 = sor.u32 %s29, %s30
    %p32 = scmp.eq.s32.totalorder %s31, 0
    %s34 = sadd.s32 %s33, 1
    %s35 = scalar_select %p32, %s33, %s34
    %p38 = pneg %p32
    %p39 = scmp.eq.s32.totalorder %s9, 3
    %p40 = por %p38, %p39
    %p41 = scmp.ne.s32.totalorder %s33, %s36
    %p42 = scmp.eq.s32.totalorder %s9, 0
    %p43 = por %p41, %p42
    %p44 = scmp.ne.s32.totalorder %s33, %s36
    %p45 = scmp.eq.s32.totalorder %s14, 3
    %p46 = por %p44, %p45
    %p47 = scmp.ne.s32.totalorder %s36, %s37
    %p48 = scmp.eq.s32.totalorder %s14, 0
    %p49 = por %p47, %p48
    %p50 = scmp.ne.s32.totalorder %s36, %s37
    %p51 = scmp.eq.s32.totalorder %s15, 3
    %p52 = por %p50, %p51
    %p54 = scmp.ne.s32.totalorder %s37, %s53
    %p55 = scmp.eq.s32.totalorder %s15, 0
    %p56 = por %p54, %p55
    %s57 = ssub.s32 %s16, %s28
    %p58 = scmp.eq.s32.totalorder %s57, 0
    %s60 = sadd.s32 %s59, 1
    %s61 = scalar_select %p58, %s59, %s60
    %p64 = pneg %p58
    %p65 = scmp.eq.s32.totalorder %s9, 3
    %p66 = por %p64, %p65
    %p67 = scmp.ne.s32.totalorder %s59, %s62
    %p68 = scmp.eq.s32.totalorder %s9, 0
    %p69 = por %p67, %p68
    %p70 = scmp.ne.s32.totalorder %s59, %s62
    %p71 = scmp.eq.s32.totalorder %s14, 3
    %p72 = por %p70, %p71
    %p73 = scmp.ne.s32.totalorder %s62, %s63
    %p74 = scmp.eq.s32.totalorder %s14, 0
    %p75 = por %p73, %p74
    %p76 = scmp.ne.s32.totalorder %s62, %s63
    %p77 = scmp.eq.s32.totalorder %s15, 3
    %p78 = por %p76, %p77
    %p80 = scmp.ne.s32.totalorder %s63, %s79
    %p81 = scmp.eq.s32.totalorder %s15, 0
    %p82 = por %p80, %p81
    %s84 = sadd.s32 %s83, 1
    %p87 = scmp.eq.s32.totalorder %s9, 3
    %p88 = scmp.ne.s32.totalorder %s83, %s85
    %p89 = scmp.eq.s32.totalorder %s9, 0
    %p90 = por %p88, %p89
    %p91 = scmp.ne.s32.totalorder %s83, %s85
    %p92 = scmp.eq.s32.totalorder %s14, 3
    %p93 = por %p91, %p92
    %p94 = scmp.ne.s32.totalorder %s85, %s86
    %p95 = scmp.eq.s32.totalorder %s14, 0
    %p96 = por %p94, %p95
    %p97 = scmp.ne.s32.totalorder %s85, %s86
    %p98 = scmp.eq.s32.totalorder %s15, 3
    %p99 = por %p97, %p98
    %p101 = scmp.ne.s32.totalorder %s86, %s100
    %p102 = scmp.eq.s32.totalorder %s15, 0
    %p103 = por %p101, %p102
    %s104 = ssub.s32 %s16, %s28
    %s105 = ssub.s32 %s17, %s24
    %s106 = sor.u32 %s104, %s105
    %p107 = scmp.eq.s32.totalorder %s106, 0
    %s109 = sadd.s32 %s108, 1
    %s110 = scalar_select %p107, %s108, %s109
    %p113 = pneg %p107
    %p114 = scmp.eq.s32.totalorder %s9, 3
    %p115 = por %p113, %p114
    %p116 = scmp.ne.s32.totalorder %s108, %s111
    %p117 = scmp.eq.s32.totalorder %s9, 0
    %p118 = por %p116, %p117
    %p119 = scmp.ne.s32.totalorder %s108, %s111
    %p120 = scmp.eq.s32.totalorder %s14, 3
    %p121 = por %p119, %p120
    %p122 = scmp.ne.s32.totalorder %s111, %s112
    %p123 = scmp.eq.s32.totalorder %s14, 0
    %p124 = por %p122, %p123
    %p125 = scmp.ne.s32.totalorder %s111, %s112
    %p126 = scmp.eq.s32.totalorder %s15, 3
    %p127 = por %p125, %p126
    %p129 = scmp.ne.s32.totalorder %s112, %s128
    %p130 = scmp.eq.s32.totalorder %s15, 0
    %p131 = por %p129, %p130
    %p132 = scmp.le.s32.totalorder 1, %s9
    %p133 = scmp.lt.s32.totalorder %s9, 5
    %p134 = pnand %p132, %p133
    %p135 = pneg %p134
    // Predicated region
    $region9: #{unet_forward.19} parent=5 // pred_check
      _
    $region10: #{unet_forward.19} parent=5 // pred_check_branch
      %137 = sbr.rel (%p134) target = $region12
    $region11: #{unet_forward.19} parent=5 // pred_region
      %s138 = ssub.s32 %s9, 1
      // Predicated region
      $region13: #{unet_forward.19} parent=11 // pred_check
        %p139 = pneg %p96
      $region14: #{unet_forward.19} parent=11 // pred_check_branch
        %141 = sbr.rel (%p139) target = $region16
      $region15: #{unet_forward.19} parent=11 // pred_region
        _
      $region16: #{unet_forward.19} parent=11 // pred_fallthru
        _
    $region12: #{unet_forward.19} parent=5 // pred_fallthru
      _
    %p142 = scmp.lt.s32.totalorder %s9, 4
    // Predicated region
    $region17: #{unet_forward.19} parent=5 // pred_check
      %p143 = pneg %p142
    $region18: #{unet_forward.19} parent=5 // pred_check_branch
      %145 = sbr.rel (%p143) target = $region20
    $region19: #{unet_forward.19} parent=5 // pred_region
      // Predicated region
      $region21: #{unet_forward.19} parent=19 // pred_check
        %p146 = pneg %p43
      $region22: #{unet_forward.19} parent=19 // pred_check_branch
        %148 = sbr.rel (%p146) target = $region24
      $region23: #{unet_forward.19} parent=19 // pred_region
        %p149 = scmp.lt.s32.totalorder %s16, 3
        %s150 = scalar_select %p149, %s16, 3
        %p151 = scmp.lt.s32.totalorder %s17, 0
        %s152 = scalar_select %p151, %s17, 0
        %s153 = smul.addr %s152, 4
        %s154 = smul.addr %s150, 4
        %s155 = sadd.s32 %s153, %s154
        %s156 = smul.addr %s155, 4
        %s157 = scalar_lea.vmem %s0, %s156
      $region24: #{unet_forward.19} parent=19 // pred_fallthru
        _
      // Predicated region
      $region25: #{unet_forward.19} parent=19 // pred_check
        %p158 = pneg %p69
      $region26: #{unet_forward.19} parent=19 // pred_check_branch
        %160 = sbr.rel (%p158) target = $region28
      $region27: #{unet_forward.19} parent=19 // pred_region
        %p161 = scmp.lt.s32.totalorder %s16, 3
        %s162 = scalar_select %p161, %s16, 3
        %s163 = smul.addr %s162, 64
        %s164 = smul.addr %s163, 4
        %s165 = scalar_lea.vmem %s1, %s164
      $region28: #{unet_forward.19} parent=19 // pred_fallthru
        _
    $region20: #{unet_forward.19} parent=5 // pred_fallthru
      _
    %p166 = scmp.le.s32.totalorder 1, %s9
    %p167 = scmp.lt.s32.totalorder %s9, 5
    %p168 = pnand %p166, %p167
    %p169 = pneg %p168
    // Predicated region
    $region29: #{unet_forward.19} parent=5 // pred_check
      _
    $region30: #{unet_forward.19} parent=5 // pred_check_branch
      %171 = sbr.rel (%p168) target = $region32
    $region31: #{unet_forward.19} parent=5 // pred_region
      %s172 = ssub.s32 %s9, 1
      %p173 = scmp.lt.s32.totalorder %s18, 3
      %s174 = scalar_select %p173, %s18, 3
      %p175 = scmp.lt.s32.totalorder %s19, 0
      %s176 = scalar_select %p175, %s19, 0
      %s177 = smul.addr %s176, 4
      %s178 = smul.addr %s174, 4
      %s179 = sadd.s32 %s177, %s178
      %s180 = smul.addr %s179, 4
      %s181 = scalar_lea.vmem %s0, %s180
      %p182 = pneg %p49
      %p183 = pneg %p46
      %p184 = scmp.lt.s32.totalorder %s18, 3
      %s185 = scalar_select %p184, %s18, 3
      %s186 = smul.addr %s185, 64
      %s187 = smul.addr %s186, 4
      %s188 = scalar_lea.vmem %s1, %s187
      %p189 = pneg %p75
      %p190 = pneg %p72
      %p191 = pneg %p96
      %p192 = pneg %p93
      %p193 = pneg %p124
      %p194 = pneg %p121
      %p195 = scmp.lt.s32.totalorder %s18, 3
      %s196 = scalar_select %p195, %s18, 3
      %p197 = scmp.lt.s32.totalorder %s19, 0
      %s198 = scalar_select %p197, %s19, 0
      %s199 = sadd.s32 %s198, %s196
      %s200 = smul.addr %s199, 8
      %s201 = scalar_lea.vmem %s3, %s200
      %p202 = scmp.lt.s32.totalorder %s18, 3
      %s203 = scalar_select %p202, %s18, 3
      %p204 = scmp.lt.s32.totalorder %s19, 0
      %s205 = scalar_select %p204, %s19, 0
      %s206 = smul.addr %s205, 4
      %s207 = smul.addr %s203, 4
      %s208 = sadd.s32 %s206, %s207
      %s209 = smul.addr %s208, 4
      %s210 = scalar_lea.vmem %s0, %s209
      %p211 = scmp.lt.s32.totalorder %s18, 3
      %s212 = scalar_select %p211, %s18, 3
      %s213 = smul.addr %s212, 64
      %s214 = smul.addr %s213, 4
      %s215 = scalar_lea.vmem %s1, %s214
      %p216 = scmp.lt.s32.totalorder %s18, 3
      %s217 = scalar_select %p216, %s18, 3
      %p218 = scmp.lt.s32.totalorder %s19, 0
      %s219 = scalar_select %p218, %s19, 0
      %s220 = sadd.s32 %s219, %s217
      %s221 = smul.addr %s220, 8
      %s222 = scalar_lea.vmem %s3, %s221
      %v224 = vld [vmem:[%s210] sm:$0xff]
      %v225 = vld [vmem:[%s210 + $0x8] sm:$0xff]
      %v226 = vld [vmem:[%s215] sm:$0xf]
      %v227 = vld [vmem:[%s215 + $0x4] sm:$0xf]
      %v228 = vld [vmem:[%s215 + $0x8] sm:$0xf]
      %v229 = vld [vmem:[%s215 + $0xc] sm:$0xf]
      %v230 = vld [vmem:[%s215 + $0x10] sm:$0xf]
      %v231 = vld [vmem:[%s215 + $0x14] sm:$0xf]
      %v232 = vld [vmem:[%s215 + $0x18] sm:$0xf]
      %v233 = vld [vmem:[%s215 + $0x1c] sm:$0xf]
      %v234 = vld [vmem:[%s215 + $0x20] sm:$0xf]
      %v235 = vld [vmem:[%s215 + $0x24] sm:$0xf]
      %v236 = vld [vmem:[%s215 + $0x28] sm:$0xf]
      %v237 = vld [vmem:[%s215 + $0x2c] sm:$0xf]
      %v238 = vld [vmem:[%s215 + $0x30] sm:$0xf]
      %v239 = vld [vmem:[%s215 + $0x34] sm:$0xf]
      %v240 = vld [vmem:[%s215 + $0x38] sm:$0xf]
      %v241 = vld [vmem:[%s215 + $0x3c] sm:$0xf]
      %v242 = vld [vmem:[%s215 + $0x40] sm:$0xf]
      %v243 = vld [vmem:[%s215 + $0x44] sm:$0xf]
      %v244 = vld [vmem:[%s215 + $0x48] sm:$0xf]
      %v245 = vld [vmem:[%s215 + $0x4c] sm:$0xf]
      %v246 = vld [vmem:[%s215 + $0x50] sm:$0xf]
      %v247 = vld [vmem:[%s215 + $0x54] sm:$0xf]
      %v248 = vld [vmem:[%s215 + $0x58] sm:$0xf]
      %v249 = vld [vmem:[%s215 + $0x5c] sm:$0xf]
      %v250 = vld [vmem:[%s215 + $0x60] sm:$0xf]
      %v251 = vld [vmem:[%s215 + $0x64] sm:$0xf]
      %v252 = vld [vmem:[%s215 + $0x68] sm:$0xf]
      %v253 = vld [vmem:[%s215 + $0x6c] sm:$0xf]
      %v254 = vld [vmem:[%s215 + $0x70] sm:$0xf]
      %v255 = vld [vmem:[%s215 + $0x74] sm:$0xf]
      %v256 = vld [vmem:[%s215 + $0x78] sm:$0xf]
      %v257 = vld [vmem:[%s215 + $0x7c] sm:$0xf]
      %v258 = vld [vmem:[%s215 + $0x80] sm:$0xf]
      %v259 = vld [vmem:[%s215 + $0x84] sm:$0xf]
      %v260 = vld [vmem:[%s215 + $0x88] sm:$0xf]
      %v261 = vld [vmem:[%s215 + $0x8c] sm:$0xf]
      %v262 = vld [vmem:[%s215 + $0x90] sm:$0xf]
      %v263 = vld [vmem:[%s215 + $0x94] sm:$0xf]
      %v264 = vld [vmem:[%s215 + $0x98] sm:$0xf]
      %v265 = vld [vmem:[%s215 + $0x9c] sm:$0xf]
      %v266 = vld [vmem:[%s215 + $0xa0] sm:$0xf]
      %v267 = vld [vmem:[%s215 + $0xa4] sm:$0xf]
      %v268 = vld [vmem:[%s215 + $0xa8] sm:$0xf]
      %v269 = vld [vmem:[%s215 + $0xac] sm:$0xf]
      %v270 = vld [vmem:[%s215 + $0xb0] sm:$0xf]
      %v271 = vld [vmem:[%s215 + $0xb4] sm:$0xf]
      %v272 = vld [vmem:[%s215 + $0xb8] sm:$0xf]
      %v273 = vld [vmem:[%s215 + $0xbc] sm:$0xf]
      %v274 = vld [vmem:[%s215 + $0xc0] sm:$0xf]
      %v275 = vld [vmem:[%s215 + $0xc4] sm:$0xf]
      %v276 = vld [vmem:[%s215 + $0xc8] sm:$0xf]
      %v277 = vld [vmem:[%s215 + $0xcc] sm:$0xf]
      %v278 = vld [vmem:[%s215 + $0xd0] sm:$0xf]
      %v279 = vld [vmem:[%s215 + $0xd4] sm:$0xf]
      %v280 = vld [vmem:[%s215 + $0xd8] sm:$0xf]
      %v281 = vld [vmem:[%s215 + $0xdc] sm:$0xf]
      %v282 = vld [vmem:[%s215 + $0xe0] sm:$0xf]
      %v283 = vld [vmem:[%s215 + $0xe4] sm:$0xf]
      %v284 = vld [vmem:[%s215 + $0xe8] sm:$0xf]
      %v285 = vld [vmem:[%s215 + $0xec] sm:$0xf]
      %v286 = vld [vmem:[%s215 + $0xf0] sm:$0xf]
      %v287 = vld [vmem:[%s215 + $0xf4] sm:$0xf]
      %v288 = vld [vmem:[%s215 + $0xf8] sm:$0xf]
      %v289 = vld [vmem:[%s215 + $0xfc] sm:$0xf]
      %v290 = vld [vmem:[%s2] sm:$0x1]
      %v292 = vlaneseq
      %v293 = vshrl.u32 %v292, 7
      %v294 = vsub.s32 0, %v293
      %v295 = vrot.slane %v290, %v294
      %v299 = vunpack.c.l.b16 %v224
      %v300 = vunpack.c.h.b16 %v224
      %v301 = vunpack.c.l.b16 %v225
      %v302 = vunpack.c.h.b16 %v225
      %v303 = vpack.c.b16 %v299, %v299
      %v304 = vpack.c.b16 %v300, %v300
      %v305 = vpack.c.b16 %v301, %v301
      %v306 = vpack.c.b16 %v302, %v302
      %v375 = vunpack.c.l.b16 %v226
      %v376 = vunpack.c.l.b16 %v227
      %v377 = vunpack.c.l.b16 %v228
      %v378 = vunpack.c.l.b16 %v229
      %v379 = vunpack.c.l.b16 %v230
      %v380 = vunpack.c.l.b16 %v231
      %v381 = vunpack.c.l.b16 %v232
      %v382 = vunpack.c.l.b16 %v233
      %v383 = vunpack.c.l.b16 %v234
      %v384 = vunpack.c.l.b16 %v235
      %v385 = vunpack.c.l.b16 %v236
      %v386 = vunpack.c.l.b16 %v237
      %v387 = vunpack.c.l.b16 %v238
      %v388 = vunpack.c.l.b16 %v239
      %v389 = vunpack.c.l.b16 %v240
      %v390 = vunpack.c.l.b16 %v241
      %v391 = vunpack.c.l.b16 %v242
      %v392 = vunpack.c.l.b16 %v243
      %v393 = vunpack.c.l.b16 %v244
      %v394 = vunpack.c.l.b16 %v245
      %v395 = vunpack.c.l.b16 %v246
      %v396 = vunpack.c.l.b16 %v247
      %v397 = vunpack.c.l.b16 %v248
      %v398 = vunpack.c.l.b16 %v249
      %v399 = vunpack.c.l.b16 %v250
      %v400 = vunpack.c.l.b16 %v251
      %v401 = vunpack.c.l.b16 %v252
      %v402 = vunpack.c.l.b16 %v253
      %v403 = vunpack.c.l.b16 %v254
      %v404 = vunpack.c.l.b16 %v255
      %v405 = vunpack.c.l.b16 %v256
      %v406 = vunpack.c.l.b16 %v257
      %v407 = vunpack.c.l.b16 %v258
      %v408 = vunpack.c.l.b16 %v259
      %v409 = vunpack.c.l.b16 %v260
      %v410 = vunpack.c.l.b16 %v261
      %v411 = vunpack.c.l.b16 %v262
      %v412 = vunpack.c.l.b16 %v263
      %v413 = vunpack.c.l.b16 %v264
      %v414 = vunpack.c.l.b16 %v265
      %v415 = vunpack.c.l.b16 %v266
      %v416 = vunpack.c.l.b16 %v267
      %v417 = vunpack.c.l.b16 %v268
      %v418 = vunpack.c.l.b16 %v269
      %v419 = vunpack.c.l.b16 %v270
      %v420 = vunpack.c.l.b16 %v271
      %v421 = vunpack.c.l.b16 %v272
      %v422 = vunpack.c.l.b16 %v273
      %v423 = vunpack.c.l.b16 %v274
      %v424 = vunpack.c.l.b16 %v275
      %v425 = vunpack.c.l.b16 %v276
      %v426 = vunpack.c.l.b16 %v277
      %v427 = vunpack.c.l.b16 %v278
      %v428 = vunpack.c.l.b16 %v279
      %v429 = vunpack.c.l.b16 %v280
      %v430 = vunpack.c.l.b16 %v281
      %v431 = vunpack.c.l.b16 %v282
      %v432 = vunpack.c.l.b16 %v283
      %v433 = vunpack.c.l.b16 %v284
      %v434 = vunpack.c.l.b16 %v285
      %v435 = vunpack.c.l.b16 %v286
      %v436 = vunpack.c.l.b16 %v287
      %v437 = vunpack.c.l.b16 %v288
      %v438 = vunpack.c.l.b16 %v289
      %v439 = vpack.c.b16 %v376, %v375
      %v440 = vpack.c.b16 %v378, %v377
      %v441 = vpack.c.b16 %v380, %v379
      %v442 = vpack.c.b16 %v382, %v381
      %v443 = vpack.c.b16 %v384, %v383
      %v444 = vpack.c.b16 %v386, %v385
      %v445 = vpack.c.b16 %v388, %v387
      %v446 = vpack.c.b16 %v390, %v389
      %v447 = vpack.c.b16 %v392, %v391
      %v448 = vpack.c.b16 %v394, %v393
      %v449 = vpack.c.b16 %v396, %v395
      %v450 = vpack.c.b16 %v398, %v397
      %v451 = vpack.c.b16 %v400, %v399
      %v452 = vpack.c.b16 %v402, %v401
      %v453 = vpack.c.b16 %v404, %v403
      %v454 = vpack.c.b16 %v406, %v405
      %v455 = vpack.c.b16 %v408, %v407
      %v456 = vpack.c.b16 %v410, %v409
      %v457 = vpack.c.b16 %v412, %v411
      %v458 = vpack.c.b16 %v414, %v413
      %v459 = vpack.c.b16 %v416, %v415
      %v460 = vpack.c.b16 %v418, %v417
      %v461 = vpack.c.b16 %v420, %v419
      %v462 = vpack.c.b16 %v422, %v421
      %v463 = vpack.c.b16 %v424, %v423
      %v464 = vpack.c.b16 %v426, %v425
      %v465 = vpack.c.b16 %v428, %v427
      %v466 = vpack.c.b16 %v430, %v429
      %v467 = vpack.c.b16 %v432, %v431
      %v468 = vpack.c.b16 %v434, %v433
      %v469 = vpack.c.b16 %v436, %v435
      %v470 = vpack.c.b16 %v438, %v437
      %503 = vmatprep.subr.bf16.mxu0 0
      %504 = vmatpush1.bf16.msra.mxu0 %v446
      %505 = vmatprep.subr.bf16.mxu0 0
      %506 = vmatpush1.bf16.msra.mxu0 %v445
      %507 = vmatprep.subr.bf16.mxu0 0
      %508 = vmatpush1.bf16.msra.mxu0 %v444
      %509 = vmatprep.subr.bf16.mxu0 0
      %510 = vmatpush1.bf16.msra.mxu0 %v443
      %511 = vmatprep.subr.bf16.mxu0 0
      %512 = vmatpush1.bf16.msra.mxu0 %v442
      %513 = vmatprep.subr.bf16.mxu0 0
      %514 = vmatpush1.bf16.msra.mxu0 %v441
      %515 = vmatprep.subr.bf16.mxu0 0
      %516 = vmatpush1.bf16.msra.mxu0 %v440
      %517 = vmatprep.subr.bf16.mxu0 0
      %518 = vmatpush1.bf16.msra.mxu0 %v439
      %519 = vmatprep.subr.bf16.mxu0 0
      %520 = vmatpush2.bf16.msra.mxu0 %v454
      %521 = vmatprep.subr.bf16.mxu0 0
      %522 = vmatpush2.bf16.msra.mxu0 %v453
      %523 = vmatprep.subr.bf16.mxu0 0
      %524 = vmatpush2.bf16.msra.mxu0 %v452
      %525 = vmatprep.subr.bf16.mxu0 0
      %526 = vmatpush2.bf16.msra.mxu0 %v451
      %527 = vmatprep.subr.bf16.mxu0 0
      %528 = vmatpush2.bf16.msra.mxu0 %v450
      %529 = vmatprep.subr.bf16.mxu0 0
      %530 = vmatpush2.bf16.msra.mxu0 %v449
      %531 = vmatprep.subr.bf16.mxu0 0
      %532 = vmatpush2.bf16.msra.mxu0 %v448
      %533 = vmatprep.subr.bf16.mxu0 0
      %534 = vmatpush2.bf16.msra.mxu0 %v447
      %535 = vmatprep.mubr.bf16.mxu0 %v304
      %536 = vmatmul.mubr.bf16.gmra.mxu0 %v303
      %v537 = vpop.f32.mrf.mxu0
      %v538 = vadd.f32 %v295, %v537
      %v539 = vpop.f32.mrf.mxu0
      %v540 = vpop.f32.mrf.mxu0
      %v541 = vpop.f32.mrf.mxu0
      %542 = vdwg.mxu0
      %543 = vmatprep.subr.bf16.mxu0 0
      %544 = vmatpush1.bf16.msra.mxu0 %v462
      %545 = vmatprep.subr.bf16.mxu0 0
      %546 = vmatpush1.bf16.msra.mxu0 %v461
      %547 = vmatprep.subr.bf16.mxu0 0
      %548 = vmatpush1.bf16.msra.mxu0 %v460
      %549 = vmatprep.subr.bf16.mxu0 0
      %550 = vmatpush1.bf16.msra.mxu0 %v459
      %551 = vmatprep.subr.bf16.mxu0 0
      %552 = vmatpush1.bf16.msra.mxu0 %v458
      %553 = vmatprep.subr.bf16.mxu0 0
      %554 = vmatpush1.bf16.msra.mxu0 %v457
      %555 = vmatprep.subr.bf16.mxu0 0
      %556 = vmatpush1.bf16.msra.mxu0 %v456
      %557 = vmatprep.subr.bf16.mxu0 0
      %558 = vmatpush1.bf16.msra.mxu0 %v455
      %559 = vmatprep.subr.bf16.mxu0 0
      %560 = vmatpush2.bf16.msra.mxu0 %v470
      %561 = vmatprep.subr.bf16.mxu0 0
      %562 = vmatpush2.bf16.msra.mxu0 %v469
      %563 = vmatprep.subr.bf16.mxu0 0
      %564 = vmatpush2.bf16.msra.mxu0 %v468
      %565 = vmatprep.subr.bf16.mxu0 0
      %566 = vmatpush2.bf16.msra.mxu0 %v467
      %567 = vmatprep.subr.bf16.mxu0 0
      %568 = vmatpush2.bf16.msra.mxu0 %v466
      %569 = vmatprep.subr.bf16.mxu0 0
      %570 = vmatpush2.bf16.msra.mxu0 %v465
      %571 = vmatprep.subr.bf16.mxu0 0
      %572 = vmatpush2.bf16.msra.mxu0 %v464
      %573 = vmatprep.subr.bf16.mxu0 0
      %574 = vmatpush2.bf16.msra.mxu0 %v463
      %575 = vmatprep.mubr.bf16.mxu0 %v306
      %576 = vmatmul.mubr.bf16.gmra.mxu0 %v305
      %v577 = vpop.f32.mrf.mxu0
      %v578 = vadd.f32 %v538, %v577
      %v579 = vpop.f32.mrf.mxu0
      %v580 = vpop.f32.mrf.mxu0
      %v581 = vpop.f32.mrf.mxu0
      %582 = vdwg.mxu0
      %vm583 = vcmask 523264
      %584 = vst.msk [vmem:[%s222] sm:$0xff] %vm583, %v578
      %p585 = scmp.lt.s32.totalorder %s18, 3
      %s586 = scalar_select %p585, %s18, 3
      %p587 = scmp.lt.s32.totalorder %s19, 0
      %s588 = scalar_select %p587, %s19, 0
      %s589 = sadd.s32 %s588, %s586
      %s590 = smul.addr %s589, 8
      %s591 = scalar_lea.vmem %s3, %s590
      // Predicated region
      $region33: #{unet_forward.19} parent=31 // pred_check
        %p592 = pneg %p121
      $region34: #{unet_forward.19} parent=31 // pred_check_branch
        %594 = sbr.rel (%p592) target = $region36
      $region35: #{unet_forward.19} parent=31 // pred_region
        _
      $region36: #{unet_forward.19} parent=31 // pred_fallthru
        _
    $region32: #{unet_forward.19} parent=5 // pred_fallthru
      _
    %p595 = scmp.le.s32.totalorder 2, %s9
    // Predicated region
    $region37: #{unet_forward.19} parent=5 // pred_check
      %p596 = pneg %p595
    $region38: #{unet_forward.19} parent=5 // pred_check_branch
      %598 = sbr.rel (%p596) target = $region40
    $region39: #{unet_forward.19} parent=5 // pred_region
      %s599 = ssub.s32 %s9, 2
      // Predicated region
      $region41: #{unet_forward.19} parent=39 // pred_check
        %p600 = pneg %p127
      $region42: #{unet_forward.19} parent=39 // pred_check_branch
        %602 = sbr.rel (%p600) target = $region44
      $region43: #{unet_forward.19} parent=39 // pred_region
        %p603 = scmp.lt.s32.totalorder %s20, 3
        %s604 = scalar_select %p603, %s20, 3
        %p605 = scmp.lt.s32.totalorder %s21, 0
        %s606 = scalar_select %p605, %s21, 0
        %s607 = sadd.s32 %s606, %s604
        %s608 = smul.addr %s607, 8
        %s609 = scalar_lea.vmem %s3, %s608
      $region44: #{unet_forward.19} parent=39 // pred_fallthru
        _
    $region40: #{unet_forward.19} parent=5 // pred_fallthru
      _
  $region6: #{unet_forward.19} parent=0 // loop_footer
    %s13 = sadd.s32 1, %s9
  $region7: #{unet_forward.19} parent=0 // loop_footer_branch
    %8 = sbr.rel target = $region3
  $region8: #{unet_forward.19} parent=0 // loop_exit
    _

// kernel: unet_forward.20
$region0: #{unet_forward.20}
  #allocation0 [shape = 'u32[]', space=smem, size = 0x4, offset = 0x4, fixed_abs, tag = 'smem constant byte address 0x4 - core index']
  #allocation1 [shape = 'u32[144,128]{1,0:T(1,128)}', space=vmem, size = 0x12000, scoped, tag = 'internal scratch']
  %s0 = inlined_call_operand.vmem [shape: bf16[4,32,512], index: 0, kind: input, shape index: {}]
  %s1 = inlined_call_operand.vmem [shape: bf16[4,512,32], index: 1, kind: input, shape index: {}]
  %s2 = inlined_call_operand.vmem [shape: f32[1,32], index: 2, kind: input, shape index: {}]
  %s3 = inlined_call_operand.vmem [shape: f32[4,32,32], index: 3, kind: output, shape index: {}]
  %s4 = sld [smem:[#allocation0]]
  $region45: #{unet_forward.20} parent=0
    _
  %s6 = ssub.s32 1, %s4
  %s7 = scalar_select 0, %s6, %s4
  loop: start=0, step=1, limit=6
  $region2: #{unet_forward.20} parent=0 // loop_pre_header
    _
  $region3: #{unet_forward.20} parent=0 // loop_header
    %s9 = sphi 0, %s13
    %p10 = scmp.ge.s32.totalorder %s9, 6
    %s16 = sphi 0, %s28
    %s17 = sphi 0, %s24
    %s18 = sphi 0, %s16
    %s19 = sphi 0, %s17
    %s20 = sphi 0, %s18
    %s21 = sphi 0, %s19
    %s33 = sphi 0, %s35
    %s36 = sphi 0, %s33
    %s37 = sphi 0, %s36
    %s53 = sphi 0, %s37
    %s59 = sphi 0, %s61
    %s62 = sphi 0, %s59
    %s63 = sphi 0, %s62
    %s79 = sphi 0, %s63
    %s83 = sphi 0, %s83
    %s85 = sphi 0, %s83
    %s86 = sphi 0, %s85
    %s100 = sphi 0, %s86
    %s108 = sphi 0, %s110
    %s111 = sphi 0, %s108
    %s112 = sphi 0, %s111
    %s128 = sphi 0, %s112
  $region4: #{unet_forward.20} parent=0 // loop_header_branch
    %12 = sbr.rel (%p10) target = $region8
  $region5: #{unet_forward.20} parent=0 // loop_body
    %s14 = ssub.s32 %s9, 1
    %s15 = ssub.s32 %s9, 2
    %s22 = sadd.s32 1, %s17
    %p23 = scmp.ge.s32.totalorder %s22, 1
    %s24 = scalar_select %p23, 0, %s22
    %s25 = sadd.s32 1, %s16
    %s26 = scalar_select %p23, %s25, %s16
    %p27 = scmp.ge.s32.totalorder %s26, 4
    %s28 = scalar_select %p27, 0, %s26
    %s29 = ssub.s32 %s16, %s28
    %s30 = ssub.s32 %s17, %s24
    %s31 = sor.u32 %s29, %s30
    %p32 = scmp.eq.s32.totalorder %s31, 0
    %s34 = sadd.s32 %s33, 1
    %s35 = scalar_select %p32, %s33, %s34
    %p38 = pneg %p32
    %p39 = scmp.eq.s32.totalorder %s9, 3
    %p40 = por %p38, %p39
    %p41 = scmp.ne.s32.totalorder %s33, %s36
    %p42 = scmp.eq.s32.totalorder %s9, 0
    %p43 = por %p41, %p42
    %p44 = scmp.ne.s32.totalorder %s33, %s36
    %p45 = scmp.eq.s32.totalorder %s14, 3
    %p46 = por %p44, %p45
    %p47 = scmp.ne.s32.totalorder %s36, %s37
    %p48 = scmp.eq.s32.totalorder %s14, 0
    %p49 = por %p47, %p48
    %p50 = scmp.ne.s32.totalorder %s36, %s37
    %p51 = scmp.eq.s32.totalorder %s15, 3
    %p52 = por %p50, %p51
    %p54 = scmp.ne.s32.totalorder %s37, %s53
    %p55 = scmp.eq.s32.totalorder %s15, 0
    %p56 = por %p54, %p55
    %s57 = ssub.s32 %s16, %s28
    %p58 = scmp.eq.s32.totalorder %s57, 0
    %s60 = sadd.s32 %s59, 1
    %s61 = scalar_select %p58, %s59, %s60
    %p64 = pneg %p58
    %p65 = scmp.eq.s32.totalorder %s9, 3
    %p66 = por %p64, %p65
    %p67 = scmp.ne.s32.totalorder %s59, %s62
    %p68 = scmp.eq.s32.totalorder %s9, 0
    %p69 = por %p67, %p68
    %p70 = scmp.ne.s32.totalorder %s59, %s62
    %p71 = scmp.eq.s32.totalorder %s14, 3
    %p72 = por %p70, %p71
    %p73 = scmp.ne.s32.totalorder %s62, %s63
    %p74 = scmp.eq.s32.totalorder %s14, 0
    %p75 = por %p73, %p74
    %p76 = scmp.ne.s32.totalorder %s62, %s63
    %p77 = scmp.eq.s32.totalorder %s15, 3
    %p78 = por %p76, %p77
    %p80 = scmp.ne.s32.totalorder %s63, %s79
    %p81 = scmp.eq.s32.totalorder %s15, 0
    %p82 = por %p80, %p81
    %s84 = sadd.s32 %s83, 1
    %p87 = scmp.eq.s32.totalorder %s9, 3
    %p88 = scmp.ne.s32.totalorder %s83, %s85
    %p89 = scmp.eq.s32.totalorder %s9, 0
    %p90 = por %p88, %p89
    %p91 = scmp.ne.s32.totalorder %s83, %s85
    %p92 = scmp.eq.s32.totalorder %s14, 3
    %p93 = por %p91, %p92
    %p94 = scmp.ne.s32.totalorder %s85, %s86
    %p95 = scmp.eq.s32.totalorder %s14, 0
    %p96 = por %p94, %p95
    %p97 = scmp.ne.s32.totalorder %s85, %s86
    %p98 = scmp.eq.s32.totalorder %s15, 3
    %p99 = por %p97, %p98
    %p101 = scmp.ne.s32.totalorder %s86, %s100
    %p102 = scmp.eq.s32.totalorder %s15, 0
    %p103 = por %p101, %p102
    %s104 = ssub.s32 %s16, %s28
    %s105 = ssub.s32 %s17, %s24
    %s106 = sor.u32 %s104, %s105
    %p107 = scmp.eq.s32.totalorder %s106, 0
    %s109 = sadd.s32 %s108, 1
    %s110 = scalar_select %p107, %s108, %s109
    %p113 = pneg %p107
    %p114 = scmp.eq.s32.totalorder %s9, 3
    %p115 = por %p113, %p114
    %p116 = scmp.ne.s32.totalorder %s108, %s111
    %p117 = scmp.eq.s32.totalorder %s9, 0
    %p118 = por %p116, %p117
    %p119 = scmp.ne.s32.totalorder %s108, %s111
    %p120 = scmp.eq.s32.totalorder %s14, 3
    %p121 = por %p119, %p120
    %p122 = scmp.ne.s32.totalorder %s111, %s112
    %p123 = scmp.eq.s32.totalorder %s14, 0
    %p124 = por %p122, %p123
    %p125 = scmp.ne.s32.totalorder %s111, %s112
    %p126 = scmp.eq.s32.totalorder %s15, 3
    %p127 = por %p125, %p126
    %p129 = scmp.ne.s32.totalorder %s112, %s128
    %p130 = scmp.eq.s32.totalorder %s15, 0
    %p131 = por %p129, %p130
    %p132 = scmp.le.s32.totalorder 1, %s9
    %p133 = scmp.lt.s32.totalorder %s9, 5
    %p134 = pnand %p132, %p133
    %p135 = pneg %p134
    // Predicated region
    $region9: #{unet_forward.20} parent=5 // pred_check
      _
    $region10: #{unet_forward.20} parent=5 // pred_check_branch
      %137 = sbr.rel (%p134) target = $region12
    $region11: #{unet_forward.20} parent=5 // pred_region
      %s138 = ssub.s32 %s9, 1
      // Predicated region
      $region13: #{unet_forward.20} parent=11 // pred_check
        %p139 = pneg %p96
      $region14: #{unet_forward.20} parent=11 // pred_check_branch
        %141 = sbr.rel (%p139) target = $region16
      $region15: #{unet_forward.20} parent=11 // pred_region
        _
      $region16: #{unet_forward.20} parent=11 // pred_fallthru
        _
    $region12: #{unet_forward.20} parent=5 // pred_fallthru
      _
    %p142 = scmp.lt.s32.totalorder %s9, 4
    // Predicated region
    $region17: #{unet_forward.20} parent=5 // pred_check
      %p143 = pneg %p142
    $region18: #{unet_forward.20} parent=5 // pred_check_branch
      %145 = sbr.rel (%p143) target = $region20
    $region19: #{unet_forward.20} parent=5 // pred_region
      // Predicated region
      $region21: #{unet_forward.20} parent=19 // pred_check
        %p146 = pneg %p43
      $region22: #{unet_forward.20} parent=19 // pred_check_branch
        %148 = sbr.rel (%p146) target = $region24
      $region23: #{unet_forward.20} parent=19 // pred_region
        %s149 = smul.u32 4, %s17
        %p150 = scmp.lt.s32.totalorder %s16, 3
        %s151 = scalar_select %p150, %s16, 3
        %p152 = scmp.lt.s32.totalorder %s149, 3
        %s153 = scalar_select %p152, %s149, 3
        %s154 = smul.addr %s153, 4
        %s155 = smul.addr %s151, 16
        %s156 = sadd.s32 %s154, %s155
        %s157 = smul.addr %s156, 4
        %s158 = scalar_lea.vmem %s0, %s157
        %s159 = smul.u32 4, %s17
      $region24: #{unet_forward.20} parent=19 // pred_fallthru
        _
      // Predicated region
      $region25: #{unet_forward.20} parent=19 // pred_check
        %p160 = pneg %p69
      $region26: #{unet_forward.20} parent=19 // pred_check_branch
        %162 = sbr.rel (%p160) target = $region28
      $region27: #{unet_forward.20} parent=19 // pred_region
        %p163 = scmp.lt.s32.totalorder %s16, 3
        %s164 = scalar_select %p163, %s16, 3
        %s165 = smul.addr %s164, 64
        %s166 = smul.addr %s165, 4
        %s167 = scalar_lea.vmem %s1, %s166
      $region28: #{unet_forward.20} parent=19 // pred_fallthru
        _
    $region20: #{unet_forward.20} parent=5 // pred_fallthru
      _
    %p168 = scmp.le.s32.totalorder 1, %s9
    %p169 = scmp.lt.s32.totalorder %s9, 5
    %p170 = pnand %p168, %p169
    %p171 = pneg %p170
    // Predicated region
    $region29: #{unet_forward.20} parent=5 // pred_check
      _
    $region30: #{unet_forward.20} parent=5 // pred_check_branch
      %173 = sbr.rel (%p170) target = $region32
    $region31: #{unet_forward.20} parent=5 // pred_region
      %s174 = ssub.s32 %s9, 1
      %s175 = smul.u32 4, %s19
      %p176 = scmp.lt.s32.totalorder %s18, 3
      %s177 = scalar_select %p176, %s18, 3
      %p178 = scmp.lt.s32.totalorder %s175, 3
      %s179 = scalar_select %p178, %s175, 3
      %s180 = smul.addr %s179, 4
      %s181 = smul.addr %s177, 16
      %s182 = sadd.s32 %s180, %s181
      %s183 = smul.addr %s182, 4
      %s184 = scalar_lea.vmem %s0, %s183
      %p185 = pneg %p49
      %p186 = pneg %p46
      %p187 = scmp.lt.s32.totalorder %s18, 3
      %s188 = scalar_select %p187, %s18, 3
      %s189 = smul.addr %s188, 64
      %s190 = smul.addr %s189, 4
      %s191 = scalar_lea.vmem %s1, %s190
      %p192 = pneg %p75
      %p193 = pneg %p72
      %p194 = pneg %p96
      %p195 = pneg %p93
      %p196 = pneg %p124
      %p197 = pneg %p121
      %s198 = smul.u32 4, %s19
      %p199 = scmp.lt.s32.totalorder %s18, 3
      %s200 = scalar_select %p199, %s18, 3
      %p201 = scmp.lt.s32.totalorder %s198, 3
      %s202 = scalar_select %p201, %s198, 3
      %s203 = smul.addr %s200, 4
      %s204 = sadd.s32 %s202, %s203
      %s205 = smul.addr %s204, 8
      %s206 = scalar_lea.vmem %s3, %s205
      %s207 = smul.u32 4, %s19
      %p208 = scmp.lt.s32.totalorder %s18, 3
      %s209 = scalar_select %p208, %s18, 3
      %p210 = scmp.lt.s32.totalorder %s207, 3
      %s211 = scalar_select %p210, %s207, 3
      %s212 = smul.addr %s211, 4
      %s213 = smul.addr %s209, 16
      %s214 = sadd.s32 %s212, %s213
      %s215 = smul.addr %s214, 4
      %s216 = scalar_lea.vmem %s0, %s215
      %s217 = smul.u32 4, %s19
      %p218 = scmp.lt.s32.totalorder %s18, 3
      %s219 = scalar_select %p218, %s18, 3
      %s220 = smul.addr %s219, 64
      %s221 = smul.addr %s220, 4
      %s222 = scalar_lea.vmem %s1, %s221
      %s223 = smul.u32 4, %s19
      %p224 = scmp.lt.s32.totalorder %s18, 3
      %s225 = scalar_select %p224, %s18, 3
      %p226 = scmp.lt.s32.totalorder %s223, 3
      %s227 = scalar_select %p226, %s223, 3
      %s228 = smul.addr %s225, 4
      %s229 = sadd.s32 %s227, %s228
      %s230 = smul.addr %s229, 8
      %s231 = scalar_lea.vmem %s3, %s230
      %s232 = smul.u32 4, %s19
      %v234 = vld [vmem:[%s216] sm:$0xff]
      %v235 = vld [vmem:[%s216 + $0x8] sm:$0xff]
      %v236 = vld [vmem:[%s216 + $0x10] sm:$0xff]
      %v237 = vld [vmem:[%s216 + $0x18] sm:$0xff]
      %v238 = vld [vmem:[%s216 + $0x20] sm:$0xff]
      %v239 = vld [vmem:[%s216 + $0x28] sm:$0xff]
      %v240 = vld [vmem:[%s216 + $0x30] sm:$0xff]
      %v241 = vld [vmem:[%s216 + $0x38] sm:$0xff]
      %v242 = vld [vmem:[%s222] sm:$0xf]
      %v243 = vld [vmem:[%s222 + $0x4] sm:$0xf]
      %v244 = vld [vmem:[%s222 + $0x8] sm:$0xf]
      %v245 = vld [vmem:[%s222 + $0xc] sm:$0xf]
      %v246 = vld [vmem:[%s222 + $0x10] sm:$0xf]
      %v247 = vld [vmem:[%s222 + $0x14] sm:$0xf]
      %v248 = vld [vmem:[%s222 + $0x18] sm:$0xf]
      %v249 = vld [vmem:[%s222 + $0x1c] sm:$0xf]
      %v250 = vld [vmem:[%s222 + $0x20] sm:$0xf]
      %v251 = vld [vmem:[%s222 + $0x24] sm:$0xf]
      %v252 = vld [vmem:[%s222 + $0x28] sm:$0xf]
      %v253 = vld [vmem:[%s222 + $0x2c] sm:$0xf]
      %v254 = vld [vmem:[%s222 + $0x30] sm:$0xf]
      %v255 = vld [vmem:[%s222 + $0x34] sm:$0xf]
      %v256 = vld [vmem:[%s222 + $0x38] sm:$0xf]
      %v257 = vld [vmem:[%s222 + $0x3c] sm:$0xf]
      %v258 = vld [vmem:[%s222 + $0x40] sm:$0xf]
      %v259 = vld [vmem:[%s222 + $0x44] sm:$0xf]
      %v260 = vld [vmem:[%s222 + $0x48] sm:$0xf]
      %v261 = vld [vmem:[%s222 + $0x4c] sm:$0xf]
      %v262 = vld [vmem:[%s222 + $0x50] sm:$0xf]
      %v263 = vld [vmem:[%s222 + $0x54] sm:$0xf]
      %v264 = vld [vmem:[%s222 + $0x58] sm:$0xf]
      %v265 = vld [vmem:[%s222 + $0x5c] sm:$0xf]
      %v266 = vld [vmem:[%s222 + $0x60] sm:$0xf]
      %v267 = vld [vmem:[%s222 + $0x64] sm:$0xf]
      %v268 = vld [vmem:[%s222 + $0x68] sm:$0xf]
      %v269 = vld [vmem:[%s222 + $0x6c] sm:$0xf]
      %v270 = vld [vmem:[%s222 + $0x70] sm:$0xf]
      %v271 = vld [vmem:[%s222 + $0x74] sm:$0xf]
      %v272 = vld [vmem:[%s222 + $0x78] sm:$0xf]
      %v273 = vld [vmem:[%s222 + $0x7c] sm:$0xf]
      %v274 = vld [vmem:[%s222 + $0x80] sm:$0xf]
      %v275 = vld [vmem:[%s222 + $0x84] sm:$0xf]
      %v276 = vld [vmem:[%s222 + $0x88] sm:$0xf]
      %v277 = vld [vmem:[%s222 + $0x8c] sm:$0xf]
      %v278 = vld [vmem:[%s222 + $0x90] sm:$0xf]
      %v279 = vld [vmem:[%s222 + $0x94] sm:$0xf]
      %v280 = vld [vmem:[%s222 + $0x98] sm:$0xf]
      %v281 = vld [vmem:[%s222 + $0x9c] sm:$0xf]
      %v282 = vld [vmem:[%s222 + $0xa0] sm:$0xf]
      %v283 = vld [vmem:[%s222 + $0xa4] sm:$0xf]
      %v284 = vld [vmem:[%s222 + $0xa8] sm:$0xf]
      %v285 = vld [vmem:[%s222 + $0xac] sm:$0xf]
      %v286 = vld [vmem:[%s222 + $0xb0] sm:$0xf]
      %v287 = vld [vmem:[%s222 + $0xb4] sm:$0xf]
      %v288 = vld [vmem:[%s222 + $0xb8] sm:$0xf]
      %v289 = vld [vmem:[%s222 + $0xbc] sm:$0xf]
      %v290 = vld [vmem:[%s222 + $0xc0] sm:$0xf]
      %v291 = vld [vmem:[%s222 + $0xc4] sm:$0xf]
      %v292 = vld [vmem:[%s222 + $0xc8] sm:$0xf]
      %v293 = vld [vmem:[%s222 + $0xcc] sm:$0xf]
      %v294 = vld [vmem:[%s222 + $0xd0] sm:$0xf]
      %v295 = vld [vmem:[%s222 + $0xd4] sm:$0xf]
      %v296 = vld [vmem:[%s222 + $0xd8] sm:$0xf]
      %v297 = vld [vmem:[%s222 + $0xdc] sm:$0xf]
      %v298 = vld [vmem:[%s222 + $0xe0] sm:$0xf]
      %v299 = vld [vmem:[%s222 + $0xe4] sm:$0xf]
      %v300 = vld [vmem:[%s222 + $0xe8] sm:$0xf]
      %v301 = vld [vmem:[%s222 + $0xec] sm:$0xf]
      %v302 = vld [vmem:[%s222 + $0xf0] sm:$0xf]
      %v303 = vld [vmem:[%s222 + $0xf4] sm:$0xf]
      %v304 = vld [vmem:[%s222 + $0xf8] sm:$0xf]
      %v305 = vld [vmem:[%s222 + $0xfc] sm:$0xf]
      %v306 = vld [vmem:[%s2] sm:$0x1]
      %v308 = vlaneseq
      %v309 = vshrl.u32 %v308, 7
      %v310 = vsub.s32 0, %v309
      %v311 = vrot.slane %v306, %v310
      %v321 = vunpack.c.l.b16 %v234
      %v322 = vunpack.c.h.b16 %v234
      %v323 = vunpack.c.l.b16 %v235
      %v324 = vunpack.c.h.b16 %v235
      %v325 = vunpack.c.l.b16 %v236
      %v326 = vunpack.c.h.b16 %v236
      %v327 = vunpack.c.l.b16 %v237
      %v328 = vunpack.c.h.b16 %v237
      %v329 = vunpack.c.l.b16 %v238
      %v330 = vunpack.c.h.b16 %v238
      %v331 = vunpack.c.l.b16 %v239
      %v332 = vunpack.c.h.b16 %v239
      %v333 = vunpack.c.l.b16 %v240
      %v334 = vunpack.c.h.b16 %v240
      %v335 = vunpack.c.l.b16 %v241
      %v336 = vunpack.c.h.b16 %v241
      %v337 = vpack.c.b16 %v325, %v321
      %v338 = vpack.c.b16 %v326, %v322
      %v339 = vpack.c.b16 %v327, %v323
      %v340 = vpack.c.b16 %v328, %v324
      %v341 = vpack.c.b16 %v333, %v329
      %v342 = vpack.c.b16 %v334, %v330
      %v343 = vpack.c.b16 %v335, %v331
      %v344 = vpack.c.b16 %v336, %v332
      %v417 = vunpack.c.l.b16 %v242
      %v418 = vunpack.c.l.b16 %v243
      %v419 = vunpack.c.l.b16 %v244
      %v420 = vunpack.c.l.b16 %v245
      %v421 = vunpack.c.l.b16 %v246
      %v422 = vunpack.c.l.b16 %v247
      %v423 = vunpack.c.l.b16 %v248
      %v424 = vunpack.c.l.b16 %v249
      %v425 = vunpack.c.l.b16 %v250
      %v426 = vunpack.c.l.b16 %v251
      %v427 = vunpack.c.l.b16 %v252
      %v428 = vunpack.c.l.b16 %v253
      %v429 = vunpack.c.l.b16 %v254
      %v430 = vunpack.c.l.b16 %v255
      %v431 = vunpack.c.l.b16 %v256
      %v432 = vunpack.c.l.b16 %v257
      %v433 = vunpack.c.l.b16 %v258
      %v434 = vunpack.c.l.b16 %v259
      %v435 = vunpack.c.l.b16 %v260
      %v436 = vunpack.c.l.b16 %v261
      %v437 = vunpack.c.l.b16 %v262
      %v438 = vunpack.c.l.b16 %v263
      %v439 = vunpack.c.l.b16 %v264
      %v440 = vunpack.c.l.b16 %v265
      %v441 = vunpack.c.l.b16 %v266
      %v442 = vunpack.c.l.b16 %v267
      %v443 = vunpack.c.l.b16 %v268
      %v444 = vunpack.c.l.b16 %v269
      %v445 = vunpack.c.l.b16 %v270
      %v446 = vunpack.c.l.b16 %v271
      %v447 = vunpack.c.l.b16 %v272
      %v448 = vunpack.c.l.b16 %v273
      %v449 = vunpack.c.l.b16 %v274
      %v450 = vunpack.c.l.b16 %v275
      %v451 = vunpack.c.l.b16 %v276
      %v452 = vunpack.c.l.b16 %v277
      %v453 = vunpack.c.l.b16 %v278
      %v454 = vunpack.c.l.b16 %v279
      %v455 = vunpack.c.l.b16 %v280
      %v456 = vunpack.c.l.b16 %v281
      %v457 = vunpack.c.l.b16 %v282
      %v458 = vunpack.c.l.b16 %v283
      %v459 = vunpack.c.l.b16 %v284
      %v460 = vunpack.c.l.b16 %v285
      %v461 = vunpack.c.l.b16 %v286
      %v462 = vunpack.c.l.b16 %v287
      %v463 = vunpack.c.l.b16 %v288
      %v464 = vunpack.c.l.b16 %v289
      %v465 = vunpack.c.l.b16 %v290
      %v466 = vunpack.c.l.b16 %v291
      %v467 = vunpack.c.l.b16 %v292
      %v468 = vunpack.c.l.b16 %v293
      %v469 = vunpack.c.l.b16 %v294
      %v470 = vunpack.c.l.b16 %v295
      %v471 = vunpack.c.l.b16 %v296
      %v472 = vunpack.c.l.b16 %v297
      %v473 = vunpack.c.l.b16 %v298
      %v474 = vunpack.c.l.b16 %v299
      %v475 = vunpack.c.l.b16 %v300
      %v476 = vunpack.c.l.b16 %v301
      %v477 = vunpack.c.l.b16 %v302
      %v478 = vunpack.c.l.b16 %v303
      %v479 = vunpack.c.l.b16 %v304
      %v480 = vunpack.c.l.b16 %v305
      %v481 = vpack.c.b16 %v418, %v417
      %v482 = vpack.c.b16 %v420, %v419
      %v483 = vpack.c.b16 %v422, %v421
      %v484 = vpack.c.b16 %v424, %v423
      %v485 = vpack.c.b16 %v426, %v425
      %v486 = vpack.c.b16 %v428, %v427
      %v487 = vpack.c.b16 %v430, %v429
      %v488 = vpack.c.b16 %v432, %v431
      %v489 = vpack.c.b16 %v434, %v433
      %v490 = vpack.c.b16 %v436, %v435
      %v491 = vpack.c.b16 %v438, %v437
      %v492 = vpack.c.b16 %v440, %v439
      %v493 = vpack.c.b16 %v442, %v441
      %v494 = vpack.c.b16 %v444, %v443
      %v495 = vpack.c.b16 %v446, %v445
      %v496 = vpack.c.b16 %v448, %v447
      %v497 = vpack.c.b16 %v450, %v449
      %v498 = vpack.c.b16 %v452, %v451
      %v499 = vpack.c.b16 %v454, %v453
      %v500 = vpack.c.b16 %v456, %v455
      %v501 = vpack.c.b16 %v458, %v457
      %v502 = vpack.c.b16 %v460, %v459
      %v503 = vpack.c.b16 %v462, %v461
      %v504 = vpack.c.b16 %v464, %v463
      %v505 = vpack.c.b16 %v466, %v465
      %v506 = vpack.c.b16 %v468, %v467
      %v507 = vpack.c.b16 %v470, %v469
      %v508 = vpack.c.b16 %v472, %v471
      %v509 = vpack.c.b16 %v474, %v473
      %v510 = vpack.c.b16 %v476, %v475
      %v511 = vpack.c.b16 %v478, %v477
      %v512 = vpack.c.b16 %v480, %v479
      %545 = vmatprep.subr.bf16.mxu0 0
      %546 = vmatpush1.bf16.msra.mxu0 %v488
      %547 = vmatprep.subr.bf16.mxu0 0
      %548 = vmatpush1.bf16.msra.mxu0 %v487
      %549 = vmatprep.subr.bf16.mxu0 0
      %550 = vmatpush1.bf16.msra.mxu0 %v486
      %551 = vmatprep.subr.bf16.mxu0 0
      %552 = vmatpush1.bf16.msra.mxu0 %v485
      %553 = vmatprep.subr.bf16.mxu0 0
      %554 = vmatpush1.bf16.msra.mxu0 %v484
      %555 = vmatprep.subr.bf16.mxu0 0
      %556 = vmatpush1.bf16.msra.mxu0 %v483
      %557 = vmatprep.subr.bf16.mxu0 0
      %558 = vmatpush1.bf16.msra.mxu0 %v482
      %559 = vmatprep.subr.bf16.mxu0 0
      %560 = vmatpush1.bf16.msra.mxu0 %v481
      %561 = vmatprep.subr.bf16.mxu0 0
      %562 = vmatpush2.bf16.msra.mxu0 %v496
      %563 = vmatprep.subr.bf16.mxu0 0
      %564 = vmatpush2.bf16.msra.mxu0 %v495
      %565 = vmatprep.subr.bf16.mxu0 0
      %566 = vmatpush2.bf16.msra.mxu0 %v494
      %567 = vmatprep.subr.bf16.mxu0 0
      %568 = vmatpush2.bf16.msra.mxu0 %v493
      %569 = vmatprep.subr.bf16.mxu0 0
      %570 = vmatpush2.bf16.msra.mxu0 %v492
      %571 = vmatprep.subr.bf16.mxu0 0
      %572 = vmatpush2.bf16.msra.mxu0 %v491
      %573 = vmatprep.subr.bf16.mxu0 0
      %574 = vmatpush2.bf16.msra.mxu0 %v490
      %575 = vmatprep.subr.bf16.mxu0 0
      %576 = vmatpush2.bf16.msra.mxu0 %v489
      %577 = vmatprep.mubr.bf16.mxu0 %v338
      %578 = vmatmul.mubr.bf16.gmra.mxu0 %v337
      %v579 = vpop.f32.mrf.mxu0
      %v580 = vadd.f32 %v311, %v579
      %v581 = vpop.f32.mrf.mxu0
      %v582 = vpop.f32.mrf.mxu0
      %v583 = vadd.f32 %v311, %v582
      %v584 = vpop.f32.mrf.mxu0
      %585 = vmatprep.mubr.bf16.mxu0 %v342
      %586 = vmatmul.mubr.bf16.gmra.mxu0 %v341
      %v587 = vpop.f32.mrf.mxu0
      %v588 = vadd.f32 %v311, %v587
      %v589 = vpop.f32.mrf.mxu0
      %v590 = vpop.f32.mrf.mxu0
      %v591 = vadd.f32 %v311, %v590
      %v592 = vpop.f32.mrf.mxu0
      %593 = vdwg.mxu0
      %594 = vmatprep.subr.bf16.mxu0 0
      %595 = vmatpush1.bf16.msra.mxu0 %v504
      %596 = vmatprep.subr.bf16.mxu0 0
      %597 = vmatpush1.bf16.msra.mxu0 %v503
      %598 = vmatprep.subr.bf16.mxu0 0
      %599 = vmatpush1.bf16.msra.mxu0 %v502
      %600 = vmatprep.subr.bf16.mxu0 0
      %601 = vmatpush1.bf16.msra.mxu0 %v501
      %602 = vmatprep.subr.bf16.mxu0 0
      %603 = vmatpush1.bf16.msra.mxu0 %v500
      %604 = vmatprep.subr.bf16.mxu0 0
      %605 = vmatpush1.bf16.msra.mxu0 %v499
      %606 = vmatprep.subr.bf16.mxu0 0
      %607 = vmatpush1.bf16.msra.mxu0 %v498
      %608 = vmatprep.subr.bf16.mxu0 0
      %609 = vmatpush1.bf16.msra.mxu0 %v497
      %610 = vmatprep.subr.bf16.mxu0 0
      %611 = vmatpush2.bf16.msra.mxu0 %v512
      %612 = vmatprep.subr.bf16.mxu0 0
      %613 = vmatpush2.bf16.msra.mxu0 %v511
      %614 = vmatprep.subr.bf16.mxu0 0
      %615 = vmatpush2.bf16.msra.mxu0 %v510
      %616 = vmatprep.subr.bf16.mxu0 0
      %617 = vmatpush2.bf16.msra.mxu0 %v509
      %618 = vmatprep.subr.bf16.mxu0 0
      %619 = vmatpush2.bf16.msra.mxu0 %v508
      %620 = vmatprep.subr.bf16.mxu0 0
      %621 = vmatpush2.bf16.msra.mxu0 %v507
      %622 = vmatprep.subr.bf16.mxu0 0
      %623 = vmatpush2.bf16.msra.mxu0 %v506
      %624 = vmatprep.subr.bf16.mxu0 0
      %625 = vmatpush2.bf16.msra.mxu0 %v505
      %626 = vmatprep.mubr.bf16.mxu0 %v340
      %627 = vmatmul.mubr.bf16.gmra.mxu0 %v339
      %v628 = vpop.f32.mrf.mxu0
      %v629 = vadd.f32 %v580, %v628
      %v630 = vpop.f32.mrf.mxu0
      %v631 = vpop.f32.mrf.mxu0
      %v632 = vadd.f32 %v583, %v631
      %v633 = vpop.f32.mrf.mxu0
      %634 = vmatprep.mubr.bf16.mxu0 %v344
      %635 = vmatmul.mubr.bf16.gmra.mxu0 %v343
      %v636 = vpop.f32.mrf.mxu0
      %v637 = vadd.f32 %v588, %v636
      %v638 = vpop.f32.mrf.mxu0
      %v639 = vpop.f32.mrf.mxu0
      %v640 = vadd.f32 %v591, %v639
      %v641 = vpop.f32.mrf.mxu0
      %642 = vdwg.mxu0
      %vm643 = vcmask 261120
      %644 = vst.msk [vmem:[%s231] sm:$0xff] %vm643, %v629
      %645 = vst.msk [vmem:[%s231 + $0x8] sm:$0xff] %vm643, %v632
      %646 = vst.msk [vmem:[%s231 + $0x10] sm:$0xff] %vm643, %v637
      %647 = vst.msk [vmem:[%s231 + $0x18] sm:$0xff] %vm643, %v640
      %s648 = smul.u32 4, %s19
      %p649 = scmp.lt.s32.totalorder %s18, 3
      %s650 = scalar_select %p649, %s18, 3
      %p651 = scmp.lt.s32.totalorder %s648, 3
      %s652 = scalar_select %p651, %s648, 3
      %s653 = smul.addr %s650, 4
      %s654 = sadd.s32 %s652, %s653
      %s655 = smul.addr %s654, 8
      %s656 = scalar_lea.vmem %s3, %s655
      // Predicated region
      $region33: #{unet_forward.20} parent=31 // pred_check
        %p657 = pneg %p121
      $region34: #{unet_forward.20} parent=31 // pred_check_branch
        %659 = sbr.rel (%p657) target = $region36
      $region35: #{unet_forward.20} parent=31 // pred_region
        %s660 = smul.u32 4, %s19
      $region36: #{unet_forward.20} parent=31 // pred_fallthru
        _
    $region32: #{unet_forward.20} parent=5 // pred_fallthru
      _
    %p661 = scmp.le.s32.totalorder 2, %s9
    // Predicated region
    $region37: #{unet_forward.20} parent=5 // pred_check
      %p662 = pneg %p661
    $region38: #{unet_forward.20} parent=5 // pred_check_branch
      %664 = sbr.rel (%p662) target = $region40
    $region39: #{unet_forward.20} parent=5 // pred_region
      %s665 = ssub.s32 %s9, 2
      // Predicated region
      $region41: #{unet_forward.20} parent=39 // pred_check
        %p666 = pneg %p127
      $region42: #{unet_forward.20} parent=39 // pred_check_branch
        %668 = sbr.rel (%p666) target = $region44
      $region43: #{unet_forward.20} parent=39 // pred_region
        %s669 = smul.u32 4, %s21
        %p670 = scmp.lt.s32.totalorder %s20, 3
        %s671 = scalar_select %p670, %s20, 3
        %p672 = scmp.lt.s32.totalorder %s669, 3
        %s673 = scalar_select %p672, %s669, 3
        %s674 = smul.addr %s671, 4
        %s675 = sadd.s32 %s673, %s674
        %s676 = smul.addr %s675, 8
        %s677 = scalar_lea.vmem %s3, %s676
      $region44: #{unet_forward.20} parent=39 // pred_fallthru
        _
    $region40: #{unet_forward.20} parent=5 // pred_fallthru
      _
  $region6: #{unet_forward.20} parent=0 // loop_footer
    %s13 = sadd.s32 1, %s9
  $region7: #{unet_forward.20} parent=0 // loop_footer_branch
    %8 = sbr.rel target = $region3
  $region8: #{unet_forward.20} parent=0 // loop_exit
    _

// kernel: unet_forward.21
$region0: #{unet_forward.21}
  #allocation0 [shape = 'u32[]', space=smem, size = 0x4, offset = 0x4, fixed_abs, tag = 'smem constant byte address 0x4 - core index']
  #allocation1 [shape = 'u32[144,128]{1,0:T(1,128)}', space=vmem, size = 0x12000, scoped, tag = 'internal scratch']
  %s0 = inlined_call_operand.vmem [shape: bf16[4,128,256], index: 0, kind: input, shape index: {}]
  %s1 = inlined_call_operand.vmem [shape: bf16[4,256,16], index: 1, kind: input, shape index: {}]
  %s2 = inlined_call_operand.vmem [shape: f32[1,16], index: 2, kind: input, shape index: {}]
  %s3 = inlined_call_operand.vmem [shape: f32[4,128,16], index: 3, kind: output, shape index: {}]
  %s4 = sld [smem:[#allocation0]]
  $region45: #{unet_forward.21} parent=0
    _
  %s6 = ssub.s32 1, %s4
  %s7 = scalar_select 0, %s6, %s4
  loop: start=0, step=1, limit=6
  $region2: #{unet_forward.21} parent=0 // loop_pre_header
    _
  $region3: #{unet_forward.21} parent=0 // loop_header
    %s9 = sphi 0, %s13
    %p10 = scmp.ge.s32.totalorder %s9, 6
    %s16 = sphi 0, %s28
    %s17 = sphi 0, %s24
    %s18 = sphi 0, %s16
    %s19 = sphi 0, %s17
    %s20 = sphi 0, %s18
    %s21 = sphi 0, %s19
    %s33 = sphi 0, %s35
    %s36 = sphi 0, %s33
    %s37 = sphi 0, %s36
    %s53 = sphi 0, %s37
    %s59 = sphi 0, %s61
    %s62 = sphi 0, %s59
    %s63 = sphi 0, %s62
    %s79 = sphi 0, %s63
    %s83 = sphi 0, %s83
    %s85 = sphi 0, %s83
    %s86 = sphi 0, %s85
    %s100 = sphi 0, %s86
    %s108 = sphi 0, %s110
    %s111 = sphi 0, %s108
    %s112 = sphi 0, %s111
    %s128 = sphi 0, %s112
  $region4: #{unet_forward.21} parent=0 // loop_header_branch
    %12 = sbr.rel (%p10) target = $region8
  $region5: #{unet_forward.21} parent=0 // loop_body
    %s14 = ssub.s32 %s9, 1
    %s15 = ssub.s32 %s9, 2
    %s22 = sadd.s32 1, %s17
    %p23 = scmp.ge.s32.totalorder %s22, 1
    %s24 = scalar_select %p23, 0, %s22
    %s25 = sadd.s32 1, %s16
    %s26 = scalar_select %p23, %s25, %s16
    %p27 = scmp.ge.s32.totalorder %s26, 4
    %s28 = scalar_select %p27, 0, %s26
    %s29 = ssub.s32 %s16, %s28
    %s30 = ssub.s32 %s17, %s24
    %s31 = sor.u32 %s29, %s30
    %p32 = scmp.eq.s32.totalorder %s31, 0
    %s34 = sadd.s32 %s33, 1
    %s35 = scalar_select %p32, %s33, %s34
    %p38 = pneg %p32
    %p39 = scmp.eq.s32.totalorder %s9, 3
    %p40 = por %p38, %p39
    %p41 = scmp.ne.s32.totalorder %s33, %s36
    %p42 = scmp.eq.s32.totalorder %s9, 0
    %p43 = por %p41, %p42
    %p44 = scmp.ne.s32.totalorder %s33, %s36
    %p45 = scmp.eq.s32.totalorder %s14, 3
    %p46 = por %p44, %p45
    %p47 = scmp.ne.s32.totalorder %s36, %s37
    %p48 = scmp.eq.s32.totalorder %s14, 0
    %p49 = por %p47, %p48
    %p50 = scmp.ne.s32.totalorder %s36, %s37
    %p51 = scmp.eq.s32.totalorder %s15, 3
    %p52 = por %p50, %p51
    %p54 = scmp.ne.s32.totalorder %s37, %s53
    %p55 = scmp.eq.s32.totalorder %s15, 0
    %p56 = por %p54, %p55
    %s57 = ssub.s32 %s16, %s28
    %p58 = scmp.eq.s32.totalorder %s57, 0
    %s60 = sadd.s32 %s59, 1
    %s61 = scalar_select %p58, %s59, %s60
    %p64 = pneg %p58
    %p65 = scmp.eq.s32.totalorder %s9, 3
    %p66 = por %p64, %p65
    %p67 = scmp.ne.s32.totalorder %s59, %s62
    %p68 = scmp.eq.s32.totalorder %s9, 0
    %p69 = por %p67, %p68
    %p70 = scmp.ne.s32.totalorder %s59, %s62
    %p71 = scmp.eq.s32.totalorder %s14, 3
    %p72 = por %p70, %p71
    %p73 = scmp.ne.s32.totalorder %s62, %s63
    %p74 = scmp.eq.s32.totalorder %s14, 0
    %p75 = por %p73, %p74
    %p76 = scmp.ne.s32.totalorder %s62, %s63
    %p77 = scmp.eq.s32.totalorder %s15, 3
    %p78 = por %p76, %p77
    %p80 = scmp.ne.s32.totalorder %s63, %s79
    %p81 = scmp.eq.s32.totalorder %s15, 0
    %p82 = por %p80, %p81
    %s84 = sadd.s32 %s83, 1
    %p87 = scmp.eq.s32.totalorder %s9, 3
    %p88 = scmp.ne.s32.totalorder %s83, %s85
    %p89 = scmp.eq.s32.totalorder %s9, 0
    %p90 = por %p88, %p89
    %p91 = scmp.ne.s32.totalorder %s83, %s85
    %p92 = scmp.eq.s32.totalorder %s14, 3
    %p93 = por %p91, %p92
    %p94 = scmp.ne.s32.totalorder %s85, %s86
    %p95 = scmp.eq.s32.totalorder %s14, 0
    %p96 = por %p94, %p95
    %p97 = scmp.ne.s32.totalorder %s85, %s86
    %p98 = scmp.eq.s32.totalorder %s15, 3
    %p99 = por %p97, %p98
    %p101 = scmp.ne.s32.totalorder %s86, %s100
    %p102 = scmp.eq.s32.totalorder %s15, 0
    %p103 = por %p101, %p102
    %s104 = ssub.s32 %s16, %s28
    %s105 = ssub.s32 %s17, %s24
    %s106 = sor.u32 %s104, %s105
    %p107 = scmp.eq.s32.totalorder %s106, 0
    %s109 = sadd.s32 %s108, 1
    %s110 = scalar_select %p107, %s108, %s109
    %p113 = pneg %p107
    %p114 = scmp.eq.s32.totalorder %s9, 3
    %p115 = por %p113, %p114
    %p116 = scmp.ne.s32.totalorder %s108, %s111
    %p117 = scmp.eq.s32.totalorder %s9, 0
    %p118 = por %p116, %p117
    %p119 = scmp.ne.s32.totalorder %s108, %s111
    %p120 = scmp.eq.s32.totalorder %s14, 3
    %p121 = por %p119, %p120
    %p122 = scmp.ne.s32.totalorder %s111, %s112
    %p123 = scmp.eq.s32.totalorder %s14, 0
    %p124 = por %p122, %p123
    %p125 = scmp.ne.s32.totalorder %s111, %s112
    %p126 = scmp.eq.s32.totalorder %s15, 3
    %p127 = por %p125, %p126
    %p129 = scmp.ne.s32.totalorder %s112, %s128
    %p130 = scmp.eq.s32.totalorder %s15, 0
    %p131 = por %p129, %p130
    %p132 = scmp.le.s32.totalorder 1, %s9
    %p133 = scmp.lt.s32.totalorder %s9, 5
    %p134 = pnand %p132, %p133
    %p135 = pneg %p134
    // Predicated region
    $region9: #{unet_forward.21} parent=5 // pred_check
      _
    $region10: #{unet_forward.21} parent=5 // pred_check_branch
      %137 = sbr.rel (%p134) target = $region12
    $region11: #{unet_forward.21} parent=5 // pred_region
      %s138 = ssub.s32 %s9, 1
      // Predicated region
      $region13: #{unet_forward.21} parent=11 // pred_check
        %p139 = pneg %p96
      $region14: #{unet_forward.21} parent=11 // pred_check_branch
        %141 = sbr.rel (%p139) target = $region16
      $region15: #{unet_forward.21} parent=11 // pred_region
        _
      $region16: #{unet_forward.21} parent=11 // pred_fallthru
        _
    $region12: #{unet_forward.21} parent=5 // pred_fallthru
      _
    %p142 = scmp.lt.s32.totalorder %s9, 4
    // Predicated region
    $region17: #{unet_forward.21} parent=5 // pred_check
      %p143 = pneg %p142
    $region18: #{unet_forward.21} parent=5 // pred_check_branch
      %145 = sbr.rel (%p143) target = $region20
    $region19: #{unet_forward.21} parent=5 // pred_region
      // Predicated region
      $region21: #{unet_forward.21} parent=19 // pred_check
        %p146 = pneg %p43
      $region22: #{unet_forward.21} parent=19 // pred_check_branch
        %148 = sbr.rel (%p146) target = $region24
      $region23: #{unet_forward.21} parent=19 // pred_region
        %s149 = smul.u32 16, %s17
        %p150 = scmp.lt.s32.totalorder %s16, 3
        %s151 = scalar_select %p150, %s16, 3
        %p152 = scmp.lt.s32.totalorder %s149, 15
        %s153 = scalar_select %p152, %s149, 15
        %s154 = smul.addr %s153, 2
        %s155 = smul.addr %s151, 32
        %s156 = sadd.s32 %s154, %s155
        %s157 = smul.addr %s156, 4
        %s158 = scalar_lea.vmem %s0, %s157
        %s159 = smul.u32 16, %s17
      $region24: #{unet_forward.21} parent=19 // pred_fallthru
        _
      // Predicated region
      $region25: #{unet_forward.21} parent=19 // pred_check
        %p160 = pneg %p69
      $region26: #{unet_forward.21} parent=19 // pred_check_branch
        %162 = sbr.rel (%p160) target = $region28
      $region27: #{unet_forward.21} parent=19 // pred_region
        %p163 = scmp.lt.s32.totalorder %s16, 3
        %s164 = scalar_select %p163, %s16, 3
        %s165 = smul.addr %s164, 32
        %s166 = smul.addr %s165, 4
        %s167 = scalar_lea.vmem %s1, %s166
      $region28: #{unet_forward.21} parent=19 // pred_fallthru
        _
    $region20: #{unet_forward.21} parent=5 // pred_fallthru
      _
    %p168 = scmp.le.s32.totalorder 1, %s9
    %p169 = scmp.lt.s32.totalorder %s9, 5
    %p170 = pnand %p168, %p169
    %p171 = pneg %p170
    // Predicated region
    $region29: #{unet_forward.21} parent=5 // pred_check
      _
    $region30: #{unet_forward.21} parent=5 // pred_check_branch
      %173 = sbr.rel (%p170) target = $region32
    $region31: #{unet_forward.21} parent=5 // pred_region
      %s174 = ssub.s32 %s9, 1
      %s175 = smul.u32 16, %s19
      %p176 = scmp.lt.s32.totalorder %s18, 3
      %s177 = scalar_select %p176, %s18, 3
      %p178 = scmp.lt.s32.totalorder %s175, 15
      %s179 = scalar_select %p178, %s175, 15
      %s180 = smul.addr %s179, 2
      %s181 = smul.addr %s177, 32
      %s182 = sadd.s32 %s180, %s181
      %s183 = smul.addr %s182, 4
      %s184 = scalar_lea.vmem %s0, %s183
      %p185 = pneg %p49
      %p186 = pneg %p46
      %p187 = scmp.lt.s32.totalorder %s18, 3
      %s188 = scalar_select %p187, %s18, 3
      %s189 = smul.addr %s188, 32
      %s190 = smul.addr %s189, 4
      %s191 = scalar_lea.vmem %s1, %s190
      %p192 = pneg %p75
      %p193 = pneg %p72
      %p194 = pneg %p96
      %p195 = pneg %p93
      %p196 = pneg %p124
      %p197 = pneg %p121
      %s198 = smul.u32 16, %s19
      %p199 = scmp.lt.s32.totalorder %s18, 3
      %s200 = scalar_select %p199, %s18, 3
      %p201 = scmp.lt.s32.totalorder %s198, 15
      %s202 = scalar_select %p201, %s198, 15
      %s203 = smul.addr %s200, 16
      %s204 = sadd.s32 %s202, %s203
      %s205 = smul.addr %s204, 8
      %s206 = scalar_lea.vmem %s3, %s205
      %s207 = smul.u32 16, %s19
      %p208 = scmp.lt.s32.totalorder %s18, 3
      %s209 = scalar_select %p208, %s18, 3
      %p210 = scmp.lt.s32.totalorder %s207, 15
      %s211 = scalar_select %p210, %s207, 15
      %s212 = smul.addr %s211, 2
      %s213 = smul.addr %s209, 32
      %s214 = sadd.s32 %s212, %s213
      %s215 = smul.addr %s214, 4
      %s216 = scalar_lea.vmem %s0, %s215
      %s217 = smul.u32 16, %s19
      %p218 = scmp.lt.s32.totalorder %s18, 3
      %s219 = scalar_select %p218, %s18, 3
      %s220 = smul.addr %s219, 32
      %s221 = smul.addr %s220, 4
      %s222 = scalar_lea.vmem %s1, %s221
      %s223 = smul.u32 16, %s19
      %p224 = scmp.lt.s32.totalorder %s18, 3
      %s225 = scalar_select %p224, %s18, 3
      %p226 = scmp.lt.s32.totalorder %s223, 15
      %s227 = scalar_select %p226, %s223, 15
      %s228 = smul.addr %s225, 16
      %s229 = sadd.s32 %s227, %s228
      %s230 = smul.addr %s229, 8
      %s231 = scalar_lea.vmem %s3, %s230
      %s232 = smul.u32 16, %s19
      %v234 = vld [vmem:[%s216] sm:$0xff]
      %v235 = vld [vmem:[%s216 + $0x8] sm:$0xff]
      %v236 = vld [vmem:[%s216 + $0x10] sm:$0xff]
      %v237 = vld [vmem:[%s216 + $0x18] sm:$0xff]
      %v238 = vld [vmem:[%s216 + $0x20] sm:$0xff]
      %v239 = vld [vmem:[%s216 + $0x28] sm:$0xff]
      %v240 = vld [vmem:[%s216 + $0x30] sm:$0xff]
      %v241 = vld [vmem:[%s216 + $0x38] sm:$0xff]
      %v242 = vld [vmem:[%s216 + $0x40] sm:$0xff]
      %v243 = vld [vmem:[%s216 + $0x48] sm:$0xff]
      %v244 = vld [vmem:[%s216 + $0x50] sm:$0xff]
      %v245 = vld [vmem:[%s216 + $0x58] sm:$0xff]
      %v246 = vld [vmem:[%s216 + $0x60] sm:$0xff]
      %v247 = vld [vmem:[%s216 + $0x68] sm:$0xff]
      %v248 = vld [vmem:[%s216 + $0x70] sm:$0xff]
      %v249 = vld [vmem:[%s216 + $0x78] sm:$0xff]
      %v250 = vld [vmem:[%s222] sm:$0xf]
      %v251 = vld [vmem:[%s222 + $0x4] sm:$0xf]
      %v252 = vld [vmem:[%s222 + $0x8] sm:$0xf]
      %v253 = vld [vmem:[%s222 + $0xc] sm:$0xf]
      %v254 = vld [vmem:[%s222 + $0x10] sm:$0xf]
      %v255 = vld [vmem:[%s222 + $0x14] sm:$0xf]
      %v256 = vld [vmem:[%s222 + $0x18] sm:$0xf]
      %v257 = vld [vmem:[%s222 + $0x1c] sm:$0xf]
      %v258 = vld [vmem:[%s222 + $0x20] sm:$0xf]
      %v259 = vld [vmem:[%s222 + $0x24] sm:$0xf]
      %v260 = vld [vmem:[%s222 + $0x28] sm:$0xf]
      %v261 = vld [vmem:[%s222 + $0x2c] sm:$0xf]
      %v262 = vld [vmem:[%s222 + $0x30] sm:$0xf]
      %v263 = vld [vmem:[%s222 + $0x34] sm:$0xf]
      %v264 = vld [vmem:[%s222 + $0x38] sm:$0xf]
      %v265 = vld [vmem:[%s222 + $0x3c] sm:$0xf]
      %v266 = vld [vmem:[%s222 + $0x40] sm:$0xf]
      %v267 = vld [vmem:[%s222 + $0x44] sm:$0xf]
      %v268 = vld [vmem:[%s222 + $0x48] sm:$0xf]
      %v269 = vld [vmem:[%s222 + $0x4c] sm:$0xf]
      %v270 = vld [vmem:[%s222 + $0x50] sm:$0xf]
      %v271 = vld [vmem:[%s222 + $0x54] sm:$0xf]
      %v272 = vld [vmem:[%s222 + $0x58] sm:$0xf]
      %v273 = vld [vmem:[%s222 + $0x5c] sm:$0xf]
      %v274 = vld [vmem:[%s222 + $0x60] sm:$0xf]
      %v275 = vld [vmem:[%s222 + $0x64] sm:$0xf]
      %v276 = vld [vmem:[%s222 + $0x68] sm:$0xf]
      %v277 = vld [vmem:[%s222 + $0x6c] sm:$0xf]
      %v278 = vld [vmem:[%s222 + $0x70] sm:$0xf]
      %v279 = vld [vmem:[%s222 + $0x74] sm:$0xf]
      %v280 = vld [vmem:[%s222 + $0x78] sm:$0xf]
      %v281 = vld [vmem:[%s222 + $0x7c] sm:$0xf]
      %v282 = vld [vmem:[%s2] sm:$0x1]
      %v284 = vlaneseq
      %v285 = vshrl.u32 %v284, 7
      %v286 = vsub.s32 0, %v285
      %v287 = vrot.slane %v282, %v286
      %v305 = vunpack.c.l.b16 %v234
      %v306 = vunpack.c.h.b16 %v234
      %v307 = vunpack.c.l.b16 %v235
      %v308 = vunpack.c.h.b16 %v235
      %v309 = vunpack.c.l.b16 %v236
      %v310 = vunpack.c.h.b16 %v236
      %v311 = vunpack.c.l.b16 %v237
      %v312 = vunpack.c.h.b16 %v237
      %v313 = vunpack.c.l.b16 %v238
      %v314 = vunpack.c.h.b16 %v238
      %v315 = vunpack.c.l.b16 %v239
      %v316 = vunpack.c.h.b16 %v239
      %v317 = vunpack.c.l.b16 %v240
      %v318 = vunpack.c.h.b16 %v240
      %v319 = vunpack.c.l.b16 %v241
      %v320 = vunpack.c.h.b16 %v241
      %v321 = vunpack.c.l.b16 %v242
      %v322 = vunpack.c.h.b16 %v242
      %v323 = vunpack.c.l.b16 %v243
      %v324 = vunpack.c.h.b16 %v243
      %v325 = vunpack.c.l.b16 %v244
      %v326 = vunpack.c.h.b16 %v244
      %v327 = vunpack.c.l.b16 %v245
      %v328 = vunpack.c.h.b16 %v245
      %v329 = vunpack.c.l.b16 %v246
      %v330 = vunpack.c.h.b16 %v246
      %v331 = vunpack.c.l.b16 %v247
      %v332 = vunpack.c.h.b16 %v247
      %v333 = vunpack.c.l.b16 %v248
      %v334 = vunpack.c.h.b16 %v248
      %v335 = vunpack.c.l.b16 %v249
      %v336 = vunpack.c.h.b16 %v249
      %v337 = vpack.c.b16 %v307, %v305
      %v338 = vpack.c.b16 %v308, %v306
      %v339 = vpack.c.b16 %v311, %v309
      %v340 = vpack.c.b16 %v312, %v310
      %v341 = vpack.c.b16 %v315, %v313
      %v342 = vpack.c.b16 %v316, %v314
      %v343 = vpack.c.b16 %v319, %v317
      %v344 = vpack.c.b16 %v320, %v318
      %v345 = vpack.c.b16 %v323, %v321
      %v346 = vpack.c.b16 %v324, %v322
      %v347 = vpack.c.b16 %v327, %v325
      %v348 = vpack.c.b16 %v328, %v326
      %v349 = vpack.c.b16 %v331, %v329
      %v350 = vpack.c.b16 %v332, %v330
      %v351 = vpack.c.b16 %v335, %v333
      %v352 = vpack.c.b16 %v336, %v334
      %v401 = vunpack.c.l.b16 %v250
      %v402 = vunpack.c.l.b16 %v251
      %v403 = vunpack.c.l.b16 %v252
      %v404 = vunpack.c.l.b16 %v253
      %v405 = vunpack.c.l.b16 %v254
      %v406 = vunpack.c.l.b16 %v255
      %v407 = vunpack.c.l.b16 %v256
      %v408 = vunpack.c.l.b16 %v257
      %v409 = vunpack.c.l.b16 %v258
      %v410 = vunpack.c.l.b16 %v259
      %v411 = vunpack.c.l.b16 %v260
      %v412 = vunpack.c.l.b16 %v261
      %v413 = vunpack.c.l.b16 %v262
      %v414 = vunpack.c.l.b16 %v263
      %v415 = vunpack.c.l.b16 %v264
      %v416 = vunpack.c.l.b16 %v265
      %v417 = vunpack.c.l.b16 %v266
      %v418 = vunpack.c.l.b16 %v267
      %v419 = vunpack.c.l.b16 %v268
      %v420 = vunpack.c.l.b16 %v269
      %v421 = vunpack.c.l.b16 %v270
      %v422 = vunpack.c.l.b16 %v271
      %v423 = vunpack.c.l.b16 %v272
      %v424 = vunpack.c.l.b16 %v273
      %v425 = vunpack.c.l.b16 %v274
      %v426 = vunpack.c.l.b16 %v275
      %v427 = vunpack.c.l.b16 %v276
      %v428 = vunpack.c.l.b16 %v277
      %v429 = vunpack.c.l.b16 %v278
      %v430 = vunpack.c.l.b16 %v279
      %v431 = vunpack.c.l.b16 %v280
      %v432 = vunpack.c.l.b16 %v281
      %v433 = vpack.c.b16 %v402, %v401
      %v434 = vpack.c.b16 %v404, %v403
      %v435 = vpack.c.b16 %v406, %v405
      %v436 = vpack.c.b16 %v408, %v407
      %v437 = vpack.c.b16 %v410, %v409
      %v438 = vpack.c.b16 %v412, %v411
      %v439 = vpack.c.b16 %v414, %v413
      %v440 = vpack.c.b16 %v416, %v415
      %v441 = vpack.c.b16 %v418, %v417
      %v442 = vpack.c.b16 %v420, %v419
      %v443 = vpack.c.b16 %v422, %v421
      %v444 = vpack.c.b16 %v424, %v423
      %v445 = vpack.c.b16 %v426, %v425
      %v446 = vpack.c.b16 %v428, %v427
      %v447 = vpack.c.b16 %v430, %v429
      %v448 = vpack.c.b16 %v432, %v431
      %465 = vmatprep.subr.bf16.mxu0 0
      %466 = vmatpush1.bf16.msra.mxu0 %v440
      %467 = vmatprep.subr.bf16.mxu0 0
      %468 = vmatpush1.bf16.msra.mxu0 %v439
      %469 = vmatprep.subr.bf16.mxu0 0
      %470 = vmatpush1.bf16.msra.mxu0 %v438
      %471 = vmatprep.subr.bf16.mxu0 0
      %472 = vmatpush1.bf16.msra.mxu0 %v437
      %473 = vmatprep.subr.bf16.mxu0 0
      %474 = vmatpush1.bf16.msra.mxu0 %v436
      %475 = vmatprep.subr.bf16.mxu0 0
      %476 = vmatpush1.bf16.msra.mxu0 %v435
      %477 = vmatprep.subr.bf16.mxu0 0
      %478 = vmatpush1.bf16.msra.mxu0 %v434
      %479 = vmatprep.subr.bf16.mxu0 0
      %480 = vmatpush1.bf16.msra.mxu0 %v433
      %481 = vmatprep.subr.bf16.mxu0 0
      %482 = vmatpush2.bf16.msra.mxu0 %v448
      %483 = vmatprep.subr.bf16.mxu0 0
      %484 = vmatpush2.bf16.msra.mxu0 %v447
      %485 = vmatprep.subr.bf16.mxu0 0
      %486 = vmatpush2.bf16.msra.mxu0 %v446
      %487 = vmatprep.subr.bf16.mxu0 0
      %488 = vmatpush2.bf16.msra.mxu0 %v445
      %489 = vmatprep.subr.bf16.mxu0 0
      %490 = vmatpush2.bf16.msra.mxu0 %v444
      %491 = vmatprep.subr.bf16.mxu0 0
      %492 = vmatpush2.bf16.msra.mxu0 %v443
      %493 = vmatprep.subr.bf16.mxu0 0
      %494 = vmatpush2.bf16.msra.mxu0 %v442
      %495 = vmatprep.subr.bf16.mxu0 0
      %496 = vmatpush2.bf16.msra.mxu0 %v441
      %497 = vmatprep.mubr.bf16.mxu0 %v338
      %498 = vmatmul.mubr.bf16.gmra.mxu0 %v337
      %v499 = vpop.f32.mrf.mxu0
      %v500 = vadd.f32 %v287, %v499
      %v501 = vpop.f32.mrf.mxu0
      %v502 = vpop.f32.mrf.mxu0
      %v503 = vadd.f32 %v287, %v502
      %v504 = vpop.f32.mrf.mxu0
      %505 = vmatprep.mubr.bf16.mxu0 %v340
      %506 = vmatmul.mubr.bf16.gmra.mxu0 %v339
      %v507 = vpop.f32.mrf.mxu0
      %v508 = vadd.f32 %v287, %v507
      %v509 = vpop.f32.mrf.mxu0
      %v510 = vpop.f32.mrf.mxu0
      %v511 = vadd.f32 %v287, %v510
      %v512 = vpop.f32.mrf.mxu0
      %513 = vmatprep.mubr.bf16.mxu0 %v342
      %514 = vmatmul.mubr.bf16.gmra.mxu0 %v341
      %v515 = vpop.f32.mrf.mxu0
      %v516 = vadd.f32 %v287, %v515
      %v517 = vpop.f32.mrf.mxu0
      %v518 = vpop.f32.mrf.mxu0
      %v519 = vadd.f32 %v287, %v518
      %v520 = vpop.f32.mrf.mxu0
      %521 = vmatprep.mubr.bf16.mxu0 %v344
      %522 = vmatmul.mubr.bf16.gmra.mxu0 %v343
      %v523 = vpop.f32.mrf.mxu0
      %v524 = vadd.f32 %v287, %v523
      %v525 = vpop.f32.mrf.mxu0
      %v526 = vpop.f32.mrf.mxu0
      %v527 = vadd.f32 %v287, %v526
      %v528 = vpop.f32.mrf.mxu0
      %529 = vmatprep.mubr.bf16.mxu0 %v346
      %530 = vmatmul.mubr.bf16.gmra.mxu0 %v345
      %v531 = vpop.f32.mrf.mxu0
      %v532 = vadd.f32 %v287, %v531
      %v533 = vpop.f32.mrf.mxu0
      %v534 = vpop.f32.mrf.mxu0
      %v535 = vadd.f32 %v287, %v534
      %v536 = vpop.f32.mrf.mxu0
      %537 = vmatprep.mubr.bf16.mxu0 %v348
      %538 = vmatmul.mubr.bf16.gmra.mxu0 %v347
      %v539 = vpop.f32.mrf.mxu0
      %v540 = vadd.f32 %v287, %v539
      %v541 = vpop.f32.mrf.mxu0
      %v542 = vpop.f32.mrf.mxu0
      %v543 = vadd.f32 %v287, %v542
      %v544 = vpop.f32.mrf.mxu0
      %545 = vmatprep.mubr.bf16.mxu0 %v350
      %546 = vmatmul.mubr.bf16.gmra.mxu0 %v349
      %v547 = vpop.f32.mrf.mxu0
      %v548 = vadd.f32 %v287, %v547
      %v549 = vpop.f32.mrf.mxu0
      %v550 = vpop.f32.mrf.mxu0
      %v551 = vadd.f32 %v287, %v550
      %v552 = vpop.f32.mrf.mxu0
      %553 = vmatprep.mubr.bf16.mxu0 %v352
      %554 = vmatmul.mubr.bf16.gmra.mxu0 %v351
      %v555 = vpop.f32.mrf.mxu0
      %v556 = vadd.f32 %v287, %v555
      %v557 = vpop.f32.mrf.mxu0
      %v558 = vpop.f32.mrf.mxu0
      %v559 = vadd.f32 %v287, %v558
      %v560 = vpop.f32.mrf.mxu0
      %561 = vdwg.mxu0
      %vm562 = vcmask 130048
      %563 = vst.msk [vmem:[%s231] sm:$0xff] %vm562, %v500
      %564 = vst.msk [vmem:[%s231 + $0x8] sm:$0xff] %vm562, %v503
      %565 = vst.msk [vmem:[%s231 + $0x10] sm:$0xff] %vm562, %v508
      %566 = vst.msk [vmem:[%s231 + $0x18] sm:$0xff] %vm562, %v511
      %567 = vst.msk [vmem:[%s231 + $0x20] sm:$0xff] %vm562, %v516
      %568 = vst.msk [vmem:[%s231 + $0x28] sm:$0xff] %vm562, %v519
      %569 = vst.msk [vmem:[%s231 + $0x30] sm:$0xff] %vm562, %v524
      %570 = vst.msk [vmem:[%s231 + $0x38] sm:$0xff] %vm562, %v527
      %571 = vst.msk [vmem:[%s231 + $0x40] sm:$0xff] %vm562, %v532
      %572 = vst.msk [vmem:[%s231 + $0x48] sm:$0xff] %vm562, %v535
      %573 = vst.msk [vmem:[%s231 + $0x50] sm:$0xff] %vm562, %v540
      %574 = vst.msk [vmem:[%s231 + $0x58] sm:$0xff] %vm562, %v543
      %575 = vst.msk [vmem:[%s231 + $0x60] sm:$0xff] %vm562, %v548
      %576 = vst.msk [vmem:[%s231 + $0x68] sm:$0xff] %vm562, %v551
      %577 = vst.msk [vmem:[%s231 + $0x70] sm:$0xff] %vm562, %v556
      %578 = vst.msk [vmem:[%s231 + $0x78] sm:$0xff] %vm562, %v559
      %s579 = smul.u32 16, %s19
      %p580 = scmp.lt.s32.totalorder %s18, 3
      %s581 = scalar_select %p580, %s18, 3
      %p582 = scmp.lt.s32.totalorder %s579, 15
      %s583 = scalar_select %p582, %s579, 15
      %s584 = smul.addr %s581, 16
      %s585 = sadd.s32 %s583, %s584
      %s586 = smul.addr %s585, 8
      %s587 = scalar_lea.vmem %s3, %s586
      // Predicated region
      $region33: #{unet_forward.21} parent=31 // pred_check
        %p588 = pneg %p121
      $region34: #{unet_forward.21} parent=31 // pred_check_branch
        %590 = sbr.rel (%p588) target = $region36
      $region35: #{unet_forward.21} parent=31 // pred_region
        %s591 = smul.u32 16, %s19
      $region36: #{unet_forward.21} parent=31 // pred_fallthru
        _
    $region32: #{unet_forward.21} parent=5 // pred_fallthru
      _
    %p592 = scmp.le.s32.totalorder 2, %s9
    // Predicated region
    $region37: #{unet_forward.21} parent=5 // pred_check
      %p593 = pneg %p592
    $region38: #{unet_forward.21} parent=5 // pred_check_branch
      %595 = sbr.rel (%p593) target = $region40
    $region39: #{unet_forward.21} parent=5 // pred_region
      %s596 = ssub.s32 %s9, 2
      // Predicated region
      $region41: #{unet_forward.21} parent=39 // pred_check
        %p597 = pneg %p127
      $region42: #{unet_forward.21} parent=39 // pred_check_branch
        %599 = sbr.rel (%p597) target = $region44
      $region43: #{unet_forward.21} parent=39 // pred_region
        %s600 = smul.u32 16, %s21
        %p601 = scmp.lt.s32.totalorder %s20, 3
        %s602 = scalar_select %p601, %s20, 3
        %p603 = scmp.lt.s32.totalorder %s600, 15
        %s604 = scalar_select %p603, %s600, 15
        %s605 = smul.addr %s602, 16
        %s606 = sadd.s32 %s604, %s605
        %s607 = smul.addr %s606, 8
        %s608 = scalar_lea.vmem %s3, %s607
      $region44: #{unet_forward.21} parent=39 // pred_fallthru
        _
    $region40: #{unet_forward.21} parent=5 // pred_fallthru
      _
  $region6: #{unet_forward.21} parent=0 // loop_footer
    %s13 = sadd.s32 1, %s9
  $region7: #{unet_forward.21} parent=0 // loop_footer_branch
    %8 = sbr.rel target = $region3
  $region8: #{unet_forward.21} parent=0 // loop_exit
    _

// kernel: unet_forward.22
$region0: #{unet_forward.22}
  #allocation0 [shape = 'u32[]', space=smem, size = 0x4, offset = 0x4, fixed_abs, tag = 'smem constant byte address 0x4 - core index']
  #allocation1 [shape = 'u32[144,128]{1,0:T(1,128)}', space=vmem, size = 0x12000, scoped, tag = 'internal scratch']
  %s0 = inlined_call_operand.vmem [shape: bf16[4,512,128], index: 0, kind: input, shape index: {}]
  %s1 = inlined_call_operand.vmem [shape: bf16[4,128,8], index: 1, kind: input, shape index: {}]
  %s2 = inlined_call_operand.vmem [shape: f32[1,8], index: 2, kind: input, shape index: {}]
  %s3 = inlined_call_operand.vmem [shape: f32[4,512,8], index: 3, kind: output, shape index: {}]
  %s4 = sld [smem:[#allocation0]]
  $region45: #{unet_forward.22} parent=0
    _
  %s6 = ssub.s32 1, %s4
  %s7 = scalar_select 0, %s6, %s4
  loop: start=0, step=1, limit=6
  $region2: #{unet_forward.22} parent=0 // loop_pre_header
    _
  $region3: #{unet_forward.22} parent=0 // loop_header
    %s9 = sphi 0, %s13
    %p10 = scmp.ge.s32.totalorder %s9, 6
    %s16 = sphi 0, %s28
    %s17 = sphi 0, %s24
    %s18 = sphi 0, %s16
    %s19 = sphi 0, %s17
    %s20 = sphi 0, %s18
    %s21 = sphi 0, %s19
    %s33 = sphi 0, %s35
    %s36 = sphi 0, %s33
    %s37 = sphi 0, %s36
    %s53 = sphi 0, %s37
    %s59 = sphi 0, %s61
    %s62 = sphi 0, %s59
    %s63 = sphi 0, %s62
    %s79 = sphi 0, %s63
    %s83 = sphi 0, %s83
    %s85 = sphi 0, %s83
    %s86 = sphi 0, %s85
    %s100 = sphi 0, %s86
    %s108 = sphi 0, %s110
    %s111 = sphi 0, %s108
    %s112 = sphi 0, %s111
    %s128 = sphi 0, %s112
  $region4: #{unet_forward.22} parent=0 // loop_header_branch
    %12 = sbr.rel (%p10) target = $region8
  $region5: #{unet_forward.22} parent=0 // loop_body
    %s14 = ssub.s32 %s9, 1
    %s15 = ssub.s32 %s9, 2
    %s22 = sadd.s32 1, %s17
    %p23 = scmp.ge.s32.totalorder %s22, 1
    %s24 = scalar_select %p23, 0, %s22
    %s25 = sadd.s32 1, %s16
    %s26 = scalar_select %p23, %s25, %s16
    %p27 = scmp.ge.s32.totalorder %s26, 4
    %s28 = scalar_select %p27, 0, %s26
    %s29 = ssub.s32 %s16, %s28
    %s30 = ssub.s32 %s17, %s24
    %s31 = sor.u32 %s29, %s30
    %p32 = scmp.eq.s32.totalorder %s31, 0
    %s34 = sadd.s32 %s33, 1
    %s35 = scalar_select %p32, %s33, %s34
    %p38 = pneg %p32
    %p39 = scmp.eq.s32.totalorder %s9, 3
    %p40 = por %p38, %p39
    %p41 = scmp.ne.s32.totalorder %s33, %s36
    %p42 = scmp.eq.s32.totalorder %s9, 0
    %p43 = por %p41, %p42
    %p44 = scmp.ne.s32.totalorder %s33, %s36
    %p45 = scmp.eq.s32.totalorder %s14, 3
    %p46 = por %p44, %p45
    %p47 = scmp.ne.s32.totalorder %s36, %s37
    %p48 = scmp.eq.s32.totalorder %s14, 0
    %p49 = por %p47, %p48
    %p50 = scmp.ne.s32.totalorder %s36, %s37
    %p51 = scmp.eq.s32.totalorder %s15, 3
    %p52 = por %p50, %p51
    %p54 = scmp.ne.s32.totalorder %s37, %s53
    %p55 = scmp.eq.s32.totalorder %s15, 0
    %p56 = por %p54, %p55
    %s57 = ssub.s32 %s16, %s28
    %p58 = scmp.eq.s32.totalorder %s57, 0
    %s60 = sadd.s32 %s59, 1
    %s61 = scalar_select %p58, %s59, %s60
    %p64 = pneg %p58
    %p65 = scmp.eq.s32.totalorder %s9, 3
    %p66 = por %p64, %p65
    %p67 = scmp.ne.s32.totalorder %s59, %s62
    %p68 = scmp.eq.s32.totalorder %s9, 0
    %p69 = por %p67, %p68
    %p70 = scmp.ne.s32.totalorder %s59, %s62
    %p71 = scmp.eq.s32.totalorder %s14, 3
    %p72 = por %p70, %p71
    %p73 = scmp.ne.s32.totalorder %s62, %s63
    %p74 = scmp.eq.s32.totalorder %s14, 0
    %p75 = por %p73, %p74
    %p76 = scmp.ne.s32.totalorder %s62, %s63
    %p77 = scmp.eq.s32.totalorder %s15, 3
    %p78 = por %p76, %p77
    %p80 = scmp.ne.s32.totalorder %s63, %s79
    %p81 = scmp.eq.s32.totalorder %s15, 0
    %p82 = por %p80, %p81
    %s84 = sadd.s32 %s83, 1
    %p87 = scmp.eq.s32.totalorder %s9, 3
    %p88 = scmp.ne.s32.totalorder %s83, %s85
    %p89 = scmp.eq.s32.totalorder %s9, 0
    %p90 = por %p88, %p89
    %p91 = scmp.ne.s32.totalorder %s83, %s85
    %p92 = scmp.eq.s32.totalorder %s14, 3
    %p93 = por %p91, %p92
    %p94 = scmp.ne.s32.totalorder %s85, %s86
    %p95 = scmp.eq.s32.totalorder %s14, 0
    %p96 = por %p94, %p95
    %p97 = scmp.ne.s32.totalorder %s85, %s86
    %p98 = scmp.eq.s32.totalorder %s15, 3
    %p99 = por %p97, %p98
    %p101 = scmp.ne.s32.totalorder %s86, %s100
    %p102 = scmp.eq.s32.totalorder %s15, 0
    %p103 = por %p101, %p102
    %s104 = ssub.s32 %s16, %s28
    %s105 = ssub.s32 %s17, %s24
    %s106 = sor.u32 %s104, %s105
    %p107 = scmp.eq.s32.totalorder %s106, 0
    %s109 = sadd.s32 %s108, 1
    %s110 = scalar_select %p107, %s108, %s109
    %p113 = pneg %p107
    %p114 = scmp.eq.s32.totalorder %s9, 3
    %p115 = por %p113, %p114
    %p116 = scmp.ne.s32.totalorder %s108, %s111
    %p117 = scmp.eq.s32.totalorder %s9, 0
    %p118 = por %p116, %p117
    %p119 = scmp.ne.s32.totalorder %s108, %s111
    %p120 = scmp.eq.s32.totalorder %s14, 3
    %p121 = por %p119, %p120
    %p122 = scmp.ne.s32.totalorder %s111, %s112
    %p123 = scmp.eq.s32.totalorder %s14, 0
    %p124 = por %p122, %p123
    %p125 = scmp.ne.s32.totalorder %s111, %s112
    %p126 = scmp.eq.s32.totalorder %s15, 3
    %p127 = por %p125, %p126
    %p129 = scmp.ne.s32.totalorder %s112, %s128
    %p130 = scmp.eq.s32.totalorder %s15, 0
    %p131 = por %p129, %p130
    %p132 = scmp.le.s32.totalorder 1, %s9
    %p133 = scmp.lt.s32.totalorder %s9, 5
    %p134 = pnand %p132, %p133
    %p135 = pneg %p134
    // Predicated region
    $region9: #{unet_forward.22} parent=5 // pred_check
      _
    $region10: #{unet_forward.22} parent=5 // pred_check_branch
      %137 = sbr.rel (%p134) target = $region12
    $region11: #{unet_forward.22} parent=5 // pred_region
      %s138 = ssub.s32 %s9, 1
      // Predicated region
      $region13: #{unet_forward.22} parent=11 // pred_check
        %p139 = pneg %p96
      $region14: #{unet_forward.22} parent=11 // pred_check_branch
        %141 = sbr.rel (%p139) target = $region16
      $region15: #{unet_forward.22} parent=11 // pred_region
        _
      $region16: #{unet_forward.22} parent=11 // pred_fallthru
        _
    $region12: #{unet_forward.22} parent=5 // pred_fallthru
      _
    %p142 = scmp.lt.s32.totalorder %s9, 4
    // Predicated region
    $region17: #{unet_forward.22} parent=5 // pred_check
      %p143 = pneg %p142
    $region18: #{unet_forward.22} parent=5 // pred_check_branch
      %145 = sbr.rel (%p143) target = $region20
    $region19: #{unet_forward.22} parent=5 // pred_region
      // Predicated region
      $region21: #{unet_forward.22} parent=19 // pred_check
        %p146 = pneg %p43
      $region22: #{unet_forward.22} parent=19 // pred_check_branch
        %148 = sbr.rel (%p146) target = $region24
      $region23: #{unet_forward.22} parent=19 // pred_region
        %s149 = smul.u32 64, %s17
        %p150 = scmp.lt.s32.totalorder %s16, 3
        %s151 = scalar_select %p150, %s16, 3
        %p152 = scmp.lt.s32.totalorder %s149, 63
        %s153 = scalar_select %p152, %s149, 63
        %s154 = smul.addr %s151, 64
        %s155 = sadd.s32 %s153, %s154
        %s156 = smul.addr %s155, 4
        %s157 = scalar_lea.vmem %s0, %s156
        %s158 = smul.u32 64, %s17
      $region24: #{unet_forward.22} parent=19 // pred_fallthru
        _
      // Predicated region
      $region25: #{unet_forward.22} parent=19 // pred_check
        %p159 = pneg %p69
      $region26: #{unet_forward.22} parent=19 // pred_check_branch
        %161 = sbr.rel (%p159) target = $region28
      $region27: #{unet_forward.22} parent=19 // pred_region
        %p162 = scmp.lt.s32.totalorder %s16, 3
        %s163 = scalar_select %p162, %s16, 3
        %s164 = smul.addr %s163, 16
        %s165 = smul.addr %s164, 4
        %s166 = scalar_lea.vmem %s1, %s165
      $region28: #{unet_forward.22} parent=19 // pred_fallthru
        _
    $region20: #{unet_forward.22} parent=5 // pred_fallthru
      _
    %p167 = scmp.le.s32.totalorder 1, %s9
    %p168 = scmp.lt.s32.totalorder %s9, 5
    %p169 = pnand %p167, %p168
    %p170 = pneg %p169
    // Predicated region
    $region29: #{unet_forward.22} parent=5 // pred_check
      _
    $region30: #{unet_forward.22} parent=5 // pred_check_branch
      %172 = sbr.rel (%p169) target = $region32
    $region31: #{unet_forward.22} parent=5 // pred_region
      %s173 = ssub.s32 %s9, 1
      %s174 = smul.u32 64, %s19
      %p175 = scmp.lt.s32.totalorder %s18, 3
      %s176 = scalar_select %p175, %s18, 3
      %p177 = scmp.lt.s32.totalorder %s174, 63
      %s178 = scalar_select %p177, %s174, 63
      %s179 = smul.addr %s176, 64
      %s180 = sadd.s32 %s178, %s179
      %s181 = smul.addr %s180, 4
      %s182 = scalar_lea.vmem %s0, %s181
      %p183 = pneg %p49
      %p184 = pneg %p46
      %p185 = scmp.lt.s32.totalorder %s18, 3
      %s186 = scalar_select %p185, %s18, 3
      %s187 = smul.addr %s186, 16
      %s188 = smul.addr %s187, 4
      %s189 = scalar_lea.vmem %s1, %s188
      %p190 = pneg %p75
      %p191 = pneg %p72
      %p192 = pneg %p96
      %p193 = pneg %p93
      %p194 = pneg %p124
      %p195 = pneg %p121
      %s196 = smul.u32 64, %s19
      %p197 = scmp.lt.s32.totalorder %s18, 3
      %s198 = scalar_select %p197, %s18, 3
      %p199 = scmp.lt.s32.totalorder %s196, 63
      %s200 = scalar_select %p199, %s196, 63
      %s201 = smul.addr %s198, 64
      %s202 = sadd.s32 %s200, %s201
      %s203 = smul.addr %s202, 8
      %s204 = scalar_lea.vmem %s3, %s203
      %s205 = smul.u32 64, %s19
      %p206 = scmp.lt.s32.totalorder %s18, 3
      %s207 = scalar_select %p206, %s18, 3
      %p208 = scmp.lt.s32.totalorder %s205, 63
      %s209 = scalar_select %p208, %s205, 63
      %s210 = smul.addr %s207, 64
      %s211 = sadd.s32 %s209, %s210
      %s212 = smul.addr %s211, 4
      %s213 = scalar_lea.vmem %s0, %s212
      %s214 = smul.u32 64, %s19
      %p215 = scmp.lt.s32.totalorder %s18, 3
      %s216 = scalar_select %p215, %s18, 3
      %s217 = smul.addr %s216, 16
      %s218 = smul.addr %s217, 4
      %s219 = scalar_lea.vmem %s1, %s218
      %s220 = smul.u32 64, %s19
      %p221 = scmp.lt.s32.totalorder %s18, 3
      %s222 = scalar_select %p221, %s18, 3
      %p223 = scmp.lt.s32.totalorder %s220, 63
      %s224 = scalar_select %p223, %s220, 63
      %s225 = smul.addr %s222, 64
      %s226 = sadd.s32 %s224, %s225
      %s227 = smul.addr %s226, 8
      %s228 = scalar_lea.vmem %s3, %s227
      %s229 = smul.u32 64, %s19
      %v231 = vld [vmem:[%s213] sm:$0xf]
      %v232 = vld [vmem:[%s213 + $0x4] sm:$0xf]
      %v233 = vld [vmem:[%s213 + $0x8] sm:$0xf]
      %v234 = vld [vmem:[%s213 + $0xc] sm:$0xf]
      %v235 = vld [vmem:[%s213 + $0x10] sm:$0xf]
      %v236 = vld [vmem:[%s213 + $0x14] sm:$0xf]
      %v237 = vld [vmem:[%s213 + $0x18] sm:$0xf]
      %v238 = vld [vmem:[%s213 + $0x1c] sm:$0xf]
      %v239 = vld [vmem:[%s213 + $0x20] sm:$0xf]
      %v240 = vld [vmem:[%s213 + $0x24] sm:$0xf]
      %v241 = vld [vmem:[%s213 + $0x28] sm:$0xf]
      %v242 = vld [vmem:[%s213 + $0x2c] sm:$0xf]
      %v243 = vld [vmem:[%s213 + $0x30] sm:$0xf]
      %v244 = vld [vmem:[%s213 + $0x34] sm:$0xf]
      %v245 = vld [vmem:[%s213 + $0x38] sm:$0xf]
      %v246 = vld [vmem:[%s213 + $0x3c] sm:$0xf]
      %v247 = vld [vmem:[%s213 + $0x40] sm:$0xf]
      %v248 = vld [vmem:[%s213 + $0x44] sm:$0xf]
      %v249 = vld [vmem:[%s213 + $0x48] sm:$0xf]
      %v250 = vld [vmem:[%s213 + $0x4c] sm:$0xf]
      %v251 = vld [vmem:[%s213 + $0x50] sm:$0xf]
      %v252 = vld [vmem:[%s213 + $0x54] sm:$0xf]
      %v253 = vld [vmem:[%s213 + $0x58] sm:$0xf]
      %v254 = vld [vmem:[%s213 + $0x5c] sm:$0xf]
      %v255 = vld [vmem:[%s213 + $0x60] sm:$0xf]
      %v256 = vld [vmem:[%s213 + $0x64] sm:$0xf]
      %v257 = vld [vmem:[%s213 + $0x68] sm:$0xf]
      %v258 = vld [vmem:[%s213 + $0x6c] sm:$0xf]
      %v259 = vld [vmem:[%s213 + $0x70] sm:$0xf]
      %v260 = vld [vmem:[%s213 + $0x74] sm:$0xf]
      %v261 = vld [vmem:[%s213 + $0x78] sm:$0xf]
      %v262 = vld [vmem:[%s213 + $0x7c] sm:$0xf]
      %v263 = vld [vmem:[%s213 + $0x80] sm:$0xf]
      %v264 = vld [vmem:[%s213 + $0x84] sm:$0xf]
      %v265 = vld [vmem:[%s213 + $0x88] sm:$0xf]
      %v266 = vld [vmem:[%s213 + $0x8c] sm:$0xf]
      %v267 = vld [vmem:[%s213 + $0x90] sm:$0xf]
      %v268 = vld [vmem:[%s213 + $0x94] sm:$0xf]
      %v269 = vld [vmem:[%s213 + $0x98] sm:$0xf]
      %v270 = vld [vmem:[%s213 + $0x9c] sm:$0xf]
      %v271 = vld [vmem:[%s213 + $0xa0] sm:$0xf]
      %v272 = vld [vmem:[%s213 + $0xa4] sm:$0xf]
      %v273 = vld [vmem:[%s213 + $0xa8] sm:$0xf]
      %v274 = vld [vmem:[%s213 + $0xac] sm:$0xf]
      %v275 = vld [vmem:[%s213 + $0xb0] sm:$0xf]
      %v276 = vld [vmem:[%s213 + $0xb4] sm:$0xf]
      %v277 = vld [vmem:[%s213 + $0xb8] sm:$0xf]
      %v278 = vld [vmem:[%s213 + $0xbc] sm:$0xf]
      %v279 = vld [vmem:[%s213 + $0xc0] sm:$0xf]
      %v280 = vld [vmem:[%s213 + $0xc4] sm:$0xf]
      %v281 = vld [vmem:[%s213 + $0xc8] sm:$0xf]
      %v282 = vld [vmem:[%s213 + $0xcc] sm:$0xf]
      %v283 = vld [vmem:[%s213 + $0xd0] sm:$0xf]
      %v284 = vld [vmem:[%s213 + $0xd4] sm:$0xf]
      %v285 = vld [vmem:[%s213 + $0xd8] sm:$0xf]
      %v286 = vld [vmem:[%s213 + $0xdc] sm:$0xf]
      %v287 = vld [vmem:[%s213 + $0xe0] sm:$0xf]
      %v288 = vld [vmem:[%s213 + $0xe4] sm:$0xf]
      %v289 = vld [vmem:[%s213 + $0xe8] sm:$0xf]
      %v290 = vld [vmem:[%s213 + $0xec] sm:$0xf]
      %v291 = vld [vmem:[%s213 + $0xf0] sm:$0xf]
      %v292 = vld [vmem:[%s213 + $0xf4] sm:$0xf]
      %v293 = vld [vmem:[%s213 + $0xf8] sm:$0xf]
      %v294 = vld [vmem:[%s213 + $0xfc] sm:$0xf]
      %v295 = vld [vmem:[%s219] sm:$0xf]
      %v296 = vld [vmem:[%s219 + $0x4] sm:$0xf]
      %v297 = vld [vmem:[%s219 + $0x8] sm:$0xf]
      %v298 = vld [vmem:[%s219 + $0xc] sm:$0xf]
      %v299 = vld [vmem:[%s219 + $0x10] sm:$0xf]
      %v300 = vld [vmem:[%s219 + $0x14] sm:$0xf]
      %v301 = vld [vmem:[%s219 + $0x18] sm:$0xf]
      %v302 = vld [vmem:[%s219 + $0x1c] sm:$0xf]
      %v303 = vld [vmem:[%s219 + $0x20] sm:$0xf]
      %v304 = vld [vmem:[%s219 + $0x24] sm:$0xf]
      %v305 = vld [vmem:[%s219 + $0x28] sm:$0xf]
      %v306 = vld [vmem:[%s219 + $0x2c] sm:$0xf]
      %v307 = vld [vmem:[%s219 + $0x30] sm:$0xf]
      %v308 = vld [vmem:[%s219 + $0x34] sm:$0xf]
      %v309 = vld [vmem:[%s219 + $0x38] sm:$0xf]
      %v310 = vld [vmem:[%s219 + $0x3c] sm:$0xf]
      %v311 = vld [vmem:[%s2] sm:$0x1]
      %v313 = vlaneseq
      %v314 = vshrl.u32 %v313, 7
      %v315 = vsub.s32 0, %v314
      %v316 = vrot.slane %v311, %v315
      %v382 = vunpack.c.l.b16 %v231
      %v383 = vunpack.c.l.b16 %v232
      %v384 = vunpack.c.l.b16 %v233
      %v385 = vunpack.c.l.b16 %v234
      %v386 = vunpack.c.l.b16 %v235
      %v387 = vunpack.c.l.b16 %v236
      %v388 = vunpack.c.l.b16 %v237
      %v389 = vunpack.c.l.b16 %v238
      %v390 = vunpack.c.l.b16 %v239
      %v391 = vunpack.c.l.b16 %v240
      %v392 = vunpack.c.l.b16 %v241
      %v393 = vunpack.c.l.b16 %v242
      %v394 = vunpack.c.l.b16 %v243
      %v395 = vunpack.c.l.b16 %v244
      %v396 = vunpack.c.l.b16 %v245
      %v397 = vunpack.c.l.b16 %v246
      %v398 = vunpack.c.l.b16 %v247
      %v399 = vunpack.c.l.b16 %v248
      %v400 = vunpack.c.l.b16 %v249
      %v401 = vunpack.c.l.b16 %v250
      %v402 = vunpack.c.l.b16 %v251
      %v403 = vunpack.c.l.b16 %v252
      %v404 = vunpack.c.l.b16 %v253
      %v405 = vunpack.c.l.b16 %v254
      %v406 = vunpack.c.l.b16 %v255
      %v407 = vunpack.c.l.b16 %v256
      %v408 = vunpack.c.l.b16 %v257
      %v409 = vunpack.c.l.b16 %v258
      %v410 = vunpack.c.l.b16 %v259
      %v411 = vunpack.c.l.b16 %v260
      %v412 = vunpack.c.l.b16 %v261
      %v413 = vunpack.c.l.b16 %v262
      %v414 = vunpack.c.l.b16 %v263
      %v415 = vunpack.c.l.b16 %v264
      %v416 = vunpack.c.l.b16 %v265
      %v417 = vunpack.c.l.b16 %v266
      %v418 = vunpack.c.l.b16 %v267
      %v419 = vunpack.c.l.b16 %v268
      %v420 = vunpack.c.l.b16 %v269
      %v421 = vunpack.c.l.b16 %v270
      %v422 = vunpack.c.l.b16 %v271
      %v423 = vunpack.c.l.b16 %v272
      %v424 = vunpack.c.l.b16 %v273
      %v425 = vunpack.c.l.b16 %v274
      %v426 = vunpack.c.l.b16 %v275
      %v427 = vunpack.c.l.b16 %v276
      %v428 = vunpack.c.l.b16 %v277
      %v429 = vunpack.c.l.b16 %v278
      %v430 = vunpack.c.l.b16 %v279
      %v431 = vunpack.c.l.b16 %v280
      %v432 = vunpack.c.l.b16 %v281
      %v433 = vunpack.c.l.b16 %v282
      %v434 = vunpack.c.l.b16 %v283
      %v435 = vunpack.c.l.b16 %v284
      %v436 = vunpack.c.l.b16 %v285
      %v437 = vunpack.c.l.b16 %v286
      %v438 = vunpack.c.l.b16 %v287
      %v439 = vunpack.c.l.b16 %v288
      %v440 = vunpack.c.l.b16 %v289
      %v441 = vunpack.c.l.b16 %v290
      %v442 = vunpack.c.l.b16 %v291
      %v443 = vunpack.c.l.b16 %v292
      %v444 = vunpack.c.l.b16 %v293
      %v445 = vunpack.c.l.b16 %v294
      %v446 = vpack.c.b16 %v383, %v382
      %v447 = vpack.c.b16 %v385, %v384
      %v448 = vpack.c.b16 %v387, %v386
      %v449 = vpack.c.b16 %v389, %v388
      %v450 = vpack.c.b16 %v391, %v390
      %v451 = vpack.c.b16 %v393, %v392
      %v452 = vpack.c.b16 %v395, %v394
      %v453 = vpack.c.b16 %v397, %v396
      %v454 = vpack.c.b16 %v399, %v398
      %v455 = vpack.c.b16 %v401, %v400
      %v456 = vpack.c.b16 %v403, %v402
      %v457 = vpack.c.b16 %v405, %v404
      %v458 = vpack.c.b16 %v407, %v406
      %v459 = vpack.c.b16 %v409, %v408
      %v460 = vpack.c.b16 %v411, %v410
      %v461 = vpack.c.b16 %v413, %v412
      %v462 = vpack.c.b16 %v415, %v414
      %v463 = vpack.c.b16 %v417, %v416
      %v464 = vpack.c.b16 %v419, %v418
      %v465 = vpack.c.b16 %v421, %v420
      %v466 = vpack.c.b16 %v423, %v422
      %v467 = vpack.c.b16 %v425, %v424
      %v468 = vpack.c.b16 %v427, %v426
      %v469 = vpack.c.b16 %v429, %v428
      %v470 = vpack.c.b16 %v431, %v430
      %v471 = vpack.c.b16 %v433, %v432
      %v472 = vpack.c.b16 %v435, %v434
      %v473 = vpack.c.b16 %v437, %v436
      %v474 = vpack.c.b16 %v439, %v438
      %v475 = vpack.c.b16 %v441, %v440
      %v476 = vpack.c.b16 %v443, %v442
      %v477 = vpack.c.b16 %v445, %v444
      %v526 = vunpack.c.l.b16 %v295
      %v527 = vunpack.c.l.b16 %v296
      %v528 = vunpack.c.l.b16 %v297
      %v529 = vunpack.c.l.b16 %v298
      %v530 = vunpack.c.l.b16 %v299
      %v531 = vunpack.c.l.b16 %v300
      %v532 = vunpack.c.l.b16 %v301
      %v533 = vunpack.c.l.b16 %v302
      %v534 = vunpack.c.l.b16 %v303
      %v535 = vunpack.c.l.b16 %v304
      %v536 = vunpack.c.l.b16 %v305
      %v537 = vunpack.c.l.b16 %v306
      %v538 = vunpack.c.l.b16 %v307
      %v539 = vunpack.c.l.b16 %v308
      %v540 = vunpack.c.l.b16 %v309
      %v541 = vunpack.c.l.b16 %v310
      %v542 = vpack.c.b16 %v527, %v526
      %v543 = vpack.c.b16 %v529, %v528
      %v544 = vpack.c.b16 %v531, %v530
      %v545 = vpack.c.b16 %v533, %v532
      %v546 = vpack.c.b16 %v535, %v534
      %v547 = vpack.c.b16 %v537, %v536
      %v548 = vpack.c.b16 %v539, %v538
      %v549 = vpack.c.b16 %v541, %v540
      %558 = vmatprep.subr.bf16.mxu0 0
      %559 = vmatpush1.bf16.msra.mxu0 %v549
      %560 = vmatprep.subr.bf16.mxu0 0
      %561 = vmatpush1.bf16.msra.mxu0 %v548
      %562 = vmatprep.subr.bf16.mxu0 0
      %563 = vmatpush1.bf16.msra.mxu0 %v547
      %564 = vmatprep.subr.bf16.mxu0 0
      %565 = vmatpush1.bf16.msra.mxu0 %v546
      %566 = vmatprep.subr.bf16.mxu0 0
      %567 = vmatpush1.bf16.msra.mxu0 %v545
      %568 = vmatprep.subr.bf16.mxu0 0
      %569 = vmatpush1.bf16.msra.mxu0 %v544
      %570 = vmatprep.subr.bf16.mxu0 0
      %571 = vmatpush1.bf16.msra.mxu0 %v543
      %572 = vmatprep.subr.bf16.mxu0 0
      %573 = vmatpush1.bf16.msra.mxu0 %v542
      %574 = vmatprep.subr.bf16.mxu0 0
      %575 = vmatpush2.bf16.msra.mxu0 0
      %576 = vmatprep.subr.bf16.mxu0 0
      %577 = vmatpush2.bf16.msra.mxu0 0
      %578 = vmatprep.subr.bf16.mxu0 0
      %579 = vmatpush2.bf16.msra.mxu0 0
      %580 = vmatprep.subr.bf16.mxu0 0
      %581 = vmatpush2.bf16.msra.mxu0 0
      %582 = vmatprep.subr.bf16.mxu0 0
      %583 = vmatpush2.bf16.msra.mxu0 0
      %584 = vmatprep.subr.bf16.mxu0 0
      %585 = vmatpush2.bf16.msra.mxu0 0
      %586 = vmatprep.subr.bf16.mxu0 0
      %587 = vmatpush2.bf16.msra.mxu0 0
      %588 = vmatprep.subr.bf16.mxu0 0
      %589 = vmatpush2.bf16.msra.mxu0 0
      %590 = vmatprep.mubr.bf16.mxu0 0
      %591 = vmatmul.mubr.bf16.gmra.mxu0 %v446
      %v592 = vpop.f32.mrf.mxu0
      %v593 = vadd.f32 %v316, %v592
      %v594 = vpop.f32.mrf.mxu0
      %v595 = vpop.f32.mrf.mxu0
      %v596 = vadd.f32 %v316, %v595
      %v597 = vpop.f32.mrf.mxu0
      %598 = vmatprep.mubr.bf16.mxu0 0
      %599 = vmatmul.mubr.bf16.gmra.mxu0 %v447
      %v600 = vpop.f32.mrf.mxu0
      %v601 = vadd.f32 %v316, %v600
      %v602 = vpop.f32.mrf.mxu0
      %v603 = vpop.f32.mrf.mxu0
      %v604 = vadd.f32 %v316, %v603
      %v605 = vpop.f32.mrf.mxu0
      %606 = vmatprep.mubr.bf16.mxu0 0
      %607 = vmatmul.mubr.bf16.gmra.mxu0 %v448
      %v608 = vpop.f32.mrf.mxu0
      %v609 = vadd.f32 %v316, %v608
      %v610 = vpop.f32.mrf.mxu0
      %v611 = vpop.f32.mrf.mxu0
      %v612 = vadd.f32 %v316, %v611
      %v613 = vpop.f32.mrf.mxu0
      %614 = vmatprep.mubr.bf16.mxu0 0
      %615 = vmatmul.mubr.bf16.gmra.mxu0 %v449
      %v616 = vpop.f32.mrf.mxu0
      %v617 = vadd.f32 %v316, %v616
      %v618 = vpop.f32.mrf.mxu0
      %v619 = vpop.f32.mrf.mxu0
      %v620 = vadd.f32 %v316, %v619
      %v621 = vpop.f32.mrf.mxu0
      %622 = vmatprep.mubr.bf16.mxu0 0
      %623 = vmatmul.mubr.bf16.gmra.mxu0 %v450
      %v624 = vpop.f32.mrf.mxu0
      %v625 = vadd.f32 %v316, %v624
      %v626 = vpop.f32.mrf.mxu0
      %v627 = vpop.f32.mrf.mxu0
      %v628 = vadd.f32 %v316, %v627
      %v629 = vpop.f32.mrf.mxu0
      %630 = vmatprep.mubr.bf16.mxu0 0
      %631 = vmatmul.mubr.bf16.gmra.mxu0 %v451
      %v632 = vpop.f32.mrf.mxu0
      %v633 = vadd.f32 %v316, %v632
      %v634 = vpop.f32.mrf.mxu0
      %v635 = vpop.f32.mrf.mxu0
      %v636 = vadd.f32 %v316, %v635
      %v637 = vpop.f32.mrf.mxu0
      %638 = vmatprep.mubr.bf16.mxu0 0
      %639 = vmatmul.mubr.bf16.gmra.mxu0 %v452
      %v640 = vpop.f32.mrf.mxu0
      %v641 = vadd.f32 %v316, %v640
      %v642 = vpop.f32.mrf.mxu0
      %v643 = vpop.f32.mrf.mxu0
      %v644 = vadd.f32 %v316, %v643
      %v645 = vpop.f32.mrf.mxu0
      %646 = vmatprep.mubr.bf16.mxu0 0
      %647 = vmatmul.mubr.bf16.gmra.mxu0 %v453
      %v648 = vpop.f32.mrf.mxu0
      %v649 = vadd.f32 %v316, %v648
      %v650 = vpop.f32.mrf.mxu0
      %v651 = vpop.f32.mrf.mxu0
      %v652 = vadd.f32 %v316, %v651
      %v653 = vpop.f32.mrf.mxu0
      %654 = vmatprep.mubr.bf16.mxu0 0
      %655 = vmatmul.mubr.bf16.gmra.mxu0 %v454
      %v656 = vpop.f32.mrf.mxu0
      %v657 = vadd.f32 %v316, %v656
      %v658 = vpop.f32.mrf.mxu0
      %v659 = vpop.f32.mrf.mxu0
      %v660 = vadd.f32 %v316, %v659
      %v661 = vpop.f32.mrf.mxu0
      %662 = vmatprep.mubr.bf16.mxu0 0
      %663 = vmatmul.mubr.bf16.gmra.mxu0 %v455
      %v664 = vpop.f32.mrf.mxu0
      %v665 = vadd.f32 %v316, %v664
      %v666 = vpop.f32.mrf.mxu0
      %v667 = vpop.f32.mrf.mxu0
      %v668 = vadd.f32 %v316, %v667
      %v669 = vpop.f32.mrf.mxu0
      %670 = vmatprep.mubr.bf16.mxu0 0
      %671 = vmatmul.mubr.bf16.gmra.mxu0 %v456
      %v672 = vpop.f32.mrf.mxu0
      %v673 = vadd.f32 %v316, %v672
      %v674 = vpop.f32.mrf.mxu0
      %v675 = vpop.f32.mrf.mxu0
      %v676 = vadd.f32 %v316, %v675
      %v677 = vpop.f32.mrf.mxu0
      %678 = vmatprep.mubr.bf16.mxu0 0
      %679 = vmatmul.mubr.bf16.gmra.mxu0 %v457
      %v680 = vpop.f32.mrf.mxu0
      %v681 = vadd.f32 %v316, %v680
      %v682 = vpop.f32.mrf.mxu0
      %v683 = vpop.f32.mrf.mxu0
      %v684 = vadd.f32 %v316, %v683
      %v685 = vpop.f32.mrf.mxu0
      %686 = vmatprep.mubr.bf16.mxu0 0
      %687 = vmatmul.mubr.bf16.gmra.mxu0 %v458
      %v688 = vpop.f32.mrf.mxu0
      %v689 = vadd.f32 %v316, %v688
      %v690 = vpop.f32.mrf.mxu0
      %v691 = vpop.f32.mrf.mxu0
      %v692 = vadd.f32 %v316, %v691
      %v693 = vpop.f32.mrf.mxu0
      %694 = vmatprep.mubr.bf16.mxu0 0
      %695 = vmatmul.mubr.bf16.gmra.mxu0 %v459
      %v696 = vpop.f32.mrf.mxu0
      %v697 = vadd.f32 %v316, %v696
      %v698 = vpop.f32.mrf.mxu0
      %v699 = vpop.f32.mrf.mxu0
      %v700 = vadd.f32 %v316, %v699
      %v701 = vpop.f32.mrf.mxu0
      %702 = vmatprep.mubr.bf16.mxu0 0
      %703 = vmatmul.mubr.bf16.gmra.mxu0 %v460
      %v704 = vpop.f32.mrf.mxu0
      %v705 = vadd.f32 %v316, %v704
      %v706 = vpop.f32.mrf.mxu0
      %v707 = vpop.f32.mrf.mxu0
      %v708 = vadd.f32 %v316, %v707
      %v709 = vpop.f32.mrf.mxu0
      %710 = vmatprep.mubr.bf16.mxu0 0
      %711 = vmatmul.mubr.bf16.gmra.mxu0 %v461
      %v712 = vpop.f32.mrf.mxu0
      %v713 = vadd.f32 %v316, %v712
      %v714 = vpop.f32.mrf.mxu0
      %v715 = vpop.f32.mrf.mxu0
      %v716 = vadd.f32 %v316, %v715
      %v717 = vpop.f32.mrf.mxu0
      %718 = vmatprep.mubr.bf16.mxu0 0
      %719 = vmatmul.mubr.bf16.gmra.mxu0 %v462
      %v720 = vpop.f32.mrf.mxu0
      %v721 = vadd.f32 %v316, %v720
      %v722 = vpop.f32.mrf.mxu0
      %v723 = vpop.f32.mrf.mxu0
      %v724 = vadd.f32 %v316, %v723
      %v725 = vpop.f32.mrf.mxu0
      %726 = vmatprep.mubr.bf16.mxu0 0
      %727 = vmatmul.mubr.bf16.gmra.mxu0 %v463
      %v728 = vpop.f32.mrf.mxu0
      %v729 = vadd.f32 %v316, %v728
      %v730 = vpop.f32.mrf.mxu0
      %v731 = vpop.f32.mrf.mxu0
      %v732 = vadd.f32 %v316, %v731
      %v733 = vpop.f32.mrf.mxu0
      %734 = vmatprep.mubr.bf16.mxu0 0
      %735 = vmatmul.mubr.bf16.gmra.mxu0 %v464
      %v736 = vpop.f32.mrf.mxu0
      %v737 = vadd.f32 %v316, %v736
      %v738 = vpop.f32.mrf.mxu0
      %v739 = vpop.f32.mrf.mxu0
      %v740 = vadd.f32 %v316, %v739
      %v741 = vpop.f32.mrf.mxu0
      %742 = vmatprep.mubr.bf16.mxu0 0
      %743 = vmatmul.mubr.bf16.gmra.mxu0 %v465
      %v744 = vpop.f32.mrf.mxu0
      %v745 = vadd.f32 %v316, %v744
      %v746 = vpop.f32.mrf.mxu0
      %v747 = vpop.f32.mrf.mxu0
      %v748 = vadd.f32 %v316, %v747
      %v749 = vpop.f32.mrf.mxu0
      %750 = vmatprep.mubr.bf16.mxu0 0
      %751 = vmatmul.mubr.bf16.gmra.mxu0 %v466
      %v752 = vpop.f32.mrf.mxu0
      %v753 = vadd.f32 %v316, %v752
      %v754 = vpop.f32.mrf.mxu0
      %v755 = vpop.f32.mrf.mxu0
      %v756 = vadd.f32 %v316, %v755
      %v757 = vpop.f32.mrf.mxu0
      %758 = vmatprep.mubr.bf16.mxu0 0
      %759 = vmatmul.mubr.bf16.gmra.mxu0 %v467
      %v760 = vpop.f32.mrf.mxu0
      %v761 = vadd.f32 %v316, %v760
      %v762 = vpop.f32.mrf.mxu0
      %v763 = vpop.f32.mrf.mxu0
      %v764 = vadd.f32 %v316, %v763
      %v765 = vpop.f32.mrf.mxu0
      %766 = vmatprep.mubr.bf16.mxu0 0
      %767 = vmatmul.mubr.bf16.gmra.mxu0 %v468
      %v768 = vpop.f32.mrf.mxu0
      %v769 = vadd.f32 %v316, %v768
      %v770 = vpop.f32.mrf.mxu0
      %v771 = vpop.f32.mrf.mxu0
      %v772 = vadd.f32 %v316, %v771
      %v773 = vpop.f32.mrf.mxu0
      %774 = vmatprep.mubr.bf16.mxu0 0
      %775 = vmatmul.mubr.bf16.gmra.mxu0 %v469
      %v776 = vpop.f32.mrf.mxu0
      %v777 = vadd.f32 %v316, %v776
      %v778 = vpop.f32.mrf.mxu0
      %v779 = vpop.f32.mrf.mxu0
      %v780 = vadd.f32 %v316, %v779
      %v781 = vpop.f32.mrf.mxu0
      %782 = vmatprep.mubr.bf16.mxu0 0
      %783 = vmatmul.mubr.bf16.gmra.mxu0 %v470
      %v784 = vpop.f32.mrf.mxu0
      %v785 = vadd.f32 %v316, %v784
      %v786 = vpop.f32.mrf.mxu0
      %v787 = vpop.f32.mrf.mxu0
      %v788 = vadd.f32 %v316, %v787
      %v789 = vpop.f32.mrf.mxu0
      %790 = vmatprep.mubr.bf16.mxu0 0
      %791 = vmatmul.mubr.bf16.gmra.mxu0 %v471
      %v792 = vpop.f32.mrf.mxu0
      %v793 = vadd.f32 %v316, %v792
      %v794 = vpop.f32.mrf.mxu0
      %v795 = vpop.f32.mrf.mxu0
      %v796 = vadd.f32 %v316, %v795
      %v797 = vpop.f32.mrf.mxu0
      %798 = vmatprep.mubr.bf16.mxu0 0
      %799 = vmatmul.mubr.bf16.gmra.mxu0 %v472
      %v800 = vpop.f32.mrf.mxu0
      %v801 = vadd.f32 %v316, %v800
      %v802 = vpop.f32.mrf.mxu0
      %v803 = vpop.f32.mrf.mxu0
      %v804 = vadd.f32 %v316, %v803
      %v805 = vpop.f32.mrf.mxu0
      %806 = vmatprep.mubr.bf16.mxu0 0
      %807 = vmatmul.mubr.bf16.gmra.mxu0 %v473
      %v808 = vpop.f32.mrf.mxu0
      %v809 = vadd.f32 %v316, %v808
      %v810 = vpop.f32.mrf.mxu0
      %v811 = vpop.f32.mrf.mxu0
      %v812 = vadd.f32 %v316, %v811
      %v813 = vpop.f32.mrf.mxu0
      %814 = vmatprep.mubr.bf16.mxu0 0
      %815 = vmatmul.mubr.bf16.gmra.mxu0 %v474
      %v816 = vpop.f32.mrf.mxu0
      %v817 = vadd.f32 %v316, %v816
      %v818 = vpop.f32.mrf.mxu0
      %v819 = vpop.f32.mrf.mxu0
      %v820 = vadd.f32 %v316, %v819
      %v821 = vpop.f32.mrf.mxu0
      %822 = vmatprep.mubr.bf16.mxu0 0
      %823 = vmatmul.mubr.bf16.gmra.mxu0 %v475
      %v824 = vpop.f32.mrf.mxu0
      %v825 = vadd.f32 %v316, %v824
      %v826 = vpop.f32.mrf.mxu0
      %v827 = vpop.f32.mrf.mxu0
      %v828 = vadd.f32 %v316, %v827
      %v829 = vpop.f32.mrf.mxu0
      %830 = vmatprep.mubr.bf16.mxu0 0
      %831 = vmatmul.mubr.bf16.gmra.mxu0 %v476
      %v832 = vpop.f32.mrf.mxu0
      %v833 = vadd.f32 %v316, %v832
      %v834 = vpop.f32.mrf.mxu0
      %v835 = vpop.f32.mrf.mxu0
      %v836 = vadd.f32 %v316, %v835
      %v837 = vpop.f32.mrf.mxu0
      %838 = vmatprep.mubr.bf16.mxu0 0
      %839 = vmatmul.mubr.bf16.gmra.mxu0 %v477
      %v840 = vpop.f32.mrf.mxu0
      %v841 = vadd.f32 %v316, %v840
      %v842 = vpop.f32.mrf.mxu0
      %v843 = vpop.f32.mrf.mxu0
      %v844 = vadd.f32 %v316, %v843
      %v845 = vpop.f32.mrf.mxu0
      %846 = vdwg.mxu0
      %vm847 = vcmask 64512
      %848 = vst.msk [vmem:[%s228] sm:$0xff] %vm847, %v593
      %849 = vst.msk [vmem:[%s228 + $0x8] sm:$0xff] %vm847, %v596
      %850 = vst.msk [vmem:[%s228 + $0x10] sm:$0xff] %vm847, %v601
      %851 = vst.msk [vmem:[%s228 + $0x18] sm:$0xff] %vm847, %v604
      %852 = vst.msk [vmem:[%s228 + $0x20] sm:$0xff] %vm847, %v609
      %853 = vst.msk [vmem:[%s228 + $0x28] sm:$0xff] %vm847, %v612
      %854 = vst.msk [vmem:[%s228 + $0x30] sm:$0xff] %vm847, %v617
      %855 = vst.msk [vmem:[%s228 + $0x38] sm:$0xff] %vm847, %v620
      %856 = vst.msk [vmem:[%s228 + $0x40] sm:$0xff] %vm847, %v625
      %857 = vst.msk [vmem:[%s228 + $0x48] sm:$0xff] %vm847, %v628
      %858 = vst.msk [vmem:[%s228 + $0x50] sm:$0xff] %vm847, %v633
      %859 = vst.msk [vmem:[%s228 + $0x58] sm:$0xff] %vm847, %v636
      %860 = vst.msk [vmem:[%s228 + $0x60] sm:$0xff] %vm847, %v641
      %861 = vst.msk [vmem:[%s228 + $0x68] sm:$0xff] %vm847, %v644
      %862 = vst.msk [vmem:[%s228 + $0x70] sm:$0xff] %vm847, %v649
      %863 = vst.msk [vmem:[%s228 + $0x78] sm:$0xff] %vm847, %v652
      %864 = vst.msk [vmem:[%s228 + $0x80] sm:$0xff] %vm847, %v657
      %865 = vst.msk [vmem:[%s228 + $0x88] sm:$0xff] %vm847, %v660
      %866 = vst.msk [vmem:[%s228 + $0x90] sm:$0xff] %vm847, %v665
      %867 = vst.msk [vmem:[%s228 + $0x98] sm:$0xff] %vm847, %v668
      %868 = vst.msk [vmem:[%s228 + $0xa0] sm:$0xff] %vm847, %v673
      %869 = vst.msk [vmem:[%s228 + $0xa8] sm:$0xff] %vm847, %v676
      %870 = vst.msk [vmem:[%s228 + $0xb0] sm:$0xff] %vm847, %v681
      %871 = vst.msk [vmem:[%s228 + $0xb8] sm:$0xff] %vm847, %v684
      %872 = vst.msk [vmem:[%s228 + $0xc0] sm:$0xff] %vm847, %v689
      %873 = vst.msk [vmem:[%s228 + $0xc8] sm:$0xff] %vm847, %v692
      %874 = vst.msk [vmem:[%s228 + $0xd0] sm:$0xff] %vm847, %v697
      %875 = vst.msk [vmem:[%s228 + $0xd8] sm:$0xff] %vm847, %v700
      %876 = vst.msk [vmem:[%s228 + $0xe0] sm:$0xff] %vm847, %v705
      %877 = vst.msk [vmem:[%s228 + $0xe8] sm:$0xff] %vm847, %v708
      %878 = vst.msk [vmem:[%s228 + $0xf0] sm:$0xff] %vm847, %v713
      %879 = vst.msk [vmem:[%s228 + $0xf8] sm:$0xff] %vm847, %v716
      %880 = vst.msk [vmem:[%s228 + $0x100] sm:$0xff] %vm847, %v721
      %881 = vst.msk [vmem:[%s228 + $0x108] sm:$0xff] %vm847, %v724
      %882 = vst.msk [vmem:[%s228 + $0x110] sm:$0xff] %vm847, %v729
      %883 = vst.msk [vmem:[%s228 + $0x118] sm:$0xff] %vm847, %v732
      %884 = vst.msk [vmem:[%s228 + $0x120] sm:$0xff] %vm847, %v737
      %885 = vst.msk [vmem:[%s228 + $0x128] sm:$0xff] %vm847, %v740
      %886 = vst.msk [vmem:[%s228 + $0x130] sm:$0xff] %vm847, %v745
      %887 = vst.msk [vmem:[%s228 + $0x138] sm:$0xff] %vm847, %v748
      %888 = vst.msk [vmem:[%s228 + $0x140] sm:$0xff] %vm847, %v753
      %889 = vst.msk [vmem:[%s228 + $0x148] sm:$0xff] %vm847, %v756
      %890 = vst.msk [vmem:[%s228 + $0x150] sm:$0xff] %vm847, %v761
      %891 = vst.msk [vmem:[%s228 + $0x158] sm:$0xff] %vm847, %v764
      %892 = vst.msk [vmem:[%s228 + $0x160] sm:$0xff] %vm847, %v769
      %893 = vst.msk [vmem:[%s228 + $0x168] sm:$0xff] %vm847, %v772
      %894 = vst.msk [vmem:[%s228 + $0x170] sm:$0xff] %vm847, %v777
      %895 = vst.msk [vmem:[%s228 + $0x178] sm:$0xff] %vm847, %v780
      %896 = vst.msk [vmem:[%s228 + $0x180] sm:$0xff] %vm847, %v785
      %897 = vst.msk [vmem:[%s228 + $0x188] sm:$0xff] %vm847, %v788
      %898 = vst.msk [vmem:[%s228 + $0x190] sm:$0xff] %vm847, %v793
      %899 = vst.msk [vmem:[%s228 + $0x198] sm:$0xff] %vm847, %v796
      %900 = vst.msk [vmem:[%s228 + $0x1a0] sm:$0xff] %vm847, %v801
      %901 = vst.msk [vmem:[%s228 + $0x1a8] sm:$0xff] %vm847, %v804
      %902 = vst.msk [vmem:[%s228 + $0x1b0] sm:$0xff] %vm847, %v809
      %903 = vst.msk [vmem:[%s228 + $0x1b8] sm:$0xff] %vm847, %v812
      %904 = vst.msk [vmem:[%s228 + $0x1c0] sm:$0xff] %vm847, %v817
      %905 = vst.msk [vmem:[%s228 + $0x1c8] sm:$0xff] %vm847, %v820
      %906 = vst.msk [vmem:[%s228 + $0x1d0] sm:$0xff] %vm847, %v825
      %907 = vst.msk [vmem:[%s228 + $0x1d8] sm:$0xff] %vm847, %v828
      %908 = vst.msk [vmem:[%s228 + $0x1e0] sm:$0xff] %vm847, %v833
      %909 = vst.msk [vmem:[%s228 + $0x1e8] sm:$0xff] %vm847, %v836
      %910 = vst.msk [vmem:[%s228 + $0x1f0] sm:$0xff] %vm847, %v841
      %911 = vst.msk [vmem:[%s228 + $0x1f8] sm:$0xff] %vm847, %v844
      %s912 = smul.u32 64, %s19
      %p913 = scmp.lt.s32.totalorder %s18, 3
      %s914 = scalar_select %p913, %s18, 3
      %p915 = scmp.lt.s32.totalorder %s912, 63
      %s916 = scalar_select %p915, %s912, 63
      %s917 = smul.addr %s914, 64
      %s918 = sadd.s32 %s916, %s917
      %s919 = smul.addr %s918, 8
      %s920 = scalar_lea.vmem %s3, %s919
      // Predicated region
      $region33: #{unet_forward.22} parent=31 // pred_check
        %p921 = pneg %p121
      $region34: #{unet_forward.22} parent=31 // pred_check_branch
        %923 = sbr.rel (%p921) target = $region36
      $region35: #{unet_forward.22} parent=31 // pred_region
        %s924 = smul.u32 64, %s19
      $region36: #{unet_forward.22} parent=31 // pred_fallthru
        _
    $region32: #{unet_forward.22} parent=5 // pred_fallthru
      _
    %p925 = scmp.le.s32.totalorder 2, %s9
    // Predicated region
    $region37: #{unet_forward.22} parent=5 // pred_check
      %p926 = pneg %p925
    $region38: #{unet_forward.22} parent=5 // pred_check_branch
      %928 = sbr.rel (%p926) target = $region40
    $region39: #{unet_forward.22} parent=5 // pred_region
      %s929 = ssub.s32 %s9, 2
      // Predicated region
      $region41: #{unet_forward.22} parent=39 // pred_check
        %p930 = pneg %p127
      $region42: #{unet_forward.22} parent=39 // pred_check_branch
        %932 = sbr.rel (%p930) target = $region44
      $region43: #{unet_forward.22} parent=39 // pred_region
        %s933 = smul.u32 64, %s21
        %p934 = scmp.lt.s32.totalorder %s20, 3
        %s935 = scalar_select %p934, %s20, 3
        %p936 = scmp.lt.s32.totalorder %s933, 63
        %s937 = scalar_select %p936, %s933, 63
        %s938 = smul.addr %s935, 64
        %s939 = sadd.s32 %s937, %s938
        %s940 = smul.addr %s939, 8
        %s941 = scalar_lea.vmem %s3, %s940
      $region44: #{unet_forward.22} parent=39 // pred_fallthru
        _
    $region40: #{unet_forward.22} parent=5 // pred_fallthru
      _
  $region6: #{unet_forward.22} parent=0 // loop_footer
    %s13 = sadd.s32 1, %s9
  $region7: #{unet_forward.22} parent=0 // loop_footer_branch
    %8 = sbr.rel target = $region3
  $region8: #{unet_forward.22} parent=0 // loop_exit
    _

// kernel: unet_forward.23
$region0: #{unet_forward.23}
  #allocation0 [shape = 'u32[]', space=smem, size = 0x4, offset = 0x4, fixed_abs, tag = 'smem constant byte address 0x4 - core index']
  #allocation1 [shape = 'u32[144,128]{1,0:T(1,128)}', space=vmem, size = 0x12000, scoped, tag = 'internal scratch']
  %s0 = inlined_call_operand.vmem [shape: bf16[4,2048,64], index: 0, kind: input, shape index: {}]
  %s1 = inlined_call_operand.vmem [shape: bf16[4,64,3], index: 1, kind: input, shape index: {}]
  %s2 = inlined_call_operand.vmem [shape: f32[1,3], index: 2, kind: input, shape index: {}]
  %s3 = inlined_call_operand.vmem [shape: f32[4,2048,3], index: 3, kind: output, shape index: {}]
  %s4 = sld [smem:[#allocation0]]
  $region45: #{unet_forward.23} parent=0
    _
  %s6 = ssub.s32 1, %s4
  %s7 = scalar_select 0, %s6, %s4
  loop: start=0, step=1, limit=18
  $region2: #{unet_forward.23} parent=0 // loop_pre_header
    _
  $region3: #{unet_forward.23} parent=0 // loop_header
    %s9 = sphi 0, %s13
    %p10 = scmp.ge.s32.totalorder %s9, 18
    %s16 = sphi 0, %s28
    %s17 = sphi 0, %s24
    %s18 = sphi 0, %s16
    %s19 = sphi 0, %s17
    %s20 = sphi 0, %s18
    %s21 = sphi 0, %s19
    %s33 = sphi 0, %s35
    %s36 = sphi 0, %s33
    %s37 = sphi 0, %s36
    %s53 = sphi 0, %s37
    %s59 = sphi 0, %s61
    %s62 = sphi 0, %s59
    %s63 = sphi 0, %s62
    %s79 = sphi 0, %s63
    %s83 = sphi 0, %s83
    %s85 = sphi 0, %s83
    %s86 = sphi 0, %s85
    %s100 = sphi 0, %s86
    %s108 = sphi 0, %s110
    %s111 = sphi 0, %s108
    %s112 = sphi 0, %s111
    %s128 = sphi 0, %s112
  $region4: #{unet_forward.23} parent=0 // loop_header_branch
    %12 = sbr.rel (%p10) target = $region8
  $region5: #{unet_forward.23} parent=0 // loop_body
    %s14 = ssub.s32 %s9, 1
    %s15 = ssub.s32 %s9, 2
    %s22 = sadd.s32 1, %s17
    %p23 = scmp.ge.s32.totalorder %s22, 4
    %s24 = scalar_select %p23, 0, %s22
    %s25 = sadd.s32 1, %s16
    %s26 = scalar_select %p23, %s25, %s16
    %p27 = scmp.ge.s32.totalorder %s26, 4
    %s28 = scalar_select %p27, 0, %s26
    %s29 = ssub.s32 %s16, %s28
    %s30 = ssub.s32 %s17, %s24
    %s31 = sor.u32 %s29, %s30
    %p32 = scmp.eq.s32.totalorder %s31, 0
    %s34 = sadd.s32 %s33, 1
    %s35 = scalar_select %p32, %s33, %s34
    %p38 = pneg %p32
    %p39 = scmp.eq.s32.totalorder %s9, 15
    %p40 = por %p38, %p39
    %p41 = scmp.ne.s32.totalorder %s33, %s36
    %p42 = scmp.eq.s32.totalorder %s9, 0
    %p43 = por %p41, %p42
    %p44 = scmp.ne.s32.totalorder %s33, %s36
    %p45 = scmp.eq.s32.totalorder %s14, 15
    %p46 = por %p44, %p45
    %p47 = scmp.ne.s32.totalorder %s36, %s37
    %p48 = scmp.eq.s32.totalorder %s14, 0
    %p49 = por %p47, %p48
    %p50 = scmp.ne.s32.totalorder %s36, %s37
    %p51 = scmp.eq.s32.totalorder %s15, 15
    %p52 = por %p50, %p51
    %p54 = scmp.ne.s32.totalorder %s37, %s53
    %p55 = scmp.eq.s32.totalorder %s15, 0
    %p56 = por %p54, %p55
    %s57 = ssub.s32 %s16, %s28
    %p58 = scmp.eq.s32.totalorder %s57, 0
    %s60 = sadd.s32 %s59, 1
    %s61 = scalar_select %p58, %s59, %s60
    %p64 = pneg %p58
    %p65 = scmp.eq.s32.totalorder %s9, 15
    %p66 = por %p64, %p65
    %p67 = scmp.ne.s32.totalorder %s59, %s62
    %p68 = scmp.eq.s32.totalorder %s9, 0
    %p69 = por %p67, %p68
    %p70 = scmp.ne.s32.totalorder %s59, %s62
    %p71 = scmp.eq.s32.totalorder %s14, 15
    %p72 = por %p70, %p71
    %p73 = scmp.ne.s32.totalorder %s62, %s63
    %p74 = scmp.eq.s32.totalorder %s14, 0
    %p75 = por %p73, %p74
    %p76 = scmp.ne.s32.totalorder %s62, %s63
    %p77 = scmp.eq.s32.totalorder %s15, 15
    %p78 = por %p76, %p77
    %p80 = scmp.ne.s32.totalorder %s63, %s79
    %p81 = scmp.eq.s32.totalorder %s15, 0
    %p82 = por %p80, %p81
    %s84 = sadd.s32 %s83, 1
    %p87 = scmp.eq.s32.totalorder %s9, 15
    %p88 = scmp.ne.s32.totalorder %s83, %s85
    %p89 = scmp.eq.s32.totalorder %s9, 0
    %p90 = por %p88, %p89
    %p91 = scmp.ne.s32.totalorder %s83, %s85
    %p92 = scmp.eq.s32.totalorder %s14, 15
    %p93 = por %p91, %p92
    %p94 = scmp.ne.s32.totalorder %s85, %s86
    %p95 = scmp.eq.s32.totalorder %s14, 0
    %p96 = por %p94, %p95
    %p97 = scmp.ne.s32.totalorder %s85, %s86
    %p98 = scmp.eq.s32.totalorder %s15, 15
    %p99 = por %p97, %p98
    %p101 = scmp.ne.s32.totalorder %s86, %s100
    %p102 = scmp.eq.s32.totalorder %s15, 0
    %p103 = por %p101, %p102
    %s104 = ssub.s32 %s16, %s28
    %s105 = ssub.s32 %s17, %s24
    %s106 = sor.u32 %s104, %s105
    %p107 = scmp.eq.s32.totalorder %s106, 0
    %s109 = sadd.s32 %s108, 1
    %s110 = scalar_select %p107, %s108, %s109
    %p113 = pneg %p107
    %p114 = scmp.eq.s32.totalorder %s9, 15
    %p115 = por %p113, %p114
    %p116 = scmp.ne.s32.totalorder %s108, %s111
    %p117 = scmp.eq.s32.totalorder %s9, 0
    %p118 = por %p116, %p117
    %p119 = scmp.ne.s32.totalorder %s108, %s111
    %p120 = scmp.eq.s32.totalorder %s14, 15
    %p121 = por %p119, %p120
    %p122 = scmp.ne.s32.totalorder %s111, %s112
    %p123 = scmp.eq.s32.totalorder %s14, 0
    %p124 = por %p122, %p123
    %p125 = scmp.ne.s32.totalorder %s111, %s112
    %p126 = scmp.eq.s32.totalorder %s15, 15
    %p127 = por %p125, %p126
    %p129 = scmp.ne.s32.totalorder %s112, %s128
    %p130 = scmp.eq.s32.totalorder %s15, 0
    %p131 = por %p129, %p130
    %p132 = scmp.le.s32.totalorder 1, %s9
    %p133 = scmp.lt.s32.totalorder %s9, 17
    %p134 = pnand %p132, %p133
    %p135 = pneg %p134
    // Predicated region
    $region9: #{unet_forward.23} parent=5 // pred_check
      _
    $region10: #{unet_forward.23} parent=5 // pred_check_branch
      %137 = sbr.rel (%p134) target = $region12
    $region11: #{unet_forward.23} parent=5 // pred_region
      %s138 = ssub.s32 %s9, 1
      // Predicated region
      $region13: #{unet_forward.23} parent=11 // pred_check
        %p139 = pneg %p96
      $region14: #{unet_forward.23} parent=11 // pred_check_branch
        %141 = sbr.rel (%p139) target = $region16
      $region15: #{unet_forward.23} parent=11 // pred_region
        _
      $region16: #{unet_forward.23} parent=11 // pred_fallthru
        _
    $region12: #{unet_forward.23} parent=5 // pred_fallthru
      _
    %p142 = scmp.lt.s32.totalorder %s9, 16
    // Predicated region
    $region17: #{unet_forward.23} parent=5 // pred_check
      %p143 = pneg %p142
    $region18: #{unet_forward.23} parent=5 // pred_check_branch
      %145 = sbr.rel (%p143) target = $region20
    $region19: #{unet_forward.23} parent=5 // pred_region
      // Predicated region
      $region21: #{unet_forward.23} parent=19 // pred_check
        %p146 = pneg %p43
      $region22: #{unet_forward.23} parent=19 // pred_check_branch
        %148 = sbr.rel (%p146) target = $region24
      $region23: #{unet_forward.23} parent=19 // pred_region
        %s149 = smul.u32 64, %s17
        %p150 = scmp.lt.s32.totalorder %s16, 3
        %s151 = scalar_select %p150, %s16, 3
        %p152 = scmp.lt.s32.totalorder %s149, 255
        %s153 = scalar_select %p152, %s149, 255
        %s154 = smul.addr %s151, 256
        %s155 = sadd.s32 %s153, %s154
        %s156 = smul.addr %s155, 4
        %s157 = scalar_lea.vmem %s0, %s156
        %s158 = smul.u32 64, %s17
      $region24: #{unet_forward.23} parent=19 // pred_fallthru
        _
      // Predicated region
      $region25: #{unet_forward.23} parent=19 // pred_check
        %p159 = pneg %p69
      $region26: #{unet_forward.23} parent=19 // pred_check_branch
        %161 = sbr.rel (%p159) target = $region28
      $region27: #{unet_forward.23} parent=19 // pred_region
        %p162 = scmp.lt.s32.totalorder %s16, 3
        %s163 = scalar_select %p162, %s16, 3
        %s164 = smul.addr %s163, 8
        %s165 = smul.addr %s164, 4
        %s166 = scalar_lea.vmem %s1, %s165
      $region28: #{unet_forward.23} parent=19 // pred_fallthru
        _
    $region20: #{unet_forward.23} parent=5 // pred_fallthru
      _
    %p167 = scmp.le.s32.totalorder 1, %s9
    %p168 = scmp.lt.s32.totalorder %s9, 17
    %p169 = pnand %p167, %p168
    %p170 = pneg %p169
    // Predicated region
    $region29: #{unet_forward.23} parent=5 // pred_check
      _
    $region30: #{unet_forward.23} parent=5 // pred_check_branch
      %172 = sbr.rel (%p169) target = $region32
    $region31: #{unet_forward.23} parent=5 // pred_region
      %s173 = ssub.s32 %s9, 1
      %s174 = smul.u32 64, %s19
      %p175 = scmp.lt.s32.totalorder %s18, 3
      %s176 = scalar_select %p175, %s18, 3
      %p177 = scmp.lt.s32.totalorder %s174, 255
      %s178 = scalar_select %p177, %s174, 255
      %s179 = smul.addr %s176, 256
      %s180 = sadd.s32 %s178, %s179
      %s181 = smul.addr %s180, 4
      %s182 = scalar_lea.vmem %s0, %s181
      %p183 = pneg %p49
      %p184 = pneg %p46
      %p185 = scmp.lt.s32.totalorder %s18, 3
      %s186 = scalar_select %p185, %s18, 3
      %s187 = smul.addr %s186, 8
      %s188 = smul.addr %s187, 4
      %s189 = scalar_lea.vmem %s1, %s188
      %p190 = pneg %p75
      %p191 = pneg %p72
      %p192 = pneg %p96
      %p193 = pneg %p93
      %p194 = pneg %p124
      %p195 = pneg %p121
      %s196 = smul.u32 64, %s19
      %p197 = scmp.lt.s32.totalorder %s18, 3
      %s198 = scalar_select %p197, %s18, 3
      %p199 = scmp.lt.s32.totalorder %s196, 255
      %s200 = scalar_select %p199, %s196, 255
      %s201 = smul.addr %s198, 256
      %s202 = sadd.s32 %s200, %s201
      %s203 = smul.addr %s202, 8
      %s204 = scalar_lea.vmem %s3, %s203
      %s205 = smul.u32 64, %s19
      %p206 = scmp.lt.s32.totalorder %s18, 3
      %s207 = scalar_select %p206, %s18, 3
      %p208 = scmp.lt.s32.totalorder %s205, 255
      %s209 = scalar_select %p208, %s205, 255
      %s210 = smul.addr %s207, 256
      %s211 = sadd.s32 %s209, %s210
      %s212 = smul.addr %s211, 4
      %s213 = scalar_lea.vmem %s0, %s212
      %s214 = smul.u32 64, %s19
      %p215 = scmp.lt.s32.totalorder %s18, 3
      %s216 = scalar_select %p215, %s18, 3
      %s217 = smul.addr %s216, 8
      %s218 = smul.addr %s217, 4
      %s219 = scalar_lea.vmem %s1, %s218
      %s220 = smul.u32 64, %s19
      %p221 = scmp.lt.s32.totalorder %s18, 3
      %s222 = scalar_select %p221, %s18, 3
      %p223 = scmp.lt.s32.totalorder %s220, 255
      %s224 = scalar_select %p223, %s220, 255
      %s225 = smul.addr %s222, 256
      %s226 = sadd.s32 %s224, %s225
      %s227 = smul.addr %s226, 8
      %s228 = scalar_lea.vmem %s3, %s227
      %s229 = smul.u32 64, %s19
      %v231 = vld [vmem:[%s213] sm:$0xf]
      %v232 = vld [vmem:[%s213 + $0x4] sm:$0xf]
      %v233 = vld [vmem:[%s213 + $0x8] sm:$0xf]
      %v234 = vld [vmem:[%s213 + $0xc] sm:$0xf]
      %v235 = vld [vmem:[%s213 + $0x10] sm:$0xf]
      %v236 = vld [vmem:[%s213 + $0x14] sm:$0xf]
      %v237 = vld [vmem:[%s213 + $0x18] sm:$0xf]
      %v238 = vld [vmem:[%s213 + $0x1c] sm:$0xf]
      %v239 = vld [vmem:[%s213 + $0x20] sm:$0xf]
      %v240 = vld [vmem:[%s213 + $0x24] sm:$0xf]
      %v241 = vld [vmem:[%s213 + $0x28] sm:$0xf]
      %v242 = vld [vmem:[%s213 + $0x2c] sm:$0xf]
      %v243 = vld [vmem:[%s213 + $0x30] sm:$0xf]
      %v244 = vld [vmem:[%s213 + $0x34] sm:$0xf]
      %v245 = vld [vmem:[%s213 + $0x38] sm:$0xf]
      %v246 = vld [vmem:[%s213 + $0x3c] sm:$0xf]
      %v247 = vld [vmem:[%s213 + $0x40] sm:$0xf]
      %v248 = vld [vmem:[%s213 + $0x44] sm:$0xf]
      %v249 = vld [vmem:[%s213 + $0x48] sm:$0xf]
      %v250 = vld [vmem:[%s213 + $0x4c] sm:$0xf]
      %v251 = vld [vmem:[%s213 + $0x50] sm:$0xf]
      %v252 = vld [vmem:[%s213 + $0x54] sm:$0xf]
      %v253 = vld [vmem:[%s213 + $0x58] sm:$0xf]
      %v254 = vld [vmem:[%s213 + $0x5c] sm:$0xf]
      %v255 = vld [vmem:[%s213 + $0x60] sm:$0xf]
      %v256 = vld [vmem:[%s213 + $0x64] sm:$0xf]
      %v257 = vld [vmem:[%s213 + $0x68] sm:$0xf]
      %v258 = vld [vmem:[%s213 + $0x6c] sm:$0xf]
      %v259 = vld [vmem:[%s213 + $0x70] sm:$0xf]
      %v260 = vld [vmem:[%s213 + $0x74] sm:$0xf]
      %v261 = vld [vmem:[%s213 + $0x78] sm:$0xf]
      %v262 = vld [vmem:[%s213 + $0x7c] sm:$0xf]
      %v263 = vld [vmem:[%s213 + $0x80] sm:$0xf]
      %v264 = vld [vmem:[%s213 + $0x84] sm:$0xf]
      %v265 = vld [vmem:[%s213 + $0x88] sm:$0xf]
      %v266 = vld [vmem:[%s213 + $0x8c] sm:$0xf]
      %v267 = vld [vmem:[%s213 + $0x90] sm:$0xf]
      %v268 = vld [vmem:[%s213 + $0x94] sm:$0xf]
      %v269 = vld [vmem:[%s213 + $0x98] sm:$0xf]
      %v270 = vld [vmem:[%s213 + $0x9c] sm:$0xf]
      %v271 = vld [vmem:[%s213 + $0xa0] sm:$0xf]
      %v272 = vld [vmem:[%s213 + $0xa4] sm:$0xf]
      %v273 = vld [vmem:[%s213 + $0xa8] sm:$0xf]
      %v274 = vld [vmem:[%s213 + $0xac] sm:$0xf]
      %v275 = vld [vmem:[%s213 + $0xb0] sm:$0xf]
      %v276 = vld [vmem:[%s213 + $0xb4] sm:$0xf]
      %v277 = vld [vmem:[%s213 + $0xb8] sm:$0xf]
      %v278 = vld [vmem:[%s213 + $0xbc] sm:$0xf]
      %v279 = vld [vmem:[%s213 + $0xc0] sm:$0xf]
      %v280 = vld [vmem:[%s213 + $0xc4] sm:$0xf]
      %v281 = vld [vmem:[%s213 + $0xc8] sm:$0xf]
      %v282 = vld [vmem:[%s213 + $0xcc] sm:$0xf]
      %v283 = vld [vmem:[%s213 + $0xd0] sm:$0xf]
      %v284 = vld [vmem:[%s213 + $0xd4] sm:$0xf]
      %v285 = vld [vmem:[%s213 + $0xd8] sm:$0xf]
      %v286 = vld [vmem:[%s213 + $0xdc] sm:$0xf]
      %v287 = vld [vmem:[%s213 + $0xe0] sm:$0xf]
      %v288 = vld [vmem:[%s213 + $0xe4] sm:$0xf]
      %v289 = vld [vmem:[%s213 + $0xe8] sm:$0xf]
      %v290 = vld [vmem:[%s213 + $0xec] sm:$0xf]
      %v291 = vld [vmem:[%s213 + $0xf0] sm:$0xf]
      %v292 = vld [vmem:[%s213 + $0xf4] sm:$0xf]
      %v293 = vld [vmem:[%s213 + $0xf8] sm:$0xf]
      %v294 = vld [vmem:[%s213 + $0xfc] sm:$0xf]
      %v295 = vld [vmem:[%s219] sm:$0xf]
      %v296 = vld [vmem:[%s219 + $0x4] sm:$0xf]
      %v297 = vld [vmem:[%s219 + $0x8] sm:$0xf]
      %v298 = vld [vmem:[%s219 + $0xc] sm:$0xf]
      %v299 = vld [vmem:[%s219 + $0x10] sm:$0xf]
      %v300 = vld [vmem:[%s219 + $0x14] sm:$0xf]
      %v301 = vld [vmem:[%s219 + $0x18] sm:$0xf]
      %v302 = vld [vmem:[%s219 + $0x1c] sm:$0xf]
      %v303 = vld [vmem:[%s2] sm:$0x1]
      %v305 = vlaneseq
      %v306 = vshrl.u32 %v305, 7
      %v307 = vsub.s32 0, %v306
      %v308 = vrot.slane %v303, %v307
      %v374 = vunpack.c.l.b16 %v231
      %v375 = vunpack.c.l.b16 %v232
      %v376 = vunpack.c.l.b16 %v233
      %v377 = vunpack.c.l.b16 %v234
      %v378 = vunpack.c.l.b16 %v235
      %v379 = vunpack.c.l.b16 %v236
      %v380 = vunpack.c.l.b16 %v237
      %v381 = vunpack.c.l.b16 %v238
      %v382 = vunpack.c.l.b16 %v239
      %v383 = vunpack.c.l.b16 %v240
      %v384 = vunpack.c.l.b16 %v241
      %v385 = vunpack.c.l.b16 %v242
      %v386 = vunpack.c.l.b16 %v243
      %v387 = vunpack.c.l.b16 %v244
      %v388 = vunpack.c.l.b16 %v245
      %v389 = vunpack.c.l.b16 %v246
      %v390 = vunpack.c.l.b16 %v247
      %v391 = vunpack.c.l.b16 %v248
      %v392 = vunpack.c.l.b16 %v249
      %v393 = vunpack.c.l.b16 %v250
      %v394 = vunpack.c.l.b16 %v251
      %v395 = vunpack.c.l.b16 %v252
      %v396 = vunpack.c.l.b16 %v253
      %v397 = vunpack.c.l.b16 %v254
      %v398 = vunpack.c.l.b16 %v255
      %v399 = vunpack.c.l.b16 %v256
      %v400 = vunpack.c.l.b16 %v257
      %v401 = vunpack.c.l.b16 %v258
      %v402 = vunpack.c.l.b16 %v259
      %v403 = vunpack.c.l.b16 %v260
      %v404 = vunpack.c.l.b16 %v261
      %v405 = vunpack.c.l.b16 %v262
      %v406 = vunpack.c.l.b16 %v263
      %v407 = vunpack.c.l.b16 %v264
      %v408 = vunpack.c.l.b16 %v265
      %v409 = vunpack.c.l.b16 %v266
      %v410 = vunpack.c.l.b16 %v267
      %v411 = vunpack.c.l.b16 %v268
      %v412 = vunpack.c.l.b16 %v269
      %v413 = vunpack.c.l.b16 %v270
      %v414 = vunpack.c.l.b16 %v271
      %v415 = vunpack.c.l.b16 %v272
      %v416 = vunpack.c.l.b16 %v273
      %v417 = vunpack.c.l.b16 %v274
      %v418 = vunpack.c.l.b16 %v275
      %v419 = vunpack.c.l.b16 %v276
      %v420 = vunpack.c.l.b16 %v277
      %v421 = vunpack.c.l.b16 %v278
      %v422 = vunpack.c.l.b16 %v279
      %v423 = vunpack.c.l.b16 %v280
      %v424 = vunpack.c.l.b16 %v281
      %v425 = vunpack.c.l.b16 %v282
      %v426 = vunpack.c.l.b16 %v283
      %v427 = vunpack.c.l.b16 %v284
      %v428 = vunpack.c.l.b16 %v285
      %v429 = vunpack.c.l.b16 %v286
      %v430 = vunpack.c.l.b16 %v287
      %v431 = vunpack.c.l.b16 %v288
      %v432 = vunpack.c.l.b16 %v289
      %v433 = vunpack.c.l.b16 %v290
      %v434 = vunpack.c.l.b16 %v291
      %v435 = vunpack.c.l.b16 %v292
      %v436 = vunpack.c.l.b16 %v293
      %v437 = vunpack.c.l.b16 %v294
      %v438 = vpack.c.b16 %v375, %v374
      %v439 = vpack.c.b16 %v377, %v376
      %v440 = vpack.c.b16 %v379, %v378
      %v441 = vpack.c.b16 %v381, %v380
      %v442 = vpack.c.b16 %v383, %v382
      %v443 = vpack.c.b16 %v385, %v384
      %v444 = vpack.c.b16 %v387, %v386
      %v445 = vpack.c.b16 %v389, %v388
      %v446 = vpack.c.b16 %v391, %v390
      %v447 = vpack.c.b16 %v393, %v392
      %v448 = vpack.c.b16 %v395, %v394
      %v449 = vpack.c.b16 %v397, %v396
      %v450 = vpack.c.b16 %v399, %v398
      %v451 = vpack.c.b16 %v401, %v400
      %v452 = vpack.c.b16 %v403, %v402
      %v453 = vpack.c.b16 %v405, %v404
      %v454 = vpack.c.b16 %v407, %v406
      %v455 = vpack.c.b16 %v409, %v408
      %v456 = vpack.c.b16 %v411, %v410
      %v457 = vpack.c.b16 %v413, %v412
      %v458 = vpack.c.b16 %v415, %v414
      %v459 = vpack.c.b16 %v417, %v416
      %v460 = vpack.c.b16 %v419, %v418
      %v461 = vpack.c.b16 %v421, %v420
      %v462 = vpack.c.b16 %v423, %v422
      %v463 = vpack.c.b16 %v425, %v424
      %v464 = vpack.c.b16 %v427, %v426
      %v465 = vpack.c.b16 %v429, %v428
      %v466 = vpack.c.b16 %v431, %v430
      %v467 = vpack.c.b16 %v433, %v432
      %v468 = vpack.c.b16 %v435, %v434
      %v469 = vpack.c.b16 %v437, %v436
      %v478 = vunpack.c.l.b16 %v295
      %v479 = vunpack.c.l.b16 %v296
      %v480 = vunpack.c.l.b16 %v297
      %v481 = vunpack.c.l.b16 %v298
      %v482 = vunpack.c.l.b16 %v299
      %v483 = vunpack.c.l.b16 %v300
      %v484 = vunpack.c.l.b16 %v301
      %v485 = vunpack.c.l.b16 %v302
      %v486 = vpack.c.b16 %v479, %v478
      %v487 = vpack.c.b16 %v481, %v480
      %v488 = vpack.c.b16 %v483, %v482
      %v489 = vpack.c.b16 %v485, %v484
      %vm494 = vcmask 523264
      %v496 = vsel %vm494, %v438, 0
      %v499 = vsel %vm494, %v439, 0
      %v502 = vsel %vm494, %v440, 0
      %v505 = vsel %vm494, %v441, 0
      %v508 = vsel %vm494, %v442, 0
      %v511 = vsel %vm494, %v443, 0
      %v514 = vsel %vm494, %v444, 0
      %v517 = vsel %vm494, %v445, 0
      %v520 = vsel %vm494, %v446, 0
      %v523 = vsel %vm494, %v447, 0
      %v526 = vsel %vm494, %v448, 0
      %v529 = vsel %vm494, %v449, 0
      %v532 = vsel %vm494, %v450, 0
      %v535 = vsel %vm494, %v451, 0
      %v538 = vsel %vm494, %v452, 0
      %v541 = vsel %vm494, %v453, 0
      %v544 = vsel %vm494, %v454, 0
      %v547 = vsel %vm494, %v455, 0
      %v550 = vsel %vm494, %v456, 0
      %v553 = vsel %vm494, %v457, 0
      %v556 = vsel %vm494, %v458, 0
      %v559 = vsel %vm494, %v459, 0
      %v562 = vsel %vm494, %v460, 0
      %v565 = vsel %vm494, %v461, 0
      %v568 = vsel %vm494, %v462, 0
      %v571 = vsel %vm494, %v463, 0
      %v574 = vsel %vm494, %v464, 0
      %v577 = vsel %vm494, %v465, 0
      %v580 = vsel %vm494, %v466, 0
      %v583 = vsel %vm494, %v467, 0
      %v586 = vsel %vm494, %v468, 0
      %v589 = vsel %vm494, %v469, 0
      %591 = vmatprep.subr.bf16.mxu0 0
      %592 = vmatpush1.bf16.msra.mxu0 0
      %593 = vmatprep.subr.bf16.mxu0 0
      %594 = vmatpush1.bf16.msra.mxu0 0
      %595 = vmatprep.subr.bf16.mxu0 0
      %596 = vmatpush1.bf16.msra.mxu0 0
      %597 = vmatprep.subr.bf16.mxu0 0
      %598 = vmatpush1.bf16.msra.mxu0 0
      %599 = vmatprep.subr.bf16.mxu0 0
      %600 = vmatpush1.bf16.msra.mxu0 %v489
      %601 = vmatprep.subr.bf16.mxu0 0
      %602 = vmatpush1.bf16.msra.mxu0 %v488
      %603 = vmatprep.subr.bf16.mxu0 0
      %604 = vmatpush1.bf16.msra.mxu0 %v487
      %605 = vmatprep.subr.bf16.mxu0 0
      %606 = vmatpush1.bf16.msra.mxu0 %v486
      %607 = vmatprep.subr.bf16.mxu0 0
      %608 = vmatpush2.bf16.msra.mxu0 0
      %609 = vmatprep.subr.bf16.mxu0 0
      %610 = vmatpush2.bf16.msra.mxu0 0
      %611 = vmatprep.subr.bf16.mxu0 0
      %612 = vmatpush2.bf16.msra.mxu0 0
      %613 = vmatprep.subr.bf16.mxu0 0
      %614 = vmatpush2.bf16.msra.mxu0 0
      %615 = vmatprep.subr.bf16.mxu0 0
      %616 = vmatpush2.bf16.msra.mxu0 0
      %617 = vmatprep.subr.bf16.mxu0 0
      %618 = vmatpush2.bf16.msra.mxu0 0
      %619 = vmatprep.subr.bf16.mxu0 0
      %620 = vmatpush2.bf16.msra.mxu0 0
      %621 = vmatprep.subr.bf16.mxu0 0
      %622 = vmatpush2.bf16.msra.mxu0 0
      %623 = vmatprep.mubr.bf16.mxu0 0
      %624 = vmatmul.mubr.bf16.gmra.mxu0 %v496
      %v625 = vpop.f32.mrf.mxu0
      %v626 = vadd.f32 %v308, %v625
      %v627 = vpop.f32.mrf.mxu0
      %v628 = vpop.f32.mrf.mxu0
      %v629 = vadd.f32 %v308, %v628
      %v630 = vpop.f32.mrf.mxu0
      %631 = vmatprep.mubr.bf16.mxu0 0
      %632 = vmatmul.mubr.bf16.gmra.mxu0 %v499
      %v633 = vpop.f32.mrf.mxu0
      %v634 = vadd.f32 %v308, %v633
      %v635 = vpop.f32.mrf.mxu0
      %v636 = vpop.f32.mrf.mxu0
      %v637 = vadd.f32 %v308, %v636
      %v638 = vpop.f32.mrf.mxu0
      %639 = vmatprep.mubr.bf16.mxu0 0
      %640 = vmatmul.mubr.bf16.gmra.mxu0 %v502
      %v641 = vpop.f32.mrf.mxu0
      %v642 = vadd.f32 %v308, %v641
      %v643 = vpop.f32.mrf.mxu0
      %v644 = vpop.f32.mrf.mxu0
      %v645 = vadd.f32 %v308, %v644
      %v646 = vpop.f32.mrf.mxu0
      %647 = vmatprep.mubr.bf16.mxu0 0
      %648 = vmatmul.mubr.bf16.gmra.mxu0 %v505
      %v649 = vpop.f32.mrf.mxu0
      %v650 = vadd.f32 %v308, %v649
      %v651 = vpop.f32.mrf.mxu0
      %v652 = vpop.f32.mrf.mxu0
      %v653 = vadd.f32 %v308, %v652
      %v654 = vpop.f32.mrf.mxu0
      %655 = vmatprep.mubr.bf16.mxu0 0
      %656 = vmatmul.mubr.bf16.gmra.mxu0 %v508
      %v657 = vpop.f32.mrf.mxu0
      %v658 = vadd.f32 %v308, %v657
      %v659 = vpop.f32.mrf.mxu0
      %v660 = vpop.f32.mrf.mxu0
      %v661 = vadd.f32 %v308, %v660
      %v662 = vpop.f32.mrf.mxu0
      %663 = vmatprep.mubr.bf16.mxu0 0
      %664 = vmatmul.mubr.bf16.gmra.mxu0 %v511
      %v665 = vpop.f32.mrf.mxu0
      %v666 = vadd.f32 %v308, %v665
      %v667 = vpop.f32.mrf.mxu0
      %v668 = vpop.f32.mrf.mxu0
      %v669 = vadd.f32 %v308, %v668
      %v670 = vpop.f32.mrf.mxu0
      %671 = vmatprep.mubr.bf16.mxu0 0
      %672 = vmatmul.mubr.bf16.gmra.mxu0 %v514
      %v673 = vpop.f32.mrf.mxu0
      %v674 = vadd.f32 %v308, %v673
      %v675 = vpop.f32.mrf.mxu0
      %v676 = vpop.f32.mrf.mxu0
      %v677 = vadd.f32 %v308, %v676
      %v678 = vpop.f32.mrf.mxu0
      %679 = vmatprep.mubr.bf16.mxu0 0
      %680 = vmatmul.mubr.bf16.gmra.mxu0 %v517
      %v681 = vpop.f32.mrf.mxu0
      %v682 = vadd.f32 %v308, %v681
      %v683 = vpop.f32.mrf.mxu0
      %v684 = vpop.f32.mrf.mxu0
      %v685 = vadd.f32 %v308, %v684
      %v686 = vpop.f32.mrf.mxu0
      %687 = vmatprep.mubr.bf16.mxu0 0
      %688 = vmatmul.mubr.bf16.gmra.mxu0 %v520
      %v689 = vpop.f32.mrf.mxu0
      %v690 = vadd.f32 %v308, %v689
      %v691 = vpop.f32.mrf.mxu0
      %v692 = vpop.f32.mrf.mxu0
      %v693 = vadd.f32 %v308, %v692
      %v694 = vpop.f32.mrf.mxu0
      %695 = vmatprep.mubr.bf16.mxu0 0
      %696 = vmatmul.mubr.bf16.gmra.mxu0 %v523
      %v697 = vpop.f32.mrf.mxu0
      %v698 = vadd.f32 %v308, %v697
      %v699 = vpop.f32.mrf.mxu0
      %v700 = vpop.f32.mrf.mxu0
      %v701 = vadd.f32 %v308, %v700
      %v702 = vpop.f32.mrf.mxu0
      %703 = vmatprep.mubr.bf16.mxu0 0
      %704 = vmatmul.mubr.bf16.gmra.mxu0 %v526
      %v705 = vpop.f32.mrf.mxu0
      %v706 = vadd.f32 %v308, %v705
      %v707 = vpop.f32.mrf.mxu0
      %v708 = vpop.f32.mrf.mxu0
      %v709 = vadd.f32 %v308, %v708
      %v710 = vpop.f32.mrf.mxu0
      %711 = vmatprep.mubr.bf16.mxu0 0
      %712 = vmatmul.mubr.bf16.gmra.mxu0 %v529
      %v713 = vpop.f32.mrf.mxu0
      %v714 = vadd.f32 %v308, %v713
      %v715 = vpop.f32.mrf.mxu0
      %v716 = vpop.f32.mrf.mxu0
      %v717 = vadd.f32 %v308, %v716
      %v718 = vpop.f32.mrf.mxu0
      %719 = vmatprep.mubr.bf16.mxu0 0
      %720 = vmatmul.mubr.bf16.gmra.mxu0 %v532
      %v721 = vpop.f32.mrf.mxu0
      %v722 = vadd.f32 %v308, %v721
      %v723 = vpop.f32.mrf.mxu0
      %v724 = vpop.f32.mrf.mxu0
      %v725 = vadd.f32 %v308, %v724
      %v726 = vpop.f32.mrf.mxu0
      %727 = vmatprep.mubr.bf16.mxu0 0
      %728 = vmatmul.mubr.bf16.gmra.mxu0 %v535
      %v729 = vpop.f32.mrf.mxu0
      %v730 = vadd.f32 %v308, %v729
      %v731 = vpop.f32.mrf.mxu0
      %v732 = vpop.f32.mrf.mxu0
      %v733 = vadd.f32 %v308, %v732
      %v734 = vpop.f32.mrf.mxu0
      %735 = vmatprep.mubr.bf16.mxu0 0
      %736 = vmatmul.mubr.bf16.gmra.mxu0 %v538
      %v737 = vpop.f32.mrf.mxu0
      %v738 = vadd.f32 %v308, %v737
      %v739 = vpop.f32.mrf.mxu0
      %v740 = vpop.f32.mrf.mxu0
      %v741 = vadd.f32 %v308, %v740
      %v742 = vpop.f32.mrf.mxu0
      %743 = vmatprep.mubr.bf16.mxu0 0
      %744 = vmatmul.mubr.bf16.gmra.mxu0 %v541
      %v745 = vpop.f32.mrf.mxu0
      %v746 = vadd.f32 %v308, %v745
      %v747 = vpop.f32.mrf.mxu0
      %v748 = vpop.f32.mrf.mxu0
      %v749 = vadd.f32 %v308, %v748
      %v750 = vpop.f32.mrf.mxu0
      %751 = vmatprep.mubr.bf16.mxu0 0
      %752 = vmatmul.mubr.bf16.gmra.mxu0 %v544
      %v753 = vpop.f32.mrf.mxu0
      %v754 = vadd.f32 %v308, %v753
      %v755 = vpop.f32.mrf.mxu0
      %v756 = vpop.f32.mrf.mxu0
      %v757 = vadd.f32 %v308, %v756
      %v758 = vpop.f32.mrf.mxu0
      %759 = vmatprep.mubr.bf16.mxu0 0
      %760 = vmatmul.mubr.bf16.gmra.mxu0 %v547
      %v761 = vpop.f32.mrf.mxu0
      %v762 = vadd.f32 %v308, %v761
      %v763 = vpop.f32.mrf.mxu0
      %v764 = vpop.f32.mrf.mxu0
      %v765 = vadd.f32 %v308, %v764
      %v766 = vpop.f32.mrf.mxu0
      %767 = vmatprep.mubr.bf16.mxu0 0
      %768 = vmatmul.mubr.bf16.gmra.mxu0 %v550
      %v769 = vpop.f32.mrf.mxu0
      %v770 = vadd.f32 %v308, %v769
      %v771 = vpop.f32.mrf.mxu0
      %v772 = vpop.f32.mrf.mxu0
      %v773 = vadd.f32 %v308, %v772
      %v774 = vpop.f32.mrf.mxu0
      %775 = vmatprep.mubr.bf16.mxu0 0
      %776 = vmatmul.mubr.bf16.gmra.mxu0 %v553
      %v777 = vpop.f32.mrf.mxu0
      %v778 = vadd.f32 %v308, %v777
      %v779 = vpop.f32.mrf.mxu0
      %v780 = vpop.f32.mrf.mxu0
      %v781 = vadd.f32 %v308, %v780
      %v782 = vpop.f32.mrf.mxu0
      %783 = vmatprep.mubr.bf16.mxu0 0
      %784 = vmatmul.mubr.bf16.gmra.mxu0 %v556
      %v785 = vpop.f32.mrf.mxu0
      %v786 = vadd.f32 %v308, %v785
      %v787 = vpop.f32.mrf.mxu0
      %v788 = vpop.f32.mrf.mxu0
      %v789 = vadd.f32 %v308, %v788
      %v790 = vpop.f32.mrf.mxu0
      %791 = vmatprep.mubr.bf16.mxu0 0
      %792 = vmatmul.mubr.bf16.gmra.mxu0 %v559
      %v793 = vpop.f32.mrf.mxu0
      %v794 = vadd.f32 %v308, %v793
      %v795 = vpop.f32.mrf.mxu0
      %v796 = vpop.f32.mrf.mxu0
      %v797 = vadd.f32 %v308, %v796
      %v798 = vpop.f32.mrf.mxu0
      %799 = vmatprep.mubr.bf16.mxu0 0
      %800 = vmatmul.mubr.bf16.gmra.mxu0 %v562
      %v801 = vpop.f32.mrf.mxu0
      %v802 = vadd.f32 %v308, %v801
      %v803 = vpop.f32.mrf.mxu0
      %v804 = vpop.f32.mrf.mxu0
      %v805 = vadd.f32 %v308, %v804
      %v806 = vpop.f32.mrf.mxu0
      %807 = vmatprep.mubr.bf16.mxu0 0
      %808 = vmatmul.mubr.bf16.gmra.mxu0 %v565
      %v809 = vpop.f32.mrf.mxu0
      %v810 = vadd.f32 %v308, %v809
      %v811 = vpop.f32.mrf.mxu0
      %v812 = vpop.f32.mrf.mxu0
      %v813 = vadd.f32 %v308, %v812
      %v814 = vpop.f32.mrf.mxu0
      %815 = vmatprep.mubr.bf16.mxu0 0
      %816 = vmatmul.mubr.bf16.gmra.mxu0 %v568
      %v817 = vpop.f32.mrf.mxu0
      %v818 = vadd.f32 %v308, %v817
      %v819 = vpop.f32.mrf.mxu0
      %v820 = vpop.f32.mrf.mxu0
      %v821 = vadd.f32 %v308, %v820
      %v822 = vpop.f32.mrf.mxu0
      %823 = vmatprep.mubr.bf16.mxu0 0
      %824 = vmatmul.mubr.bf16.gmra.mxu0 %v571
      %v825 = vpop.f32.mrf.mxu0
      %v826 = vadd.f32 %v308, %v825
      %v827 = vpop.f32.mrf.mxu0
      %v828 = vpop.f32.mrf.mxu0
      %v829 = vadd.f32 %v308, %v828
      %v830 = vpop.f32.mrf.mxu0
      %831 = vmatprep.mubr.bf16.mxu0 0
      %832 = vmatmul.mubr.bf16.gmra.mxu0 %v574
      %v833 = vpop.f32.mrf.mxu0
      %v834 = vadd.f32 %v308, %v833
      %v835 = vpop.f32.mrf.mxu0
      %v836 = vpop.f32.mrf.mxu0
      %v837 = vadd.f32 %v308, %v836
      %v838 = vpop.f32.mrf.mxu0
      %839 = vmatprep.mubr.bf16.mxu0 0
      %840 = vmatmul.mubr.bf16.gmra.mxu0 %v577
      %v841 = vpop.f32.mrf.mxu0
      %v842 = vadd.f32 %v308, %v841
      %v843 = vpop.f32.mrf.mxu0
      %v844 = vpop.f32.mrf.mxu0
      %v845 = vadd.f32 %v308, %v844
      %v846 = vpop.f32.mrf.mxu0
      %847 = vmatprep.mubr.bf16.mxu0 0
      %848 = vmatmul.mubr.bf16.gmra.mxu0 %v580
      %v849 = vpop.f32.mrf.mxu0
      %v850 = vadd.f32 %v308, %v849
      %v851 = vpop.f32.mrf.mxu0
      %v852 = vpop.f32.mrf.mxu0
      %v853 = vadd.f32 %v308, %v852
      %v854 = vpop.f32.mrf.mxu0
      %855 = vmatprep.mubr.bf16.mxu0 0
      %856 = vmatmul.mubr.bf16.gmra.mxu0 %v583
      %v857 = vpop.f32.mrf.mxu0
      %v858 = vadd.f32 %v308, %v857
      %v859 = vpop.f32.mrf.mxu0
      %v860 = vpop.f32.mrf.mxu0
      %v861 = vadd.f32 %v308, %v860
      %v862 = vpop.f32.mrf.mxu0
      %863 = vmatprep.mubr.bf16.mxu0 0
      %864 = vmatmul.mubr.bf16.gmra.mxu0 %v586
      %v865 = vpop.f32.mrf.mxu0
      %v866 = vadd.f32 %v308, %v865
      %v867 = vpop.f32.mrf.mxu0
      %v868 = vpop.f32.mrf.mxu0
      %v869 = vadd.f32 %v308, %v868
      %v870 = vpop.f32.mrf.mxu0
      %871 = vmatprep.mubr.bf16.mxu0 0
      %872 = vmatmul.mubr.bf16.gmra.mxu0 %v589
      %v873 = vpop.f32.mrf.mxu0
      %v874 = vadd.f32 %v308, %v873
      %v875 = vpop.f32.mrf.mxu0
      %v876 = vpop.f32.mrf.mxu0
      %v877 = vadd.f32 %v308, %v876
      %v878 = vpop.f32.mrf.mxu0
      %879 = vdwg.mxu0
      %v880 = vtanh.pop %v626
      %v881 = vtanh.pop %v629
      %v882 = vtanh.pop %v634
      %v883 = vtanh.pop %v637
      %v884 = vtanh.pop %v642
      %v885 = vtanh.pop %v645
      %v886 = vtanh.pop %v650
      %v887 = vtanh.pop %v653
      %v888 = vtanh.pop %v658
      %v889 = vtanh.pop %v661
      %v890 = vtanh.pop %v666
      %v891 = vtanh.pop %v669
      %v892 = vtanh.pop %v674
      %v893 = vtanh.pop %v677
      %v894 = vtanh.pop %v682
      %v895 = vtanh.pop %v685
      %v896 = vtanh.pop %v690
      %v897 = vtanh.pop %v693
      %v898 = vtanh.pop %v698
      %v899 = vtanh.pop %v701
      %v900 = vtanh.pop %v706
      %v901 = vtanh.pop %v709
      %v902 = vtanh.pop %v714
      %v903 = vtanh.pop %v717
      %v904 = vtanh.pop %v722
      %v905 = vtanh.pop %v725
      %v906 = vtanh.pop %v730
      %v907 = vtanh.pop %v733
      %v908 = vtanh.pop %v738
      %v909 = vtanh.pop %v741
      %v910 = vtanh.pop %v746
      %v911 = vtanh.pop %v749
      %v912 = vtanh.pop %v754
      %v913 = vtanh.pop %v757
      %v914 = vtanh.pop %v762
      %v915 = vtanh.pop %v765
      %v916 = vtanh.pop %v770
      %v917 = vtanh.pop %v773
      %v918 = vtanh.pop %v778
      %v919 = vtanh.pop %v781
      %v920 = vtanh.pop %v786
      %v921 = vtanh.pop %v789
      %v922 = vtanh.pop %v794
      %v923 = vtanh.pop %v797
      %v924 = vtanh.pop %v802
      %v925 = vtanh.pop %v805
      %v926 = vtanh.pop %v810
      %v927 = vtanh.pop %v813
      %v928 = vtanh.pop %v818
      %v929 = vtanh.pop %v821
      %v930 = vtanh.pop %v826
      %v931 = vtanh.pop %v829
      %v932 = vtanh.pop %v834
      %v933 = vtanh.pop %v837
      %v934 = vtanh.pop %v842
      %v935 = vtanh.pop %v845
      %v936 = vtanh.pop %v850
      %v937 = vtanh.pop %v853
      %v938 = vtanh.pop %v858
      %v939 = vtanh.pop %v861
      %v940 = vtanh.pop %v866
      %v941 = vtanh.pop %v869
      %v942 = vtanh.pop %v874
      %v943 = vtanh.pop %v877
      %vm944 = vcmask 23552
      %945 = vst.msk [vmem:[%s228] sm:$0xff] %vm944, %v880
      %946 = vst.msk [vmem:[%s228 + $0x8] sm:$0xff] %vm944, %v881
      %947 = vst.msk [vmem:[%s228 + $0x10] sm:$0xff] %vm944, %v882
      %948 = vst.msk [vmem:[%s228 + $0x18] sm:$0xff] %vm944, %v883
      %949 = vst.msk [vmem:[%s228 + $0x20] sm:$0xff] %vm944, %v884
      %950 = vst.msk [vmem:[%s228 + $0x28] sm:$0xff] %vm944, %v885
      %951 = vst.msk [vmem:[%s228 + $0x30] sm:$0xff] %vm944, %v886
      %952 = vst.msk [vmem:[%s228 + $0x38] sm:$0xff] %vm944, %v887
      %953 = vst.msk [vmem:[%s228 + $0x40] sm:$0xff] %vm944, %v888
      %954 = vst.msk [vmem:[%s228 + $0x48] sm:$0xff] %vm944, %v889
      %955 = vst.msk [vmem:[%s228 + $0x50] sm:$0xff] %vm944, %v890
      %956 = vst.msk [vmem:[%s228 + $0x58] sm:$0xff] %vm944, %v891
      %957 = vst.msk [vmem:[%s228 + $0x60] sm:$0xff] %vm944, %v892
      %958 = vst.msk [vmem:[%s228 + $0x68] sm:$0xff] %vm944, %v893
      %959 = vst.msk [vmem:[%s228 + $0x70] sm:$0xff] %vm944, %v894
      %960 = vst.msk [vmem:[%s228 + $0x78] sm:$0xff] %vm944, %v895
      %961 = vst.msk [vmem:[%s228 + $0x80] sm:$0xff] %vm944, %v896
      %962 = vst.msk [vmem:[%s228 + $0x88] sm:$0xff] %vm944, %v897
      %963 = vst.msk [vmem:[%s228 + $0x90] sm:$0xff] %vm944, %v898
      %964 = vst.msk [vmem:[%s228 + $0x98] sm:$0xff] %vm944, %v899
      %965 = vst.msk [vmem:[%s228 + $0xa0] sm:$0xff] %vm944, %v900
      %966 = vst.msk [vmem:[%s228 + $0xa8] sm:$0xff] %vm944, %v901
      %967 = vst.msk [vmem:[%s228 + $0xb0] sm:$0xff] %vm944, %v902
      %968 = vst.msk [vmem:[%s228 + $0xb8] sm:$0xff] %vm944, %v903
      %969 = vst.msk [vmem:[%s228 + $0xc0] sm:$0xff] %vm944, %v904
      %970 = vst.msk [vmem:[%s228 + $0xc8] sm:$0xff] %vm944, %v905
      %971 = vst.msk [vmem:[%s228 + $0xd0] sm:$0xff] %vm944, %v906
      %972 = vst.msk [vmem:[%s228 + $0xd8] sm:$0xff] %vm944, %v907
      %973 = vst.msk [vmem:[%s228 + $0xe0] sm:$0xff] %vm944, %v908
      %974 = vst.msk [vmem:[%s228 + $0xe8] sm:$0xff] %vm944, %v909
      %975 = vst.msk [vmem:[%s228 + $0xf0] sm:$0xff] %vm944, %v910
      %976 = vst.msk [vmem:[%s228 + $0xf8] sm:$0xff] %vm944, %v911
      %977 = vst.msk [vmem:[%s228 + $0x100] sm:$0xff] %vm944, %v912
      %978 = vst.msk [vmem:[%s228 + $0x108] sm:$0xff] %vm944, %v913
      %979 = vst.msk [vmem:[%s228 + $0x110] sm:$0xff] %vm944, %v914
      %980 = vst.msk [vmem:[%s228 + $0x118] sm:$0xff] %vm944, %v915
      %981 = vst.msk [vmem:[%s228 + $0x120] sm:$0xff] %vm944, %v916
      %982 = vst.msk [vmem:[%s228 + $0x128] sm:$0xff] %vm944, %v917
      %983 = vst.msk [vmem:[%s228 + $0x130] sm:$0xff] %vm944, %v918
      %984 = vst.msk [vmem:[%s228 + $0x138] sm:$0xff] %vm944, %v919
      %985 = vst.msk [vmem:[%s228 + $0x140] sm:$0xff] %vm944, %v920
      %986 = vst.msk [vmem:[%s228 + $0x148] sm:$0xff] %vm944, %v921
      %987 = vst.msk [vmem:[%s228 + $0x150] sm:$0xff] %vm944, %v922
      %988 = vst.msk [vmem:[%s228 + $0x158] sm:$0xff] %vm944, %v923
      %989 = vst.msk [vmem:[%s228 + $0x160] sm:$0xff] %vm944, %v924
      %990 = vst.msk [vmem:[%s228 + $0x168] sm:$0xff] %vm944, %v925
      %991 = vst.msk [vmem:[%s228 + $0x170] sm:$0xff] %vm944, %v926
      %992 = vst.msk [vmem:[%s228 + $0x178] sm:$0xff] %vm944, %v927
      %993 = vst.msk [vmem:[%s228 + $0x180] sm:$0xff] %vm944, %v928
      %994 = vst.msk [vmem:[%s228 + $0x188] sm:$0xff] %vm944, %v929
      %995 = vst.msk [vmem:[%s228 + $0x190] sm:$0xff] %vm944, %v930
      %996 = vst.msk [vmem:[%s228 + $0x198] sm:$0xff] %vm944, %v931
      %997 = vst.msk [vmem:[%s228 + $0x1a0] sm:$0xff] %vm944, %v932
      %998 = vst.msk [vmem:[%s228 + $0x1a8] sm:$0xff] %vm944, %v933
      %999 = vst.msk [vmem:[%s228 + $0x1b0] sm:$0xff] %vm944, %v934
      %1000 = vst.msk [vmem:[%s228 + $0x1b8] sm:$0xff] %vm944, %v935
      %1001 = vst.msk [vmem:[%s228 + $0x1c0] sm:$0xff] %vm944, %v936
      %1002 = vst.msk [vmem:[%s228 + $0x1c8] sm:$0xff] %vm944, %v937
      %1003 = vst.msk [vmem:[%s228 + $0x1d0] sm:$0xff] %vm944, %v938
      %1004 = vst.msk [vmem:[%s228 + $0x1d8] sm:$0xff] %vm944, %v939
      %1005 = vst.msk [vmem:[%s228 + $0x1e0] sm:$0xff] %vm944, %v940
      %1006 = vst.msk [vmem:[%s228 + $0x1e8] sm:$0xff] %vm944, %v941
      %1007 = vst.msk [vmem:[%s228 + $0x1f0] sm:$0xff] %vm944, %v942
      %1008 = vst.msk [vmem:[%s228 + $0x1f8] sm:$0xff] %vm944, %v943
      %s1009 = smul.u32 64, %s19
      %p1010 = scmp.lt.s32.totalorder %s18, 3
      %s1011 = scalar_select %p1010, %s18, 3
      %p1012 = scmp.lt.s32.totalorder %s1009, 255
      %s1013 = scalar_select %p1012, %s1009, 255
      %s1014 = smul.addr %s1011, 256
      %s1015 = sadd.s32 %s1013, %s1014
      %s1016 = smul.addr %s1015, 8
      %s1017 = scalar_lea.vmem %s3, %s1016
      // Predicated region
      $region33: #{unet_forward.23} parent=31 // pred_check
        %p1018 = pneg %p121
      $region34: #{unet_forward.23} parent=31 // pred_check_branch
        %1020 = sbr.rel (%p1018) target = $region36
      $region35: #{unet_forward.23} parent=31 // pred_region
        %s1021 = smul.u32 64, %s19
      $region36: #{unet_forward.23} parent=31 // pred_fallthru
        _
    $region32: #{unet_forward.23} parent=5 // pred_fallthru
      _
    %p1022 = scmp.le.s32.totalorder 2, %s9
    // Predicated region
    $region37: #{unet_forward.23} parent=5 // pred_check
      %p1023 = pneg %p1022
    $region38: #{unet_forward.23} parent=5 // pred_check_branch
      %1025 = sbr.rel (%p1023) target = $region40
    $region39: #{unet_forward.23} parent=5 // pred_region
      %s1026 = ssub.s32 %s9, 2
      // Predicated region
      $region41: #{unet_forward.23} parent=39 // pred_check
        %p1027 = pneg %p127
      $region42: #{unet_forward.23} parent=39 // pred_check_branch
        %1029 = sbr.rel (%p1027) target = $region44
      $region43: #{unet_forward.23} parent=39 // pred_region
        %s1030 = smul.u32 64, %s21
        %p1031 = scmp.lt.s32.totalorder %s20, 3
        %s1032 = scalar_select %p1031, %s20, 3
        %p1033 = scmp.lt.s32.totalorder %s1030, 255
        %s1034 = scalar_select %p1033, %s1030, 255
        %s1035 = smul.addr %s1032, 256
        %s1036 = sadd.s32 %s1034, %s1035
        %s1037 = smul.addr %s1036, 8
        %s1038 = scalar_lea.vmem %s3, %s1037
      $region44: #{unet_forward.23} parent=39 // pred_fallthru
        _
    $region40: #{unet_forward.23} parent=5 // pred_fallthru
      _
  $region6: #{unet_forward.23} parent=0 // loop_footer
    %s13 = sadd.s32 1, %s9
  $region7: #{unet_forward.23} parent=0 // loop_footer_branch
    %8 = sbr.rel target = $region3
  $region8: #{unet_forward.23} parent=0 // loop_exit
    _

</llo_original>
